<compile_context>
chip_gen: v5e
topology: v5e:2x2
jax: 0.10.0
libtpu: 0.0.40
codegen_flags: <defaults>
</compile_context>

<pallas_src>
import jax
import jax.numpy as jnp
from jax import lax
from jax.experimental import pallas as pl
from jax.experimental.pallas import tpu as pltpu

NUM_CLASSES = 5          # Config.num_classes
FEAT_CH = 1536           # efficientnet_b3 classifier in_features
MAIN_HID = 512           # backbone.classifier Linear(1536, 512)
AUX_HID = 256            # aux_classifier Linear(1536, 256)
BN_EPS = 1e-5            # nn.BatchNorm1d default eps
HEAD_PAD = 128           # lane-dense padded logits width (>= NUM_CLASSES)
MAX_TILE = 256           # max batch rows per grid step
VMEM_LIMIT = 32 * 1024 * 1024

IN_CH, IN_HW = 3, 16     # synthetic backbone input (N,3,16,16)
C1, H1 = 16, 8           # conv1 out: (N,8,8,16)  -> flat 1024
C2, H2 = 32, 4           # conv2 out: (N,4,4,32)  -> flat 512
IN_FLAT = IN_CH * IN_HW * IN_HW          # 768
F1_FLAT = C1 * H1 * H1                   # 1024
F2_FLAT = C2 * H2 * H2                   # 512


def _round_up(v, m):
    return ((v + m - 1) // m) * m


def _silu(y):
    # exact y * sigmoid(y)
    return y * (1.0 / (1.0 + jnp.exp(-y)))


# --------------------------------------------------------------------------
# Single fused kernel: conv1 -> SiLU -> conv2 -> SiLU -> conv3 -> SiLU
#   -> [main: Linear(1536,512)+SiLU+BN(folded)+Linear(512,5)]
#   -> [aux : avgpool(identity)+Linear(1536,256)+ReLU+Linear(256,5)*0.3(folded)]
#   -> logits = main + aux, written lane-dense as (TB,128)
# Convs are dense Toeplitz matmuls over the flattened per-sample vector.
# --------------------------------------------------------------------------
def _fused_forward_kernel(x_ref, t1_ref, b1_ref, t2_ref, b2_ref,
                          c3w_ref, c3b_ref, wcat_ref, bcat_ref,
                          w2_ref, a2_ref, bout_ref, o_ref):
    x = x_ref[...].astype(jnp.bfloat16)                                   # (TB, 768)

    # conv1 (3x3/s2/p1, 3->16) as dense matmul + SiLU
    h1 = _silu(jnp.dot(x, t1_ref[...],
                       preferred_element_type=jnp.float32) + b1_ref[...])  # (TB,1024)
    # conv2 (3x3/s2/p1, 16->32) as dense matmul + SiLU
    h2 = _silu(jnp.dot(h1.astype(jnp.bfloat16), t2_ref[...],
                       preferred_element_type=jnp.float32) + b2_ref[...])  # (TB,512)
    # conv3 (4x4/s4 over 4x4 map, 32->1536) == dense matmul + SiLU
    f = _silu(jnp.dot(h2.astype(jnp.bfloat16), c3w_ref[...],
                      preferred_element_type=jnp.float32) + c3b_ref[...])  # (TB,1536)

    # main Linear(1536,512) and aux Linear(1536,256) fused into one (1536,768) dot
    ha = jnp.dot(f.astype(jnp.bfloat16), wcat_ref[...],
                 preferred_element_type=jnp.float32) + bcat_ref[...]       # (TB,768)
    hb = _silu(ha[:, :MAIN_HID]).astype(jnp.bfloat16)        # main hidden (Dropout=id)
    ab = jnp.maximum(ha[:, MAIN_HID:], 0.0).astype(jnp.bfloat16)           # aux ReLU

    # BN folded into w2/bout; 0.3 aux scale folded into a2/bout at prepare time.
    logits = (jnp.dot(hb, w2_ref[...], preferred_element_type=jnp.float32)
              + jnp.dot(ab, a2_ref[...], preferred_element_type=jnp.float32)
              + bout_ref[...])                                             # (TB,128)
    o_ref[...] = logits.astype(o_ref.dtype)


def pallas_fused_forward(x_flat, p):
    N, K = x_flat.shape                                  # K == 768
    if N <= 8:
        TB = N                                           # full-dim block (allowed)
        n_pad = N
    else:
        # aim for >=2 grid steps (v7x: 2 TensorCores), 8-row aligned, capped at 256
        TB = min(MAX_TILE, _round_up((N + 1) // 2, 8))
        n_pad = _round_up(N, TB)
        if n_pad != N:
            x_flat = jnp.pad(x_flat, ((0, n_pad - N), (0, 0)))
    grid = (n_pad // TB,)

    args = [x_flat,
            p["t1"], p["b1f"], p["t2"], p["b2f"],
            p["c3w"], p["c3b"], p["wcat"], p["bcat"],
            p["w2f"], p["a2s"], p["bout"]]
    in_specs = [pl.BlockSpec((TB, K), lambda i: (i, 0))]
    in_specs += [pl.BlockSpec(a.shape, lambda i: (0, 0)) for a in args[1:]]

    out = pl.pallas_call(
        _fused_forward_kernel,
        out_shape=jax.ShapeDtypeStruct((n_pad, HEAD_PAD), jnp.float32),
        grid=grid,
        in_specs=in_specs,
        out_specs=pl.BlockSpec((TB, HEAD_PAD), lambda i: (i, 0)),
        compiler_params=pltpu.CompilerParams(
            dimension_semantics=("parallel",),
            vmem_limit_bytes=VMEM_LIMIT),
    )(*args)
    return out[:N, :NUM_CLASSES]


# --------------------------------------------------------------------------
# Full forward pass (AdvancedCNN.forward equivalent)
# --------------------------------------------------------------------------
def advanced_cnn_forward(x_nchw, p):
    N = x_nchw.shape[0]
    x_flat = x_nchw.reshape(N, IN_FLAT)     # flattened NCHW input (matches Toeplitz)
    return pallas_fused_forward(x_flat, p)  # (N, 5)


# --------------------------------------------------------------------------
# Deterministic synthetic parameters (shapes dictated by the module __init__)
# --------------------------------------------------------------------------
def init_params(key):
    ks = jax.random.split(key, 16)

    def w(k, shape, scale):
        return jax.random.normal(k, shape, jnp.float32) * scale

    return {
        # frozen backbone stand-in (HWIO conv weights)
        "c1_w": w(ks[0], (3, 3, IN_CH, C1), 0.10), "c1_b": w(ks[1], (C1,), 0.10),
        "c2_w": w(ks[2], (3, 3, C1, C2), 0.05), "c2_b": w(ks[3], (C2,), 0.05),
        "c3_w": w(ks[4], (4, 4, C2, FEAT_CH), 0.05), "c3_b": w(ks[5], (FEAT_CH,), 0.05),
        # backbone.classifier: Linear(1536,512) / BatchNorm1d(512) / Linear(512,5)
        "w1": w(ks[6], (FEAT_CH, MAIN_HID), 0.02), "b1": w(ks[7], (MAIN_HID,), 0.02),
        "bn_gamma": 1.0 + 0.1 * jax.random.normal(ks[8], (MAIN_HID,), jnp.float32),
        "bn_beta": 0.1 * jax.random.normal(ks[9], (MAIN_HID,), jnp.float32),
        "bn_mean": 0.1 * jax.random.normal(ks[10], (MAIN_HID,), jnp.float32),
        "bn_var": 0.5 + jax.random.uniform(ks[11], (MAIN_HID,), jnp.float32),
        "w2": w(ks[12], (MAIN_HID, NUM_CLASSES), 0.05), "b2": w(ks[13], (NUM_CLASSES,), 0.05),
        # aux_classifier: Linear(1536,256) / Linear(256,5)
        "a1": w(ks[14], (FEAT_CH, AUX_HID), 0.02),
        "ab1": jnp.zeros((AUX_HID,), jnp.float32),
        "a2": w(ks[15], (AUX_HID, NUM_CLASSES), 0.05),
        "ab2": jnp.zeros((NUM_CLASSES,), jnp.float32),
    }


def prepare_params(p):
    """One-time layout/dtype prep (outside jit):
       * conv1/conv2 lowered to dense Toeplitz matmuls over flattened activations
         (built exactly by convolving identity basis images; bias handled separately)
       * eval-mode BatchNorm folded into the final main linear; 0.3 aux scale folded
         into the aux head; main/aux hidden linears concatenated into one weight
       * large matmul weights cast to bf16 (f32 accumulation in-kernel)
       * 5-class output weights/biases zero-padded to 128 lanes (lane-dense store)
    """
    # conv1 Toeplitz: flattened NCHW input (768) -> flattened NHWC output (1024)
    eye1 = jnp.eye(IN_FLAT, dtype=jnp.float32).reshape(IN_FLAT, IN_CH, IN_HW, IN_HW)
    t1 = lax.conv_general_dilated(
        eye1, p["c1_w"], window_strides=(2, 2), padding=((1, 1), (1, 1)),
        dimension_numbers=("NCHW", "HWIO", "NHWC")).reshape(IN_FLAT, F1_FLAT)
    # conv2 Toeplitz: flattened NHWC (1024) -> flattened NHWC (512)
    eye2 = jnp.eye(F1_FLAT, dtype=jnp.float32).reshape(F1_FLAT, H1, H1, C1)
    t2 = lax.conv_general_dilated(
        eye2, p["c2_w"], window_strides=(2, 2), padding=((1, 1), (1, 1)),
        dimension_numbers=("NHWC", "HWIO", "NHWC")).reshape(F1_FLAT, F2_FLAT)

    # fold eval-mode BatchNorm1d into the main-branch final linear
    s = p["bn_gamma"] / jnp.sqrt(p["bn_var"] + BN_EPS)
    w2_fold = p["w2"] * s[:, None]
    b2_fold = p["b2"] + (p["bn_beta"] - p["bn_mean"] * s) @ p["w2"]

    pad = HEAD_PAD - NUM_CLASSES
    w2p = jnp.pad(w2_fold, ((0, 0), (0, pad)))
    a2p = jnp.pad(0.3 * p["a2"], ((0, 0), (0, pad)))              # 0.3 aux scale folded
    boutp = jnp.pad((b2_fold + 0.3 * p["ab2"]).reshape(1, NUM_CLASSES), ((0, 0), (0, pad)))

    return {
        "t1": t1.astype(jnp.bfloat16),
        "b1f": jnp.tile(p["c1_b"], H1 * H1).reshape(1, F1_FLAT),
        "t2": t2.astype(jnp.bfloat16),
        "b2f": jnp.tile(p["c2_b"], H2 * H2).reshape(1, F2_FLAT),
        "c3w": p["c3_w"].reshape(4 * 4 * C2, FEAT_CH).astype(jnp.bfloat16),
        "c3b": p["c3_b"].reshape(1, FEAT_CH),
        "wcat": jnp.concatenate([p["w1"], p["a1"]], axis=1).astype(jnp.bfloat16),
        "bcat": jnp.concatenate([p["b1"], p["ab1"]]).reshape(1, MAIN_HID + AUX_HID),
        "w2f": w2p.astype(jnp.bfloat16),
        "a2s": a2p.astype(jnp.bfloat16),
        "bout": boutp.astype(jnp.float32),
    }


if __name__ == "__main__":
    key = jax.random.PRNGKey(0)
    pkey, xkey = jax.random.split(key)
    params = prepare_params(init_params(pkey))
    x = jax.random.normal(xkey, (2, IN_CH, IN_HW, IN_HW), jnp.float32)   # NCHW, like PyTorch
    out = jax.jit(advanced_cnn_forward)(x, params)
    out = jax.block_until_ready(out)
    assert out.shape == (2, NUM_CLASSES) and out.dtype == jnp.float32
    print("KERNEL_OK")
</pallas_src>

<mosaic_0001>
module attributes {stable_mosaic.version = 11 : i64} {
  func.func @_fused_forward_kernel(%arg0: i32, %arg1: memref<2x768xf32, #tpu.memory_space<vmem>>, %arg2: memref<768x1024xbf16, #tpu.memory_space<vmem>>, %arg3: memref<1x1024xf32, #tpu.memory_space<vmem>>, %arg4: memref<1024x512xbf16, #tpu.memory_space<vmem>>, %arg5: memref<1x512xf32, #tpu.memory_space<vmem>>, %arg6: memref<512x1536xbf16, #tpu.memory_space<vmem>>, %arg7: memref<1x1536xf32, #tpu.memory_space<vmem>>, %arg8: memref<1536x768xbf16, #tpu.memory_space<vmem>>, %arg9: memref<1x768xf32, #tpu.memory_space<vmem>>, %arg10: memref<512x128xbf16, #tpu.memory_space<vmem>>, %arg11: memref<256x128xbf16, #tpu.memory_space<vmem>>, %arg12: memref<1x128xf32, #tpu.memory_space<vmem>>, %arg13: memref<2x128xf32, #tpu.memory_space<vmem>>) attributes {dimension_semantics = [#tpu.dimension_semantics<parallel>], iteration_bounds = array<i64: 1>, scalar_prefetch = 0 : i64, scratch_operands = 0 : i64, tpu.core_type = #tpu.core_type<tc>, window_params = [{transform_indices = @transform_0, window_bounds = array<i64: 2, 768>}, {pipeline_mode = #tpu.pipeline_mode<synchronous>, transform_indices = @transform_1, window_bounds = array<i64: 768, 1024>}, {pipeline_mode = #tpu.pipeline_mode<synchronous>, transform_indices = @transform_2, window_bounds = array<i64: 1, 1024>}, {pipeline_mode = #tpu.pipeline_mode<synchronous>, transform_indices = @transform_3, window_bounds = array<i64: 1024, 512>}, {pipeline_mode = #tpu.pipeline_mode<synchronous>, transform_indices = @transform_4, window_bounds = array<i64: 1, 512>}, {pipeline_mode = #tpu.pipeline_mode<synchronous>, transform_indices = @transform_5, window_bounds = array<i64: 512, 1536>}, {pipeline_mode = #tpu.pipeline_mode<synchronous>, transform_indices = @transform_6, window_bounds = array<i64: 1, 1536>}, {pipeline_mode = #tpu.pipeline_mode<synchronous>, transform_indices = @transform_7, window_bounds = array<i64: 1536, 768>}, {pipeline_mode = #tpu.pipeline_mode<synchronous>, transform_indices = @transform_8, window_bounds = array<i64: 1, 768>}, {pipeline_mode = #tpu.pipeline_mode<synchronous>, transform_indices = @transform_9, window_bounds = array<i64: 512, 128>}, {pipeline_mode = #tpu.pipeline_mode<synchronous>, transform_indices = @transform_10, window_bounds = array<i64: 256, 128>}, {pipeline_mode = #tpu.pipeline_mode<synchronous>, transform_indices = @transform_11, window_bounds = array<i64: 1, 128>}, {transform_indices = @transform_12, window_bounds = array<i64: 2, 128>}]} {
    %c0 = arith.constant 0 : index
    %c0_0 = arith.constant 0 : index
    %0 = vector.load %arg1[%c0, %c0_0] : memref<2x768xf32, #tpu.memory_space<vmem>>, vector<2x768xf32>
    %1 = arith.truncf %0 : vector<2x768xf32> to vector<2x768xbf16>
    %c0_1 = arith.constant 0 : index
    %c0_2 = arith.constant 0 : index
    %2 = vector.load %arg2[%c0_1, %c0_2] : memref<768x1024xbf16, #tpu.memory_space<vmem>>, vector<768x1024xbf16>
    %cst = arith.constant dense<0.000000e+00> : vector<2x1024xf32>
    %3 = tpu.matmul %1, %2, %cst {dimension_numbers = #tpu.dot_dimension_numbers<[1], [0], [0], [1], [0, 0, 1, 1], [], []>} : vector<2x768xbf16>, vector<768x1024xbf16>, vector<2x1024xf32> -> vector<2x1024xf32>
    %c0_3 = arith.constant 0 : index
    %c0_4 = arith.constant 0 : index
    %4 = vector.load %arg3[%c0_3, %c0_4] : memref<1x1024xf32, #tpu.memory_space<vmem>>, vector<1x1024xf32>
    %5 = vector.broadcast %4 : vector<1x1024xf32> to vector<2x1024xf32>
    %6 = arith.addf %3, %5 : vector<2x1024xf32>
    %cst_5 = arith.constant 0.000000e+00 : f32
    %7 = vector.broadcast %cst_5 : f32 to vector<2x1024xf32>
    %8 = arith.subf %7, %6 : vector<2x1024xf32>
    %9 = math.exp %8 : vector<2x1024xf32>
    %cst_6 = arith.constant 1.000000e+00 : f32
    %10 = vector.broadcast %cst_6 : f32 to vector<2x1024xf32>
    %11 = arith.addf %10, %9 : vector<2x1024xf32>
    %cst_7 = arith.constant 1.000000e+00 : f32
    %12 = vector.broadcast %cst_7 : f32 to vector<2x1024xf32>
    %13 = arith.divf %12, %11 : vector<2x1024xf32>
    %14 = arith.mulf %6, %13 : vector<2x1024xf32>
    %15 = arith.truncf %14 : vector<2x1024xf32> to vector<2x1024xbf16>
    %c0_8 = arith.constant 0 : index
    %c0_9 = arith.constant 0 : index
    %16 = vector.load %arg4[%c0_8, %c0_9] : memref<1024x512xbf16, #tpu.memory_space<vmem>>, vector<1024x512xbf16>
    %cst_10 = arith.constant dense<0.000000e+00> : vector<2x512xf32>
    %17 = tpu.matmul %15, %16, %cst_10 {dimension_numbers = #tpu.dot_dimension_numbers<[1], [0], [0], [1], [0, 0, 1, 1], [], []>} : vector<2x1024xbf16>, vector<1024x512xbf16>, vector<2x512xf32> -> vector<2x512xf32>
    %c0_11 = arith.constant 0 : index
    %c0_12 = arith.constant 0 : index
    %18 = vector.load %arg5[%c0_11, %c0_12] : memref<1x512xf32, #tpu.memory_space<vmem>>, vector<1x512xf32>
    %19 = vector.broadcast %18 : vector<1x512xf32> to vector<2x512xf32>
    %20 = arith.addf %17, %19 : vector<2x512xf32>
    %cst_13 = arith.constant 0.000000e+00 : f32
    %21 = vector.broadcast %cst_13 : f32 to vector<2x512xf32>
    %22 = arith.subf %21, %20 : vector<2x512xf32>
    %23 = math.exp %22 : vector<2x512xf32>
    %cst_14 = arith.constant 1.000000e+00 : f32
    %24 = vector.broadcast %cst_14 : f32 to vector<2x512xf32>
    %25 = arith.addf %24, %23 : vector<2x512xf32>
    %cst_15 = arith.constant 1.000000e+00 : f32
    %26 = vector.broadcast %cst_15 : f32 to vector<2x512xf32>
    %27 = arith.divf %26, %25 : vector<2x512xf32>
    %28 = arith.mulf %20, %27 : vector<2x512xf32>
    %29 = arith.truncf %28 : vector<2x512xf32> to vector<2x512xbf16>
    %c0_16 = arith.constant 0 : index
    %c0_17 = arith.constant 0 : index
    %30 = vector.load %arg6[%c0_16, %c0_17] : memref<512x1536xbf16, #tpu.memory_space<vmem>>, vector<512x1536xbf16>
    %cst_18 = arith.constant dense<0.000000e+00> : vector<2x1536xf32>
    %31 = tpu.matmul %29, %30, %cst_18 {dimension_numbers = #tpu.dot_dimension_numbers<[1], [0], [0], [1], [0, 0, 1, 1], [], []>} : vector<2x512xbf16>, vector<512x1536xbf16>, vector<2x1536xf32> -> vector<2x1536xf32>
    %c0_19 = arith.constant 0 : index
    %c0_20 = arith.constant 0 : index
    %32 = vector.load %arg7[%c0_19, %c0_20] : memref<1x1536xf32, #tpu.memory_space<vmem>>, vector<1x1536xf32>
    %33 = vector.broadcast %32 : vector<1x1536xf32> to vector<2x1536xf32>
    %34 = arith.addf %31, %33 : vector<2x1536xf32>
    %cst_21 = arith.constant 0.000000e+00 : f32
    %35 = vector.broadcast %cst_21 : f32 to vector<2x1536xf32>
    %36 = arith.subf %35, %34 : vector<2x1536xf32>
    %37 = math.exp %36 : vector<2x1536xf32>
    %cst_22 = arith.constant 1.000000e+00 : f32
    %38 = vector.broadcast %cst_22 : f32 to vector<2x1536xf32>
    %39 = arith.addf %38, %37 : vector<2x1536xf32>
    %cst_23 = arith.constant 1.000000e+00 : f32
    %40 = vector.broadcast %cst_23 : f32 to vector<2x1536xf32>
    %41 = arith.divf %40, %39 : vector<2x1536xf32>
    %42 = arith.mulf %34, %41 : vector<2x1536xf32>
    %43 = arith.truncf %42 : vector<2x1536xf32> to vector<2x1536xbf16>
    %c0_24 = arith.constant 0 : index
    %c0_25 = arith.constant 0 : index
    %44 = vector.load %arg8[%c0_24, %c0_25] : memref<1536x768xbf16, #tpu.memory_space<vmem>>, vector<1536x768xbf16>
    %cst_26 = arith.constant dense<0.000000e+00> : vector<2x768xf32>
    %45 = tpu.matmul %43, %44, %cst_26 {dimension_numbers = #tpu.dot_dimension_numbers<[1], [0], [0], [1], [0, 0, 1, 1], [], []>} : vector<2x1536xbf16>, vector<1536x768xbf16>, vector<2x768xf32> -> vector<2x768xf32>
    %c0_27 = arith.constant 0 : index
    %c0_28 = arith.constant 0 : index
    %46 = vector.load %arg9[%c0_27, %c0_28] : memref<1x768xf32, #tpu.memory_space<vmem>>, vector<1x768xf32>
    %47 = vector.broadcast %46 : vector<1x768xf32> to vector<2x768xf32>
    %48 = arith.addf %45, %47 : vector<2x768xf32>
    %49 = vector.extract_strided_slice %48 {offsets = [0, 0], sizes = [2, 512], strides = [1, 1]} : vector<2x768xf32> to vector<2x512xf32>
    %cst_29 = arith.constant 0.000000e+00 : f32
    %50 = vector.broadcast %cst_29 : f32 to vector<2x512xf32>
    %51 = arith.subf %50, %49 : vector<2x512xf32>
    %52 = math.exp %51 : vector<2x512xf32>
    %cst_30 = arith.constant 1.000000e+00 : f32
    %53 = vector.broadcast %cst_30 : f32 to vector<2x512xf32>
    %54 = arith.addf %53, %52 : vector<2x512xf32>
    %cst_31 = arith.constant 1.000000e+00 : f32
    %55 = vector.broadcast %cst_31 : f32 to vector<2x512xf32>
    %56 = arith.divf %55, %54 : vector<2x512xf32>
    %57 = arith.mulf %49, %56 : vector<2x512xf32>
    %58 = arith.truncf %57 : vector<2x512xf32> to vector<2x512xbf16>
    %59 = vector.extract_strided_slice %48 {offsets = [0, 512], sizes = [2, 256], strides = [1, 1]} : vector<2x768xf32> to vector<2x256xf32>
    %cst_32 = arith.constant 0.000000e+00 : f32
    %60 = vector.broadcast %cst_32 : f32 to vector<2x256xf32>
    %61 = arith.maximumf %59, %60 : vector<2x256xf32>
    %62 = arith.truncf %61 : vector<2x256xf32> to vector<2x256xbf16>
    %c0_33 = arith.constant 0 : index
    %c0_34 = arith.constant 0 : index
    %63 = vector.load %arg10[%c0_33, %c0_34] : memref<512x128xbf16, #tpu.memory_space<vmem>>, vector<512x128xbf16>
    %cst_35 = arith.constant dense<0.000000e+00> : vector<2x128xf32>
    %64 = tpu.matmul %58, %63, %cst_35 {dimension_numbers = #tpu.dot_dimension_numbers<[1], [0], [0], [1], [0, 0, 1, 1], [], []>} : vector<2x512xbf16>, vector<512x128xbf16>, vector<2x128xf32> -> vector<2x128xf32>
    %c0_36 = arith.constant 0 : index
    %c0_37 = arith.constant 0 : index
    %65 = vector.load %arg11[%c0_36, %c0_37] : memref<256x128xbf16, #tpu.memory_space<vmem>>, vector<256x128xbf16>
    %cst_38 = arith.constant dense<0.000000e+00> : vector<2x128xf32>
    %66 = tpu.matmul %62, %65, %cst_38 {dimension_numbers = #tpu.dot_dimension_numbers<[1], [0], [0], [1], [0, 0, 1, 1], [], []>} : vector<2x256xbf16>, vector<256x128xbf16>, vector<2x128xf32> -> vector<2x128xf32>
    %67 = arith.addf %64, %66 : vector<2x128xf32>
    %c0_39 = arith.constant 0 : index
    %c0_40 = arith.constant 0 : index
    %68 = vector.load %arg12[%c0_39, %c0_40] : memref<1x128xf32, #tpu.memory_space<vmem>>, vector<1x128xf32>
    %69 = vector.broadcast %68 : vector<1x128xf32> to vector<2x128xf32>
    %70 = arith.addf %67, %69 : vector<2x128xf32>
    %c0_41 = arith.constant 0 : index
    %c0_42 = arith.constant 0 : index
    %71 = vector.load %arg13[%c0_41, %c0_42] : memref<2x128xf32, #tpu.memory_space<vmem>>, vector<2x128xf32>
    tpu.vector_store %arg13[%c0_41, %c0_42], %70 {strides = array<i32>} : memref<2x128xf32, #tpu.memory_space<vmem>>, vector<2x128xf32>,
    return
  }
  func.func @transform_0(%arg0: i32) -> (i32, i32) {
    %c0_i32 = arith.constant 0 : i32
    %c0_i32_0 = arith.constant 0 : i32
    return %arg0, %c0_i32 : i32, i32
  }
  func.func @transform_1(%arg0: i32) -> (i32, i32) {
    %c0_i32 = arith.constant 0 : i32
    %c0_i32_0 = arith.constant 0 : i32
    %c0_i32_1 = arith.constant 0 : i32
    return %c0_i32, %c0_i32_0 : i32, i32
  }
  func.func @transform_2(%arg0: i32) -> (i32, i32) {
    %c0_i32 = arith.constant 0 : i32
    %c0_i32_0 = arith.constant 0 : i32
    %c0_i32_1 = arith.constant 0 : i32
    return %c0_i32, %c0_i32_0 : i32, i32
  }
  func.func @transform_3(%arg0: i32) -> (i32, i32) {
    %c0_i32 = arith.constant 0 : i32
    %c0_i32_0 = arith.constant 0 : i32
    %c0_i32_1 = arith.constant 0 : i32
    return %c0_i32, %c0_i32_0 : i32, i32
  }
  func.func @transform_4(%arg0: i32) -> (i32, i32) {
    %c0_i32 = arith.constant 0 : i32
    %c0_i32_0 = arith.constant 0 : i32
    %c0_i32_1 = arith.constant 0 : i32
    return %c0_i32, %c0_i32_0 : i32, i32
  }
  func.func @transform_5(%arg0: i32) -> (i32, i32) {
    %c0_i32 = arith.constant 0 : i32
    %c0_i32_0 = arith.constant 0 : i32
    %c0_i32_1 = arith.constant 0 : i32
    return %c0_i32, %c0_i32_0 : i32, i32
  }
  func.func @transform_6(%arg0: i32) -> (i32, i32) {
    %c0_i32 = arith.constant 0 : i32
    %c0_i32_0 = arith.constant 0 : i32
    %c0_i32_1 = arith.constant 0 : i32
    return %c0_i32, %c0_i32_0 : i32, i32
  }
  func.func @transform_7(%arg0: i32) -> (i32, i32) {
    %c0_i32 = arith.constant 0 : i32
    %c0_i32_0 = arith.constant 0 : i32
    %c0_i32_1 = arith.constant 0 : i32
    return %c0_i32, %c0_i32_0 : i32, i32
  }
  func.func @transform_8(%arg0: i32) -> (i32, i32) {
    %c0_i32 = arith.constant 0 : i32
    %c0_i32_0 = arith.constant 0 : i32
    %c0_i32_1 = arith.constant 0 : i32
    return %c0_i32, %c0_i32_0 : i32, i32
  }
  func.func @transform_9(%arg0: i32) -> (i32, i32) {
    %c0_i32 = arith.constant 0 : i32
    %c0_i32_0 = arith.constant 0 : i32
    %c0_i32_1 = arith.constant 0 : i32
    return %c0_i32, %c0_i32_0 : i32, i32
  }
  func.func @transform_10(%arg0: i32) -> (i32, i32) {
    %c0_i32 = arith.constant 0 : i32
    %c0_i32_0 = arith.constant 0 : i32
    %c0_i32_1 = arith.constant 0 : i32
    return %c0_i32, %c0_i32_0 : i32, i32
  }
  func.func @transform_11(%arg0: i32) -> (i32, i32) {
    %c0_i32 = arith.constant 0 : i32
    %c0_i32_0 = arith.constant 0 : i32
    %c0_i32_1 = arith.constant 0 : i32
    return %c0_i32, %c0_i32_0 : i32, i32
  }
  func.func @transform_12(%arg0: i32) -> (i32, i32) {
    %c0_i32 = arith.constant 0 : i32
    %c0_i32_0 = arith.constant 0 : i32
    return %arg0, %c0_i32 : i32, i32
  }
}

</mosaic_0001>

<llo_original>
// kernel: advanced_cnn_forward.1
$region0: #{advanced_cnn_forward.1}
  #allocation0 [shape = 'u32[]', space=smem, size = 0x4, offset = 0x4, fixed_abs, tag = 'smem constant byte address 0x4 - core index']
  #allocation1 [shape = 'u32[72,128]{1,0:T(1,128)}', space=vmem, size = 0x9000, scoped, tag = 'internal scratch']
  %s0 = inlined_call_operand.vmem [shape: f32[2,768], index: 0, kind: input, shape index: {}]
  %s1 = inlined_call_operand.hbm [shape: bf16[768,1024], index: 1, kind: input, shape index: {}]
  %s2 = inlined_call_operand.hbm [shape: f32[1,1024], index: 2, kind: input, shape index: {}]
  %s3 = inlined_call_operand.hbm [shape: bf16[1024,512], index: 3, kind: input, shape index: {}]
  %s4 = inlined_call_operand.hbm [shape: f32[1,512], index: 4, kind: input, shape index: {}]
  %s5 = inlined_call_operand.hbm [shape: bf16[512,1536], index: 5, kind: input, shape index: {}]
  %s6 = inlined_call_operand.hbm [shape: f32[1,1536], index: 6, kind: input, shape index: {}]
  %s7 = inlined_call_operand.hbm [shape: bf16[1536,768], index: 7, kind: input, shape index: {}]
  %s8 = inlined_call_operand.hbm [shape: f32[1,768], index: 8, kind: input, shape index: {}]
  %s9 = inlined_call_operand.hbm [shape: bf16[512,128], index: 9, kind: input, shape index: {}]
  %s10 = inlined_call_operand.hbm [shape: bf16[256,128], index: 10, kind: input, shape index: {}]
  %s11 = inlined_call_operand.hbm [shape: f32[1,128], index: 11, kind: input, shape index: {}]
  %s12 = inlined_call_operand.hbm [shape: f32[2,128], index: 12, kind: output, shape index: {}]
  %s13 = sld [smem:[#allocation0]]
  $region102: #{advanced_cnn_forward.1} parent=0
    _
  %s15 = ssub.s32 1, %s13
  %s16 = scalar_select 0, %s15, %s13
  $region1: #{advanced_cnn_forward.1} parent=0
    #allocation2 [shape = 'u8[1572864]{0}', space=vmem, size = 0x180000, scoped, tag = 'input window, operand 1, single buffered']
    #allocation3 [shape = 's32[1]{0}', space=sflag, size = 0x4, scoped, tag = 'scoped memory for advanced_cnn_forward.1']
    #allocation4 [shape = 's32[1]{0}', space=sflag, size = 0x4, scoped, tag = 'scoped memory for advanced_cnn_forward.1']
    #allocation5 [shape = 'u8[4096]{0}', space=vmem, size = 0x1000, scoped, tag = 'input window, operand 2, single buffered']
    #allocation6 [shape = 's32[1]{0}', space=sflag, size = 0x4, scoped, tag = 'scoped memory for advanced_cnn_forward.1']
    #allocation7 [shape = 'u8[1048576]{0}', space=vmem, size = 0x100000, scoped, tag = 'input window, operand 3, single buffered']
    #allocation8 [shape = 'u8[2048]{0}', space=vmem, size = 0x800, scoped, tag = 'input window, operand 4, single buffered']
    #allocation9 [shape = 's32[1]{0}', space=sflag, size = 0x4, scoped, tag = 'scoped memory for advanced_cnn_forward.1']
    #allocation10 [shape = 'u8[1572864]{0}', space=vmem, size = 0x180000, scoped, tag = 'input window, operand 5, single buffered']
    #allocation11 [shape = 'u8[6144]{0}', space=vmem, size = 0x1800, scoped, tag = 'input window, operand 6, single buffered']
    #allocation12 [shape = 's32[1]{0}', space=sflag, size = 0x4, scoped, tag = 'scoped memory for advanced_cnn_forward.1']
    #allocation13 [shape = 'u8[2359296]{0}', space=vmem, size = 0x240000, scoped, tag = 'input window, operand 7, single buffered']
    #allocation14 [shape = 'u8[3072]{0}', space=vmem, size = 0xc00, scoped, tag = 'input window, operand 8, single buffered']
    #allocation15 [shape = 's32[1]{0}', space=sflag, size = 0x4, scoped, tag = 'scoped memory for advanced_cnn_forward.1']
    #allocation16 [shape = 'u8[131072]{0}', space=vmem, size = 0x20000, scoped, tag = 'input window, operand 9, single buffered']
    #allocation17 [shape = 'u8[65536]{0}', space=vmem, size = 0x10000, scoped, tag = 'input window, operand 10, single buffered']
    #allocation18 [shape = 's32[1]{0}', space=sflag, size = 0x4, scoped, tag = 'scoped memory for advanced_cnn_forward.1']
    #allocation19 [shape = 'u8[512]{0}', space=vmem, size = 0x400, scoped, tag = 'input window, operand 11, single buffered']
    #allocation20 [shape = 'u8[1024]{0}', space=vmem, size = 0x400, scoped, tag = 'output window, operand 0, single buffered']
    %17 = vsyncpa [#allocation3], 0
    %18 = vsyncpa [#allocation6], 0
    %19 = vsyncpa [#allocation9], 0
    %20 = vsyncpa [#allocation12], 0
    %21 = vsyncpa [#allocation15], 0
    %22 = vsyncpa [#allocation18], 0
    %23 = vsyncpa [#allocation4], 0
    // Predicated region
    $region2: #{advanced_cnn_forward.1} parent=1 // pred_check
      _
    $region3: #{advanced_cnn_forward.1} parent=1 // pred_check_branch
      %25 = sbr.rel (0) target = $region5
    $region4: #{advanced_cnn_forward.1} parent=1 // pred_region
      _
    $region5: #{advanced_cnn_forward.1} parent=1 // pred_fallthru
      _
    // Predicated region
    $region6: #{advanced_cnn_forward.1} parent=1 // pred_check
      _
    $region7: #{advanced_cnn_forward.1} parent=1 // pred_check_branch
      %27 = sbr.rel (0) target = $region9
    $region8: #{advanced_cnn_forward.1} parent=1 // pred_region
      %29 = vsyncadd [#allocation3], 0
      %s30 = sshll.u32 %s1, 4
      %s31 = int_to_ptr.hbm [resolvable:$true] %s30
      %s32 = sshll.u32 [#allocation2], 4
      %s33 = int_to_ptr.vmem [resolvable:$true] %s32
      %38 = dma.hbm_to_vmem [thread:$0]  %s31, 49152, %s33, [#allocation3], 512, 512, 32
    $region9: #{advanced_cnn_forward.1} parent=1 // pred_fallthru
      _
    // Predicated region
    $region10: #{advanced_cnn_forward.1} parent=1 // pred_check
      _
    $region11: #{advanced_cnn_forward.1} parent=1 // pred_check_branch
      %40 = sbr.rel (0) target = $region13
    $region12: #{advanced_cnn_forward.1} parent=1 // pred_region
      %42 = vsyncadd [#allocation6], 0
      %s44 = sshll.u32 %s2, 4
      %s45 = int_to_ptr.hbm [resolvable:$true] %s44
      %s46 = sshll.u32 [#allocation5], 4
      %s47 = int_to_ptr.vmem [resolvable:$true] %s46
      %49 = dma.hbm_to_vmem [thread:$0]  %s45, 128, %s47, [#allocation6]
    $region13: #{advanced_cnn_forward.1} parent=1 // pred_fallthru
      _
    // Predicated region
    $region14: #{advanced_cnn_forward.1} parent=1 // pred_check
      _
    $region15: #{advanced_cnn_forward.1} parent=1 // pred_check_branch
      %51 = sbr.rel (0) target = $region17
    $region16: #{advanced_cnn_forward.1} parent=1 // pred_region
      %53 = vsyncadd [#allocation6], 0
      %s54 = sshll.u32 %s3, 4
      %s55 = int_to_ptr.hbm [resolvable:$true] %s54
      %s56 = sshll.u32 [#allocation7], 4
      %s57 = int_to_ptr.vmem [resolvable:$true] %s56
      %62 = dma.hbm_to_vmem [thread:$0]  %s55, 32768, %s57, [#allocation6], 256, 256, 16
    $region17: #{advanced_cnn_forward.1} parent=1 // pred_fallthru
      _
    // Predicated region
    $region18: #{advanced_cnn_forward.1} parent=1 // pred_check
      _
    $region19: #{advanced_cnn_forward.1} parent=1 // pred_check_branch
      %64 = sbr.rel (0) target = $region21
    $region20: #{advanced_cnn_forward.1} parent=1 // pred_region
      %66 = vsyncadd [#allocation9], 0
      %s68 = sshll.u32 %s4, 4
      %s69 = int_to_ptr.hbm [resolvable:$true] %s68
      %s70 = sshll.u32 [#allocation8], 4
      %s71 = int_to_ptr.vmem [resolvable:$true] %s70
      %73 = dma.hbm_to_vmem [thread:$0]  %s69, 64, %s71, [#allocation9]
    $region21: #{advanced_cnn_forward.1} parent=1 // pred_fallthru
      _
    // Predicated region
    $region22: #{advanced_cnn_forward.1} parent=1 // pred_check
      _
    $region23: #{advanced_cnn_forward.1} parent=1 // pred_check_branch
      %75 = sbr.rel (0) target = $region25
    $region24: #{advanced_cnn_forward.1} parent=1 // pred_region
      %77 = vsyncadd [#allocation9], 0
      %s78 = sshll.u32 %s5, 4
      %s79 = int_to_ptr.hbm [resolvable:$true] %s78
      %s80 = sshll.u32 [#allocation10], 4
      %s81 = int_to_ptr.vmem [resolvable:$true] %s80
      %86 = dma.hbm_to_vmem [thread:$0]  %s79, 49152, %s81, [#allocation9], 768, 768, 48
    $region25: #{advanced_cnn_forward.1} parent=1 // pred_fallthru
      _
    // Predicated region
    $region26: #{advanced_cnn_forward.1} parent=1 // pred_check
      _
    $region27: #{advanced_cnn_forward.1} parent=1 // pred_check_branch
      %88 = sbr.rel (0) target = $region29
    $region28: #{advanced_cnn_forward.1} parent=1 // pred_region
      %90 = vsyncadd [#allocation12], 0
      %s92 = sshll.u32 %s6, 4
      %s93 = int_to_ptr.hbm [resolvable:$true] %s92
      %s94 = sshll.u32 [#allocation11], 4
      %s95 = int_to_ptr.vmem [resolvable:$true] %s94
      %97 = dma.hbm_to_vmem [thread:$0]  %s93, 192, %s95, [#allocation12]
    $region29: #{advanced_cnn_forward.1} parent=1 // pred_fallthru
      _
    // Predicated region
    $region30: #{advanced_cnn_forward.1} parent=1 // pred_check
      _
    $region31: #{advanced_cnn_forward.1} parent=1 // pred_check_branch
      %99 = sbr.rel (0) target = $region33
    $region32: #{advanced_cnn_forward.1} parent=1 // pred_region
      %101 = vsyncadd [#allocation12], 0
      %s102 = sshll.u32 %s7, 4
      %s103 = int_to_ptr.hbm [resolvable:$true] %s102
      %s104 = sshll.u32 [#allocation13], 4
      %s105 = int_to_ptr.vmem [resolvable:$true] %s104
      %110 = dma.hbm_to_vmem [thread:$0]  %s103, 73728, %s105, [#allocation12], 384, 384, 24
    $region33: #{advanced_cnn_forward.1} parent=1 // pred_fallthru
      _
    // Predicated region
    $region34: #{advanced_cnn_forward.1} parent=1 // pred_check
      _
    $region35: #{advanced_cnn_forward.1} parent=1 // pred_check_branch
      %112 = sbr.rel (0) target = $region37
    $region36: #{advanced_cnn_forward.1} parent=1 // pred_region
      %114 = vsyncadd [#allocation15], 0
      %s116 = sshll.u32 %s8, 4
      %s117 = int_to_ptr.hbm [resolvable:$true] %s116
      %s118 = sshll.u32 [#allocation14], 4
      %s119 = int_to_ptr.vmem [resolvable:$true] %s118
      %121 = dma.hbm_to_vmem [thread:$0]  %s117, 96, %s119, [#allocation15]
    $region37: #{advanced_cnn_forward.1} parent=1 // pred_fallthru
      _
    // Predicated region
    $region38: #{advanced_cnn_forward.1} parent=1 // pred_check
      _
    $region39: #{advanced_cnn_forward.1} parent=1 // pred_check_branch
      %123 = sbr.rel (0) target = $region41
    $region40: #{advanced_cnn_forward.1} parent=1 // pred_region
      %125 = vsyncadd [#allocation15], 0
      %s126 = sshll.u32 %s9, 4
      %s127 = int_to_ptr.hbm [resolvable:$true] %s126
      %s128 = sshll.u32 [#allocation16], 4
      %s129 = int_to_ptr.vmem [resolvable:$true] %s128
      %134 = dma.hbm_to_vmem [thread:$0]  %s127, 4096, %s129, [#allocation15], 64, 64, 4
    $region41: #{advanced_cnn_forward.1} parent=1 // pred_fallthru
      _
    // Predicated region
    $region42: #{advanced_cnn_forward.1} parent=1 // pred_check
      _
    $region43: #{advanced_cnn_forward.1} parent=1 // pred_check_branch
      %136 = sbr.rel (0) target = $region45
    $region44: #{advanced_cnn_forward.1} parent=1 // pred_region
      %138 = vsyncadd [#allocation18], 0
      %s139 = sshll.u32 %s10, 4
      %s140 = int_to_ptr.hbm [resolvable:$true] %s139
      %s141 = sshll.u32 [#allocation17], 4
      %s142 = int_to_ptr.vmem [resolvable:$true] %s141
      %147 = dma.hbm_to_vmem [thread:$0]  %s140, 2048, %s142, [#allocation18], 64, 64, 4
    $region45: #{advanced_cnn_forward.1} parent=1 // pred_fallthru
      _
    // Predicated region
    $region46: #{advanced_cnn_forward.1} parent=1 // pred_check
      _
    $region47: #{advanced_cnn_forward.1} parent=1 // pred_check_branch
      %149 = sbr.rel (0) target = $region49
    $region48: #{advanced_cnn_forward.1} parent=1 // pred_region
      %151 = vsyncadd [#allocation18], 0
      %s153 = sshll.u32 %s11, 4
      %s154 = int_to_ptr.hbm [resolvable:$true] %s153
      %s155 = sshll.u32 [#allocation19], 4
      %s156 = int_to_ptr.vmem [resolvable:$true] %s155
      %158 = dma.hbm_to_vmem [thread:$0]  %s154, 16, %s156, [#allocation18]
    $region49: #{advanced_cnn_forward.1} parent=1 // pred_fallthru
      _
    // Predicated region
    $region50: #{advanced_cnn_forward.1} parent=1 // pred_check
      _
    $region51: #{advanced_cnn_forward.1} parent=1 // pred_check_branch
      %160 = sbr.rel (0) target = $region53
    $region52: #{advanced_cnn_forward.1} parent=1 // pred_region
      %162 = dma.done [#allocation3], 49152
    $region53: #{advanced_cnn_forward.1} parent=1 // pred_fallthru
      _
    // Predicated region
    $region54: #{advanced_cnn_forward.1} parent=1 // pred_check
      _
    $region55: #{advanced_cnn_forward.1} parent=1 // pred_check_branch
      %164 = sbr.rel (0) target = $region57
    $region56: #{advanced_cnn_forward.1} parent=1 // pred_region
      %166 = dma.done [#allocation6], 128
    $region57: #{advanced_cnn_forward.1} parent=1 // pred_fallthru
      _
    // Predicated region
    $region58: #{advanced_cnn_forward.1} parent=1 // pred_check
      _
    $region59: #{advanced_cnn_forward.1} parent=1 // pred_check_branch
      %168 = sbr.rel (0) target = $region61
    $region60: #{advanced_cnn_forward.1} parent=1 // pred_region
      %170 = dma.done [#allocation6], 32768
    $region61: #{advanced_cnn_forward.1} parent=1 // pred_fallthru
      _
    // Predicated region
    $region62: #{advanced_cnn_forward.1} parent=1 // pred_check
      _
    $region63: #{advanced_cnn_forward.1} parent=1 // pred_check_branch
      %172 = sbr.rel (0) target = $region65
    $region64: #{advanced_cnn_forward.1} parent=1 // pred_region
      %174 = dma.done [#allocation9], 64
    $region65: #{advanced_cnn_forward.1} parent=1 // pred_fallthru
      _
    // Predicated region
    $region66: #{advanced_cnn_forward.1} parent=1 // pred_check
      _
    $region67: #{advanced_cnn_forward.1} parent=1 // pred_check_branch
      %176 = sbr.rel (0) target = $region69
    $region68: #{advanced_cnn_forward.1} parent=1 // pred_region
      %178 = dma.done [#allocation9], 49152
    $region69: #{advanced_cnn_forward.1} parent=1 // pred_fallthru
      _
    // Predicated region
    $region70: #{advanced_cnn_forward.1} parent=1 // pred_check
      _
    $region71: #{advanced_cnn_forward.1} parent=1 // pred_check_branch
      %180 = sbr.rel (0) target = $region73
    $region72: #{advanced_cnn_forward.1} parent=1 // pred_region
      %182 = dma.done [#allocation12], 192
    $region73: #{advanced_cnn_forward.1} parent=1 // pred_fallthru
      _
    // Predicated region
    $region74: #{advanced_cnn_forward.1} parent=1 // pred_check
      _
    $region75: #{advanced_cnn_forward.1} parent=1 // pred_check_branch
      %184 = sbr.rel (0) target = $region77
    $region76: #{advanced_cnn_forward.1} parent=1 // pred_region
      %186 = dma.done [#allocation12], 73728
    $region77: #{advanced_cnn_forward.1} parent=1 // pred_fallthru
      _
    // Predicated region
    $region78: #{advanced_cnn_forward.1} parent=1 // pred_check
      _
    $region79: #{advanced_cnn_forward.1} parent=1 // pred_check_branch
      %188 = sbr.rel (0) target = $region81
    $region80: #{advanced_cnn_forward.1} parent=1 // pred_region
      %190 = dma.done [#allocation15], 96
    $region81: #{advanced_cnn_forward.1} parent=1 // pred_fallthru
      _
    // Predicated region
    $region82: #{advanced_cnn_forward.1} parent=1 // pred_check
      _
    $region83: #{advanced_cnn_forward.1} parent=1 // pred_check_branch
      %192 = sbr.rel (0) target = $region85
    $region84: #{advanced_cnn_forward.1} parent=1 // pred_region
      %194 = dma.done [#allocation15], 4096
    $region85: #{advanced_cnn_forward.1} parent=1 // pred_fallthru
      _
    // Predicated region
    $region86: #{advanced_cnn_forward.1} parent=1 // pred_check
      _
    $region87: #{advanced_cnn_forward.1} parent=1 // pred_check_branch
      %196 = sbr.rel (0) target = $region89
    $region88: #{advanced_cnn_forward.1} parent=1 // pred_region
      %198 = dma.done [#allocation18], 2048
    $region89: #{advanced_cnn_forward.1} parent=1 // pred_fallthru
      _
    // Predicated region
    $region90: #{advanced_cnn_forward.1} parent=1 // pred_check
      _
    $region91: #{advanced_cnn_forward.1} parent=1 // pred_check_branch
      %200 = sbr.rel (0) target = $region93
    $region92: #{advanced_cnn_forward.1} parent=1 // pred_region
      %202 = dma.done [#allocation18], 16
    $region93: #{advanced_cnn_forward.1} parent=1 // pred_fallthru
      _
    %v203 = vld [vmem:[%s0] sm:$0xff]
    %v204 = vld [vmem:[%s0 + $0x8] sm:$0xf]
    %207 = vst [vmem:[#allocation1] ss:$4 sm:$0xff] %v203
    %s208 = scalar_lea.vmem [#allocation1], 32
    %209 = vst [vmem:[%s208] ss:$4 sm:$0xff] %v204
    %v210 = vld.sshfl [vmem:[#allocation1] sm:$0xff pattern:$0x73625140]
    %v211 = vld.sshfl [vmem:[#allocation1 + $0x8] sm:$0xff pattern:$0x73625140]
    %v212 = vld.sshfl [vmem:[#allocation1 + $0x10] sm:$0xff pattern:$0x73625140]
    %v213 = vld.sshfl [vmem:[#allocation1 + $0x18] sm:$0xff pattern:$0x73625140]
    %v214 = vld.sshfl [vmem:[#allocation1 + $0x20] sm:$0xff pattern:$0x73625140]
    %v215 = vld.sshfl [vmem:[#allocation1 + $0x28] sm:$0xff pattern:$0x73625140]
    %v222 = vpack.c.bf16 %v210, %v210
    %v223 = vpack.c.bf16 %v211, %v211
    %v224 = vpack.c.bf16 %v212, %v212
    %v225 = vpack.c.bf16 %v213, %v213
    %v226 = vpack.c.bf16 %v214, %v214
    %v227 = vpack.c.bf16 %v215, %v215
    %v228 = vld [vmem:[#allocation2] sm:$0xff]
    %v229 = vld [vmem:[#allocation2 + $0x8] sm:$0xff]
    %v230 = vld [vmem:[#allocation2 + $0x10] sm:$0xff]
    %v231 = vld [vmem:[#allocation2 + $0x18] sm:$0xff]
    %v232 = vld [vmem:[#allocation2 + $0x20] sm:$0xff]
    %v233 = vld [vmem:[#allocation2 + $0x28] sm:$0xff]
    %v234 = vld [vmem:[#allocation2 + $0x30] sm:$0xff]
    %v235 = vld [vmem:[#allocation2 + $0x38] sm:$0xff]
    %v236 = vld [vmem:[#allocation2 + $0x40] sm:$0xff]
    %v237 = vld [vmem:[#allocation2 + $0x48] sm:$0xff]
    %v238 = vld [vmem:[#allocation2 + $0x50] sm:$0xff]
    %v239 = vld [vmem:[#allocation2 + $0x58] sm:$0xff]
    %v240 = vld [vmem:[#allocation2 + $0x60] sm:$0xff]
    %v241 = vld [vmem:[#allocation2 + $0x68] sm:$0xff]
    %v242 = vld [vmem:[#allocation2 + $0x70] sm:$0xff]
    %v243 = vld [vmem:[#allocation2 + $0x78] sm:$0xff]
    %v244 = vld [vmem:[#allocation2 + $0x80] sm:$0xff]
    %v245 = vld [vmem:[#allocation2 + $0x88] sm:$0xff]
    %v246 = vld [vmem:[#allocation2 + $0x90] sm:$0xff]
    %v247 = vld [vmem:[#allocation2 + $0x98] sm:$0xff]
    %v248 = vld [vmem:[#allocation2 + $0xa0] sm:$0xff]
    %v249 = vld [vmem:[#allocation2 + $0xa8] sm:$0xff]
    %v250 = vld [vmem:[#allocation2 + $0xb0] sm:$0xff]
    %v251 = vld [vmem:[#allocation2 + $0xb8] sm:$0xff]
    %v252 = vld [vmem:[#allocation2 + $0xc0] sm:$0xff]
    %v253 = vld [vmem:[#allocation2 + $0xc8] sm:$0xff]
    %v254 = vld [vmem:[#allocation2 + $0xd0] sm:$0xff]
    %v255 = vld [vmem:[#allocation2 + $0xd8] sm:$0xff]
    %v256 = vld [vmem:[#allocation2 + $0xe0] sm:$0xff]
    %v257 = vld [vmem:[#allocation2 + $0xe8] sm:$0xff]
    %v258 = vld [vmem:[#allocation2 + $0xf0] sm:$0xff]
    %v259 = vld [vmem:[#allocation2 + $0xf8] sm:$0xff]
    %v260 = vld [vmem:[#allocation2 + $0x100] sm:$0xff]
    %v261 = vld [vmem:[#allocation2 + $0x108] sm:$0xff]
    %v262 = vld [vmem:[#allocation2 + $0x110] sm:$0xff]
    %v263 = vld [vmem:[#allocation2 + $0x118] sm:$0xff]
    %v264 = vld [vmem:[#allocation2 + $0x120] sm:$0xff]
    %v265 = vld [vmem:[#allocation2 + $0x128] sm:$0xff]
    %v266 = vld [vmem:[#allocation2 + $0x130] sm:$0xff]
    %v267 = vld [vmem:[#allocation2 + $0x138] sm:$0xff]
    %v268 = vld [vmem:[#allocation2 + $0x140] sm:$0xff]
    %v269 = vld [vmem:[#allocation2 + $0x148] sm:$0xff]
    %v270 = vld [vmem:[#allocation2 + $0x150] sm:$0xff]
    %v271 = vld [vmem:[#allocation2 + $0x158] sm:$0xff]
    %v272 = vld [vmem:[#allocation2 + $0x160] sm:$0xff]
    %v273 = vld [vmem:[#allocation2 + $0x168] sm:$0xff]
    %v274 = vld [vmem:[#allocation2 + $0x170] sm:$0xff]
    %v275 = vld [vmem:[#allocation2 + $0x178] sm:$0xff]
    %v276 = vld [vmem:[#allocation2 + $0x180] sm:$0xff]
    %v277 = vld [vmem:[#allocation2 + $0x188] sm:$0xff]
    %v278 = vld [vmem:[#allocation2 + $0x190] sm:$0xff]
    %v279 = vld [vmem:[#allocation2 + $0x198] sm:$0xff]
    %v280 = vld [vmem:[#allocation2 + $0x1a0] sm:$0xff]
    %v281 = vld [vmem:[#allocation2 + $0x1a8] sm:$0xff]
    %v282 = vld [vmem:[#allocation2 + $0x1b0] sm:$0xff]
    %v283 = vld [vmem:[#allocation2 + $0x1b8] sm:$0xff]
    %v284 = vld [vmem:[#allocation2 + $0x1c0] sm:$0xff]
    %v285 = vld [vmem:[#allocation2 + $0x1c8] sm:$0xff]
    %v286 = vld [vmem:[#allocation2 + $0x1d0] sm:$0xff]
    %v287 = vld [vmem:[#allocation2 + $0x1d8] sm:$0xff]
    %v288 = vld [vmem:[#allocation2 + $0x1e0] sm:$0xff]
    %v289 = vld [vmem:[#allocation2 + $0x1e8] sm:$0xff]
    %v290 = vld [vmem:[#allocation2 + $0x1f0] sm:$0xff]
    %v291 = vld [vmem:[#allocation2 + $0x1f8] sm:$0xff]
    %v292 = vld [vmem:[#allocation2 + $0x200] sm:$0xff]
    %v293 = vld [vmem:[#allocation2 + $0x208] sm:$0xff]
    %v294 = vld [vmem:[#allocation2 + $0x210] sm:$0xff]
    %v295 = vld [vmem:[#allocation2 + $0x218] sm:$0xff]
    %v296 = vld [vmem:[#allocation2 + $0x220] sm:$0xff]
    %v297 = vld [vmem:[#allocation2 + $0x228] sm:$0xff]
    %v298 = vld [vmem:[#allocation2 + $0x230] sm:$0xff]
    %v299 = vld [vmem:[#allocation2 + $0x238] sm:$0xff]
    %v300 = vld [vmem:[#allocation2 + $0x240] sm:$0xff]
    %v301 = vld [vmem:[#allocation2 + $0x248] sm:$0xff]
    %v302 = vld [vmem:[#allocation2 + $0x250] sm:$0xff]
    %v303 = vld [vmem:[#allocation2 + $0x258] sm:$0xff]
    %v304 = vld [vmem:[#allocation2 + $0x260] sm:$0xff]
    %v305 = vld [vmem:[#allocation2 + $0x268] sm:$0xff]
    %v306 = vld [vmem:[#allocation2 + $0x270] sm:$0xff]
    %v307 = vld [vmem:[#allocation2 + $0x278] sm:$0xff]
    %v308 = vld [vmem:[#allocation2 + $0x280] sm:$0xff]
    %v309 = vld [vmem:[#allocation2 + $0x288] sm:$0xff]
    %v310 = vld [vmem:[#allocation2 + $0x290] sm:$0xff]
    %v311 = vld [vmem:[#allocation2 + $0x298] sm:$0xff]
    %v312 = vld [vmem:[#allocation2 + $0x2a0] sm:$0xff]
    %v313 = vld [vmem:[#allocation2 + $0x2a8] sm:$0xff]
    %v314 = vld [vmem:[#allocation2 + $0x2b0] sm:$0xff]
    %v315 = vld [vmem:[#allocation2 + $0x2b8] sm:$0xff]
    %v316 = vld [vmem:[#allocation2 + $0x2c0] sm:$0xff]
    %v317 = vld [vmem:[#allocation2 + $0x2c8] sm:$0xff]
    %v318 = vld [vmem:[#allocation2 + $0x2d0] sm:$0xff]
    %v319 = vld [vmem:[#allocation2 + $0x2d8] sm:$0xff]
    %v320 = vld [vmem:[#allocation2 + $0x2e0] sm:$0xff]
    %v321 = vld [vmem:[#allocation2 + $0x2e8] sm:$0xff]
    %v322 = vld [vmem:[#allocation2 + $0x2f0] sm:$0xff]
    %v323 = vld [vmem:[#allocation2 + $0x2f8] sm:$0xff]
    %v324 = vld [vmem:[#allocation2 + $0x300] sm:$0xff]
    %v325 = vld [vmem:[#allocation2 + $0x308] sm:$0xff]
    %v326 = vld [vmem:[#allocation2 + $0x310] sm:$0xff]
    %v327 = vld [vmem:[#allocation2 + $0x318] sm:$0xff]
    %v328 = vld [vmem:[#allocation2 + $0x320] sm:$0xff]
    %v329 = vld [vmem:[#allocation2 + $0x328] sm:$0xff]
    %v330 = vld [vmem:[#allocation2 + $0x330] sm:$0xff]
    %v331 = vld [vmem:[#allocation2 + $0x338] sm:$0xff]
    %v332 = vld [vmem:[#allocation2 + $0x340] sm:$0xff]
    %v333 = vld [vmem:[#allocation2 + $0x348] sm:$0xff]
    %v334 = vld [vmem:[#allocation2 + $0x350] sm:$0xff]
    %v335 = vld [vmem:[#allocation2 + $0x358] sm:$0xff]
    %v336 = vld [vmem:[#allocation2 + $0x360] sm:$0xff]
    %v337 = vld [vmem:[#allocation2 + $0x368] sm:$0xff]
    %v338 = vld [vmem:[#allocation2 + $0x370] sm:$0xff]
    %v339 = vld [vmem:[#allocation2 + $0x378] sm:$0xff]
    %v340 = vld [vmem:[#allocation2 + $0x380] sm:$0xff]
    %v341 = vld [vmem:[#allocation2 + $0x388] sm:$0xff]
    %v342 = vld [vmem:[#allocation2 + $0x390] sm:$0xff]
    %v343 = vld [vmem:[#allocation2 + $0x398] sm:$0xff]
    %v344 = vld [vmem:[#allocation2 + $0x3a0] sm:$0xff]
    %v345 = vld [vmem:[#allocation2 + $0x3a8] sm:$0xff]
    %v346 = vld [vmem:[#allocation2 + $0x3b0] sm:$0xff]
    %v347 = vld [vmem:[#allocation2 + $0x3b8] sm:$0xff]
    %v348 = vld [vmem:[#allocation2 + $0x3c0] sm:$0xff]
    %v349 = vld [vmem:[#allocation2 + $0x3c8] sm:$0xff]
    %v350 = vld [vmem:[#allocation2 + $0x3d0] sm:$0xff]
    %v351 = vld [vmem:[#allocation2 + $0x3d8] sm:$0xff]
    %v352 = vld [vmem:[#allocation2 + $0x3e0] sm:$0xff]
    %v353 = vld [vmem:[#allocation2 + $0x3e8] sm:$0xff]
    %v354 = vld [vmem:[#allocation2 + $0x3f0] sm:$0xff]
    %v355 = vld [vmem:[#allocation2 + $0x3f8] sm:$0xff]
    %v356 = vld [vmem:[#allocation2 + $0x400] sm:$0xff]
    %v357 = vld [vmem:[#allocation2 + $0x408] sm:$0xff]
    %v358 = vld [vmem:[#allocation2 + $0x410] sm:$0xff]
    %v359 = vld [vmem:[#allocation2 + $0x418] sm:$0xff]
    %v360 = vld [vmem:[#allocation2 + $0x420] sm:$0xff]
    %v361 = vld [vmem:[#allocation2 + $0x428] sm:$0xff]
    %v362 = vld [vmem:[#allocation2 + $0x430] sm:$0xff]
    %v363 = vld [vmem:[#allocation2 + $0x438] sm:$0xff]
    %v364 = vld [vmem:[#allocation2 + $0x440] sm:$0xff]
    %v365 = vld [vmem:[#allocation2 + $0x448] sm:$0xff]
    %v366 = vld [vmem:[#allocation2 + $0x450] sm:$0xff]
    %v367 = vld [vmem:[#allocation2 + $0x458] sm:$0xff]
    %v368 = vld [vmem:[#allocation2 + $0x460] sm:$0xff]
    %v369 = vld [vmem:[#allocation2 + $0x468] sm:$0xff]
    %v370 = vld [vmem:[#allocation2 + $0x470] sm:$0xff]
    %v371 = vld [vmem:[#allocation2 + $0x478] sm:$0xff]
    %v372 = vld [vmem:[#allocation2 + $0x480] sm:$0xff]
    %v373 = vld [vmem:[#allocation2 + $0x488] sm:$0xff]
    %v374 = vld [vmem:[#allocation2 + $0x490] sm:$0xff]
    %v375 = vld [vmem:[#allocation2 + $0x498] sm:$0xff]
    %v376 = vld [vmem:[#allocation2 + $0x4a0] sm:$0xff]
    %v377 = vld [vmem:[#allocation2 + $0x4a8] sm:$0xff]
    %v378 = vld [vmem:[#allocation2 + $0x4b0] sm:$0xff]
    %v379 = vld [vmem:[#allocation2 + $0x4b8] sm:$0xff]
    %v380 = vld [vmem:[#allocation2 + $0x4c0] sm:$0xff]
    %v381 = vld [vmem:[#allocation2 + $0x4c8] sm:$0xff]
    %v382 = vld [vmem:[#allocation2 + $0x4d0] sm:$0xff]
    %v383 = vld [vmem:[#allocation2 + $0x4d8] sm:$0xff]
    %v384 = vld [vmem:[#allocation2 + $0x4e0] sm:$0xff]
    %v385 = vld [vmem:[#allocation2 + $0x4e8] sm:$0xff]
    %v386 = vld [vmem:[#allocation2 + $0x4f0] sm:$0xff]
    %v387 = vld [vmem:[#allocation2 + $0x4f8] sm:$0xff]
    %v388 = vld [vmem:[#allocation2 + $0x500] sm:$0xff]
    %v389 = vld [vmem:[#allocation2 + $0x508] sm:$0xff]
    %v390 = vld [vmem:[#allocation2 + $0x510] sm:$0xff]
    %v391 = vld [vmem:[#allocation2 + $0x518] sm:$0xff]
    %v392 = vld [vmem:[#allocation2 + $0x520] sm:$0xff]
    %v393 = vld [vmem:[#allocation2 + $0x528] sm:$0xff]
    %v394 = vld [vmem:[#allocation2 + $0x530] sm:$0xff]
    %v395 = vld [vmem:[#allocation2 + $0x538] sm:$0xff]
    %v396 = vld [vmem:[#allocation2 + $0x540] sm:$0xff]
    %v397 = vld [vmem:[#allocation2 + $0x548] sm:$0xff]
    %v398 = vld [vmem:[#allocation2 + $0x550] sm:$0xff]
    %v399 = vld [vmem:[#allocation2 + $0x558] sm:$0xff]
    %v400 = vld [vmem:[#allocation2 + $0x560] sm:$0xff]
    %v401 = vld [vmem:[#allocation2 + $0x568] sm:$0xff]
    %v402 = vld [vmem:[#allocation2 + $0x570] sm:$0xff]
    %v403 = vld [vmem:[#allocation2 + $0x578] sm:$0xff]
    %v404 = vld [vmem:[#allocation2 + $0x580] sm:$0xff]
    %v405 = vld [vmem:[#allocation2 + $0x588] sm:$0xff]
    %v406 = vld [vmem:[#allocation2 + $0x590] sm:$0xff]
    %v407 = vld [vmem:[#allocation2 + $0x598] sm:$0xff]
    %v408 = vld [vmem:[#allocation2 + $0x5a0] sm:$0xff]
    %v409 = vld [vmem:[#allocation2 + $0x5a8] sm:$0xff]
    %v410 = vld [vmem:[#allocation2 + $0x5b0] sm:$0xff]
    %v411 = vld [vmem:[#allocation2 + $0x5b8] sm:$0xff]
    %v412 = vld [vmem:[#allocation2 + $0x5c0] sm:$0xff]
    %v413 = vld [vmem:[#allocation2 + $0x5c8] sm:$0xff]
    %v414 = vld [vmem:[#allocation2 + $0x5d0] sm:$0xff]
    %v415 = vld [vmem:[#allocation2 + $0x5d8] sm:$0xff]
    %v416 = vld [vmem:[#allocation2 + $0x5e0] sm:$0xff]
    %v417 = vld [vmem:[#allocation2 + $0x5e8] sm:$0xff]
    %v418 = vld [vmem:[#allocation2 + $0x5f0] sm:$0xff]
    %v419 = vld [vmem:[#allocation2 + $0x5f8] sm:$0xff]
    %v420 = vld [vmem:[#allocation2 + $0x600] sm:$0xff]
    %v421 = vld [vmem:[#allocation2 + $0x608] sm:$0xff]
    %v422 = vld [vmem:[#allocation2 + $0x610] sm:$0xff]
    %v423 = vld [vmem:[#allocation2 + $0x618] sm:$0xff]
    %v424 = vld [vmem:[#allocation2 + $0x620] sm:$0xff]
    %v425 = vld [vmem:[#allocation2 + $0x628] sm:$0xff]
    %v426 = vld [vmem:[#allocation2 + $0x630] sm:$0xff]
    %v427 = vld [vmem:[#allocation2 + $0x638] sm:$0xff]
    %v428 = vld [vmem:[#allocation2 + $0x640] sm:$0xff]
    %v429 = vld [vmem:[#allocation2 + $0x648] sm:$0xff]
    %v430 = vld [vmem:[#allocation2 + $0x650] sm:$0xff]
    %v431 = vld [vmem:[#allocation2 + $0x658] sm:$0xff]
    %v432 = vld [vmem:[#allocation2 + $0x660] sm:$0xff]
    %v433 = vld [vmem:[#allocation2 + $0x668] sm:$0xff]
    %v434 = vld [vmem:[#allocation2 + $0x670] sm:$0xff]
    %v435 = vld [vmem:[#allocation2 + $0x678] sm:$0xff]
    %v436 = vld [vmem:[#allocation2 + $0x680] sm:$0xff]
    %v437 = vld [vmem:[#allocation2 + $0x688] sm:$0xff]
    %v438 = vld [vmem:[#allocation2 + $0x690] sm:$0xff]
    %v439 = vld [vmem:[#allocation2 + $0x698] sm:$0xff]
    %v440 = vld [vmem:[#allocation2 + $0x6a0] sm:$0xff]
    %v441 = vld [vmem:[#allocation2 + $0x6a8] sm:$0xff]
    %v442 = vld [vmem:[#allocation2 + $0x6b0] sm:$0xff]
    %v443 = vld [vmem:[#allocation2 + $0x6b8] sm:$0xff]
    %v444 = vld [vmem:[#allocation2 + $0x6c0] sm:$0xff]
    %v445 = vld [vmem:[#allocation2 + $0x6c8] sm:$0xff]
    %v446 = vld [vmem:[#allocation2 + $0x6d0] sm:$0xff]
    %v447 = vld [vmem:[#allocation2 + $0x6d8] sm:$0xff]
    %v448 = vld [vmem:[#allocation2 + $0x6e0] sm:$0xff]
    %v449 = vld [vmem:[#allocation2 + $0x6e8] sm:$0xff]
    %v450 = vld [vmem:[#allocation2 + $0x6f0] sm:$0xff]
    %v451 = vld [vmem:[#allocation2 + $0x6f8] sm:$0xff]
    %v452 = vld [vmem:[#allocation2 + $0x700] sm:$0xff]
    %v453 = vld [vmem:[#allocation2 + $0x708] sm:$0xff]
    %v454 = vld [vmem:[#allocation2 + $0x710] sm:$0xff]
    %v455 = vld [vmem:[#allocation2 + $0x718] sm:$0xff]
    %v456 = vld [vmem:[#allocation2 + $0x720] sm:$0xff]
    %v457 = vld [vmem:[#allocation2 + $0x728] sm:$0xff]
    %v458 = vld [vmem:[#allocation2 + $0x730] sm:$0xff]
    %v459 = vld [vmem:[#allocation2 + $0x738] sm:$0xff]
    %v460 = vld [vmem:[#allocation2 + $0x740] sm:$0xff]
    %v461 = vld [vmem:[#allocation2 + $0x748] sm:$0xff]
    %v462 = vld [vmem:[#allocation2 + $0x750] sm:$0xff]
    %v463 = vld [vmem:[#allocation2 + $0x758] sm:$0xff]
    %v464 = vld [vmem:[#allocation2 + $0x760] sm:$0xff]
    %v465 = vld [vmem:[#allocation2 + $0x768] sm:$0xff]
    %v466 = vld [vmem:[#allocation2 + $0x770] sm:$0xff]
    %v467 = vld [vmem:[#allocation2 + $0x778] sm:$0xff]
    %v468 = vld [vmem:[#allocation2 + $0x780] sm:$0xff]
    %v469 = vld [vmem:[#allocation2 + $0x788] sm:$0xff]
    %v470 = vld [vmem:[#allocation2 + $0x790] sm:$0xff]
    %v471 = vld [vmem:[#allocation2 + $0x798] sm:$0xff]
    %v472 = vld [vmem:[#allocation2 + $0x7a0] sm:$0xff]
    %v473 = vld [vmem:[#allocation2 + $0x7a8] sm:$0xff]
    %v474 = vld [vmem:[#allocation2 + $0x7b0] sm:$0xff]
    %v475 = vld [vmem:[#allocation2 + $0x7b8] sm:$0xff]
    %v476 = vld [vmem:[#allocation2 + $0x7c0] sm:$0xff]
    %v477 = vld [vmem:[#allocation2 + $0x7c8] sm:$0xff]
    %v478 = vld [vmem:[#allocation2 + $0x7d0] sm:$0xff]
    %v479 = vld [vmem:[#allocation2 + $0x7d8] sm:$0xff]
    %v480 = vld [vmem:[#allocation2 + $0x7e0] sm:$0xff]
    %v481 = vld [vmem:[#allocation2 + $0x7e8] sm:$0xff]
    %v482 = vld [vmem:[#allocation2 + $0x7f0] sm:$0xff]
    %v483 = vld [vmem:[#allocation2 + $0x7f8] sm:$0xff]
    %v484 = vld [vmem:[#allocation2 + $0x800] sm:$0xff]
    %v485 = vld [vmem:[#allocation2 + $0x808] sm:$0xff]
    %v486 = vld [vmem:[#allocation2 + $0x810] sm:$0xff]
    %v487 = vld [vmem:[#allocation2 + $0x818] sm:$0xff]
    %v488 = vld [vmem:[#allocation2 + $0x820] sm:$0xff]
    %v489 = vld [vmem:[#allocation2 + $0x828] sm:$0xff]
    %v490 = vld [vmem:[#allocation2 + $0x830] sm:$0xff]
    %v491 = vld [vmem:[#allocation2 + $0x838] sm:$0xff]
    %v492 = vld [vmem:[#allocation2 + $0x840] sm:$0xff]
    %v493 = vld [vmem:[#allocation2 + $0x848] sm:$0xff]
    %v494 = vld [vmem:[#allocation2 + $0x850] sm:$0xff]
    %v495 = vld [vmem:[#allocation2 + $0x858] sm:$0xff]
    %v496 = vld [vmem:[#allocation2 + $0x860] sm:$0xff]
    %v497 = vld [vmem:[#allocation2 + $0x868] sm:$0xff]
    %v498 = vld [vmem:[#allocation2 + $0x870] sm:$0xff]
    %v499 = vld [vmem:[#allocation2 + $0x878] sm:$0xff]
    %v500 = vld [vmem:[#allocation2 + $0x880] sm:$0xff]
    %v501 = vld [vmem:[#allocation2 + $0x888] sm:$0xff]
    %v502 = vld [vmem:[#allocation2 + $0x890] sm:$0xff]
    %v503 = vld [vmem:[#allocation2 + $0x898] sm:$0xff]
    %v504 = vld [vmem:[#allocation2 + $0x8a0] sm:$0xff]
    %v505 = vld [vmem:[#allocation2 + $0x8a8] sm:$0xff]
    %v506 = vld [vmem:[#allocation2 + $0x8b0] sm:$0xff]
    %v507 = vld [vmem:[#allocation2 + $0x8b8] sm:$0xff]
    %v508 = vld [vmem:[#allocation2 + $0x8c0] sm:$0xff]
    %v509 = vld [vmem:[#allocation2 + $0x8c8] sm:$0xff]
    %v510 = vld [vmem:[#allocation2 + $0x8d0] sm:$0xff]
    %v511 = vld [vmem:[#allocation2 + $0x8d8] sm:$0xff]
    %v512 = vld [vmem:[#allocation2 + $0x8e0] sm:$0xff]
    %v513 = vld [vmem:[#allocation2 + $0x8e8] sm:$0xff]
    %v514 = vld [vmem:[#allocation2 + $0x8f0] sm:$0xff]
    %v515 = vld [vmem:[#allocation2 + $0x8f8] sm:$0xff]
    %v516 = vld [vmem:[#allocation2 + $0x900] sm:$0xff]
    %v517 = vld [vmem:[#allocation2 + $0x908] sm:$0xff]
    %v518 = vld [vmem:[#allocation2 + $0x910] sm:$0xff]
    %v519 = vld [vmem:[#allocation2 + $0x918] sm:$0xff]
    %v520 = vld [vmem:[#allocation2 + $0x920] sm:$0xff]
    %v521 = vld [vmem:[#allocation2 + $0x928] sm:$0xff]
    %v522 = vld [vmem:[#allocation2 + $0x930] sm:$0xff]
    %v523 = vld [vmem:[#allocation2 + $0x938] sm:$0xff]
    %v524 = vld [vmem:[#allocation2 + $0x940] sm:$0xff]
    %v525 = vld [vmem:[#allocation2 + $0x948] sm:$0xff]
    %v526 = vld [vmem:[#allocation2 + $0x950] sm:$0xff]
    %v527 = vld [vmem:[#allocation2 + $0x958] sm:$0xff]
    %v528 = vld [vmem:[#allocation2 + $0x960] sm:$0xff]
    %v529 = vld [vmem:[#allocation2 + $0x968] sm:$0xff]
    %v530 = vld [vmem:[#allocation2 + $0x970] sm:$0xff]
    %v531 = vld [vmem:[#allocation2 + $0x978] sm:$0xff]
    %v532 = vld [vmem:[#allocation2 + $0x980] sm:$0xff]
    %v533 = vld [vmem:[#allocation2 + $0x988] sm:$0xff]
    %v534 = vld [vmem:[#allocation2 + $0x990] sm:$0xff]
    %v535 = vld [vmem:[#allocation2 + $0x998] sm:$0xff]
    %v536 = vld [vmem:[#allocation2 + $0x9a0] sm:$0xff]
    %v537 = vld [vmem:[#allocation2 + $0x9a8] sm:$0xff]
    %v538 = vld [vmem:[#allocation2 + $0x9b0] sm:$0xff]
    %v539 = vld [vmem:[#allocation2 + $0x9b8] sm:$0xff]
    %v540 = vld [vmem:[#allocation2 + $0x9c0] sm:$0xff]
    %v541 = vld [vmem:[#allocation2 + $0x9c8] sm:$0xff]
    %v542 = vld [vmem:[#allocation2 + $0x9d0] sm:$0xff]
    %v543 = vld [vmem:[#allocation2 + $0x9d8] sm:$0xff]
    %v544 = vld [vmem:[#allocation2 + $0x9e0] sm:$0xff]
    %v545 = vld [vmem:[#allocation2 + $0x9e8] sm:$0xff]
    %v546 = vld [vmem:[#allocation2 + $0x9f0] sm:$0xff]
    %v547 = vld [vmem:[#allocation2 + $0x9f8] sm:$0xff]
    %v548 = vld [vmem:[#allocation2 + $0xa00] sm:$0xff]
    %v549 = vld [vmem:[#allocation2 + $0xa08] sm:$0xff]
    %v550 = vld [vmem:[#allocation2 + $0xa10] sm:$0xff]
    %v551 = vld [vmem:[#allocation2 + $0xa18] sm:$0xff]
    %v552 = vld [vmem:[#allocation2 + $0xa20] sm:$0xff]
    %v553 = vld [vmem:[#allocation2 + $0xa28] sm:$0xff]
    %v554 = vld [vmem:[#allocation2 + $0xa30] sm:$0xff]
    %v555 = vld [vmem:[#allocation2 + $0xa38] sm:$0xff]
    %v556 = vld [vmem:[#allocation2 + $0xa40] sm:$0xff]
    %v557 = vld [vmem:[#allocation2 + $0xa48] sm:$0xff]
    %v558 = vld [vmem:[#allocation2 + $0xa50] sm:$0xff]
    %v559 = vld [vmem:[#allocation2 + $0xa58] sm:$0xff]
    %v560 = vld [vmem:[#allocation2 + $0xa60] sm:$0xff]
    %v561 = vld [vmem:[#allocation2 + $0xa68] sm:$0xff]
    %v562 = vld [vmem:[#allocation2 + $0xa70] sm:$0xff]
    %v563 = vld [vmem:[#allocation2 + $0xa78] sm:$0xff]
    %v564 = vld [vmem:[#allocation2 + $0xa80] sm:$0xff]
    %v565 = vld [vmem:[#allocation2 + $0xa88] sm:$0xff]
    %v566 = vld [vmem:[#allocation2 + $0xa90] sm:$0xff]
    %v567 = vld [vmem:[#allocation2 + $0xa98] sm:$0xff]
    %v568 = vld [vmem:[#allocation2 + $0xaa0] sm:$0xff]
    %v569 = vld [vmem:[#allocation2 + $0xaa8] sm:$0xff]
    %v570 = vld [vmem:[#allocation2 + $0xab0] sm:$0xff]
    %v571 = vld [vmem:[#allocation2 + $0xab8] sm:$0xff]
    %v572 = vld [vmem:[#allocation2 + $0xac0] sm:$0xff]
    %v573 = vld [vmem:[#allocation2 + $0xac8] sm:$0xff]
    %v574 = vld [vmem:[#allocation2 + $0xad0] sm:$0xff]
    %v575 = vld [vmem:[#allocation2 + $0xad8] sm:$0xff]
    %v576 = vld [vmem:[#allocation2 + $0xae0] sm:$0xff]
    %v577 = vld [vmem:[#allocation2 + $0xae8] sm:$0xff]
    %v578 = vld [vmem:[#allocation2 + $0xaf0] sm:$0xff]
    %v579 = vld [vmem:[#allocation2 + $0xaf8] sm:$0xff]
    %v580 = vld [vmem:[#allocation2 + $0xb00] sm:$0xff]
    %v581 = vld [vmem:[#allocation2 + $0xb08] sm:$0xff]
    %v582 = vld [vmem:[#allocation2 + $0xb10] sm:$0xff]
    %v583 = vld [vmem:[#allocation2 + $0xb18] sm:$0xff]
    %v584 = vld [vmem:[#allocation2 + $0xb20] sm:$0xff]
    %v585 = vld [vmem:[#allocation2 + $0xb28] sm:$0xff]
    %v586 = vld [vmem:[#allocation2 + $0xb30] sm:$0xff]
    %v587 = vld [vmem:[#allocation2 + $0xb38] sm:$0xff]
    %v588 = vld [vmem:[#allocation2 + $0xb40] sm:$0xff]
    %v589 = vld [vmem:[#allocation2 + $0xb48] sm:$0xff]
    %v590 = vld [vmem:[#allocation2 + $0xb50] sm:$0xff]
    %v591 = vld [vmem:[#allocation2 + $0xb58] sm:$0xff]
    %v592 = vld [vmem:[#allocation2 + $0xb60] sm:$0xff]
    %v593 = vld [vmem:[#allocation2 + $0xb68] sm:$0xff]
    %v594 = vld [vmem:[#allocation2 + $0xb70] sm:$0xff]
    %v595 = vld [vmem:[#allocation2 + $0xb78] sm:$0xff]
    %v596 = vld [vmem:[#allocation2 + $0xb80] sm:$0xff]
    %v597 = vld [vmem:[#allocation2 + $0xb88] sm:$0xff]
    %v598 = vld [vmem:[#allocation2 + $0xb90] sm:$0xff]
    %v599 = vld [vmem:[#allocation2 + $0xb98] sm:$0xff]
    %v600 = vld [vmem:[#allocation2 + $0xba0] sm:$0xff]
    %v601 = vld [vmem:[#allocation2 + $0xba8] sm:$0xff]
    %v602 = vld [vmem:[#allocation2 + $0xbb0] sm:$0xff]
    %v603 = vld [vmem:[#allocation2 + $0xbb8] sm:$0xff]
    %v604 = vld [vmem:[#allocation2 + $0xbc0] sm:$0xff]
    %v605 = vld [vmem:[#allocation2 + $0xbc8] sm:$0xff]
    %v606 = vld [vmem:[#allocation2 + $0xbd0] sm:$0xff]
    %v607 = vld [vmem:[#allocation2 + $0xbd8] sm:$0xff]
    %v608 = vld [vmem:[#allocation2 + $0xbe0] sm:$0xff]
    %v609 = vld [vmem:[#allocation2 + $0xbe8] sm:$0xff]
    %v610 = vld [vmem:[#allocation2 + $0xbf0] sm:$0xff]
    %v611 = vld [vmem:[#allocation2 + $0xbf8] sm:$0xff]
    %v612 = vld [vmem:[#allocation5] sm:$0xff]
    %v614 = vperm.slane %v612, 0
    %v615 = vperm.slane %v612, 1
    %v616 = vperm.slane %v612, 2
    %v617 = vperm.slane %v612, 3
    %v618 = vperm.slane %v612, 4
    %v619 = vperm.slane %v612, 5
    %v620 = vperm.slane %v612, 6
    %v621 = vperm.slane %v612, 7
    %v1014 = vunpack.c.l.b16 %v228
    %v1015 = vunpack.c.h.b16 %v228
    %v1016 = vunpack.c.l.b16 %v229
    %v1017 = vunpack.c.h.b16 %v229
    %v1018 = vunpack.c.l.b16 %v230
    %v1019 = vunpack.c.h.b16 %v230
    %v1020 = vunpack.c.l.b16 %v231
    %v1021 = vunpack.c.h.b16 %v231
    %v1022 = vunpack.c.l.b16 %v232
    %v1023 = vunpack.c.h.b16 %v232
    %v1024 = vunpack.c.l.b16 %v233
    %v1025 = vunpack.c.h.b16 %v233
    %v1026 = vunpack.c.l.b16 %v234
    %v1027 = vunpack.c.h.b16 %v234
    %v1028 = vunpack.c.l.b16 %v235
    %v1029 = vunpack.c.h.b16 %v235
    %v1030 = vunpack.c.l.b16 %v236
    %v1031 = vunpack.c.h.b16 %v236
    %v1032 = vunpack.c.l.b16 %v237
    %v1033 = vunpack.c.h.b16 %v237
    %v1034 = vunpack.c.l.b16 %v238
    %v1035 = vunpack.c.h.b16 %v238
    %v1036 = vunpack.c.l.b16 %v239
    %v1037 = vunpack.c.h.b16 %v239
    %v1038 = vunpack.c.l.b16 %v240
    %v1039 = vunpack.c.h.b16 %v240
    %v1040 = vunpack.c.l.b16 %v241
    %v1041 = vunpack.c.h.b16 %v241
    %v1042 = vunpack.c.l.b16 %v242
    %v1043 = vunpack.c.h.b16 %v242
    %v1044 = vunpack.c.l.b16 %v243
    %v1045 = vunpack.c.h.b16 %v243
    %v1046 = vunpack.c.l.b16 %v244
    %v1047 = vunpack.c.h.b16 %v244
    %v1048 = vunpack.c.l.b16 %v245
    %v1049 = vunpack.c.h.b16 %v245
    %v1050 = vunpack.c.l.b16 %v246
    %v1051 = vunpack.c.h.b16 %v246
    %v1052 = vunpack.c.l.b16 %v247
    %v1053 = vunpack.c.h.b16 %v247
    %v1054 = vunpack.c.l.b16 %v248
    %v1055 = vunpack.c.h.b16 %v248
    %v1056 = vunpack.c.l.b16 %v249
    %v1057 = vunpack.c.h.b16 %v249
    %v1058 = vunpack.c.l.b16 %v250
    %v1059 = vunpack.c.h.b16 %v250
    %v1060 = vunpack.c.l.b16 %v251
    %v1061 = vunpack.c.h.b16 %v251
    %v1062 = vunpack.c.l.b16 %v252
    %v1063 = vunpack.c.h.b16 %v252
    %v1064 = vunpack.c.l.b16 %v253
    %v1065 = vunpack.c.h.b16 %v253
    %v1066 = vunpack.c.l.b16 %v254
    %v1067 = vunpack.c.h.b16 %v254
    %v1068 = vunpack.c.l.b16 %v255
    %v1069 = vunpack.c.h.b16 %v255
    %v1070 = vunpack.c.l.b16 %v256
    %v1071 = vunpack.c.h.b16 %v256
    %v1072 = vunpack.c.l.b16 %v257
    %v1073 = vunpack.c.h.b16 %v257
    %v1074 = vunpack.c.l.b16 %v258
    %v1075 = vunpack.c.h.b16 %v258
    %v1076 = vunpack.c.l.b16 %v259
    %v1077 = vunpack.c.h.b16 %v259
    %v1078 = vunpack.c.l.b16 %v260
    %v1079 = vunpack.c.h.b16 %v260
    %v1080 = vunpack.c.l.b16 %v261
    %v1081 = vunpack.c.h.b16 %v261
    %v1082 = vunpack.c.l.b16 %v262
    %v1083 = vunpack.c.h.b16 %v262
    %v1084 = vunpack.c.l.b16 %v263
    %v1085 = vunpack.c.h.b16 %v263
    %v1086 = vunpack.c.l.b16 %v264
    %v1087 = vunpack.c.h.b16 %v264
    %v1088 = vunpack.c.l.b16 %v265
    %v1089 = vunpack.c.h.b16 %v265
    %v1090 = vunpack.c.l.b16 %v266
    %v1091 = vunpack.c.h.b16 %v266
    %v1092 = vunpack.c.l.b16 %v267
    %v1093 = vunpack.c.h.b16 %v267
    %v1094 = vunpack.c.l.b16 %v268
    %v1095 = vunpack.c.h.b16 %v268
    %v1096 = vunpack.c.l.b16 %v269
    %v1097 = vunpack.c.h.b16 %v269
    %v1098 = vunpack.c.l.b16 %v270
    %v1099 = vunpack.c.h.b16 %v270
    %v1100 = vunpack.c.l.b16 %v271
    %v1101 = vunpack.c.h.b16 %v271
    %v1102 = vunpack.c.l.b16 %v272
    %v1103 = vunpack.c.h.b16 %v272
    %v1104 = vunpack.c.l.b16 %v273
    %v1105 = vunpack.c.h.b16 %v273
    %v1106 = vunpack.c.l.b16 %v274
    %v1107 = vunpack.c.h.b16 %v274
    %v1108 = vunpack.c.l.b16 %v275
    %v1109 = vunpack.c.h.b16 %v275
    %v1110 = vunpack.c.l.b16 %v276
    %v1111 = vunpack.c.h.b16 %v276
    %v1112 = vunpack.c.l.b16 %v277
    %v1113 = vunpack.c.h.b16 %v277
    %v1114 = vunpack.c.l.b16 %v278
    %v1115 = vunpack.c.h.b16 %v278
    %v1116 = vunpack.c.l.b16 %v279
    %v1117 = vunpack.c.h.b16 %v279
    %v1118 = vunpack.c.l.b16 %v280
    %v1119 = vunpack.c.h.b16 %v280
    %v1120 = vunpack.c.l.b16 %v281
    %v1121 = vunpack.c.h.b16 %v281
    %v1122 = vunpack.c.l.b16 %v282
    %v1123 = vunpack.c.h.b16 %v282
    %v1124 = vunpack.c.l.b16 %v283
    %v1125 = vunpack.c.h.b16 %v283
    %v1126 = vunpack.c.l.b16 %v284
    %v1127 = vunpack.c.h.b16 %v284
    %v1128 = vunpack.c.l.b16 %v285
    %v1129 = vunpack.c.h.b16 %v285
    %v1130 = vunpack.c.l.b16 %v286
    %v1131 = vunpack.c.h.b16 %v286
    %v1132 = vunpack.c.l.b16 %v287
    %v1133 = vunpack.c.h.b16 %v287
    %v1134 = vunpack.c.l.b16 %v288
    %v1135 = vunpack.c.h.b16 %v288
    %v1136 = vunpack.c.l.b16 %v289
    %v1137 = vunpack.c.h.b16 %v289
    %v1138 = vunpack.c.l.b16 %v290
    %v1139 = vunpack.c.h.b16 %v290
    %v1140 = vunpack.c.l.b16 %v291
    %v1141 = vunpack.c.h.b16 %v291
    %v1142 = vunpack.c.l.b16 %v292
    %v1143 = vunpack.c.h.b16 %v292
    %v1144 = vunpack.c.l.b16 %v293
    %v1145 = vunpack.c.h.b16 %v293
    %v1146 = vunpack.c.l.b16 %v294
    %v1147 = vunpack.c.h.b16 %v294
    %v1148 = vunpack.c.l.b16 %v295
    %v1149 = vunpack.c.h.b16 %v295
    %v1150 = vunpack.c.l.b16 %v296
    %v1151 = vunpack.c.h.b16 %v296
    %v1152 = vunpack.c.l.b16 %v297
    %v1153 = vunpack.c.h.b16 %v297
    %v1154 = vunpack.c.l.b16 %v298
    %v1155 = vunpack.c.h.b16 %v298
    %v1156 = vunpack.c.l.b16 %v299
    %v1157 = vunpack.c.h.b16 %v299
    %v1158 = vunpack.c.l.b16 %v300
    %v1159 = vunpack.c.h.b16 %v300
    %v1160 = vunpack.c.l.b16 %v301
    %v1161 = vunpack.c.h.b16 %v301
    %v1162 = vunpack.c.l.b16 %v302
    %v1163 = vunpack.c.h.b16 %v302
    %v1164 = vunpack.c.l.b16 %v303
    %v1165 = vunpack.c.h.b16 %v303
    %v1166 = vunpack.c.l.b16 %v304
    %v1167 = vunpack.c.h.b16 %v304
    %v1168 = vunpack.c.l.b16 %v305
    %v1169 = vunpack.c.h.b16 %v305
    %v1170 = vunpack.c.l.b16 %v306
    %v1171 = vunpack.c.h.b16 %v306
    %v1172 = vunpack.c.l.b16 %v307
    %v1173 = vunpack.c.h.b16 %v307
    %v1174 = vunpack.c.l.b16 %v308
    %v1175 = vunpack.c.h.b16 %v308
    %v1176 = vunpack.c.l.b16 %v309
    %v1177 = vunpack.c.h.b16 %v309
    %v1178 = vunpack.c.l.b16 %v310
    %v1179 = vunpack.c.h.b16 %v310
    %v1180 = vunpack.c.l.b16 %v311
    %v1181 = vunpack.c.h.b16 %v311
    %v1182 = vunpack.c.l.b16 %v312
    %v1183 = vunpack.c.h.b16 %v312
    %v1184 = vunpack.c.l.b16 %v313
    %v1185 = vunpack.c.h.b16 %v313
    %v1186 = vunpack.c.l.b16 %v314
    %v1187 = vunpack.c.h.b16 %v314
    %v1188 = vunpack.c.l.b16 %v315
    %v1189 = vunpack.c.h.b16 %v315
    %v1190 = vunpack.c.l.b16 %v316
    %v1191 = vunpack.c.h.b16 %v316
    %v1192 = vunpack.c.l.b16 %v317
    %v1193 = vunpack.c.h.b16 %v317
    %v1194 = vunpack.c.l.b16 %v318
    %v1195 = vunpack.c.h.b16 %v318
    %v1196 = vunpack.c.l.b16 %v319
    %v1197 = vunpack.c.h.b16 %v319
    %v1198 = vunpack.c.l.b16 %v320
    %v1199 = vunpack.c.h.b16 %v320
    %v1200 = vunpack.c.l.b16 %v321
    %v1201 = vunpack.c.h.b16 %v321
    %v1202 = vunpack.c.l.b16 %v322
    %v1203 = vunpack.c.h.b16 %v322
    %v1204 = vunpack.c.l.b16 %v323
    %v1205 = vunpack.c.h.b16 %v323
    %v1206 = vunpack.c.l.b16 %v324
    %v1207 = vunpack.c.h.b16 %v324
    %v1208 = vunpack.c.l.b16 %v325
    %v1209 = vunpack.c.h.b16 %v325
    %v1210 = vunpack.c.l.b16 %v326
    %v1211 = vunpack.c.h.b16 %v326
    %v1212 = vunpack.c.l.b16 %v327
    %v1213 = vunpack.c.h.b16 %v327
    %v1214 = vunpack.c.l.b16 %v328
    %v1215 = vunpack.c.h.b16 %v328
    %v1216 = vunpack.c.l.b16 %v329
    %v1217 = vunpack.c.h.b16 %v329
    %v1218 = vunpack.c.l.b16 %v330
    %v1219 = vunpack.c.h.b16 %v330
    %v1220 = vunpack.c.l.b16 %v331
    %v1221 = vunpack.c.h.b16 %v331
    %v1222 = vunpack.c.l.b16 %v332
    %v1223 = vunpack.c.h.b16 %v332
    %v1224 = vunpack.c.l.b16 %v333
    %v1225 = vunpack.c.h.b16 %v333
    %v1226 = vunpack.c.l.b16 %v334
    %v1227 = vunpack.c.h.b16 %v334
    %v1228 = vunpack.c.l.b16 %v335
    %v1229 = vunpack.c.h.b16 %v335
    %v1230 = vunpack.c.l.b16 %v336
    %v1231 = vunpack.c.h.b16 %v336
    %v1232 = vunpack.c.l.b16 %v337
    %v1233 = vunpack.c.h.b16 %v337
    %v1234 = vunpack.c.l.b16 %v338
    %v1235 = vunpack.c.h.b16 %v338
    %v1236 = vunpack.c.l.b16 %v339
    %v1237 = vunpack.c.h.b16 %v339
    %v1238 = vunpack.c.l.b16 %v340
    %v1239 = vunpack.c.h.b16 %v340
    %v1240 = vunpack.c.l.b16 %v341
    %v1241 = vunpack.c.h.b16 %v341
    %v1242 = vunpack.c.l.b16 %v342
    %v1243 = vunpack.c.h.b16 %v342
    %v1244 = vunpack.c.l.b16 %v343
    %v1245 = vunpack.c.h.b16 %v343
    %v1246 = vunpack.c.l.b16 %v344
    %v1247 = vunpack.c.h.b16 %v344
    %v1248 = vunpack.c.l.b16 %v345
    %v1249 = vunpack.c.h.b16 %v345
    %v1250 = vunpack.c.l.b16 %v346
    %v1251 = vunpack.c.h.b16 %v346
    %v1252 = vunpack.c.l.b16 %v347
    %v1253 = vunpack.c.h.b16 %v347
    %v1254 = vunpack.c.l.b16 %v348
    %v1255 = vunpack.c.h.b16 %v348
    %v1256 = vunpack.c.l.b16 %v349
    %v1257 = vunpack.c.h.b16 %v349
    %v1258 = vunpack.c.l.b16 %v350
    %v1259 = vunpack.c.h.b16 %v350
    %v1260 = vunpack.c.l.b16 %v351
    %v1261 = vunpack.c.h.b16 %v351
    %v1262 = vunpack.c.l.b16 %v352
    %v1263 = vunpack.c.h.b16 %v352
    %v1264 = vunpack.c.l.b16 %v353
    %v1265 = vunpack.c.h.b16 %v353
    %v1266 = vunpack.c.l.b16 %v354
    %v1267 = vunpack.c.h.b16 %v354
    %v1268 = vunpack.c.l.b16 %v355
    %v1269 = vunpack.c.h.b16 %v355
    %v1270 = vunpack.c.l.b16 %v356
    %v1271 = vunpack.c.h.b16 %v356
    %v1272 = vunpack.c.l.b16 %v357
    %v1273 = vunpack.c.h.b16 %v357
    %v1274 = vunpack.c.l.b16 %v358
    %v1275 = vunpack.c.h.b16 %v358
    %v1276 = vunpack.c.l.b16 %v359
    %v1277 = vunpack.c.h.b16 %v359
    %v1278 = vunpack.c.l.b16 %v360
    %v1279 = vunpack.c.h.b16 %v360
    %v1280 = vunpack.c.l.b16 %v361
    %v1281 = vunpack.c.h.b16 %v361
    %v1282 = vunpack.c.l.b16 %v362
    %v1283 = vunpack.c.h.b16 %v362
    %v1284 = vunpack.c.l.b16 %v363
    %v1285 = vunpack.c.h.b16 %v363
    %v1286 = vunpack.c.l.b16 %v364
    %v1287 = vunpack.c.h.b16 %v364
    %v1288 = vunpack.c.l.b16 %v365
    %v1289 = vunpack.c.h.b16 %v365
    %v1290 = vunpack.c.l.b16 %v366
    %v1291 = vunpack.c.h.b16 %v366
    %v1292 = vunpack.c.l.b16 %v367
    %v1293 = vunpack.c.h.b16 %v367
    %v1294 = vunpack.c.l.b16 %v368
    %v1295 = vunpack.c.h.b16 %v368
    %v1296 = vunpack.c.l.b16 %v369
    %v1297 = vunpack.c.h.b16 %v369
    %v1298 = vunpack.c.l.b16 %v370
    %v1299 = vunpack.c.h.b16 %v370
    %v1300 = vunpack.c.l.b16 %v371
    %v1301 = vunpack.c.h.b16 %v371
    %v1302 = vunpack.c.l.b16 %v372
    %v1303 = vunpack.c.h.b16 %v372
    %v1304 = vunpack.c.l.b16 %v373
    %v1305 = vunpack.c.h.b16 %v373
    %v1306 = vunpack.c.l.b16 %v374
    %v1307 = vunpack.c.h.b16 %v374
    %v1308 = vunpack.c.l.b16 %v375
    %v1309 = vunpack.c.h.b16 %v375
    %v1310 = vunpack.c.l.b16 %v376
    %v1311 = vunpack.c.h.b16 %v376
    %v1312 = vunpack.c.l.b16 %v377
    %v1313 = vunpack.c.h.b16 %v377
    %v1314 = vunpack.c.l.b16 %v378
    %v1315 = vunpack.c.h.b16 %v378
    %v1316 = vunpack.c.l.b16 %v379
    %v1317 = vunpack.c.h.b16 %v379
    %v1318 = vunpack.c.l.b16 %v380
    %v1319 = vunpack.c.h.b16 %v380
    %v1320 = vunpack.c.l.b16 %v381
    %v1321 = vunpack.c.h.b16 %v381
    %v1322 = vunpack.c.l.b16 %v382
    %v1323 = vunpack.c.h.b16 %v382
    %v1324 = vunpack.c.l.b16 %v383
    %v1325 = vunpack.c.h.b16 %v383
    %v1326 = vunpack.c.l.b16 %v384
    %v1327 = vunpack.c.h.b16 %v384
    %v1328 = vunpack.c.l.b16 %v385
    %v1329 = vunpack.c.h.b16 %v385
    %v1330 = vunpack.c.l.b16 %v386
    %v1331 = vunpack.c.h.b16 %v386
    %v1332 = vunpack.c.l.b16 %v387
    %v1333 = vunpack.c.h.b16 %v387
    %v1334 = vunpack.c.l.b16 %v388
    %v1335 = vunpack.c.h.b16 %v388
    %v1336 = vunpack.c.l.b16 %v389
    %v1337 = vunpack.c.h.b16 %v389
    %v1338 = vunpack.c.l.b16 %v390
    %v1339 = vunpack.c.h.b16 %v390
    %v1340 = vunpack.c.l.b16 %v391
    %v1341 = vunpack.c.h.b16 %v391
    %v1342 = vunpack.c.l.b16 %v392
    %v1343 = vunpack.c.h.b16 %v392
    %v1344 = vunpack.c.l.b16 %v393
    %v1345 = vunpack.c.h.b16 %v393
    %v1346 = vunpack.c.l.b16 %v394
    %v1347 = vunpack.c.h.b16 %v394
    %v1348 = vunpack.c.l.b16 %v395
    %v1349 = vunpack.c.h.b16 %v395
    %v1350 = vunpack.c.l.b16 %v396
    %v1351 = vunpack.c.h.b16 %v396
    %v1352 = vunpack.c.l.b16 %v397
    %v1353 = vunpack.c.h.b16 %v397
    %v1354 = vunpack.c.l.b16 %v398
    %v1355 = vunpack.c.h.b16 %v398
    %v1356 = vunpack.c.l.b16 %v399
    %v1357 = vunpack.c.h.b16 %v399
    %v1358 = vunpack.c.l.b16 %v400
    %v1359 = vunpack.c.h.b16 %v400
    %v1360 = vunpack.c.l.b16 %v401
    %v1361 = vunpack.c.h.b16 %v401
    %v1362 = vunpack.c.l.b16 %v402
    %v1363 = vunpack.c.h.b16 %v402
    %v1364 = vunpack.c.l.b16 %v403
    %v1365 = vunpack.c.h.b16 %v403
    %v1366 = vunpack.c.l.b16 %v404
    %v1367 = vunpack.c.h.b16 %v404
    %v1368 = vunpack.c.l.b16 %v405
    %v1369 = vunpack.c.h.b16 %v405
    %v1370 = vunpack.c.l.b16 %v406
    %v1371 = vunpack.c.h.b16 %v406
    %v1372 = vunpack.c.l.b16 %v407
    %v1373 = vunpack.c.h.b16 %v407
    %v1374 = vunpack.c.l.b16 %v408
    %v1375 = vunpack.c.h.b16 %v408
    %v1376 = vunpack.c.l.b16 %v409
    %v1377 = vunpack.c.h.b16 %v409
    %v1378 = vunpack.c.l.b16 %v410
    %v1379 = vunpack.c.h.b16 %v410
    %v1380 = vunpack.c.l.b16 %v411
    %v1381 = vunpack.c.h.b16 %v411
    %v1382 = vunpack.c.l.b16 %v412
    %v1383 = vunpack.c.h.b16 %v412
    %v1384 = vunpack.c.l.b16 %v413
    %v1385 = vunpack.c.h.b16 %v413
    %v1386 = vunpack.c.l.b16 %v414
    %v1387 = vunpack.c.h.b16 %v414
    %v1388 = vunpack.c.l.b16 %v415
    %v1389 = vunpack.c.h.b16 %v415
    %v1390 = vunpack.c.l.b16 %v416
    %v1391 = vunpack.c.h.b16 %v416
    %v1392 = vunpack.c.l.b16 %v417
    %v1393 = vunpack.c.h.b16 %v417
    %v1394 = vunpack.c.l.b16 %v418
    %v1395 = vunpack.c.h.b16 %v418
    %v1396 = vunpack.c.l.b16 %v419
    %v1397 = vunpack.c.h.b16 %v419
    %v1398 = vunpack.c.l.b16 %v420
    %v1399 = vunpack.c.h.b16 %v420
    %v1400 = vunpack.c.l.b16 %v421
    %v1401 = vunpack.c.h.b16 %v421
    %v1402 = vunpack.c.l.b16 %v422
    %v1403 = vunpack.c.h.b16 %v422
    %v1404 = vunpack.c.l.b16 %v423
    %v1405 = vunpack.c.h.b16 %v423
    %v1406 = vunpack.c.l.b16 %v424
    %v1407 = vunpack.c.h.b16 %v424
    %v1408 = vunpack.c.l.b16 %v425
    %v1409 = vunpack.c.h.b16 %v425
    %v1410 = vunpack.c.l.b16 %v426
    %v1411 = vunpack.c.h.b16 %v426
    %v1412 = vunpack.c.l.b16 %v427
    %v1413 = vunpack.c.h.b16 %v427
    %v1414 = vunpack.c.l.b16 %v428
    %v1415 = vunpack.c.h.b16 %v428
    %v1416 = vunpack.c.l.b16 %v429
    %v1417 = vunpack.c.h.b16 %v429
    %v1418 = vunpack.c.l.b16 %v430
    %v1419 = vunpack.c.h.b16 %v430
    %v1420 = vunpack.c.l.b16 %v431
    %v1421 = vunpack.c.h.b16 %v431
    %v1422 = vunpack.c.l.b16 %v432
    %v1423 = vunpack.c.h.b16 %v432
    %v1424 = vunpack.c.l.b16 %v433
    %v1425 = vunpack.c.h.b16 %v433
    %v1426 = vunpack.c.l.b16 %v434
    %v1427 = vunpack.c.h.b16 %v434
    %v1428 = vunpack.c.l.b16 %v435
    %v1429 = vunpack.c.h.b16 %v435
    %v1430 = vunpack.c.l.b16 %v436
    %v1431 = vunpack.c.h.b16 %v436
    %v1432 = vunpack.c.l.b16 %v437
    %v1433 = vunpack.c.h.b16 %v437
    %v1434 = vunpack.c.l.b16 %v438
    %v1435 = vunpack.c.h.b16 %v438
    %v1436 = vunpack.c.l.b16 %v439
    %v1437 = vunpack.c.h.b16 %v439
    %v1438 = vunpack.c.l.b16 %v440
    %v1439 = vunpack.c.h.b16 %v440
    %v1440 = vunpack.c.l.b16 %v441
    %v1441 = vunpack.c.h.b16 %v441
    %v1442 = vunpack.c.l.b16 %v442
    %v1443 = vunpack.c.h.b16 %v442
    %v1444 = vunpack.c.l.b16 %v443
    %v1445 = vunpack.c.h.b16 %v443
    %v1446 = vunpack.c.l.b16 %v444
    %v1447 = vunpack.c.h.b16 %v444
    %v1448 = vunpack.c.l.b16 %v445
    %v1449 = vunpack.c.h.b16 %v445
    %v1450 = vunpack.c.l.b16 %v446
    %v1451 = vunpack.c.h.b16 %v446
    %v1452 = vunpack.c.l.b16 %v447
    %v1453 = vunpack.c.h.b16 %v447
    %v1454 = vunpack.c.l.b16 %v448
    %v1455 = vunpack.c.h.b16 %v448
    %v1456 = vunpack.c.l.b16 %v449
    %v1457 = vunpack.c.h.b16 %v449
    %v1458 = vunpack.c.l.b16 %v450
    %v1459 = vunpack.c.h.b16 %v450
    %v1460 = vunpack.c.l.b16 %v451
    %v1461 = vunpack.c.h.b16 %v451
    %v1462 = vunpack.c.l.b16 %v452
    %v1463 = vunpack.c.h.b16 %v452
    %v1464 = vunpack.c.l.b16 %v453
    %v1465 = vunpack.c.h.b16 %v453
    %v1466 = vunpack.c.l.b16 %v454
    %v1467 = vunpack.c.h.b16 %v454
    %v1468 = vunpack.c.l.b16 %v455
    %v1469 = vunpack.c.h.b16 %v455
    %v1470 = vunpack.c.l.b16 %v456
    %v1471 = vunpack.c.h.b16 %v456
    %v1472 = vunpack.c.l.b16 %v457
    %v1473 = vunpack.c.h.b16 %v457
    %v1474 = vunpack.c.l.b16 %v458
    %v1475 = vunpack.c.h.b16 %v458
    %v1476 = vunpack.c.l.b16 %v459
    %v1477 = vunpack.c.h.b16 %v459
    %v1478 = vunpack.c.l.b16 %v460
    %v1479 = vunpack.c.h.b16 %v460
    %v1480 = vunpack.c.l.b16 %v461
    %v1481 = vunpack.c.h.b16 %v461
    %v1482 = vunpack.c.l.b16 %v462
    %v1483 = vunpack.c.h.b16 %v462
    %v1484 = vunpack.c.l.b16 %v463
    %v1485 = vunpack.c.h.b16 %v463
    %v1486 = vunpack.c.l.b16 %v464
    %v1487 = vunpack.c.h.b16 %v464
    %v1488 = vunpack.c.l.b16 %v465
    %v1489 = vunpack.c.h.b16 %v465
    %v1490 = vunpack.c.l.b16 %v466
    %v1491 = vunpack.c.h.b16 %v466
    %v1492 = vunpack.c.l.b16 %v467
    %v1493 = vunpack.c.h.b16 %v467
    %v1494 = vunpack.c.l.b16 %v468
    %v1495 = vunpack.c.h.b16 %v468
    %v1496 = vunpack.c.l.b16 %v469
    %v1497 = vunpack.c.h.b16 %v469
    %v1498 = vunpack.c.l.b16 %v470
    %v1499 = vunpack.c.h.b16 %v470
    %v1500 = vunpack.c.l.b16 %v471
    %v1501 = vunpack.c.h.b16 %v471
    %v1502 = vunpack.c.l.b16 %v472
    %v1503 = vunpack.c.h.b16 %v472
    %v1504 = vunpack.c.l.b16 %v473
    %v1505 = vunpack.c.h.b16 %v473
    %v1506 = vunpack.c.l.b16 %v474
    %v1507 = vunpack.c.h.b16 %v474
    %v1508 = vunpack.c.l.b16 %v475
    %v1509 = vunpack.c.h.b16 %v475
    %v1510 = vunpack.c.l.b16 %v476
    %v1511 = vunpack.c.h.b16 %v476
    %v1512 = vunpack.c.l.b16 %v477
    %v1513 = vunpack.c.h.b16 %v477
    %v1514 = vunpack.c.l.b16 %v478
    %v1515 = vunpack.c.h.b16 %v478
    %v1516 = vunpack.c.l.b16 %v479
    %v1517 = vunpack.c.h.b16 %v479
    %v1518 = vunpack.c.l.b16 %v480
    %v1519 = vunpack.c.h.b16 %v480
    %v1520 = vunpack.c.l.b16 %v481
    %v1521 = vunpack.c.h.b16 %v481
    %v1522 = vunpack.c.l.b16 %v482
    %v1523 = vunpack.c.h.b16 %v482
    %v1524 = vunpack.c.l.b16 %v483
    %v1525 = vunpack.c.h.b16 %v483
    %v1526 = vunpack.c.l.b16 %v484
    %v1527 = vunpack.c.h.b16 %v484
    %v1528 = vunpack.c.l.b16 %v485
    %v1529 = vunpack.c.h.b16 %v485
    %v1530 = vunpack.c.l.b16 %v486
    %v1531 = vunpack.c.h.b16 %v486
    %v1532 = vunpack.c.l.b16 %v487
    %v1533 = vunpack.c.h.b16 %v487
    %v1534 = vunpack.c.l.b16 %v488
    %v1535 = vunpack.c.h.b16 %v488
    %v1536 = vunpack.c.l.b16 %v489
    %v1537 = vunpack.c.h.b16 %v489
    %v1538 = vunpack.c.l.b16 %v490
    %v1539 = vunpack.c.h.b16 %v490
    %v1540 = vunpack.c.l.b16 %v491
    %v1541 = vunpack.c.h.b16 %v491
    %v1542 = vunpack.c.l.b16 %v492
    %v1543 = vunpack.c.h.b16 %v492
    %v1544 = vunpack.c.l.b16 %v493
    %v1545 = vunpack.c.h.b16 %v493
    %v1546 = vunpack.c.l.b16 %v494
    %v1547 = vunpack.c.h.b16 %v494
    %v1548 = vunpack.c.l.b16 %v495
    %v1549 = vunpack.c.h.b16 %v495
    %v1550 = vunpack.c.l.b16 %v496
    %v1551 = vunpack.c.h.b16 %v496
    %v1552 = vunpack.c.l.b16 %v497
    %v1553 = vunpack.c.h.b16 %v497
    %v1554 = vunpack.c.l.b16 %v498
    %v1555 = vunpack.c.h.b16 %v498
    %v1556 = vunpack.c.l.b16 %v499
    %v1557 = vunpack.c.h.b16 %v499
    %v1558 = vunpack.c.l.b16 %v500
    %v1559 = vunpack.c.h.b16 %v500
    %v1560 = vunpack.c.l.b16 %v501
    %v1561 = vunpack.c.h.b16 %v501
    %v1562 = vunpack.c.l.b16 %v502
    %v1563 = vunpack.c.h.b16 %v502
    %v1564 = vunpack.c.l.b16 %v503
    %v1565 = vunpack.c.h.b16 %v503
    %v1566 = vunpack.c.l.b16 %v504
    %v1567 = vunpack.c.h.b16 %v504
    %v1568 = vunpack.c.l.b16 %v505
    %v1569 = vunpack.c.h.b16 %v505
    %v1570 = vunpack.c.l.b16 %v506
    %v1571 = vunpack.c.h.b16 %v506
    %v1572 = vunpack.c.l.b16 %v507
    %v1573 = vunpack.c.h.b16 %v507
    %v1574 = vunpack.c.l.b16 %v508
    %v1575 = vunpack.c.h.b16 %v508
    %v1576 = vunpack.c.l.b16 %v509
    %v1577 = vunpack.c.h.b16 %v509
    %v1578 = vunpack.c.l.b16 %v510
    %v1579 = vunpack.c.h.b16 %v510
    %v1580 = vunpack.c.l.b16 %v511
    %v1581 = vunpack.c.h.b16 %v511
    %v1582 = vunpack.c.l.b16 %v512
    %v1583 = vunpack.c.h.b16 %v512
    %v1584 = vunpack.c.l.b16 %v513
    %v1585 = vunpack.c.h.b16 %v513
    %v1586 = vunpack.c.l.b16 %v514
    %v1587 = vunpack.c.h.b16 %v514
    %v1588 = vunpack.c.l.b16 %v515
    %v1589 = vunpack.c.h.b16 %v515
    %v1590 = vunpack.c.l.b16 %v516
    %v1591 = vunpack.c.h.b16 %v516
    %v1592 = vunpack.c.l.b16 %v517
    %v1593 = vunpack.c.h.b16 %v517
    %v1594 = vunpack.c.l.b16 %v518
    %v1595 = vunpack.c.h.b16 %v518
    %v1596 = vunpack.c.l.b16 %v519
    %v1597 = vunpack.c.h.b16 %v519
    %v1598 = vunpack.c.l.b16 %v520
    %v1599 = vunpack.c.h.b16 %v520
    %v1600 = vunpack.c.l.b16 %v521
    %v1601 = vunpack.c.h.b16 %v521
    %v1602 = vunpack.c.l.b16 %v522
    %v1603 = vunpack.c.h.b16 %v522
    %v1604 = vunpack.c.l.b16 %v523
    %v1605 = vunpack.c.h.b16 %v523
    %v1606 = vunpack.c.l.b16 %v524
    %v1607 = vunpack.c.h.b16 %v524
    %v1608 = vunpack.c.l.b16 %v525
    %v1609 = vunpack.c.h.b16 %v525
    %v1610 = vunpack.c.l.b16 %v526
    %v1611 = vunpack.c.h.b16 %v526
    %v1612 = vunpack.c.l.b16 %v527
    %v1613 = vunpack.c.h.b16 %v527
    %v1614 = vunpack.c.l.b16 %v528
    %v1615 = vunpack.c.h.b16 %v528
    %v1616 = vunpack.c.l.b16 %v529
    %v1617 = vunpack.c.h.b16 %v529
    %v1618 = vunpack.c.l.b16 %v530
    %v1619 = vunpack.c.h.b16 %v530
    %v1620 = vunpack.c.l.b16 %v531
    %v1621 = vunpack.c.h.b16 %v531
    %v1622 = vunpack.c.l.b16 %v532
    %v1623 = vunpack.c.h.b16 %v532
    %v1624 = vunpack.c.l.b16 %v533
    %v1625 = vunpack.c.h.b16 %v533
    %v1626 = vunpack.c.l.b16 %v534
    %v1627 = vunpack.c.h.b16 %v534
    %v1628 = vunpack.c.l.b16 %v535
    %v1629 = vunpack.c.h.b16 %v535
    %v1630 = vunpack.c.l.b16 %v536
    %v1631 = vunpack.c.h.b16 %v536
    %v1632 = vunpack.c.l.b16 %v537
    %v1633 = vunpack.c.h.b16 %v537
    %v1634 = vunpack.c.l.b16 %v538
    %v1635 = vunpack.c.h.b16 %v538
    %v1636 = vunpack.c.l.b16 %v539
    %v1637 = vunpack.c.h.b16 %v539
    %v1638 = vunpack.c.l.b16 %v540
    %v1639 = vunpack.c.h.b16 %v540
    %v1640 = vunpack.c.l.b16 %v541
    %v1641 = vunpack.c.h.b16 %v541
    %v1642 = vunpack.c.l.b16 %v542
    %v1643 = vunpack.c.h.b16 %v542
    %v1644 = vunpack.c.l.b16 %v543
    %v1645 = vunpack.c.h.b16 %v543
    %v1646 = vunpack.c.l.b16 %v544
    %v1647 = vunpack.c.h.b16 %v544
    %v1648 = vunpack.c.l.b16 %v545
    %v1649 = vunpack.c.h.b16 %v545
    %v1650 = vunpack.c.l.b16 %v546
    %v1651 = vunpack.c.h.b16 %v546
    %v1652 = vunpack.c.l.b16 %v547
    %v1653 = vunpack.c.h.b16 %v547
    %v1654 = vunpack.c.l.b16 %v548
    %v1655 = vunpack.c.h.b16 %v548
    %v1656 = vunpack.c.l.b16 %v549
    %v1657 = vunpack.c.h.b16 %v549
    %v1658 = vunpack.c.l.b16 %v550
    %v1659 = vunpack.c.h.b16 %v550
    %v1660 = vunpack.c.l.b16 %v551
    %v1661 = vunpack.c.h.b16 %v551
    %v1662 = vunpack.c.l.b16 %v552
    %v1663 = vunpack.c.h.b16 %v552
    %v1664 = vunpack.c.l.b16 %v553
    %v1665 = vunpack.c.h.b16 %v553
    %v1666 = vunpack.c.l.b16 %v554
    %v1667 = vunpack.c.h.b16 %v554
    %v1668 = vunpack.c.l.b16 %v555
    %v1669 = vunpack.c.h.b16 %v555
    %v1670 = vunpack.c.l.b16 %v556
    %v1671 = vunpack.c.h.b16 %v556
    %v1672 = vunpack.c.l.b16 %v557
    %v1673 = vunpack.c.h.b16 %v557
    %v1674 = vunpack.c.l.b16 %v558
    %v1675 = vunpack.c.h.b16 %v558
    %v1676 = vunpack.c.l.b16 %v559
    %v1677 = vunpack.c.h.b16 %v559
    %v1678 = vunpack.c.l.b16 %v560
    %v1679 = vunpack.c.h.b16 %v560
    %v1680 = vunpack.c.l.b16 %v561
    %v1681 = vunpack.c.h.b16 %v561
    %v1682 = vunpack.c.l.b16 %v562
    %v1683 = vunpack.c.h.b16 %v562
    %v1684 = vunpack.c.l.b16 %v563
    %v1685 = vunpack.c.h.b16 %v563
    %v1686 = vunpack.c.l.b16 %v564
    %v1687 = vunpack.c.h.b16 %v564
    %v1688 = vunpack.c.l.b16 %v565
    %v1689 = vunpack.c.h.b16 %v565
    %v1690 = vunpack.c.l.b16 %v566
    %v1691 = vunpack.c.h.b16 %v566
    %v1692 = vunpack.c.l.b16 %v567
    %v1693 = vunpack.c.h.b16 %v567
    %v1694 = vunpack.c.l.b16 %v568
    %v1695 = vunpack.c.h.b16 %v568
    %v1696 = vunpack.c.l.b16 %v569
    %v1697 = vunpack.c.h.b16 %v569
    %v1698 = vunpack.c.l.b16 %v570
    %v1699 = vunpack.c.h.b16 %v570
    %v1700 = vunpack.c.l.b16 %v571
    %v1701 = vunpack.c.h.b16 %v571
    %v1702 = vunpack.c.l.b16 %v572
    %v1703 = vunpack.c.h.b16 %v572
    %v1704 = vunpack.c.l.b16 %v573
    %v1705 = vunpack.c.h.b16 %v573
    %v1706 = vunpack.c.l.b16 %v574
    %v1707 = vunpack.c.h.b16 %v574
    %v1708 = vunpack.c.l.b16 %v575
    %v1709 = vunpack.c.h.b16 %v575
    %v1710 = vunpack.c.l.b16 %v576
    %v1711 = vunpack.c.h.b16 %v576
    %v1712 = vunpack.c.l.b16 %v577
    %v1713 = vunpack.c.h.b16 %v577
    %v1714 = vunpack.c.l.b16 %v578
    %v1715 = vunpack.c.h.b16 %v578
    %v1716 = vunpack.c.l.b16 %v579
    %v1717 = vunpack.c.h.b16 %v579
    %v1718 = vunpack.c.l.b16 %v580
    %v1719 = vunpack.c.h.b16 %v580
    %v1720 = vunpack.c.l.b16 %v581
    %v1721 = vunpack.c.h.b16 %v581
    %v1722 = vunpack.c.l.b16 %v582
    %v1723 = vunpack.c.h.b16 %v582
    %v1724 = vunpack.c.l.b16 %v583
    %v1725 = vunpack.c.h.b16 %v583
    %v1726 = vunpack.c.l.b16 %v584
    %v1727 = vunpack.c.h.b16 %v584
    %v1728 = vunpack.c.l.b16 %v585
    %v1729 = vunpack.c.h.b16 %v585
    %v1730 = vunpack.c.l.b16 %v586
    %v1731 = vunpack.c.h.b16 %v586
    %v1732 = vunpack.c.l.b16 %v587
    %v1733 = vunpack.c.h.b16 %v587
    %v1734 = vunpack.c.l.b16 %v588
    %v1735 = vunpack.c.h.b16 %v588
    %v1736 = vunpack.c.l.b16 %v589
    %v1737 = vunpack.c.h.b16 %v589
    %v1738 = vunpack.c.l.b16 %v590
    %v1739 = vunpack.c.h.b16 %v590
    %v1740 = vunpack.c.l.b16 %v591
    %v1741 = vunpack.c.h.b16 %v591
    %v1742 = vunpack.c.l.b16 %v592
    %v1743 = vunpack.c.h.b16 %v592
    %v1744 = vunpack.c.l.b16 %v593
    %v1745 = vunpack.c.h.b16 %v593
    %v1746 = vunpack.c.l.b16 %v594
    %v1747 = vunpack.c.h.b16 %v594
    %v1748 = vunpack.c.l.b16 %v595
    %v1749 = vunpack.c.h.b16 %v595
    %v1750 = vunpack.c.l.b16 %v596
    %v1751 = vunpack.c.h.b16 %v596
    %v1752 = vunpack.c.l.b16 %v597
    %v1753 = vunpack.c.h.b16 %v597
    %v1754 = vunpack.c.l.b16 %v598
    %v1755 = vunpack.c.h.b16 %v598
    %v1756 = vunpack.c.l.b16 %v599
    %v1757 = vunpack.c.h.b16 %v599
    %v1758 = vunpack.c.l.b16 %v600
    %v1759 = vunpack.c.h.b16 %v600
    %v1760 = vunpack.c.l.b16 %v601
    %v1761 = vunpack.c.h.b16 %v601
    %v1762 = vunpack.c.l.b16 %v602
    %v1763 = vunpack.c.h.b16 %v602
    %v1764 = vunpack.c.l.b16 %v603
    %v1765 = vunpack.c.h.b16 %v603
    %v1766 = vunpack.c.l.b16 %v604
    %v1767 = vunpack.c.h.b16 %v604
    %v1768 = vunpack.c.l.b16 %v605
    %v1769 = vunpack.c.h.b16 %v605
    %v1770 = vunpack.c.l.b16 %v606
    %v1771 = vunpack.c.h.b16 %v606
    %v1772 = vunpack.c.l.b16 %v607
    %v1773 = vunpack.c.h.b16 %v607
    %v1774 = vunpack.c.l.b16 %v608
    %v1775 = vunpack.c.h.b16 %v608
    %v1776 = vunpack.c.l.b16 %v609
    %v1777 = vunpack.c.h.b16 %v609
    %v1778 = vunpack.c.l.b16 %v610
    %v1779 = vunpack.c.h.b16 %v610
    %v1780 = vunpack.c.l.b16 %v611
    %v1781 = vunpack.c.h.b16 %v611
    %v1782 = vpack.c.b16 %v1022, %v1014
    %v1783 = vpack.c.b16 %v1023, %v1015
    %v1784 = vpack.c.b16 %v1024, %v1016
    %v1785 = vpack.c.b16 %v1025, %v1017
    %v1786 = vpack.c.b16 %v1026, %v1018
    %v1787 = vpack.c.b16 %v1027, %v1019
    %v1788 = vpack.c.b16 %v1028, %v1020
    %v1789 = vpack.c.b16 %v1029, %v1021
    %v1790 = vpack.c.b16 %v1038, %v1030
    %v1791 = vpack.c.b16 %v1039, %v1031
    %v1792 = vpack.c.b16 %v1040, %v1032
    %v1793 = vpack.c.b16 %v1041, %v1033
    %v1794 = vpack.c.b16 %v1042, %v1034
    %v1795 = vpack.c.b16 %v1043, %v1035
    %v1796 = vpack.c.b16 %v1044, %v1036
    %v1797 = vpack.c.b16 %v1045, %v1037
    %v1798 = vpack.c.b16 %v1054, %v1046
    %v1799 = vpack.c.b16 %v1055, %v1047
    %v1800 = vpack.c.b16 %v1056, %v1048
    %v1801 = vpack.c.b16 %v1057, %v1049
    %v1802 = vpack.c.b16 %v1058, %v1050
    %v1803 = vpack.c.b16 %v1059, %v1051
    %v1804 = vpack.c.b16 %v1060, %v1052
    %v1805 = vpack.c.b16 %v1061, %v1053
    %v1806 = vpack.c.b16 %v1070, %v1062
    %v1807 = vpack.c.b16 %v1071, %v1063
    %v1808 = vpack.c.b16 %v1072, %v1064
    %v1809 = vpack.c.b16 %v1073, %v1065
    %v1810 = vpack.c.b16 %v1074, %v1066
    %v1811 = vpack.c.b16 %v1075, %v1067
    %v1812 = vpack.c.b16 %v1076, %v1068
    %v1813 = vpack.c.b16 %v1077, %v1069
    %v1814 = vpack.c.b16 %v1086, %v1078
    %v1815 = vpack.c.b16 %v1087, %v1079
    %v1816 = vpack.c.b16 %v1088, %v1080
    %v1817 = vpack.c.b16 %v1089, %v1081
    %v1818 = vpack.c.b16 %v1090, %v1082
    %v1819 = vpack.c.b16 %v1091, %v1083
    %v1820 = vpack.c.b16 %v1092, %v1084
    %v1821 = vpack.c.b16 %v1093, %v1085
    %v1822 = vpack.c.b16 %v1102, %v1094
    %v1823 = vpack.c.b16 %v1103, %v1095
    %v1824 = vpack.c.b16 %v1104, %v1096
    %v1825 = vpack.c.b16 %v1105, %v1097
    %v1826 = vpack.c.b16 %v1106, %v1098
    %v1827 = vpack.c.b16 %v1107, %v1099
    %v1828 = vpack.c.b16 %v1108, %v1100
    %v1829 = vpack.c.b16 %v1109, %v1101
    %v1830 = vpack.c.b16 %v1118, %v1110
    %v1831 = vpack.c.b16 %v1119, %v1111
    %v1832 = vpack.c.b16 %v1120, %v1112
    %v1833 = vpack.c.b16 %v1121, %v1113
    %v1834 = vpack.c.b16 %v1122, %v1114
    %v1835 = vpack.c.b16 %v1123, %v1115
    %v1836 = vpack.c.b16 %v1124, %v1116
    %v1837 = vpack.c.b16 %v1125, %v1117
    %v1838 = vpack.c.b16 %v1134, %v1126
    %v1839 = vpack.c.b16 %v1135, %v1127
    %v1840 = vpack.c.b16 %v1136, %v1128
    %v1841 = vpack.c.b16 %v1137, %v1129
    %v1842 = vpack.c.b16 %v1138, %v1130
    %v1843 = vpack.c.b16 %v1139, %v1131
    %v1844 = vpack.c.b16 %v1140, %v1132
    %v1845 = vpack.c.b16 %v1141, %v1133
    %v1846 = vpack.c.b16 %v1150, %v1142
    %v1847 = vpack.c.b16 %v1151, %v1143
    %v1848 = vpack.c.b16 %v1152, %v1144
    %v1849 = vpack.c.b16 %v1153, %v1145
    %v1850 = vpack.c.b16 %v1154, %v1146
    %v1851 = vpack.c.b16 %v1155, %v1147
    %v1852 = vpack.c.b16 %v1156, %v1148
    %v1853 = vpack.c.b16 %v1157, %v1149
    %v1854 = vpack.c.b16 %v1166, %v1158
    %v1855 = vpack.c.b16 %v1167, %v1159
    %v1856 = vpack.c.b16 %v1168, %v1160
    %v1857 = vpack.c.b16 %v1169, %v1161
    %v1858 = vpack.c.b16 %v1170, %v1162
    %v1859 = vpack.c.b16 %v1171, %v1163
    %v1860 = vpack.c.b16 %v1172, %v1164
    %v1861 = vpack.c.b16 %v1173, %v1165
    %v1862 = vpack.c.b16 %v1182, %v1174
    %v1863 = vpack.c.b16 %v1183, %v1175
    %v1864 = vpack.c.b16 %v1184, %v1176
    %v1865 = vpack.c.b16 %v1185, %v1177
    %v1866 = vpack.c.b16 %v1186, %v1178
    %v1867 = vpack.c.b16 %v1187, %v1179
    %v1868 = vpack.c.b16 %v1188, %v1180
    %v1869 = vpack.c.b16 %v1189, %v1181
    %v1870 = vpack.c.b16 %v1198, %v1190
    %v1871 = vpack.c.b16 %v1199, %v1191
    %v1872 = vpack.c.b16 %v1200, %v1192
    %v1873 = vpack.c.b16 %v1201, %v1193
    %v1874 = vpack.c.b16 %v1202, %v1194
    %v1875 = vpack.c.b16 %v1203, %v1195
    %v1876 = vpack.c.b16 %v1204, %v1196
    %v1877 = vpack.c.b16 %v1205, %v1197
    %v1878 = vpack.c.b16 %v1214, %v1206
    %v1879 = vpack.c.b16 %v1215, %v1207
    %v1880 = vpack.c.b16 %v1216, %v1208
    %v1881 = vpack.c.b16 %v1217, %v1209
    %v1882 = vpack.c.b16 %v1218, %v1210
    %v1883 = vpack.c.b16 %v1219, %v1211
    %v1884 = vpack.c.b16 %v1220, %v1212
    %v1885 = vpack.c.b16 %v1221, %v1213
    %v1886 = vpack.c.b16 %v1230, %v1222
    %v1887 = vpack.c.b16 %v1231, %v1223
    %v1888 = vpack.c.b16 %v1232, %v1224
    %v1889 = vpack.c.b16 %v1233, %v1225
    %v1890 = vpack.c.b16 %v1234, %v1226
    %v1891 = vpack.c.b16 %v1235, %v1227
    %v1892 = vpack.c.b16 %v1236, %v1228
    %v1893 = vpack.c.b16 %v1237, %v1229
    %v1894 = vpack.c.b16 %v1246, %v1238
    %v1895 = vpack.c.b16 %v1247, %v1239
    %v1896 = vpack.c.b16 %v1248, %v1240
    %v1897 = vpack.c.b16 %v1249, %v1241
    %v1898 = vpack.c.b16 %v1250, %v1242
    %v1899 = vpack.c.b16 %v1251, %v1243
    %v1900 = vpack.c.b16 %v1252, %v1244
    %v1901 = vpack.c.b16 %v1253, %v1245
    %v1902 = vpack.c.b16 %v1262, %v1254
    %v1903 = vpack.c.b16 %v1263, %v1255
    %v1904 = vpack.c.b16 %v1264, %v1256
    %v1905 = vpack.c.b16 %v1265, %v1257
    %v1906 = vpack.c.b16 %v1266, %v1258
    %v1907 = vpack.c.b16 %v1267, %v1259
    %v1908 = vpack.c.b16 %v1268, %v1260
    %v1909 = vpack.c.b16 %v1269, %v1261
    %v1910 = vpack.c.b16 %v1278, %v1270
    %v1911 = vpack.c.b16 %v1279, %v1271
    %v1912 = vpack.c.b16 %v1280, %v1272
    %v1913 = vpack.c.b16 %v1281, %v1273
    %v1914 = vpack.c.b16 %v1282, %v1274
    %v1915 = vpack.c.b16 %v1283, %v1275
    %v1916 = vpack.c.b16 %v1284, %v1276
    %v1917 = vpack.c.b16 %v1285, %v1277
    %v1918 = vpack.c.b16 %v1294, %v1286
    %v1919 = vpack.c.b16 %v1295, %v1287
    %v1920 = vpack.c.b16 %v1296, %v1288
    %v1921 = vpack.c.b16 %v1297, %v1289
    %v1922 = vpack.c.b16 %v1298, %v1290
    %v1923 = vpack.c.b16 %v1299, %v1291
    %v1924 = vpack.c.b16 %v1300, %v1292
    %v1925 = vpack.c.b16 %v1301, %v1293
    %v1926 = vpack.c.b16 %v1310, %v1302
    %v1927 = vpack.c.b16 %v1311, %v1303
    %v1928 = vpack.c.b16 %v1312, %v1304
    %v1929 = vpack.c.b16 %v1313, %v1305
    %v1930 = vpack.c.b16 %v1314, %v1306
    %v1931 = vpack.c.b16 %v1315, %v1307
    %v1932 = vpack.c.b16 %v1316, %v1308
    %v1933 = vpack.c.b16 %v1317, %v1309
    %v1934 = vpack.c.b16 %v1326, %v1318
    %v1935 = vpack.c.b16 %v1327, %v1319
    %v1936 = vpack.c.b16 %v1328, %v1320
    %v1937 = vpack.c.b16 %v1329, %v1321
    %v1938 = vpack.c.b16 %v1330, %v1322
    %v1939 = vpack.c.b16 %v1331, %v1323
    %v1940 = vpack.c.b16 %v1332, %v1324
    %v1941 = vpack.c.b16 %v1333, %v1325
    %v1942 = vpack.c.b16 %v1342, %v1334
    %v1943 = vpack.c.b16 %v1343, %v1335
    %v1944 = vpack.c.b16 %v1344, %v1336
    %v1945 = vpack.c.b16 %v1345, %v1337
    %v1946 = vpack.c.b16 %v1346, %v1338
    %v1947 = vpack.c.b16 %v1347, %v1339
    %v1948 = vpack.c.b16 %v1348, %v1340
    %v1949 = vpack.c.b16 %v1349, %v1341
    %v1950 = vpack.c.b16 %v1358, %v1350
    %v1951 = vpack.c.b16 %v1359, %v1351
    %v1952 = vpack.c.b16 %v1360, %v1352
    %v1953 = vpack.c.b16 %v1361, %v1353
    %v1954 = vpack.c.b16 %v1362, %v1354
    %v1955 = vpack.c.b16 %v1363, %v1355
    %v1956 = vpack.c.b16 %v1364, %v1356
    %v1957 = vpack.c.b16 %v1365, %v1357
    %v1958 = vpack.c.b16 %v1374, %v1366
    %v1959 = vpack.c.b16 %v1375, %v1367
    %v1960 = vpack.c.b16 %v1376, %v1368
    %v1961 = vpack.c.b16 %v1377, %v1369
    %v1962 = vpack.c.b16 %v1378, %v1370
    %v1963 = vpack.c.b16 %v1379, %v1371
    %v1964 = vpack.c.b16 %v1380, %v1372
    %v1965 = vpack.c.b16 %v1381, %v1373
    %v1966 = vpack.c.b16 %v1390, %v1382
    %v1967 = vpack.c.b16 %v1391, %v1383
    %v1968 = vpack.c.b16 %v1392, %v1384
    %v1969 = vpack.c.b16 %v1393, %v1385
    %v1970 = vpack.c.b16 %v1394, %v1386
    %v1971 = vpack.c.b16 %v1395, %v1387
    %v1972 = vpack.c.b16 %v1396, %v1388
    %v1973 = vpack.c.b16 %v1397, %v1389
    %v1974 = vpack.c.b16 %v1406, %v1398
    %v1975 = vpack.c.b16 %v1407, %v1399
    %v1976 = vpack.c.b16 %v1408, %v1400
    %v1977 = vpack.c.b16 %v1409, %v1401
    %v1978 = vpack.c.b16 %v1410, %v1402
    %v1979 = vpack.c.b16 %v1411, %v1403
    %v1980 = vpack.c.b16 %v1412, %v1404
    %v1981 = vpack.c.b16 %v1413, %v1405
    %v1982 = vpack.c.b16 %v1422, %v1414
    %v1983 = vpack.c.b16 %v1423, %v1415
    %v1984 = vpack.c.b16 %v1424, %v1416
    %v1985 = vpack.c.b16 %v1425, %v1417
    %v1986 = vpack.c.b16 %v1426, %v1418
    %v1987 = vpack.c.b16 %v1427, %v1419
    %v1988 = vpack.c.b16 %v1428, %v1420
    %v1989 = vpack.c.b16 %v1429, %v1421
    %v1990 = vpack.c.b16 %v1438, %v1430
    %v1991 = vpack.c.b16 %v1439, %v1431
    %v1992 = vpack.c.b16 %v1440, %v1432
    %v1993 = vpack.c.b16 %v1441, %v1433
    %v1994 = vpack.c.b16 %v1442, %v1434
    %v1995 = vpack.c.b16 %v1443, %v1435
    %v1996 = vpack.c.b16 %v1444, %v1436
    %v1997 = vpack.c.b16 %v1445, %v1437
    %v1998 = vpack.c.b16 %v1454, %v1446
    %v1999 = vpack.c.b16 %v1455, %v1447
    %v2000 = vpack.c.b16 %v1456, %v1448
    %v2001 = vpack.c.b16 %v1457, %v1449
    %v2002 = vpack.c.b16 %v1458, %v1450
    %v2003 = vpack.c.b16 %v1459, %v1451
    %v2004 = vpack.c.b16 %v1460, %v1452
    %v2005 = vpack.c.b16 %v1461, %v1453
    %v2006 = vpack.c.b16 %v1470, %v1462
    %v2007 = vpack.c.b16 %v1471, %v1463
    %v2008 = vpack.c.b16 %v1472, %v1464
    %v2009 = vpack.c.b16 %v1473, %v1465
    %v2010 = vpack.c.b16 %v1474, %v1466
    %v2011 = vpack.c.b16 %v1475, %v1467
    %v2012 = vpack.c.b16 %v1476, %v1468
    %v2013 = vpack.c.b16 %v1477, %v1469
    %v2014 = vpack.c.b16 %v1486, %v1478
    %v2015 = vpack.c.b16 %v1487, %v1479
    %v2016 = vpack.c.b16 %v1488, %v1480
    %v2017 = vpack.c.b16 %v1489, %v1481
    %v2018 = vpack.c.b16 %v1490, %v1482
    %v2019 = vpack.c.b16 %v1491, %v1483
    %v2020 = vpack.c.b16 %v1492, %v1484
    %v2021 = vpack.c.b16 %v1493, %v1485
    %v2022 = vpack.c.b16 %v1502, %v1494
    %v2023 = vpack.c.b16 %v1503, %v1495
    %v2024 = vpack.c.b16 %v1504, %v1496
    %v2025 = vpack.c.b16 %v1505, %v1497
    %v2026 = vpack.c.b16 %v1506, %v1498
    %v2027 = vpack.c.b16 %v1507, %v1499
    %v2028 = vpack.c.b16 %v1508, %v1500
    %v2029 = vpack.c.b16 %v1509, %v1501
    %v2030 = vpack.c.b16 %v1518, %v1510
    %v2031 = vpack.c.b16 %v1519, %v1511
    %v2032 = vpack.c.b16 %v1520, %v1512
    %v2033 = vpack.c.b16 %v1521, %v1513
    %v2034 = vpack.c.b16 %v1522, %v1514
    %v2035 = vpack.c.b16 %v1523, %v1515
    %v2036 = vpack.c.b16 %v1524, %v1516
    %v2037 = vpack.c.b16 %v1525, %v1517
    %v2038 = vpack.c.b16 %v1534, %v1526
    %v2039 = vpack.c.b16 %v1535, %v1527
    %v2040 = vpack.c.b16 %v1536, %v1528
    %v2041 = vpack.c.b16 %v1537, %v1529
    %v2042 = vpack.c.b16 %v1538, %v1530
    %v2043 = vpack.c.b16 %v1539, %v1531
    %v2044 = vpack.c.b16 %v1540, %v1532
    %v2045 = vpack.c.b16 %v1541, %v1533
    %v2046 = vpack.c.b16 %v1550, %v1542
    %v2047 = vpack.c.b16 %v1551, %v1543
    %v2048 = vpack.c.b16 %v1552, %v1544
    %v2049 = vpack.c.b16 %v1553, %v1545
    %v2050 = vpack.c.b16 %v1554, %v1546
    %v2051 = vpack.c.b16 %v1555, %v1547
    %v2052 = vpack.c.b16 %v1556, %v1548
    %v2053 = vpack.c.b16 %v1557, %v1549
    %v2054 = vpack.c.b16 %v1566, %v1558
    %v2055 = vpack.c.b16 %v1567, %v1559
    %v2056 = vpack.c.b16 %v1568, %v1560
    %v2057 = vpack.c.b16 %v1569, %v1561
    %v2058 = vpack.c.b16 %v1570, %v1562
    %v2059 = vpack.c.b16 %v1571, %v1563
    %v2060 = vpack.c.b16 %v1572, %v1564
    %v2061 = vpack.c.b16 %v1573, %v1565
    %v2062 = vpack.c.b16 %v1582, %v1574
    %v2063 = vpack.c.b16 %v1583, %v1575
    %v2064 = vpack.c.b16 %v1584, %v1576
    %v2065 = vpack.c.b16 %v1585, %v1577
    %v2066 = vpack.c.b16 %v1586, %v1578
    %v2067 = vpack.c.b16 %v1587, %v1579
    %v2068 = vpack.c.b16 %v1588, %v1580
    %v2069 = vpack.c.b16 %v1589, %v1581
    %v2070 = vpack.c.b16 %v1598, %v1590
    %v2071 = vpack.c.b16 %v1599, %v1591
    %v2072 = vpack.c.b16 %v1600, %v1592
    %v2073 = vpack.c.b16 %v1601, %v1593
    %v2074 = vpack.c.b16 %v1602, %v1594
    %v2075 = vpack.c.b16 %v1603, %v1595
    %v2076 = vpack.c.b16 %v1604, %v1596
    %v2077 = vpack.c.b16 %v1605, %v1597
    %v2078 = vpack.c.b16 %v1614, %v1606
    %v2079 = vpack.c.b16 %v1615, %v1607
    %v2080 = vpack.c.b16 %v1616, %v1608
    %v2081 = vpack.c.b16 %v1617, %v1609
    %v2082 = vpack.c.b16 %v1618, %v1610
    %v2083 = vpack.c.b16 %v1619, %v1611
    %v2084 = vpack.c.b16 %v1620, %v1612
    %v2085 = vpack.c.b16 %v1621, %v1613
    %v2086 = vpack.c.b16 %v1630, %v1622
    %v2087 = vpack.c.b16 %v1631, %v1623
    %v2088 = vpack.c.b16 %v1632, %v1624
    %v2089 = vpack.c.b16 %v1633, %v1625
    %v2090 = vpack.c.b16 %v1634, %v1626
    %v2091 = vpack.c.b16 %v1635, %v1627
    %v2092 = vpack.c.b16 %v1636, %v1628
    %v2093 = vpack.c.b16 %v1637, %v1629
    %v2094 = vpack.c.b16 %v1646, %v1638
    %v2095 = vpack.c.b16 %v1647, %v1639
    %v2096 = vpack.c.b16 %v1648, %v1640
    %v2097 = vpack.c.b16 %v1649, %v1641
    %v2098 = vpack.c.b16 %v1650, %v1642
    %v2099 = vpack.c.b16 %v1651, %v1643
    %v2100 = vpack.c.b16 %v1652, %v1644
    %v2101 = vpack.c.b16 %v1653, %v1645
    %v2102 = vpack.c.b16 %v1662, %v1654
    %v2103 = vpack.c.b16 %v1663, %v1655
    %v2104 = vpack.c.b16 %v1664, %v1656
    %v2105 = vpack.c.b16 %v1665, %v1657
    %v2106 = vpack.c.b16 %v1666, %v1658
    %v2107 = vpack.c.b16 %v1667, %v1659
    %v2108 = vpack.c.b16 %v1668, %v1660
    %v2109 = vpack.c.b16 %v1669, %v1661
    %v2110 = vpack.c.b16 %v1678, %v1670
    %v2111 = vpack.c.b16 %v1679, %v1671
    %v2112 = vpack.c.b16 %v1680, %v1672
    %v2113 = vpack.c.b16 %v1681, %v1673
    %v2114 = vpack.c.b16 %v1682, %v1674
    %v2115 = vpack.c.b16 %v1683, %v1675
    %v2116 = vpack.c.b16 %v1684, %v1676
    %v2117 = vpack.c.b16 %v1685, %v1677
    %v2118 = vpack.c.b16 %v1694, %v1686
    %v2119 = vpack.c.b16 %v1695, %v1687
    %v2120 = vpack.c.b16 %v1696, %v1688
    %v2121 = vpack.c.b16 %v1697, %v1689
    %v2122 = vpack.c.b16 %v1698, %v1690
    %v2123 = vpack.c.b16 %v1699, %v1691
    %v2124 = vpack.c.b16 %v1700, %v1692
    %v2125 = vpack.c.b16 %v1701, %v1693
    %v2126 = vpack.c.b16 %v1710, %v1702
    %v2127 = vpack.c.b16 %v1711, %v1703
    %v2128 = vpack.c.b16 %v1712, %v1704
    %v2129 = vpack.c.b16 %v1713, %v1705
    %v2130 = vpack.c.b16 %v1714, %v1706
    %v2131 = vpack.c.b16 %v1715, %v1707
    %v2132 = vpack.c.b16 %v1716, %v1708
    %v2133 = vpack.c.b16 %v1717, %v1709
    %v2134 = vpack.c.b16 %v1726, %v1718
    %v2135 = vpack.c.b16 %v1727, %v1719
    %v2136 = vpack.c.b16 %v1728, %v1720
    %v2137 = vpack.c.b16 %v1729, %v1721
    %v2138 = vpack.c.b16 %v1730, %v1722
    %v2139 = vpack.c.b16 %v1731, %v1723
    %v2140 = vpack.c.b16 %v1732, %v1724
    %v2141 = vpack.c.b16 %v1733, %v1725
    %v2142 = vpack.c.b16 %v1742, %v1734
    %v2143 = vpack.c.b16 %v1743, %v1735
    %v2144 = vpack.c.b16 %v1744, %v1736
    %v2145 = vpack.c.b16 %v1745, %v1737
    %v2146 = vpack.c.b16 %v1746, %v1738
    %v2147 = vpack.c.b16 %v1747, %v1739
    %v2148 = vpack.c.b16 %v1748, %v1740
    %v2149 = vpack.c.b16 %v1749, %v1741
    %v2150 = vpack.c.b16 %v1758, %v1750
    %v2151 = vpack.c.b16 %v1759, %v1751
    %v2152 = vpack.c.b16 %v1760, %v1752
    %v2153 = vpack.c.b16 %v1761, %v1753
    %v2154 = vpack.c.b16 %v1762, %v1754
    %v2155 = vpack.c.b16 %v1763, %v1755
    %v2156 = vpack.c.b16 %v1764, %v1756
    %v2157 = vpack.c.b16 %v1765, %v1757
    %v2158 = vpack.c.b16 %v1774, %v1766
    %v2159 = vpack.c.b16 %v1775, %v1767
    %v2160 = vpack.c.b16 %v1776, %v1768
    %v2161 = vpack.c.b16 %v1777, %v1769
    %v2162 = vpack.c.b16 %v1778, %v1770
    %v2163 = vpack.c.b16 %v1779, %v1771
    %v2164 = vpack.c.b16 %v1780, %v1772
    %v2165 = vpack.c.b16 %v1781, %v1773
    %2550 = vmatpush.bf16.msra.mxu0 %v1838
    %2551 = vmatpush.bf16.msra.mxu0 %v1830
    %2552 = vmatpush.bf16.msra.mxu0 %v1822
    %2553 = vmatpush.bf16.msra.mxu0 %v1814
    %2554 = vmatpush.bf16.msra.mxu0 %v1806
    %2555 = vmatpush.bf16.msra.mxu0 %v1798
    %2556 = vmatpush.bf16.msra.mxu0 %v1790
    %2557 = vmatpush.bf16.msra.mxu0 %v1782
    %2558 = vmatmul.bf16.gmra.mxu0 %v222
    %v2559 = vpop.f32.mrf.mxu0
    %v2560 = vadd.f32 %v614, %v2559
    %v2561 = vpop.f32.mrf.mxu0
    %2562 = vdwg.mxu0
    %2563 = vmatpush.bf16.msra.mxu0 %v1902
    %2564 = vmatpush.bf16.msra.mxu0 %v1894
    %2565 = vmatpush.bf16.msra.mxu0 %v1886
    %2566 = vmatpush.bf16.msra.mxu0 %v1878
    %2567 = vmatpush.bf16.msra.mxu0 %v1870
    %2568 = vmatpush.bf16.msra.mxu0 %v1862
    %2569 = vmatpush.bf16.msra.mxu0 %v1854
    %2570 = vmatpush.bf16.msra.mxu0 %v1846
    %2571 = vmatmul.bf16.gmra.mxu0 %v223
    %v2572 = vpop.f32.mrf.mxu0
    %v2573 = vadd.f32 %v2560, %v2572
    %v2574 = vpop.f32.mrf.mxu0
    %2575 = vdwg.mxu0
    %2576 = vmatpush.bf16.msra.mxu0 %v1966
    %2577 = vmatpush.bf16.msra.mxu0 %v1958
    %2578 = vmatpush.bf16.msra.mxu0 %v1950
    %2579 = vmatpush.bf16.msra.mxu0 %v1942
    %2580 = vmatpush.bf16.msra.mxu0 %v1934
    %2581 = vmatpush.bf16.msra.mxu0 %v1926
    %2582 = vmatpush.bf16.msra.mxu0 %v1918
    %2583 = vmatpush.bf16.msra.mxu0 %v1910
    %2584 = vmatmul.bf16.gmra.mxu0 %v224
    %v2585 = vpop.f32.mrf.mxu0
    %v2586 = vadd.f32 %v2573, %v2585
    %v2587 = vpop.f32.mrf.mxu0
    %2588 = vdwg.mxu0
    %2589 = vmatpush.bf16.msra.mxu0 %v2030
    %2590 = vmatpush.bf16.msra.mxu0 %v2022
    %2591 = vmatpush.bf16.msra.mxu0 %v2014
    %2592 = vmatpush.bf16.msra.mxu0 %v2006
    %2593 = vmatpush.bf16.msra.mxu0 %v1998
    %2594 = vmatpush.bf16.msra.mxu0 %v1990
    %2595 = vmatpush.bf16.msra.mxu0 %v1982
    %2596 = vmatpush.bf16.msra.mxu0 %v1974
    %2597 = vmatmul.bf16.gmra.mxu0 %v225
    %v2598 = vpop.f32.mrf.mxu0
    %v2599 = vadd.f32 %v2586, %v2598
    %v2600 = vpop.f32.mrf.mxu0
    %2601 = vdwg.mxu0
    %2602 = vmatpush.bf16.msra.mxu0 %v2094
    %2603 = vmatpush.bf16.msra.mxu0 %v2086
    %2604 = vmatpush.bf16.msra.mxu0 %v2078
    %2605 = vmatpush.bf16.msra.mxu0 %v2070
    %2606 = vmatpush.bf16.msra.mxu0 %v2062
    %2607 = vmatpush.bf16.msra.mxu0 %v2054
    %2608 = vmatpush.bf16.msra.mxu0 %v2046
    %2609 = vmatpush.bf16.msra.mxu0 %v2038
    %2610 = vmatmul.bf16.gmra.mxu0 %v226
    %v2611 = vpop.f32.mrf.mxu0
    %v2612 = vadd.f32 %v2599, %v2611
    %v2613 = vpop.f32.mrf.mxu0
    %2614 = vdwg.mxu0
    %2615 = vmatpush.bf16.msra.mxu0 %v2158
    %2616 = vmatpush.bf16.msra.mxu0 %v2150
    %2617 = vmatpush.bf16.msra.mxu0 %v2142
    %2618 = vmatpush.bf16.msra.mxu0 %v2134
    %2619 = vmatpush.bf16.msra.mxu0 %v2126
    %2620 = vmatpush.bf16.msra.mxu0 %v2118
    %2621 = vmatpush.bf16.msra.mxu0 %v2110
    %2622 = vmatpush.bf16.msra.mxu0 %v2102
    %2623 = vmatmul.bf16.gmra.mxu0 %v227
    %v2624 = vpop.f32.mrf.mxu0
    %v2625 = vadd.f32 %v2612, %v2624
    %v2626 = vpop.f32.mrf.mxu0
    %2627 = vdwg.mxu0
    %2628 = vmatpush.bf16.msra.mxu0 %v1839
    %2629 = vmatpush.bf16.msra.mxu0 %v1831
    %2630 = vmatpush.bf16.msra.mxu0 %v1823
    %2631 = vmatpush.bf16.msra.mxu0 %v1815
    %2632 = vmatpush.bf16.msra.mxu0 %v1807
    %2633 = vmatpush.bf16.msra.mxu0 %v1799
    %2634 = vmatpush.bf16.msra.mxu0 %v1791
    %2635 = vmatpush.bf16.msra.mxu0 %v1783
    %2636 = vmatmul.bf16.gmra.mxu0 %v222
    %v2637 = vpop.f32.mrf.mxu0
    %v2638 = vadd.f32 %v615, %v2637
    %v2639 = vpop.f32.mrf.mxu0
    %2640 = vdwg.mxu0
    %2641 = vmatpush.bf16.msra.mxu0 %v1903
    %2642 = vmatpush.bf16.msra.mxu0 %v1895
    %2643 = vmatpush.bf16.msra.mxu0 %v1887
    %2644 = vmatpush.bf16.msra.mxu0 %v1879
    %2645 = vmatpush.bf16.msra.mxu0 %v1871
    %2646 = vmatpush.bf16.msra.mxu0 %v1863
    %2647 = vmatpush.bf16.msra.mxu0 %v1855
    %2648 = vmatpush.bf16.msra.mxu0 %v1847
    %2649 = vmatmul.bf16.gmra.mxu0 %v223
    %v2650 = vpop.f32.mrf.mxu0
    %v2651 = vadd.f32 %v2638, %v2650
    %v2652 = vpop.f32.mrf.mxu0
    %2653 = vdwg.mxu0
    %2654 = vmatpush.bf16.msra.mxu0 %v1967
    %2655 = vmatpush.bf16.msra.mxu0 %v1959
    %2656 = vmatpush.bf16.msra.mxu0 %v1951
    %2657 = vmatpush.bf16.msra.mxu0 %v1943
    %2658 = vmatpush.bf16.msra.mxu0 %v1935
    %2659 = vmatpush.bf16.msra.mxu0 %v1927
    %2660 = vmatpush.bf16.msra.mxu0 %v1919
    %2661 = vmatpush.bf16.msra.mxu0 %v1911
    %2662 = vmatmul.bf16.gmra.mxu0 %v224
    %v2663 = vpop.f32.mrf.mxu0
    %v2664 = vadd.f32 %v2651, %v2663
    %v2665 = vpop.f32.mrf.mxu0
    %2666 = vdwg.mxu0
    %2667 = vmatpush.bf16.msra.mxu0 %v2031
    %2668 = vmatpush.bf16.msra.mxu0 %v2023
    %2669 = vmatpush.bf16.msra.mxu0 %v2015
    %2670 = vmatpush.bf16.msra.mxu0 %v2007
    %2671 = vmatpush.bf16.msra.mxu0 %v1999
    %2672 = vmatpush.bf16.msra.mxu0 %v1991
    %2673 = vmatpush.bf16.msra.mxu0 %v1983
    %2674 = vmatpush.bf16.msra.mxu0 %v1975
    %2675 = vmatmul.bf16.gmra.mxu0 %v225
    %v2676 = vpop.f32.mrf.mxu0
    %v2677 = vadd.f32 %v2664, %v2676
    %v2678 = vpop.f32.mrf.mxu0
    %2679 = vdwg.mxu0
    %2680 = vmatpush.bf16.msra.mxu0 %v2095
    %2681 = vmatpush.bf16.msra.mxu0 %v2087
    %2682 = vmatpush.bf16.msra.mxu0 %v2079
    %2683 = vmatpush.bf16.msra.mxu0 %v2071
    %2684 = vmatpush.bf16.msra.mxu0 %v2063
    %2685 = vmatpush.bf16.msra.mxu0 %v2055
    %2686 = vmatpush.bf16.msra.mxu0 %v2047
    %2687 = vmatpush.bf16.msra.mxu0 %v2039
    %2688 = vmatmul.bf16.gmra.mxu0 %v226
    %v2689 = vpop.f32.mrf.mxu0
    %v2690 = vadd.f32 %v2677, %v2689
    %v2691 = vpop.f32.mrf.mxu0
    %2692 = vdwg.mxu0
    %2693 = vmatpush.bf16.msra.mxu0 %v2159
    %2694 = vmatpush.bf16.msra.mxu0 %v2151
    %2695 = vmatpush.bf16.msra.mxu0 %v2143
    %2696 = vmatpush.bf16.msra.mxu0 %v2135
    %2697 = vmatpush.bf16.msra.mxu0 %v2127
    %2698 = vmatpush.bf16.msra.mxu0 %v2119
    %2699 = vmatpush.bf16.msra.mxu0 %v2111
    %2700 = vmatpush.bf16.msra.mxu0 %v2103
    %2701 = vmatmul.bf16.gmra.mxu0 %v227
    %v2702 = vpop.f32.mrf.mxu0
    %v2703 = vadd.f32 %v2690, %v2702
    %v2704 = vpop.f32.mrf.mxu0
    %2705 = vdwg.mxu0
    %2706 = vmatpush.bf16.msra.mxu0 %v1840
    %2707 = vmatpush.bf16.msra.mxu0 %v1832
    %2708 = vmatpush.bf16.msra.mxu0 %v1824
    %2709 = vmatpush.bf16.msra.mxu0 %v1816
    %2710 = vmatpush.bf16.msra.mxu0 %v1808
    %2711 = vmatpush.bf16.msra.mxu0 %v1800
    %2712 = vmatpush.bf16.msra.mxu0 %v1792
    %2713 = vmatpush.bf16.msra.mxu0 %v1784
    %2714 = vmatmul.bf16.gmra.mxu0 %v222
    %v2715 = vpop.f32.mrf.mxu0
    %v2716 = vadd.f32 %v616, %v2715
    %v2717 = vpop.f32.mrf.mxu0
    %2718 = vdwg.mxu0
    %2719 = vmatpush.bf16.msra.mxu0 %v1904
    %2720 = vmatpush.bf16.msra.mxu0 %v1896
    %2721 = vmatpush.bf16.msra.mxu0 %v1888
    %2722 = vmatpush.bf16.msra.mxu0 %v1880
    %2723 = vmatpush.bf16.msra.mxu0 %v1872
    %2724 = vmatpush.bf16.msra.mxu0 %v1864
    %2725 = vmatpush.bf16.msra.mxu0 %v1856
    %2726 = vmatpush.bf16.msra.mxu0 %v1848
    %2727 = vmatmul.bf16.gmra.mxu0 %v223
    %v2728 = vpop.f32.mrf.mxu0
    %v2729 = vadd.f32 %v2716, %v2728
    %v2730 = vpop.f32.mrf.mxu0
    %2731 = vdwg.mxu0
    %2732 = vmatpush.bf16.msra.mxu0 %v1968
    %2733 = vmatpush.bf16.msra.mxu0 %v1960
    %2734 = vmatpush.bf16.msra.mxu0 %v1952
    %2735 = vmatpush.bf16.msra.mxu0 %v1944
    %2736 = vmatpush.bf16.msra.mxu0 %v1936
    %2737 = vmatpush.bf16.msra.mxu0 %v1928
    %2738 = vmatpush.bf16.msra.mxu0 %v1920
    %2739 = vmatpush.bf16.msra.mxu0 %v1912
    %2740 = vmatmul.bf16.gmra.mxu0 %v224
    %v2741 = vpop.f32.mrf.mxu0
    %v2742 = vadd.f32 %v2729, %v2741
    %v2743 = vpop.f32.mrf.mxu0
    %2744 = vdwg.mxu0
    %2745 = vmatpush.bf16.msra.mxu0 %v2032
    %2746 = vmatpush.bf16.msra.mxu0 %v2024
    %2747 = vmatpush.bf16.msra.mxu0 %v2016
    %2748 = vmatpush.bf16.msra.mxu0 %v2008
    %2749 = vmatpush.bf16.msra.mxu0 %v2000
    %2750 = vmatpush.bf16.msra.mxu0 %v1992
    %2751 = vmatpush.bf16.msra.mxu0 %v1984
    %2752 = vmatpush.bf16.msra.mxu0 %v1976
    %2753 = vmatmul.bf16.gmra.mxu0 %v225
    %v2754 = vpop.f32.mrf.mxu0
    %v2755 = vadd.f32 %v2742, %v2754
    %v2756 = vpop.f32.mrf.mxu0
    %2757 = vdwg.mxu0
    %2758 = vmatpush.bf16.msra.mxu0 %v2096
    %2759 = vmatpush.bf16.msra.mxu0 %v2088
    %2760 = vmatpush.bf16.msra.mxu0 %v2080
    %2761 = vmatpush.bf16.msra.mxu0 %v2072
    %2762 = vmatpush.bf16.msra.mxu0 %v2064
    %2763 = vmatpush.bf16.msra.mxu0 %v2056
    %2764 = vmatpush.bf16.msra.mxu0 %v2048
    %2765 = vmatpush.bf16.msra.mxu0 %v2040
    %2766 = vmatmul.bf16.gmra.mxu0 %v226
    %v2767 = vpop.f32.mrf.mxu0
    %v2768 = vadd.f32 %v2755, %v2767
    %v2769 = vpop.f32.mrf.mxu0
    %2770 = vdwg.mxu0
    %2771 = vmatpush.bf16.msra.mxu0 %v2160
    %2772 = vmatpush.bf16.msra.mxu0 %v2152
    %2773 = vmatpush.bf16.msra.mxu0 %v2144
    %2774 = vmatpush.bf16.msra.mxu0 %v2136
    %2775 = vmatpush.bf16.msra.mxu0 %v2128
    %2776 = vmatpush.bf16.msra.mxu0 %v2120
    %2777 = vmatpush.bf16.msra.mxu0 %v2112
    %2778 = vmatpush.bf16.msra.mxu0 %v2104
    %2779 = vmatmul.bf16.gmra.mxu0 %v227
    %v2780 = vpop.f32.mrf.mxu0
    %v2781 = vadd.f32 %v2768, %v2780
    %v2782 = vpop.f32.mrf.mxu0
    %2783 = vdwg.mxu0
    %2784 = vmatpush.bf16.msra.mxu0 %v1841
    %2785 = vmatpush.bf16.msra.mxu0 %v1833
    %2786 = vmatpush.bf16.msra.mxu0 %v1825
    %2787 = vmatpush.bf16.msra.mxu0 %v1817
    %2788 = vmatpush.bf16.msra.mxu0 %v1809
    %2789 = vmatpush.bf16.msra.mxu0 %v1801
    %2790 = vmatpush.bf16.msra.mxu0 %v1793
    %2791 = vmatpush.bf16.msra.mxu0 %v1785
    %2792 = vmatmul.bf16.gmra.mxu0 %v222
    %v2793 = vpop.f32.mrf.mxu0
    %v2794 = vadd.f32 %v617, %v2793
    %v2795 = vpop.f32.mrf.mxu0
    %2796 = vdwg.mxu0
    %2797 = vmatpush.bf16.msra.mxu0 %v1905
    %2798 = vmatpush.bf16.msra.mxu0 %v1897
    %2799 = vmatpush.bf16.msra.mxu0 %v1889
    %2800 = vmatpush.bf16.msra.mxu0 %v1881
    %2801 = vmatpush.bf16.msra.mxu0 %v1873
    %2802 = vmatpush.bf16.msra.mxu0 %v1865
    %2803 = vmatpush.bf16.msra.mxu0 %v1857
    %2804 = vmatpush.bf16.msra.mxu0 %v1849
    %2805 = vmatmul.bf16.gmra.mxu0 %v223
    %v2806 = vpop.f32.mrf.mxu0
    %v2807 = vadd.f32 %v2794, %v2806
    %v2808 = vpop.f32.mrf.mxu0
    %2809 = vdwg.mxu0
    %2810 = vmatpush.bf16.msra.mxu0 %v1969
    %2811 = vmatpush.bf16.msra.mxu0 %v1961
    %2812 = vmatpush.bf16.msra.mxu0 %v1953
    %2813 = vmatpush.bf16.msra.mxu0 %v1945
    %2814 = vmatpush.bf16.msra.mxu0 %v1937
    %2815 = vmatpush.bf16.msra.mxu0 %v1929
    %2816 = vmatpush.bf16.msra.mxu0 %v1921
    %2817 = vmatpush.bf16.msra.mxu0 %v1913
    %2818 = vmatmul.bf16.gmra.mxu0 %v224
    %v2819 = vpop.f32.mrf.mxu0
    %v2820 = vadd.f32 %v2807, %v2819
    %v2821 = vpop.f32.mrf.mxu0
    %2822 = vdwg.mxu0
    %2823 = vmatpush.bf16.msra.mxu0 %v2033
    %2824 = vmatpush.bf16.msra.mxu0 %v2025
    %2825 = vmatpush.bf16.msra.mxu0 %v2017
    %2826 = vmatpush.bf16.msra.mxu0 %v2009
    %2827 = vmatpush.bf16.msra.mxu0 %v2001
    %2828 = vmatpush.bf16.msra.mxu0 %v1993
    %2829 = vmatpush.bf16.msra.mxu0 %v1985
    %2830 = vmatpush.bf16.msra.mxu0 %v1977
    %2831 = vmatmul.bf16.gmra.mxu0 %v225
    %v2832 = vpop.f32.mrf.mxu0
    %v2833 = vadd.f32 %v2820, %v2832
    %v2834 = vpop.f32.mrf.mxu0
    %2835 = vdwg.mxu0
    %2836 = vmatpush.bf16.msra.mxu0 %v2097
    %2837 = vmatpush.bf16.msra.mxu0 %v2089
    %2838 = vmatpush.bf16.msra.mxu0 %v2081
    %2839 = vmatpush.bf16.msra.mxu0 %v2073
    %2840 = vmatpush.bf16.msra.mxu0 %v2065
    %2841 = vmatpush.bf16.msra.mxu0 %v2057
    %2842 = vmatpush.bf16.msra.mxu0 %v2049
    %2843 = vmatpush.bf16.msra.mxu0 %v2041
    %2844 = vmatmul.bf16.gmra.mxu0 %v226
    %v2845 = vpop.f32.mrf.mxu0
    %v2846 = vadd.f32 %v2833, %v2845
    %v2847 = vpop.f32.mrf.mxu0
    %2848 = vdwg.mxu0
    %2849 = vmatpush.bf16.msra.mxu0 %v2161
    %2850 = vmatpush.bf16.msra.mxu0 %v2153
    %2851 = vmatpush.bf16.msra.mxu0 %v2145
    %2852 = vmatpush.bf16.msra.mxu0 %v2137
    %2853 = vmatpush.bf16.msra.mxu0 %v2129
    %2854 = vmatpush.bf16.msra.mxu0 %v2121
    %2855 = vmatpush.bf16.msra.mxu0 %v2113
    %2856 = vmatpush.bf16.msra.mxu0 %v2105
    %2857 = vmatmul.bf16.gmra.mxu0 %v227
    %v2858 = vpop.f32.mrf.mxu0
    %v2859 = vadd.f32 %v2846, %v2858
    %v2860 = vpop.f32.mrf.mxu0
    %2861 = vdwg.mxu0
    %2862 = vmatpush.bf16.msra.mxu0 %v1842
    %2863 = vmatpush.bf16.msra.mxu0 %v1834
    %2864 = vmatpush.bf16.msra.mxu0 %v1826
    %2865 = vmatpush.bf16.msra.mxu0 %v1818
    %2866 = vmatpush.bf16.msra.mxu0 %v1810
    %2867 = vmatpush.bf16.msra.mxu0 %v1802
    %2868 = vmatpush.bf16.msra.mxu0 %v1794
    %2869 = vmatpush.bf16.msra.mxu0 %v1786
    %2870 = vmatmul.bf16.gmra.mxu0 %v222
    %v2871 = vpop.f32.mrf.mxu0
    %v2872 = vadd.f32 %v618, %v2871
    %v2873 = vpop.f32.mrf.mxu0
    %2874 = vdwg.mxu0
    %2875 = vmatpush.bf16.msra.mxu0 %v1906
    %2876 = vmatpush.bf16.msra.mxu0 %v1898
    %2877 = vmatpush.bf16.msra.mxu0 %v1890
    %2878 = vmatpush.bf16.msra.mxu0 %v1882
    %2879 = vmatpush.bf16.msra.mxu0 %v1874
    %2880 = vmatpush.bf16.msra.mxu0 %v1866
    %2881 = vmatpush.bf16.msra.mxu0 %v1858
    %2882 = vmatpush.bf16.msra.mxu0 %v1850
    %2883 = vmatmul.bf16.gmra.mxu0 %v223
    %v2884 = vpop.f32.mrf.mxu0
    %v2885 = vadd.f32 %v2872, %v2884
    %v2886 = vpop.f32.mrf.mxu0
    %2887 = vdwg.mxu0
    %2888 = vmatpush.bf16.msra.mxu0 %v1970
    %2889 = vmatpush.bf16.msra.mxu0 %v1962
    %2890 = vmatpush.bf16.msra.mxu0 %v1954
    %2891 = vmatpush.bf16.msra.mxu0 %v1946
    %2892 = vmatpush.bf16.msra.mxu0 %v1938
    %2893 = vmatpush.bf16.msra.mxu0 %v1930
    %2894 = vmatpush.bf16.msra.mxu0 %v1922
    %2895 = vmatpush.bf16.msra.mxu0 %v1914
    %2896 = vmatmul.bf16.gmra.mxu0 %v224
    %v2897 = vpop.f32.mrf.mxu0
    %v2898 = vadd.f32 %v2885, %v2897
    %v2899 = vpop.f32.mrf.mxu0
    %2900 = vdwg.mxu0
    %2901 = vmatpush.bf16.msra.mxu0 %v2034
    %2902 = vmatpush.bf16.msra.mxu0 %v2026
    %2903 = vmatpush.bf16.msra.mxu0 %v2018
    %2904 = vmatpush.bf16.msra.mxu0 %v2010
    %2905 = vmatpush.bf16.msra.mxu0 %v2002
    %2906 = vmatpush.bf16.msra.mxu0 %v1994
    %2907 = vmatpush.bf16.msra.mxu0 %v1986
    %2908 = vmatpush.bf16.msra.mxu0 %v1978
    %2909 = vmatmul.bf16.gmra.mxu0 %v225
    %v2910 = vpop.f32.mrf.mxu0
    %v2911 = vadd.f32 %v2898, %v2910
    %v2912 = vpop.f32.mrf.mxu0
    %2913 = vdwg.mxu0
    %2914 = vmatpush.bf16.msra.mxu0 %v2098
    %2915 = vmatpush.bf16.msra.mxu0 %v2090
    %2916 = vmatpush.bf16.msra.mxu0 %v2082
    %2917 = vmatpush.bf16.msra.mxu0 %v2074
    %2918 = vmatpush.bf16.msra.mxu0 %v2066
    %2919 = vmatpush.bf16.msra.mxu0 %v2058
    %2920 = vmatpush.bf16.msra.mxu0 %v2050
    %2921 = vmatpush.bf16.msra.mxu0 %v2042
    %2922 = vmatmul.bf16.gmra.mxu0 %v226
    %v2923 = vpop.f32.mrf.mxu0
    %v2924 = vadd.f32 %v2911, %v2923
    %v2925 = vpop.f32.mrf.mxu0
    %2926 = vdwg.mxu0
    %2927 = vmatpush.bf16.msra.mxu0 %v2162
    %2928 = vmatpush.bf16.msra.mxu0 %v2154
    %2929 = vmatpush.bf16.msra.mxu0 %v2146
    %2930 = vmatpush.bf16.msra.mxu0 %v2138
    %2931 = vmatpush.bf16.msra.mxu0 %v2130
    %2932 = vmatpush.bf16.msra.mxu0 %v2122
    %2933 = vmatpush.bf16.msra.mxu0 %v2114
    %2934 = vmatpush.bf16.msra.mxu0 %v2106
    %2935 = vmatmul.bf16.gmra.mxu0 %v227
    %v2936 = vpop.f32.mrf.mxu0
    %v2937 = vadd.f32 %v2924, %v2936
    %v2938 = vpop.f32.mrf.mxu0
    %2939 = vdwg.mxu0
    %2940 = vmatpush.bf16.msra.mxu0 %v1843
    %2941 = vmatpush.bf16.msra.mxu0 %v1835
    %2942 = vmatpush.bf16.msra.mxu0 %v1827
    %2943 = vmatpush.bf16.msra.mxu0 %v1819
    %2944 = vmatpush.bf16.msra.mxu0 %v1811
    %2945 = vmatpush.bf16.msra.mxu0 %v1803
    %2946 = vmatpush.bf16.msra.mxu0 %v1795
    %2947 = vmatpush.bf16.msra.mxu0 %v1787
    %2948 = vmatmul.bf16.gmra.mxu0 %v222
    %v2949 = vpop.f32.mrf.mxu0
    %v2950 = vadd.f32 %v619, %v2949
    %v2951 = vpop.f32.mrf.mxu0
    %2952 = vdwg.mxu0
    %2953 = vmatpush.bf16.msra.mxu0 %v1907
    %2954 = vmatpush.bf16.msra.mxu0 %v1899
    %2955 = vmatpush.bf16.msra.mxu0 %v1891
    %2956 = vmatpush.bf16.msra.mxu0 %v1883
    %2957 = vmatpush.bf16.msra.mxu0 %v1875
    %2958 = vmatpush.bf16.msra.mxu0 %v1867
    %2959 = vmatpush.bf16.msra.mxu0 %v1859
    %2960 = vmatpush.bf16.msra.mxu0 %v1851
    %2961 = vmatmul.bf16.gmra.mxu0 %v223
    %v2962 = vpop.f32.mrf.mxu0
    %v2963 = vadd.f32 %v2950, %v2962
    %v2964 = vpop.f32.mrf.mxu0
    %2965 = vdwg.mxu0
    %2966 = vmatpush.bf16.msra.mxu0 %v1971
    %2967 = vmatpush.bf16.msra.mxu0 %v1963
    %2968 = vmatpush.bf16.msra.mxu0 %v1955
    %2969 = vmatpush.bf16.msra.mxu0 %v1947
    %2970 = vmatpush.bf16.msra.mxu0 %v1939
    %2971 = vmatpush.bf16.msra.mxu0 %v1931
    %2972 = vmatpush.bf16.msra.mxu0 %v1923
    %2973 = vmatpush.bf16.msra.mxu0 %v1915
    %2974 = vmatmul.bf16.gmra.mxu0 %v224
    %v2975 = vpop.f32.mrf.mxu0
    %v2976 = vadd.f32 %v2963, %v2975
    %v2977 = vpop.f32.mrf.mxu0
    %2978 = vdwg.mxu0
    %2979 = vmatpush.bf16.msra.mxu0 %v2035
    %2980 = vmatpush.bf16.msra.mxu0 %v2027
    %2981 = vmatpush.bf16.msra.mxu0 %v2019
    %2982 = vmatpush.bf16.msra.mxu0 %v2011
    %2983 = vmatpush.bf16.msra.mxu0 %v2003
    %2984 = vmatpush.bf16.msra.mxu0 %v1995
    %2985 = vmatpush.bf16.msra.mxu0 %v1987
    %2986 = vmatpush.bf16.msra.mxu0 %v1979
    %2987 = vmatmul.bf16.gmra.mxu0 %v225
    %v2988 = vpop.f32.mrf.mxu0
    %v2989 = vadd.f32 %v2976, %v2988
    %v2990 = vpop.f32.mrf.mxu0
    %2991 = vdwg.mxu0
    %2992 = vmatpush.bf16.msra.mxu0 %v2099
    %2993 = vmatpush.bf16.msra.mxu0 %v2091
    %2994 = vmatpush.bf16.msra.mxu0 %v2083
    %2995 = vmatpush.bf16.msra.mxu0 %v2075
    %2996 = vmatpush.bf16.msra.mxu0 %v2067
    %2997 = vmatpush.bf16.msra.mxu0 %v2059
    %2998 = vmatpush.bf16.msra.mxu0 %v2051
    %2999 = vmatpush.bf16.msra.mxu0 %v2043
    %3000 = vmatmul.bf16.gmra.mxu0 %v226
    %v3001 = vpop.f32.mrf.mxu0
    %v3002 = vadd.f32 %v2989, %v3001
    %v3003 = vpop.f32.mrf.mxu0
    %3004 = vdwg.mxu0
    %3005 = vmatpush.bf16.msra.mxu0 %v2163
    %3006 = vmatpush.bf16.msra.mxu0 %v2155
    %3007 = vmatpush.bf16.msra.mxu0 %v2147
    %3008 = vmatpush.bf16.msra.mxu0 %v2139
    %3009 = vmatpush.bf16.msra.mxu0 %v2131
    %3010 = vmatpush.bf16.msra.mxu0 %v2123
    %3011 = vmatpush.bf16.msra.mxu0 %v2115
    %3012 = vmatpush.bf16.msra.mxu0 %v2107
    %3013 = vmatmul.bf16.gmra.mxu0 %v227
    %v3014 = vpop.f32.mrf.mxu0
    %v3015 = vadd.f32 %v3002, %v3014
    %v3016 = vpop.f32.mrf.mxu0
    %3017 = vdwg.mxu0
    %3018 = vmatpush.bf16.msra.mxu0 %v1844
    %3019 = vmatpush.bf16.msra.mxu0 %v1836
    %3020 = vmatpush.bf16.msra.mxu0 %v1828
    %3021 = vmatpush.bf16.msra.mxu0 %v1820
    %3022 = vmatpush.bf16.msra.mxu0 %v1812
    %3023 = vmatpush.bf16.msra.mxu0 %v1804
    %3024 = vmatpush.bf16.msra.mxu0 %v1796
    %3025 = vmatpush.bf16.msra.mxu0 %v1788
    %3026 = vmatmul.bf16.gmra.mxu0 %v222
    %v3027 = vpop.f32.mrf.mxu0
    %v3028 = vadd.f32 %v620, %v3027
    %v3029 = vpop.f32.mrf.mxu0
    %3030 = vdwg.mxu0
    %3031 = vmatpush.bf16.msra.mxu0 %v1908
    %3032 = vmatpush.bf16.msra.mxu0 %v1900
    %3033 = vmatpush.bf16.msra.mxu0 %v1892
    %3034 = vmatpush.bf16.msra.mxu0 %v1884
    %3035 = vmatpush.bf16.msra.mxu0 %v1876
    %3036 = vmatpush.bf16.msra.mxu0 %v1868
    %3037 = vmatpush.bf16.msra.mxu0 %v1860
    %3038 = vmatpush.bf16.msra.mxu0 %v1852
    %3039 = vmatmul.bf16.gmra.mxu0 %v223
    %v3040 = vpop.f32.mrf.mxu0
    %v3041 = vadd.f32 %v3028, %v3040
    %v3042 = vpop.f32.mrf.mxu0
    %3043 = vdwg.mxu0
    %3044 = vmatpush.bf16.msra.mxu0 %v1972
    %3045 = vmatpush.bf16.msra.mxu0 %v1964
    %3046 = vmatpush.bf16.msra.mxu0 %v1956
    %3047 = vmatpush.bf16.msra.mxu0 %v1948
    %3048 = vmatpush.bf16.msra.mxu0 %v1940
    %3049 = vmatpush.bf16.msra.mxu0 %v1932
    %3050 = vmatpush.bf16.msra.mxu0 %v1924
    %3051 = vmatpush.bf16.msra.mxu0 %v1916
    %3052 = vmatmul.bf16.gmra.mxu0 %v224
    %v3053 = vpop.f32.mrf.mxu0
    %v3054 = vadd.f32 %v3041, %v3053
    %v3055 = vpop.f32.mrf.mxu0
    %3056 = vdwg.mxu0
    %3057 = vmatpush.bf16.msra.mxu0 %v2036
    %3058 = vmatpush.bf16.msra.mxu0 %v2028
    %3059 = vmatpush.bf16.msra.mxu0 %v2020
    %3060 = vmatpush.bf16.msra.mxu0 %v2012
    %3061 = vmatpush.bf16.msra.mxu0 %v2004
    %3062 = vmatpush.bf16.msra.mxu0 %v1996
    %3063 = vmatpush.bf16.msra.mxu0 %v1988
    %3064 = vmatpush.bf16.msra.mxu0 %v1980
    %3065 = vmatmul.bf16.gmra.mxu0 %v225
    %v3066 = vpop.f32.mrf.mxu0
    %v3067 = vadd.f32 %v3054, %v3066
    %v3068 = vpop.f32.mrf.mxu0
    %3069 = vdwg.mxu0
    %3070 = vmatpush.bf16.msra.mxu0 %v2100
    %3071 = vmatpush.bf16.msra.mxu0 %v2092
    %3072 = vmatpush.bf16.msra.mxu0 %v2084
    %3073 = vmatpush.bf16.msra.mxu0 %v2076
    %3074 = vmatpush.bf16.msra.mxu0 %v2068
    %3075 = vmatpush.bf16.msra.mxu0 %v2060
    %3076 = vmatpush.bf16.msra.mxu0 %v2052
    %3077 = vmatpush.bf16.msra.mxu0 %v2044
    %3078 = vmatmul.bf16.gmra.mxu0 %v226
    %v3079 = vpop.f32.mrf.mxu0
    %v3080 = vadd.f32 %v3067, %v3079
    %v3081 = vpop.f32.mrf.mxu0
    %3082 = vdwg.mxu0
    %3083 = vmatpush.bf16.msra.mxu0 %v2164
    %3084 = vmatpush.bf16.msra.mxu0 %v2156
    %3085 = vmatpush.bf16.msra.mxu0 %v2148
    %3086 = vmatpush.bf16.msra.mxu0 %v2140
    %3087 = vmatpush.bf16.msra.mxu0 %v2132
    %3088 = vmatpush.bf16.msra.mxu0 %v2124
    %3089 = vmatpush.bf16.msra.mxu0 %v2116
    %3090 = vmatpush.bf16.msra.mxu0 %v2108
    %3091 = vmatmul.bf16.gmra.mxu0 %v227
    %v3092 = vpop.f32.mrf.mxu0
    %v3093 = vadd.f32 %v3080, %v3092
    %v3094 = vpop.f32.mrf.mxu0
    %3095 = vdwg.mxu0
    %3096 = vmatpush.bf16.msra.mxu0 %v1845
    %3097 = vmatpush.bf16.msra.mxu0 %v1837
    %3098 = vmatpush.bf16.msra.mxu0 %v1829
    %3099 = vmatpush.bf16.msra.mxu0 %v1821
    %3100 = vmatpush.bf16.msra.mxu0 %v1813
    %3101 = vmatpush.bf16.msra.mxu0 %v1805
    %3102 = vmatpush.bf16.msra.mxu0 %v1797
    %3103 = vmatpush.bf16.msra.mxu0 %v1789
    %3104 = vmatmul.bf16.gmra.mxu0 %v222
    %v3105 = vpop.f32.mrf.mxu0
    %v3106 = vadd.f32 %v621, %v3105
    %v3107 = vpop.f32.mrf.mxu0
    %3108 = vdwg.mxu0
    %3109 = vmatpush.bf16.msra.mxu0 %v1909
    %3110 = vmatpush.bf16.msra.mxu0 %v1901
    %3111 = vmatpush.bf16.msra.mxu0 %v1893
    %3112 = vmatpush.bf16.msra.mxu0 %v1885
    %3113 = vmatpush.bf16.msra.mxu0 %v1877
    %3114 = vmatpush.bf16.msra.mxu0 %v1869
    %3115 = vmatpush.bf16.msra.mxu0 %v1861
    %3116 = vmatpush.bf16.msra.mxu0 %v1853
    %3117 = vmatmul.bf16.gmra.mxu0 %v223
    %v3118 = vpop.f32.mrf.mxu0
    %v3119 = vadd.f32 %v3106, %v3118
    %v3120 = vpop.f32.mrf.mxu0
    %3121 = vdwg.mxu0
    %3122 = vmatpush.bf16.msra.mxu0 %v1973
    %3123 = vmatpush.bf16.msra.mxu0 %v1965
    %3124 = vmatpush.bf16.msra.mxu0 %v1957
    %3125 = vmatpush.bf16.msra.mxu0 %v1949
    %3126 = vmatpush.bf16.msra.mxu0 %v1941
    %3127 = vmatpush.bf16.msra.mxu0 %v1933
    %3128 = vmatpush.bf16.msra.mxu0 %v1925
    %3129 = vmatpush.bf16.msra.mxu0 %v1917
    %3130 = vmatmul.bf16.gmra.mxu0 %v224
    %v3131 = vpop.f32.mrf.mxu0
    %v3132 = vadd.f32 %v3119, %v3131
    %v3133 = vpop.f32.mrf.mxu0
    %3134 = vdwg.mxu0
    %3135 = vmatpush.bf16.msra.mxu0 %v2037
    %3136 = vmatpush.bf16.msra.mxu0 %v2029
    %3137 = vmatpush.bf16.msra.mxu0 %v2021
    %3138 = vmatpush.bf16.msra.mxu0 %v2013
    %3139 = vmatpush.bf16.msra.mxu0 %v2005
    %3140 = vmatpush.bf16.msra.mxu0 %v1997
    %3141 = vmatpush.bf16.msra.mxu0 %v1989
    %3142 = vmatpush.bf16.msra.mxu0 %v1981
    %3143 = vmatmul.bf16.gmra.mxu0 %v225
    %v3144 = vpop.f32.mrf.mxu0
    %v3145 = vadd.f32 %v3132, %v3144
    %v3146 = vpop.f32.mrf.mxu0
    %3147 = vdwg.mxu0
    %3148 = vmatpush.bf16.msra.mxu0 %v2101
    %3149 = vmatpush.bf16.msra.mxu0 %v2093
    %3150 = vmatpush.bf16.msra.mxu0 %v2085
    %3151 = vmatpush.bf16.msra.mxu0 %v2077
    %3152 = vmatpush.bf16.msra.mxu0 %v2069
    %3153 = vmatpush.bf16.msra.mxu0 %v2061
    %3154 = vmatpush.bf16.msra.mxu0 %v2053
    %3155 = vmatpush.bf16.msra.mxu0 %v2045
    %3156 = vmatmul.bf16.gmra.mxu0 %v226
    %v3157 = vpop.f32.mrf.mxu0
    %v3158 = vadd.f32 %v3145, %v3157
    %v3159 = vpop.f32.mrf.mxu0
    %3160 = vdwg.mxu0
    %3161 = vmatpush.bf16.msra.mxu0 %v2165
    %3162 = vmatpush.bf16.msra.mxu0 %v2157
    %3163 = vmatpush.bf16.msra.mxu0 %v2149
    %3164 = vmatpush.bf16.msra.mxu0 %v2141
    %3165 = vmatpush.bf16.msra.mxu0 %v2133
    %3166 = vmatpush.bf16.msra.mxu0 %v2125
    %3167 = vmatpush.bf16.msra.mxu0 %v2117
    %3168 = vmatpush.bf16.msra.mxu0 %v2109
    %3169 = vmatmul.bf16.gmra.mxu0 %v227
    %v3170 = vpop.f32.mrf.mxu0
    %v3171 = vadd.f32 %v3158, %v3170
    %v3172 = vpop.f32.mrf.mxu0
    %3173 = vdwg.mxu0
    %v3174 = vsub.f32 0.0, %v2625
    %v3175 = vsub.f32 0.0, %v2703
    %v3176 = vsub.f32 0.0, %v2781
    %v3177 = vsub.f32 0.0, %v2859
    %v3178 = vsub.f32 0.0, %v2937
    %v3179 = vsub.f32 0.0, %v3015
    %v3180 = vsub.f32 0.0, %v3093
    %v3181 = vsub.f32 0.0, %v3171
    %v3182 = vmul.f32 %v3174, 1.442695
    %v3183 = vpow.pop %v3182
    %v3184 = vmul.f32 %v3175, 1.442695
    %v3185 = vpow.pop %v3184
    %v3186 = vmul.f32 %v3176, 1.442695
    %v3187 = vpow.pop %v3186
    %v3188 = vmul.f32 %v3177, 1.442695
    %v3189 = vpow.pop %v3188
    %v3190 = vmul.f32 %v3178, 1.442695
    %v3191 = vpow.pop %v3190
    %v3192 = vmul.f32 %v3179, 1.442695
    %v3193 = vpow.pop %v3192
    %v3194 = vmul.f32 %v3180, 1.442695
    %v3195 = vpow.pop %v3194
    %v3196 = vmul.f32 %v3181, 1.442695
    %v3197 = vpow.pop %v3196
    %v3198 = vadd.f32 %v3183, 1.0
    %v3199 = vadd.f32 %v3185, 1.0
    %v3200 = vadd.f32 %v3187, 1.0
    %v3201 = vadd.f32 %v3189, 1.0
    %v3202 = vadd.f32 %v3191, 1.0
    %v3203 = vadd.f32 %v3193, 1.0
    %v3204 = vadd.f32 %v3195, 1.0
    %v3205 = vadd.f32 %v3197, 1.0
    %v3206 = vrcp.pop %v3198
    %v3207 = vmul.f32 %v3198, %v3206
    %v3208 = vsub.f32 1.0, %v3207
    %v3209 = vmul.f32 %v3206, %v3208
    %v3210 = vadd.f32 %v3206, %v3209
    %vm3211 = vweird.f32 %v3198
    %vm3212 = vweird.f32 %v3206
    %vm3213 = vmor %vm3211, %vm3212
    %v3214 = vsel %vm3213, %v3206, %v3210
    %v3215 = vand.u32 2147483647, %v3198
    %vm3216 = vcmp.eq.f32.partialorder %v3215, 8.507059e+37
    %v3217 = vand.u32 %v3198, 2147483648
    %v3218 = vor.u32 1.1754944e-38, %v3217
    %v3219 = vsel %vm3216, %v3218, %v3214
    %v3220 = vmul.f32 1.0, %v3219
    %v3221 = vrcp.pop %v3199
    %v3222 = vmul.f32 %v3199, %v3221
    %v3223 = vsub.f32 1.0, %v3222
    %v3224 = vmul.f32 %v3221, %v3223
    %v3225 = vadd.f32 %v3221, %v3224
    %vm3226 = vweird.f32 %v3199
    %vm3227 = vweird.f32 %v3221
    %vm3228 = vmor %vm3226, %vm3227
    %v3229 = vsel %vm3228, %v3221, %v3225
    %v3230 = vand.u32 2147483647, %v3199
    %vm3231 = vcmp.eq.f32.partialorder %v3230, 8.507059e+37
    %v3232 = vand.u32 %v3199, 2147483648
    %v3233 = vor.u32 1.1754944e-38, %v3232
    %v3234 = vsel %vm3231, %v3233, %v3229
    %v3235 = vmul.f32 1.0, %v3234
    %v3236 = vrcp.pop %v3200
    %v3237 = vmul.f32 %v3200, %v3236
    %v3238 = vsub.f32 1.0, %v3237
    %v3239 = vmul.f32 %v3236, %v3238
    %v3240 = vadd.f32 %v3236, %v3239
    %vm3241 = vweird.f32 %v3200
    %vm3242 = vweird.f32 %v3236
    %vm3243 = vmor %vm3241, %vm3242
    %v3244 = vsel %vm3243, %v3236, %v3240
    %v3245 = vand.u32 2147483647, %v3200
    %vm3246 = vcmp.eq.f32.partialorder %v3245, 8.507059e+37
    %v3247 = vand.u32 %v3200, 2147483648
    %v3248 = vor.u32 1.1754944e-38, %v3247
    %v3249 = vsel %vm3246, %v3248, %v3244
    %v3250 = vmul.f32 1.0, %v3249
    %v3251 = vrcp.pop %v3201
    %v3252 = vmul.f32 %v3201, %v3251
    %v3253 = vsub.f32 1.0, %v3252
    %v3254 = vmul.f32 %v3251, %v3253
    %v3255 = vadd.f32 %v3251, %v3254
    %vm3256 = vweird.f32 %v3201
    %vm3257 = vweird.f32 %v3251
    %vm3258 = vmor %vm3256, %vm3257
    %v3259 = vsel %vm3258, %v3251, %v3255
    %v3260 = vand.u32 2147483647, %v3201
    %vm3261 = vcmp.eq.f32.partialorder %v3260, 8.507059e+37
    %v3262 = vand.u32 %v3201, 2147483648
    %v3263 = vor.u32 1.1754944e-38, %v3262
    %v3264 = vsel %vm3261, %v3263, %v3259
    %v3265 = vmul.f32 1.0, %v3264
    %v3266 = vrcp.pop %v3202
    %v3267 = vmul.f32 %v3202, %v3266
    %v3268 = vsub.f32 1.0, %v3267
    %v3269 = vmul.f32 %v3266, %v3268
    %v3270 = vadd.f32 %v3266, %v3269
    %vm3271 = vweird.f32 %v3202
    %vm3272 = vweird.f32 %v3266
    %vm3273 = vmor %vm3271, %vm3272
    %v3274 = vsel %vm3273, %v3266, %v3270
    %v3275 = vand.u32 2147483647, %v3202
    %vm3276 = vcmp.eq.f32.partialorder %v3275, 8.507059e+37
    %v3277 = vand.u32 %v3202, 2147483648
    %v3278 = vor.u32 1.1754944e-38, %v3277
    %v3279 = vsel %vm3276, %v3278, %v3274
    %v3280 = vmul.f32 1.0, %v3279
    %v3281 = vrcp.pop %v3203
    %v3282 = vmul.f32 %v3203, %v3281
    %v3283 = vsub.f32 1.0, %v3282
    %v3284 = vmul.f32 %v3281, %v3283
    %v3285 = vadd.f32 %v3281, %v3284
    %vm3286 = vweird.f32 %v3203
    %vm3287 = vweird.f32 %v3281
    %vm3288 = vmor %vm3286, %vm3287
    %v3289 = vsel %vm3288, %v3281, %v3285
    %v3290 = vand.u32 2147483647, %v3203
    %vm3291 = vcmp.eq.f32.partialorder %v3290, 8.507059e+37
    %v3292 = vand.u32 %v3203, 2147483648
    %v3293 = vor.u32 1.1754944e-38, %v3292
    %v3294 = vsel %vm3291, %v3293, %v3289
    %v3295 = vmul.f32 1.0, %v3294
    %v3296 = vrcp.pop %v3204
    %v3297 = vmul.f32 %v3204, %v3296
    %v3298 = vsub.f32 1.0, %v3297
    %v3299 = vmul.f32 %v3296, %v3298
    %v3300 = vadd.f32 %v3296, %v3299
    %vm3301 = vweird.f32 %v3204
    %vm3302 = vweird.f32 %v3296
    %vm3303 = vmor %vm3301, %vm3302
    %v3304 = vsel %vm3303, %v3296, %v3300
    %v3305 = vand.u32 2147483647, %v3204
    %vm3306 = vcmp.eq.f32.partialorder %v3305, 8.507059e+37
    %v3307 = vand.u32 %v3204, 2147483648
    %v3308 = vor.u32 1.1754944e-38, %v3307
    %v3309 = vsel %vm3306, %v3308, %v3304
    %v3310 = vmul.f32 1.0, %v3309
    %v3311 = vrcp.pop %v3205
    %v3312 = vmul.f32 %v3205, %v3311
    %v3313 = vsub.f32 1.0, %v3312
    %v3314 = vmul.f32 %v3311, %v3313
    %v3315 = vadd.f32 %v3311, %v3314
    %vm3316 = vweird.f32 %v3205
    %vm3317 = vweird.f32 %v3311
    %vm3318 = vmor %vm3316, %vm3317
    %v3319 = vsel %vm3318, %v3311, %v3315
    %v3320 = vand.u32 2147483647, %v3205
    %vm3321 = vcmp.eq.f32.partialorder %v3320, 8.507059e+37
    %v3322 = vand.u32 %v3205, 2147483648
    %v3323 = vor.u32 1.1754944e-38, %v3322
    %v3324 = vsel %vm3321, %v3323, %v3319
    %v3325 = vmul.f32 1.0, %v3324
    %v3326 = vmul.f32 %v2625, %v3220
    %v3327 = vmul.f32 %v2703, %v3235
    %v3328 = vmul.f32 %v2781, %v3250
    %v3329 = vmul.f32 %v2859, %v3265
    %v3330 = vmul.f32 %v2937, %v3280
    %v3331 = vmul.f32 %v3015, %v3295
    %v3332 = vmul.f32 %v3093, %v3310
    %v3333 = vmul.f32 %v3171, %v3325
    %v3334 = vpack.c.bf16 %v3326, %v3326
    %v3335 = vpack.c.bf16 %v3327, %v3327
    %v3336 = vpack.c.bf16 %v3328, %v3328
    %v3337 = vpack.c.bf16 %v3329, %v3329
    %v3338 = vpack.c.bf16 %v3330, %v3330
    %v3339 = vpack.c.bf16 %v3331, %v3331
    %v3340 = vpack.c.bf16 %v3332, %v3332
    %v3341 = vpack.c.bf16 %v3333, %v3333
    %v3342 = vld [vmem:[#allocation7] sm:$0xff]
    %v3343 = vld [vmem:[#allocation7 + $0x8] sm:$0xff]
    %v3344 = vld [vmem:[#allocation7 + $0x10] sm:$0xff]
    %v3345 = vld [vmem:[#allocation7 + $0x18] sm:$0xff]
    %v3346 = vld [vmem:[#allocation7 + $0x20] sm:$0xff]
    %v3347 = vld [vmem:[#allocation7 + $0x28] sm:$0xff]
    %v3348 = vld [vmem:[#allocation7 + $0x30] sm:$0xff]
    %v3349 = vld [vmem:[#allocation7 + $0x38] sm:$0xff]
    %v3350 = vld [vmem:[#allocation7 + $0x40] sm:$0xff]
    %v3351 = vld [vmem:[#allocation7 + $0x48] sm:$0xff]
    %v3352 = vld [vmem:[#allocation7 + $0x50] sm:$0xff]
    %v3353 = vld [vmem:[#allocation7 + $0x58] sm:$0xff]
    %v3354 = vld [vmem:[#allocation7 + $0x60] sm:$0xff]
    %v3355 = vld [vmem:[#allocation7 + $0x68] sm:$0xff]
    %v3356 = vld [vmem:[#allocation7 + $0x70] sm:$0xff]
    %v3357 = vld [vmem:[#allocation7 + $0x78] sm:$0xff]
    %v3358 = vld [vmem:[#allocation7 + $0x80] sm:$0xff]
    %v3359 = vld [vmem:[#allocation7 + $0x88] sm:$0xff]
    %v3360 = vld [vmem:[#allocation7 + $0x90] sm:$0xff]
    %v3361 = vld [vmem:[#allocation7 + $0x98] sm:$0xff]
    %v3362 = vld [vmem:[#allocation7 + $0xa0] sm:$0xff]
    %v3363 = vld [vmem:[#allocation7 + $0xa8] sm:$0xff]
    %v3364 = vld [vmem:[#allocation7 + $0xb0] sm:$0xff]
    %v3365 = vld [vmem:[#allocation7 + $0xb8] sm:$0xff]
    %v3366 = vld [vmem:[#allocation7 + $0xc0] sm:$0xff]
    %v3367 = vld [vmem:[#allocation7 + $0xc8] sm:$0xff]
    %v3368 = vld [vmem:[#allocation7 + $0xd0] sm:$0xff]
    %v3369 = vld [vmem:[#allocation7 + $0xd8] sm:$0xff]
    %v3370 = vld [vmem:[#allocation7 + $0xe0] sm:$0xff]
    %v3371 = vld [vmem:[#allocation7 + $0xe8] sm:$0xff]
    %v3372 = vld [vmem:[#allocation7 + $0xf0] sm:$0xff]
    %v3373 = vld [vmem:[#allocation7 + $0xf8] sm:$0xff]
    %v3374 = vld [vmem:[#allocation7 + $0x100] sm:$0xff]
    %v3375 = vld [vmem:[#allocation7 + $0x108] sm:$0xff]
    %v3376 = vld [vmem:[#allocation7 + $0x110] sm:$0xff]
    %v3377 = vld [vmem:[#allocation7 + $0x118] sm:$0xff]
    %v3378 = vld [vmem:[#allocation7 + $0x120] sm:$0xff]
    %v3379 = vld [vmem:[#allocation7 + $0x128] sm:$0xff]
    %v3380 = vld [vmem:[#allocation7 + $0x130] sm:$0xff]
    %v3381 = vld [vmem:[#allocation7 + $0x138] sm:$0xff]
    %v3382 = vld [vmem:[#allocation7 + $0x140] sm:$0xff]
    %v3383 = vld [vmem:[#allocation7 + $0x148] sm:$0xff]
    %v3384 = vld [vmem:[#allocation7 + $0x150] sm:$0xff]
    %v3385 = vld [vmem:[#allocation7 + $0x158] sm:$0xff]
    %v3386 = vld [vmem:[#allocation7 + $0x160] sm:$0xff]
    %v3387 = vld [vmem:[#allocation7 + $0x168] sm:$0xff]
    %v3388 = vld [vmem:[#allocation7 + $0x170] sm:$0xff]
    %v3389 = vld [vmem:[#allocation7 + $0x178] sm:$0xff]
    %v3390 = vld [vmem:[#allocation7 + $0x180] sm:$0xff]
    %v3391 = vld [vmem:[#allocation7 + $0x188] sm:$0xff]
    %v3392 = vld [vmem:[#allocation7 + $0x190] sm:$0xff]
    %v3393 = vld [vmem:[#allocation7 + $0x198] sm:$0xff]
    %v3394 = vld [vmem:[#allocation7 + $0x1a0] sm:$0xff]
    %v3395 = vld [vmem:[#allocation7 + $0x1a8] sm:$0xff]
    %v3396 = vld [vmem:[#allocation7 + $0x1b0] sm:$0xff]
    %v3397 = vld [vmem:[#allocation7 + $0x1b8] sm:$0xff]
    %v3398 = vld [vmem:[#allocation7 + $0x1c0] sm:$0xff]
    %v3399 = vld [vmem:[#allocation7 + $0x1c8] sm:$0xff]
    %v3400 = vld [vmem:[#allocation7 + $0x1d0] sm:$0xff]
    %v3401 = vld [vmem:[#allocation7 + $0x1d8] sm:$0xff]
    %v3402 = vld [vmem:[#allocation7 + $0x1e0] sm:$0xff]
    %v3403 = vld [vmem:[#allocation7 + $0x1e8] sm:$0xff]
    %v3404 = vld [vmem:[#allocation7 + $0x1f0] sm:$0xff]
    %v3405 = vld [vmem:[#allocation7 + $0x1f8] sm:$0xff]
    %v3406 = vld [vmem:[#allocation7 + $0x200] sm:$0xff]
    %v3407 = vld [vmem:[#allocation7 + $0x208] sm:$0xff]
    %v3408 = vld [vmem:[#allocation7 + $0x210] sm:$0xff]
    %v3409 = vld [vmem:[#allocation7 + $0x218] sm:$0xff]
    %v3410 = vld [vmem:[#allocation7 + $0x220] sm:$0xff]
    %v3411 = vld [vmem:[#allocation7 + $0x228] sm:$0xff]
    %v3412 = vld [vmem:[#allocation7 + $0x230] sm:$0xff]
    %v3413 = vld [vmem:[#allocation7 + $0x238] sm:$0xff]
    %v3414 = vld [vmem:[#allocation7 + $0x240] sm:$0xff]
    %v3415 = vld [vmem:[#allocation7 + $0x248] sm:$0xff]
    %v3416 = vld [vmem:[#allocation7 + $0x250] sm:$0xff]
    %v3417 = vld [vmem:[#allocation7 + $0x258] sm:$0xff]
    %v3418 = vld [vmem:[#allocation7 + $0x260] sm:$0xff]
    %v3419 = vld [vmem:[#allocation7 + $0x268] sm:$0xff]
    %v3420 = vld [vmem:[#allocation7 + $0x270] sm:$0xff]
    %v3421 = vld [vmem:[#allocation7 + $0x278] sm:$0xff]
    %v3422 = vld [vmem:[#allocation7 + $0x280] sm:$0xff]
    %v3423 = vld [vmem:[#allocation7 + $0x288] sm:$0xff]
    %v3424 = vld [vmem:[#allocation7 + $0x290] sm:$0xff]
    %v3425 = vld [vmem:[#allocation7 + $0x298] sm:$0xff]
    %v3426 = vld [vmem:[#allocation7 + $0x2a0] sm:$0xff]
    %v3427 = vld [vmem:[#allocation7 + $0x2a8] sm:$0xff]
    %v3428 = vld [vmem:[#allocation7 + $0x2b0] sm:$0xff]
    %v3429 = vld [vmem:[#allocation7 + $0x2b8] sm:$0xff]
    %v3430 = vld [vmem:[#allocation7 + $0x2c0] sm:$0xff]
    %v3431 = vld [vmem:[#allocation7 + $0x2c8] sm:$0xff]
    %v3432 = vld [vmem:[#allocation7 + $0x2d0] sm:$0xff]
    %v3433 = vld [vmem:[#allocation7 + $0x2d8] sm:$0xff]
    %v3434 = vld [vmem:[#allocation7 + $0x2e0] sm:$0xff]
    %v3435 = vld [vmem:[#allocation7 + $0x2e8] sm:$0xff]
    %v3436 = vld [vmem:[#allocation7 + $0x2f0] sm:$0xff]
    %v3437 = vld [vmem:[#allocation7 + $0x2f8] sm:$0xff]
    %v3438 = vld [vmem:[#allocation7 + $0x300] sm:$0xff]
    %v3439 = vld [vmem:[#allocation7 + $0x308] sm:$0xff]
    %v3440 = vld [vmem:[#allocation7 + $0x310] sm:$0xff]
    %v3441 = vld [vmem:[#allocation7 + $0x318] sm:$0xff]
    %v3442 = vld [vmem:[#allocation7 + $0x320] sm:$0xff]
    %v3443 = vld [vmem:[#allocation7 + $0x328] sm:$0xff]
    %v3444 = vld [vmem:[#allocation7 + $0x330] sm:$0xff]
    %v3445 = vld [vmem:[#allocation7 + $0x338] sm:$0xff]
    %v3446 = vld [vmem:[#allocation7 + $0x340] sm:$0xff]
    %v3447 = vld [vmem:[#allocation7 + $0x348] sm:$0xff]
    %v3448 = vld [vmem:[#allocation7 + $0x350] sm:$0xff]
    %v3449 = vld [vmem:[#allocation7 + $0x358] sm:$0xff]
    %v3450 = vld [vmem:[#allocation7 + $0x360] sm:$0xff]
    %v3451 = vld [vmem:[#allocation7 + $0x368] sm:$0xff]
    %v3452 = vld [vmem:[#allocation7 + $0x370] sm:$0xff]
    %v3453 = vld [vmem:[#allocation7 + $0x378] sm:$0xff]
    %v3454 = vld [vmem:[#allocation7 + $0x380] sm:$0xff]
    %v3455 = vld [vmem:[#allocation7 + $0x388] sm:$0xff]
    %v3456 = vld [vmem:[#allocation7 + $0x390] sm:$0xff]
    %v3457 = vld [vmem:[#allocation7 + $0x398] sm:$0xff]
    %v3458 = vld [vmem:[#allocation7 + $0x3a0] sm:$0xff]
    %v3459 = vld [vmem:[#allocation7 + $0x3a8] sm:$0xff]
    %v3460 = vld [vmem:[#allocation7 + $0x3b0] sm:$0xff]
    %v3461 = vld [vmem:[#allocation7 + $0x3b8] sm:$0xff]
    %v3462 = vld [vmem:[#allocation7 + $0x3c0] sm:$0xff]
    %v3463 = vld [vmem:[#allocation7 + $0x3c8] sm:$0xff]
    %v3464 = vld [vmem:[#allocation7 + $0x3d0] sm:$0xff]
    %v3465 = vld [vmem:[#allocation7 + $0x3d8] sm:$0xff]
    %v3466 = vld [vmem:[#allocation7 + $0x3e0] sm:$0xff]
    %v3467 = vld [vmem:[#allocation7 + $0x3e8] sm:$0xff]
    %v3468 = vld [vmem:[#allocation7 + $0x3f0] sm:$0xff]
    %v3469 = vld [vmem:[#allocation7 + $0x3f8] sm:$0xff]
    %v3470 = vld [vmem:[#allocation7 + $0x400] sm:$0xff]
    %v3471 = vld [vmem:[#allocation7 + $0x408] sm:$0xff]
    %v3472 = vld [vmem:[#allocation7 + $0x410] sm:$0xff]
    %v3473 = vld [vmem:[#allocation7 + $0x418] sm:$0xff]
    %v3474 = vld [vmem:[#allocation7 + $0x420] sm:$0xff]
    %v3475 = vld [vmem:[#allocation7 + $0x428] sm:$0xff]
    %v3476 = vld [vmem:[#allocation7 + $0x430] sm:$0xff]
    %v3477 = vld [vmem:[#allocation7 + $0x438] sm:$0xff]
    %v3478 = vld [vmem:[#allocation7 + $0x440] sm:$0xff]
    %v3479 = vld [vmem:[#allocation7 + $0x448] sm:$0xff]
    %v3480 = vld [vmem:[#allocation7 + $0x450] sm:$0xff]
    %v3481 = vld [vmem:[#allocation7 + $0x458] sm:$0xff]
    %v3482 = vld [vmem:[#allocation7 + $0x460] sm:$0xff]
    %v3483 = vld [vmem:[#allocation7 + $0x468] sm:$0xff]
    %v3484 = vld [vmem:[#allocation7 + $0x470] sm:$0xff]
    %v3485 = vld [vmem:[#allocation7 + $0x478] sm:$0xff]
    %v3486 = vld [vmem:[#allocation7 + $0x480] sm:$0xff]
    %v3487 = vld [vmem:[#allocation7 + $0x488] sm:$0xff]
    %v3488 = vld [vmem:[#allocation7 + $0x490] sm:$0xff]
    %v3489 = vld [vmem:[#allocation7 + $0x498] sm:$0xff]
    %v3490 = vld [vmem:[#allocation7 + $0x4a0] sm:$0xff]
    %v3491 = vld [vmem:[#allocation7 + $0x4a8] sm:$0xff]
    %v3492 = vld [vmem:[#allocation7 + $0x4b0] sm:$0xff]
    %v3493 = vld [vmem:[#allocation7 + $0x4b8] sm:$0xff]
    %v3494 = vld [vmem:[#allocation7 + $0x4c0] sm:$0xff]
    %v3495 = vld [vmem:[#allocation7 + $0x4c8] sm:$0xff]
    %v3496 = vld [vmem:[#allocation7 + $0x4d0] sm:$0xff]
    %v3497 = vld [vmem:[#allocation7 + $0x4d8] sm:$0xff]
    %v3498 = vld [vmem:[#allocation7 + $0x4e0] sm:$0xff]
    %v3499 = vld [vmem:[#allocation7 + $0x4e8] sm:$0xff]
    %v3500 = vld [vmem:[#allocation7 + $0x4f0] sm:$0xff]
    %v3501 = vld [vmem:[#allocation7 + $0x4f8] sm:$0xff]
    %v3502 = vld [vmem:[#allocation7 + $0x500] sm:$0xff]
    %v3503 = vld [vmem:[#allocation7 + $0x508] sm:$0xff]
    %v3504 = vld [vmem:[#allocation7 + $0x510] sm:$0xff]
    %v3505 = vld [vmem:[#allocation7 + $0x518] sm:$0xff]
    %v3506 = vld [vmem:[#allocation7 + $0x520] sm:$0xff]
    %v3507 = vld [vmem:[#allocation7 + $0x528] sm:$0xff]
    %v3508 = vld [vmem:[#allocation7 + $0x530] sm:$0xff]
    %v3509 = vld [vmem:[#allocation7 + $0x538] sm:$0xff]
    %v3510 = vld [vmem:[#allocation7 + $0x540] sm:$0xff]
    %v3511 = vld [vmem:[#allocation7 + $0x548] sm:$0xff]
    %v3512 = vld [vmem:[#allocation7 + $0x550] sm:$0xff]
    %v3513 = vld [vmem:[#allocation7 + $0x558] sm:$0xff]
    %v3514 = vld [vmem:[#allocation7 + $0x560] sm:$0xff]
    %v3515 = vld [vmem:[#allocation7 + $0x568] sm:$0xff]
    %v3516 = vld [vmem:[#allocation7 + $0x570] sm:$0xff]
    %v3517 = vld [vmem:[#allocation7 + $0x578] sm:$0xff]
    %v3518 = vld [vmem:[#allocation7 + $0x580] sm:$0xff]
    %v3519 = vld [vmem:[#allocation7 + $0x588] sm:$0xff]
    %v3520 = vld [vmem:[#allocation7 + $0x590] sm:$0xff]
    %v3521 = vld [vmem:[#allocation7 + $0x598] sm:$0xff]
    %v3522 = vld [vmem:[#allocation7 + $0x5a0] sm:$0xff]
    %v3523 = vld [vmem:[#allocation7 + $0x5a8] sm:$0xff]
    %v3524 = vld [vmem:[#allocation7 + $0x5b0] sm:$0xff]
    %v3525 = vld [vmem:[#allocation7 + $0x5b8] sm:$0xff]
    %v3526 = vld [vmem:[#allocation7 + $0x5c0] sm:$0xff]
    %v3527 = vld [vmem:[#allocation7 + $0x5c8] sm:$0xff]
    %v3528 = vld [vmem:[#allocation7 + $0x5d0] sm:$0xff]
    %v3529 = vld [vmem:[#allocation7 + $0x5d8] sm:$0xff]
    %v3530 = vld [vmem:[#allocation7 + $0x5e0] sm:$0xff]
    %v3531 = vld [vmem:[#allocation7 + $0x5e8] sm:$0xff]
    %v3532 = vld [vmem:[#allocation7 + $0x5f0] sm:$0xff]
    %v3533 = vld [vmem:[#allocation7 + $0x5f8] sm:$0xff]
    %v3534 = vld [vmem:[#allocation7 + $0x600] sm:$0xff]
    %v3535 = vld [vmem:[#allocation7 + $0x608] sm:$0xff]
    %v3536 = vld [vmem:[#allocation7 + $0x610] sm:$0xff]
    %v3537 = vld [vmem:[#allocation7 + $0x618] sm:$0xff]
    %v3538 = vld [vmem:[#allocation7 + $0x620] sm:$0xff]
    %v3539 = vld [vmem:[#allocation7 + $0x628] sm:$0xff]
    %v3540 = vld [vmem:[#allocation7 + $0x630] sm:$0xff]
    %v3541 = vld [vmem:[#allocation7 + $0x638] sm:$0xff]
    %v3542 = vld [vmem:[#allocation7 + $0x640] sm:$0xff]
    %v3543 = vld [vmem:[#allocation7 + $0x648] sm:$0xff]
    %v3544 = vld [vmem:[#allocation7 + $0x650] sm:$0xff]
    %v3545 = vld [vmem:[#allocation7 + $0x658] sm:$0xff]
    %v3546 = vld [vmem:[#allocation7 + $0x660] sm:$0xff]
    %v3547 = vld [vmem:[#allocation7 + $0x668] sm:$0xff]
    %v3548 = vld [vmem:[#allocation7 + $0x670] sm:$0xff]
    %v3549 = vld [vmem:[#allocation7 + $0x678] sm:$0xff]
    %v3550 = vld [vmem:[#allocation7 + $0x680] sm:$0xff]
    %v3551 = vld [vmem:[#allocation7 + $0x688] sm:$0xff]
    %v3552 = vld [vmem:[#allocation7 + $0x690] sm:$0xff]
    %v3553 = vld [vmem:[#allocation7 + $0x698] sm:$0xff]
    %v3554 = vld [vmem:[#allocation7 + $0x6a0] sm:$0xff]
    %v3555 = vld [vmem:[#allocation7 + $0x6a8] sm:$0xff]
    %v3556 = vld [vmem:[#allocation7 + $0x6b0] sm:$0xff]
    %v3557 = vld [vmem:[#allocation7 + $0x6b8] sm:$0xff]
    %v3558 = vld [vmem:[#allocation7 + $0x6c0] sm:$0xff]
    %v3559 = vld [vmem:[#allocation7 + $0x6c8] sm:$0xff]
    %v3560 = vld [vmem:[#allocation7 + $0x6d0] sm:$0xff]
    %v3561 = vld [vmem:[#allocation7 + $0x6d8] sm:$0xff]
    %v3562 = vld [vmem:[#allocation7 + $0x6e0] sm:$0xff]
    %v3563 = vld [vmem:[#allocation7 + $0x6e8] sm:$0xff]
    %v3564 = vld [vmem:[#allocation7 + $0x6f0] sm:$0xff]
    %v3565 = vld [vmem:[#allocation7 + $0x6f8] sm:$0xff]
    %v3566 = vld [vmem:[#allocation7 + $0x700] sm:$0xff]
    %v3567 = vld [vmem:[#allocation7 + $0x708] sm:$0xff]
    %v3568 = vld [vmem:[#allocation7 + $0x710] sm:$0xff]
    %v3569 = vld [vmem:[#allocation7 + $0x718] sm:$0xff]
    %v3570 = vld [vmem:[#allocation7 + $0x720] sm:$0xff]
    %v3571 = vld [vmem:[#allocation7 + $0x728] sm:$0xff]
    %v3572 = vld [vmem:[#allocation7 + $0x730] sm:$0xff]
    %v3573 = vld [vmem:[#allocation7 + $0x738] sm:$0xff]
    %v3574 = vld [vmem:[#allocation7 + $0x740] sm:$0xff]
    %v3575 = vld [vmem:[#allocation7 + $0x748] sm:$0xff]
    %v3576 = vld [vmem:[#allocation7 + $0x750] sm:$0xff]
    %v3577 = vld [vmem:[#allocation7 + $0x758] sm:$0xff]
    %v3578 = vld [vmem:[#allocation7 + $0x760] sm:$0xff]
    %v3579 = vld [vmem:[#allocation7 + $0x768] sm:$0xff]
    %v3580 = vld [vmem:[#allocation7 + $0x770] sm:$0xff]
    %v3581 = vld [vmem:[#allocation7 + $0x778] sm:$0xff]
    %v3582 = vld [vmem:[#allocation7 + $0x780] sm:$0xff]
    %v3583 = vld [vmem:[#allocation7 + $0x788] sm:$0xff]
    %v3584 = vld [vmem:[#allocation7 + $0x790] sm:$0xff]
    %v3585 = vld [vmem:[#allocation7 + $0x798] sm:$0xff]
    %v3586 = vld [vmem:[#allocation7 + $0x7a0] sm:$0xff]
    %v3587 = vld [vmem:[#allocation7 + $0x7a8] sm:$0xff]
    %v3588 = vld [vmem:[#allocation7 + $0x7b0] sm:$0xff]
    %v3589 = vld [vmem:[#allocation7 + $0x7b8] sm:$0xff]
    %v3590 = vld [vmem:[#allocation7 + $0x7c0] sm:$0xff]
    %v3591 = vld [vmem:[#allocation7 + $0x7c8] sm:$0xff]
    %v3592 = vld [vmem:[#allocation7 + $0x7d0] sm:$0xff]
    %v3593 = vld [vmem:[#allocation7 + $0x7d8] sm:$0xff]
    %v3594 = vld [vmem:[#allocation7 + $0x7e0] sm:$0xff]
    %v3595 = vld [vmem:[#allocation7 + $0x7e8] sm:$0xff]
    %v3596 = vld [vmem:[#allocation7 + $0x7f0] sm:$0xff]
    %v3597 = vld [vmem:[#allocation7 + $0x7f8] sm:$0xff]
    %v3598 = vld [vmem:[#allocation8] sm:$0xf]
    %v3600 = vperm.slane %v3598, 0
    %v3601 = vperm.slane %v3598, 1
    %v3602 = vperm.slane %v3598, 2
    %v3603 = vperm.slane %v3598, 3
    %v3864 = vunpack.c.l.b16 %v3342
    %v3865 = vunpack.c.h.b16 %v3342
    %v3866 = vunpack.c.l.b16 %v3343
    %v3867 = vunpack.c.h.b16 %v3343
    %v3868 = vunpack.c.l.b16 %v3344
    %v3869 = vunpack.c.h.b16 %v3344
    %v3870 = vunpack.c.l.b16 %v3345
    %v3871 = vunpack.c.h.b16 %v3345
    %v3872 = vunpack.c.l.b16 %v3346
    %v3873 = vunpack.c.h.b16 %v3346
    %v3874 = vunpack.c.l.b16 %v3347
    %v3875 = vunpack.c.h.b16 %v3347
    %v3876 = vunpack.c.l.b16 %v3348
    %v3877 = vunpack.c.h.b16 %v3348
    %v3878 = vunpack.c.l.b16 %v3349
    %v3879 = vunpack.c.h.b16 %v3349
    %v3880 = vunpack.c.l.b16 %v3350
    %v3881 = vunpack.c.h.b16 %v3350
    %v3882 = vunpack.c.l.b16 %v3351
    %v3883 = vunpack.c.h.b16 %v3351
    %v3884 = vunpack.c.l.b16 %v3352
    %v3885 = vunpack.c.h.b16 %v3352
    %v3886 = vunpack.c.l.b16 %v3353
    %v3887 = vunpack.c.h.b16 %v3353
    %v3888 = vunpack.c.l.b16 %v3354
    %v3889 = vunpack.c.h.b16 %v3354
    %v3890 = vunpack.c.l.b16 %v3355
    %v3891 = vunpack.c.h.b16 %v3355
    %v3892 = vunpack.c.l.b16 %v3356
    %v3893 = vunpack.c.h.b16 %v3356
    %v3894 = vunpack.c.l.b16 %v3357
    %v3895 = vunpack.c.h.b16 %v3357
    %v3896 = vunpack.c.l.b16 %v3358
    %v3897 = vunpack.c.h.b16 %v3358
    %v3898 = vunpack.c.l.b16 %v3359
    %v3899 = vunpack.c.h.b16 %v3359
    %v3900 = vunpack.c.l.b16 %v3360
    %v3901 = vunpack.c.h.b16 %v3360
    %v3902 = vunpack.c.l.b16 %v3361
    %v3903 = vunpack.c.h.b16 %v3361
    %v3904 = vunpack.c.l.b16 %v3362
    %v3905 = vunpack.c.h.b16 %v3362
    %v3906 = vunpack.c.l.b16 %v3363
    %v3907 = vunpack.c.h.b16 %v3363
    %v3908 = vunpack.c.l.b16 %v3364
    %v3909 = vunpack.c.h.b16 %v3364
    %v3910 = vunpack.c.l.b16 %v3365
    %v3911 = vunpack.c.h.b16 %v3365
    %v3912 = vunpack.c.l.b16 %v3366
    %v3913 = vunpack.c.h.b16 %v3366
    %v3914 = vunpack.c.l.b16 %v3367
    %v3915 = vunpack.c.h.b16 %v3367
    %v3916 = vunpack.c.l.b16 %v3368
    %v3917 = vunpack.c.h.b16 %v3368
    %v3918 = vunpack.c.l.b16 %v3369
    %v3919 = vunpack.c.h.b16 %v3369
    %v3920 = vunpack.c.l.b16 %v3370
    %v3921 = vunpack.c.h.b16 %v3370
    %v3922 = vunpack.c.l.b16 %v3371
    %v3923 = vunpack.c.h.b16 %v3371
    %v3924 = vunpack.c.l.b16 %v3372
    %v3925 = vunpack.c.h.b16 %v3372
    %v3926 = vunpack.c.l.b16 %v3373
    %v3927 = vunpack.c.h.b16 %v3373
    %v3928 = vunpack.c.l.b16 %v3374
    %v3929 = vunpack.c.h.b16 %v3374
    %v3930 = vunpack.c.l.b16 %v3375
    %v3931 = vunpack.c.h.b16 %v3375
    %v3932 = vunpack.c.l.b16 %v3376
    %v3933 = vunpack.c.h.b16 %v3376
    %v3934 = vunpack.c.l.b16 %v3377
    %v3935 = vunpack.c.h.b16 %v3377
    %v3936 = vunpack.c.l.b16 %v3378
    %v3937 = vunpack.c.h.b16 %v3378
    %v3938 = vunpack.c.l.b16 %v3379
    %v3939 = vunpack.c.h.b16 %v3379
    %v3940 = vunpack.c.l.b16 %v3380
    %v3941 = vunpack.c.h.b16 %v3380
    %v3942 = vunpack.c.l.b16 %v3381
    %v3943 = vunpack.c.h.b16 %v3381
    %v3944 = vunpack.c.l.b16 %v3382
    %v3945 = vunpack.c.h.b16 %v3382
    %v3946 = vunpack.c.l.b16 %v3383
    %v3947 = vunpack.c.h.b16 %v3383
    %v3948 = vunpack.c.l.b16 %v3384
    %v3949 = vunpack.c.h.b16 %v3384
    %v3950 = vunpack.c.l.b16 %v3385
    %v3951 = vunpack.c.h.b16 %v3385
    %v3952 = vunpack.c.l.b16 %v3386
    %v3953 = vunpack.c.h.b16 %v3386
    %v3954 = vunpack.c.l.b16 %v3387
    %v3955 = vunpack.c.h.b16 %v3387
    %v3956 = vunpack.c.l.b16 %v3388
    %v3957 = vunpack.c.h.b16 %v3388
    %v3958 = vunpack.c.l.b16 %v3389
    %v3959 = vunpack.c.h.b16 %v3389
    %v3960 = vunpack.c.l.b16 %v3390
    %v3961 = vunpack.c.h.b16 %v3390
    %v3962 = vunpack.c.l.b16 %v3391
    %v3963 = vunpack.c.h.b16 %v3391
    %v3964 = vunpack.c.l.b16 %v3392
    %v3965 = vunpack.c.h.b16 %v3392
    %v3966 = vunpack.c.l.b16 %v3393
    %v3967 = vunpack.c.h.b16 %v3393
    %v3968 = vunpack.c.l.b16 %v3394
    %v3969 = vunpack.c.h.b16 %v3394
    %v3970 = vunpack.c.l.b16 %v3395
    %v3971 = vunpack.c.h.b16 %v3395
    %v3972 = vunpack.c.l.b16 %v3396
    %v3973 = vunpack.c.h.b16 %v3396
    %v3974 = vunpack.c.l.b16 %v3397
    %v3975 = vunpack.c.h.b16 %v3397
    %v3976 = vunpack.c.l.b16 %v3398
    %v3977 = vunpack.c.h.b16 %v3398
    %v3978 = vunpack.c.l.b16 %v3399
    %v3979 = vunpack.c.h.b16 %v3399
    %v3980 = vunpack.c.l.b16 %v3400
    %v3981 = vunpack.c.h.b16 %v3400
    %v3982 = vunpack.c.l.b16 %v3401
    %v3983 = vunpack.c.h.b16 %v3401
    %v3984 = vunpack.c.l.b16 %v3402
    %v3985 = vunpack.c.h.b16 %v3402
    %v3986 = vunpack.c.l.b16 %v3403
    %v3987 = vunpack.c.h.b16 %v3403
    %v3988 = vunpack.c.l.b16 %v3404
    %v3989 = vunpack.c.h.b16 %v3404
    %v3990 = vunpack.c.l.b16 %v3405
    %v3991 = vunpack.c.h.b16 %v3405
    %v3992 = vunpack.c.l.b16 %v3406
    %v3993 = vunpack.c.h.b16 %v3406
    %v3994 = vunpack.c.l.b16 %v3407
    %v3995 = vunpack.c.h.b16 %v3407
    %v3996 = vunpack.c.l.b16 %v3408
    %v3997 = vunpack.c.h.b16 %v3408
    %v3998 = vunpack.c.l.b16 %v3409
    %v3999 = vunpack.c.h.b16 %v3409
    %v4000 = vunpack.c.l.b16 %v3410
    %v4001 = vunpack.c.h.b16 %v3410
    %v4002 = vunpack.c.l.b16 %v3411
    %v4003 = vunpack.c.h.b16 %v3411
    %v4004 = vunpack.c.l.b16 %v3412
    %v4005 = vunpack.c.h.b16 %v3412
    %v4006 = vunpack.c.l.b16 %v3413
    %v4007 = vunpack.c.h.b16 %v3413
    %v4008 = vunpack.c.l.b16 %v3414
    %v4009 = vunpack.c.h.b16 %v3414
    %v4010 = vunpack.c.l.b16 %v3415
    %v4011 = vunpack.c.h.b16 %v3415
    %v4012 = vunpack.c.l.b16 %v3416
    %v4013 = vunpack.c.h.b16 %v3416
    %v4014 = vunpack.c.l.b16 %v3417
    %v4015 = vunpack.c.h.b16 %v3417
    %v4016 = vunpack.c.l.b16 %v3418
    %v4017 = vunpack.c.h.b16 %v3418
    %v4018 = vunpack.c.l.b16 %v3419
    %v4019 = vunpack.c.h.b16 %v3419
    %v4020 = vunpack.c.l.b16 %v3420
    %v4021 = vunpack.c.h.b16 %v3420
    %v4022 = vunpack.c.l.b16 %v3421
    %v4023 = vunpack.c.h.b16 %v3421
    %v4024 = vunpack.c.l.b16 %v3422
    %v4025 = vunpack.c.h.b16 %v3422
    %v4026 = vunpack.c.l.b16 %v3423
    %v4027 = vunpack.c.h.b16 %v3423
    %v4028 = vunpack.c.l.b16 %v3424
    %v4029 = vunpack.c.h.b16 %v3424
    %v4030 = vunpack.c.l.b16 %v3425
    %v4031 = vunpack.c.h.b16 %v3425
    %v4032 = vunpack.c.l.b16 %v3426
    %v4033 = vunpack.c.h.b16 %v3426
    %v4034 = vunpack.c.l.b16 %v3427
    %v4035 = vunpack.c.h.b16 %v3427
    %v4036 = vunpack.c.l.b16 %v3428
    %v4037 = vunpack.c.h.b16 %v3428
    %v4038 = vunpack.c.l.b16 %v3429
    %v4039 = vunpack.c.h.b16 %v3429
    %v4040 = vunpack.c.l.b16 %v3430
    %v4041 = vunpack.c.h.b16 %v3430
    %v4042 = vunpack.c.l.b16 %v3431
    %v4043 = vunpack.c.h.b16 %v3431
    %v4044 = vunpack.c.l.b16 %v3432
    %v4045 = vunpack.c.h.b16 %v3432
    %v4046 = vunpack.c.l.b16 %v3433
    %v4047 = vunpack.c.h.b16 %v3433
    %v4048 = vunpack.c.l.b16 %v3434
    %v4049 = vunpack.c.h.b16 %v3434
    %v4050 = vunpack.c.l.b16 %v3435
    %v4051 = vunpack.c.h.b16 %v3435
    %v4052 = vunpack.c.l.b16 %v3436
    %v4053 = vunpack.c.h.b16 %v3436
    %v4054 = vunpack.c.l.b16 %v3437
    %v4055 = vunpack.c.h.b16 %v3437
    %v4056 = vunpack.c.l.b16 %v3438
    %v4057 = vunpack.c.h.b16 %v3438
    %v4058 = vunpack.c.l.b16 %v3439
    %v4059 = vunpack.c.h.b16 %v3439
    %v4060 = vunpack.c.l.b16 %v3440
    %v4061 = vunpack.c.h.b16 %v3440
    %v4062 = vunpack.c.l.b16 %v3441
    %v4063 = vunpack.c.h.b16 %v3441
    %v4064 = vunpack.c.l.b16 %v3442
    %v4065 = vunpack.c.h.b16 %v3442
    %v4066 = vunpack.c.l.b16 %v3443
    %v4067 = vunpack.c.h.b16 %v3443
    %v4068 = vunpack.c.l.b16 %v3444
    %v4069 = vunpack.c.h.b16 %v3444
    %v4070 = vunpack.c.l.b16 %v3445
    %v4071 = vunpack.c.h.b16 %v3445
    %v4072 = vunpack.c.l.b16 %v3446
    %v4073 = vunpack.c.h.b16 %v3446
    %v4074 = vunpack.c.l.b16 %v3447
    %v4075 = vunpack.c.h.b16 %v3447
    %v4076 = vunpack.c.l.b16 %v3448
    %v4077 = vunpack.c.h.b16 %v3448
    %v4078 = vunpack.c.l.b16 %v3449
    %v4079 = vunpack.c.h.b16 %v3449
    %v4080 = vunpack.c.l.b16 %v3450
    %v4081 = vunpack.c.h.b16 %v3450
    %v4082 = vunpack.c.l.b16 %v3451
    %v4083 = vunpack.c.h.b16 %v3451
    %v4084 = vunpack.c.l.b16 %v3452
    %v4085 = vunpack.c.h.b16 %v3452
    %v4086 = vunpack.c.l.b16 %v3453
    %v4087 = vunpack.c.h.b16 %v3453
    %v4088 = vunpack.c.l.b16 %v3454
    %v4089 = vunpack.c.h.b16 %v3454
    %v4090 = vunpack.c.l.b16 %v3455
    %v4091 = vunpack.c.h.b16 %v3455
    %v4092 = vunpack.c.l.b16 %v3456
    %v4093 = vunpack.c.h.b16 %v3456
    %v4094 = vunpack.c.l.b16 %v3457
    %v4095 = vunpack.c.h.b16 %v3457
    %v4096 = vunpack.c.l.b16 %v3458
    %v4097 = vunpack.c.h.b16 %v3458
    %v4098 = vunpack.c.l.b16 %v3459
    %v4099 = vunpack.c.h.b16 %v3459
    %v4100 = vunpack.c.l.b16 %v3460
    %v4101 = vunpack.c.h.b16 %v3460
    %v4102 = vunpack.c.l.b16 %v3461
    %v4103 = vunpack.c.h.b16 %v3461
    %v4104 = vunpack.c.l.b16 %v3462
    %v4105 = vunpack.c.h.b16 %v3462
    %v4106 = vunpack.c.l.b16 %v3463
    %v4107 = vunpack.c.h.b16 %v3463
    %v4108 = vunpack.c.l.b16 %v3464
    %v4109 = vunpack.c.h.b16 %v3464
    %v4110 = vunpack.c.l.b16 %v3465
    %v4111 = vunpack.c.h.b16 %v3465
    %v4112 = vunpack.c.l.b16 %v3466
    %v4113 = vunpack.c.h.b16 %v3466
    %v4114 = vunpack.c.l.b16 %v3467
    %v4115 = vunpack.c.h.b16 %v3467
    %v4116 = vunpack.c.l.b16 %v3468
    %v4117 = vunpack.c.h.b16 %v3468
    %v4118 = vunpack.c.l.b16 %v3469
    %v4119 = vunpack.c.h.b16 %v3469
    %v4120 = vunpack.c.l.b16 %v3470
    %v4121 = vunpack.c.h.b16 %v3470
    %v4122 = vunpack.c.l.b16 %v3471
    %v4123 = vunpack.c.h.b16 %v3471
    %v4124 = vunpack.c.l.b16 %v3472
    %v4125 = vunpack.c.h.b16 %v3472
    %v4126 = vunpack.c.l.b16 %v3473
    %v4127 = vunpack.c.h.b16 %v3473
    %v4128 = vunpack.c.l.b16 %v3474
    %v4129 = vunpack.c.h.b16 %v3474
    %v4130 = vunpack.c.l.b16 %v3475
    %v4131 = vunpack.c.h.b16 %v3475
    %v4132 = vunpack.c.l.b16 %v3476
    %v4133 = vunpack.c.h.b16 %v3476
    %v4134 = vunpack.c.l.b16 %v3477
    %v4135 = vunpack.c.h.b16 %v3477
    %v4136 = vunpack.c.l.b16 %v3478
    %v4137 = vunpack.c.h.b16 %v3478
    %v4138 = vunpack.c.l.b16 %v3479
    %v4139 = vunpack.c.h.b16 %v3479
    %v4140 = vunpack.c.l.b16 %v3480
    %v4141 = vunpack.c.h.b16 %v3480
    %v4142 = vunpack.c.l.b16 %v3481
    %v4143 = vunpack.c.h.b16 %v3481
    %v4144 = vunpack.c.l.b16 %v3482
    %v4145 = vunpack.c.h.b16 %v3482
    %v4146 = vunpack.c.l.b16 %v3483
    %v4147 = vunpack.c.h.b16 %v3483
    %v4148 = vunpack.c.l.b16 %v3484
    %v4149 = vunpack.c.h.b16 %v3484
    %v4150 = vunpack.c.l.b16 %v3485
    %v4151 = vunpack.c.h.b16 %v3485
    %v4152 = vunpack.c.l.b16 %v3486
    %v4153 = vunpack.c.h.b16 %v3486
    %v4154 = vunpack.c.l.b16 %v3487
    %v4155 = vunpack.c.h.b16 %v3487
    %v4156 = vunpack.c.l.b16 %v3488
    %v4157 = vunpack.c.h.b16 %v3488
    %v4158 = vunpack.c.l.b16 %v3489
    %v4159 = vunpack.c.h.b16 %v3489
    %v4160 = vunpack.c.l.b16 %v3490
    %v4161 = vunpack.c.h.b16 %v3490
    %v4162 = vunpack.c.l.b16 %v3491
    %v4163 = vunpack.c.h.b16 %v3491
    %v4164 = vunpack.c.l.b16 %v3492
    %v4165 = vunpack.c.h.b16 %v3492
    %v4166 = vunpack.c.l.b16 %v3493
    %v4167 = vunpack.c.h.b16 %v3493
    %v4168 = vunpack.c.l.b16 %v3494
    %v4169 = vunpack.c.h.b16 %v3494
    %v4170 = vunpack.c.l.b16 %v3495
    %v4171 = vunpack.c.h.b16 %v3495
    %v4172 = vunpack.c.l.b16 %v3496
    %v4173 = vunpack.c.h.b16 %v3496
    %v4174 = vunpack.c.l.b16 %v3497
    %v4175 = vunpack.c.h.b16 %v3497
    %v4176 = vunpack.c.l.b16 %v3498
    %v4177 = vunpack.c.h.b16 %v3498
    %v4178 = vunpack.c.l.b16 %v3499
    %v4179 = vunpack.c.h.b16 %v3499
    %v4180 = vunpack.c.l.b16 %v3500
    %v4181 = vunpack.c.h.b16 %v3500
    %v4182 = vunpack.c.l.b16 %v3501
    %v4183 = vunpack.c.h.b16 %v3501
    %v4184 = vunpack.c.l.b16 %v3502
    %v4185 = vunpack.c.h.b16 %v3502
    %v4186 = vunpack.c.l.b16 %v3503
    %v4187 = vunpack.c.h.b16 %v3503
    %v4188 = vunpack.c.l.b16 %v3504
    %v4189 = vunpack.c.h.b16 %v3504
    %v4190 = vunpack.c.l.b16 %v3505
    %v4191 = vunpack.c.h.b16 %v3505
    %v4192 = vunpack.c.l.b16 %v3506
    %v4193 = vunpack.c.h.b16 %v3506
    %v4194 = vunpack.c.l.b16 %v3507
    %v4195 = vunpack.c.h.b16 %v3507
    %v4196 = vunpack.c.l.b16 %v3508
    %v4197 = vunpack.c.h.b16 %v3508
    %v4198 = vunpack.c.l.b16 %v3509
    %v4199 = vunpack.c.h.b16 %v3509
    %v4200 = vunpack.c.l.b16 %v3510
    %v4201 = vunpack.c.h.b16 %v3510
    %v4202 = vunpack.c.l.b16 %v3511
    %v4203 = vunpack.c.h.b16 %v3511
    %v4204 = vunpack.c.l.b16 %v3512
    %v4205 = vunpack.c.h.b16 %v3512
    %v4206 = vunpack.c.l.b16 %v3513
    %v4207 = vunpack.c.h.b16 %v3513
    %v4208 = vunpack.c.l.b16 %v3514
    %v4209 = vunpack.c.h.b16 %v3514
    %v4210 = vunpack.c.l.b16 %v3515
    %v4211 = vunpack.c.h.b16 %v3515
    %v4212 = vunpack.c.l.b16 %v3516
    %v4213 = vunpack.c.h.b16 %v3516
    %v4214 = vunpack.c.l.b16 %v3517
    %v4215 = vunpack.c.h.b16 %v3517
    %v4216 = vunpack.c.l.b16 %v3518
    %v4217 = vunpack.c.h.b16 %v3518
    %v4218 = vunpack.c.l.b16 %v3519
    %v4219 = vunpack.c.h.b16 %v3519
    %v4220 = vunpack.c.l.b16 %v3520
    %v4221 = vunpack.c.h.b16 %v3520
    %v4222 = vunpack.c.l.b16 %v3521
    %v4223 = vunpack.c.h.b16 %v3521
    %v4224 = vunpack.c.l.b16 %v3522
    %v4225 = vunpack.c.h.b16 %v3522
    %v4226 = vunpack.c.l.b16 %v3523
    %v4227 = vunpack.c.h.b16 %v3523
    %v4228 = vunpack.c.l.b16 %v3524
    %v4229 = vunpack.c.h.b16 %v3524
    %v4230 = vunpack.c.l.b16 %v3525
    %v4231 = vunpack.c.h.b16 %v3525
    %v4232 = vunpack.c.l.b16 %v3526
    %v4233 = vunpack.c.h.b16 %v3526
    %v4234 = vunpack.c.l.b16 %v3527
    %v4235 = vunpack.c.h.b16 %v3527
    %v4236 = vunpack.c.l.b16 %v3528
    %v4237 = vunpack.c.h.b16 %v3528
    %v4238 = vunpack.c.l.b16 %v3529
    %v4239 = vunpack.c.h.b16 %v3529
    %v4240 = vunpack.c.l.b16 %v3530
    %v4241 = vunpack.c.h.b16 %v3530
    %v4242 = vunpack.c.l.b16 %v3531
    %v4243 = vunpack.c.h.b16 %v3531
    %v4244 = vunpack.c.l.b16 %v3532
    %v4245 = vunpack.c.h.b16 %v3532
    %v4246 = vunpack.c.l.b16 %v3533
    %v4247 = vunpack.c.h.b16 %v3533
    %v4248 = vunpack.c.l.b16 %v3534
    %v4249 = vunpack.c.h.b16 %v3534
    %v4250 = vunpack.c.l.b16 %v3535
    %v4251 = vunpack.c.h.b16 %v3535
    %v4252 = vunpack.c.l.b16 %v3536
    %v4253 = vunpack.c.h.b16 %v3536
    %v4254 = vunpack.c.l.b16 %v3537
    %v4255 = vunpack.c.h.b16 %v3537
    %v4256 = vunpack.c.l.b16 %v3538
    %v4257 = vunpack.c.h.b16 %v3538
    %v4258 = vunpack.c.l.b16 %v3539
    %v4259 = vunpack.c.h.b16 %v3539
    %v4260 = vunpack.c.l.b16 %v3540
    %v4261 = vunpack.c.h.b16 %v3540
    %v4262 = vunpack.c.l.b16 %v3541
    %v4263 = vunpack.c.h.b16 %v3541
    %v4264 = vunpack.c.l.b16 %v3542
    %v4265 = vunpack.c.h.b16 %v3542
    %v4266 = vunpack.c.l.b16 %v3543
    %v4267 = vunpack.c.h.b16 %v3543
    %v4268 = vunpack.c.l.b16 %v3544
    %v4269 = vunpack.c.h.b16 %v3544
    %v4270 = vunpack.c.l.b16 %v3545
    %v4271 = vunpack.c.h.b16 %v3545
    %v4272 = vunpack.c.l.b16 %v3546
    %v4273 = vunpack.c.h.b16 %v3546
    %v4274 = vunpack.c.l.b16 %v3547
    %v4275 = vunpack.c.h.b16 %v3547
    %v4276 = vunpack.c.l.b16 %v3548
    %v4277 = vunpack.c.h.b16 %v3548
    %v4278 = vunpack.c.l.b16 %v3549
    %v4279 = vunpack.c.h.b16 %v3549
    %v4280 = vunpack.c.l.b16 %v3550
    %v4281 = vunpack.c.h.b16 %v3550
    %v4282 = vunpack.c.l.b16 %v3551
    %v4283 = vunpack.c.h.b16 %v3551
    %v4284 = vunpack.c.l.b16 %v3552
    %v4285 = vunpack.c.h.b16 %v3552
    %v4286 = vunpack.c.l.b16 %v3553
    %v4287 = vunpack.c.h.b16 %v3553
    %v4288 = vunpack.c.l.b16 %v3554
    %v4289 = vunpack.c.h.b16 %v3554
    %v4290 = vunpack.c.l.b16 %v3555
    %v4291 = vunpack.c.h.b16 %v3555
    %v4292 = vunpack.c.l.b16 %v3556
    %v4293 = vunpack.c.h.b16 %v3556
    %v4294 = vunpack.c.l.b16 %v3557
    %v4295 = vunpack.c.h.b16 %v3557
    %v4296 = vunpack.c.l.b16 %v3558
    %v4297 = vunpack.c.h.b16 %v3558
    %v4298 = vunpack.c.l.b16 %v3559
    %v4299 = vunpack.c.h.b16 %v3559
    %v4300 = vunpack.c.l.b16 %v3560
    %v4301 = vunpack.c.h.b16 %v3560
    %v4302 = vunpack.c.l.b16 %v3561
    %v4303 = vunpack.c.h.b16 %v3561
    %v4304 = vunpack.c.l.b16 %v3562
    %v4305 = vunpack.c.h.b16 %v3562
    %v4306 = vunpack.c.l.b16 %v3563
    %v4307 = vunpack.c.h.b16 %v3563
    %v4308 = vunpack.c.l.b16 %v3564
    %v4309 = vunpack.c.h.b16 %v3564
    %v4310 = vunpack.c.l.b16 %v3565
    %v4311 = vunpack.c.h.b16 %v3565
    %v4312 = vunpack.c.l.b16 %v3566
    %v4313 = vunpack.c.h.b16 %v3566
    %v4314 = vunpack.c.l.b16 %v3567
    %v4315 = vunpack.c.h.b16 %v3567
    %v4316 = vunpack.c.l.b16 %v3568
    %v4317 = vunpack.c.h.b16 %v3568
    %v4318 = vunpack.c.l.b16 %v3569
    %v4319 = vunpack.c.h.b16 %v3569
    %v4320 = vunpack.c.l.b16 %v3570
    %v4321 = vunpack.c.h.b16 %v3570
    %v4322 = vunpack.c.l.b16 %v3571
    %v4323 = vunpack.c.h.b16 %v3571
    %v4324 = vunpack.c.l.b16 %v3572
    %v4325 = vunpack.c.h.b16 %v3572
    %v4326 = vunpack.c.l.b16 %v3573
    %v4327 = vunpack.c.h.b16 %v3573
    %v4328 = vunpack.c.l.b16 %v3574
    %v4329 = vunpack.c.h.b16 %v3574
    %v4330 = vunpack.c.l.b16 %v3575
    %v4331 = vunpack.c.h.b16 %v3575
    %v4332 = vunpack.c.l.b16 %v3576
    %v4333 = vunpack.c.h.b16 %v3576
    %v4334 = vunpack.c.l.b16 %v3577
    %v4335 = vunpack.c.h.b16 %v3577
    %v4336 = vunpack.c.l.b16 %v3578
    %v4337 = vunpack.c.h.b16 %v3578
    %v4338 = vunpack.c.l.b16 %v3579
    %v4339 = vunpack.c.h.b16 %v3579
    %v4340 = vunpack.c.l.b16 %v3580
    %v4341 = vunpack.c.h.b16 %v3580
    %v4342 = vunpack.c.l.b16 %v3581
    %v4343 = vunpack.c.h.b16 %v3581
    %v4344 = vunpack.c.l.b16 %v3582
    %v4345 = vunpack.c.h.b16 %v3582
    %v4346 = vunpack.c.l.b16 %v3583
    %v4347 = vunpack.c.h.b16 %v3583
    %v4348 = vunpack.c.l.b16 %v3584
    %v4349 = vunpack.c.h.b16 %v3584
    %v4350 = vunpack.c.l.b16 %v3585
    %v4351 = vunpack.c.h.b16 %v3585
    %v4352 = vunpack.c.l.b16 %v3586
    %v4353 = vunpack.c.h.b16 %v3586
    %v4354 = vunpack.c.l.b16 %v3587
    %v4355 = vunpack.c.h.b16 %v3587
    %v4356 = vunpack.c.l.b16 %v3588
    %v4357 = vunpack.c.h.b16 %v3588
    %v4358 = vunpack.c.l.b16 %v3589
    %v4359 = vunpack.c.h.b16 %v3589
    %v4360 = vunpack.c.l.b16 %v3590
    %v4361 = vunpack.c.h.b16 %v3590
    %v4362 = vunpack.c.l.b16 %v3591
    %v4363 = vunpack.c.h.b16 %v3591
    %v4364 = vunpack.c.l.b16 %v3592
    %v4365 = vunpack.c.h.b16 %v3592
    %v4366 = vunpack.c.l.b16 %v3593
    %v4367 = vunpack.c.h.b16 %v3593
    %v4368 = vunpack.c.l.b16 %v3594
    %v4369 = vunpack.c.h.b16 %v3594
    %v4370 = vunpack.c.l.b16 %v3595
    %v4371 = vunpack.c.h.b16 %v3595
    %v4372 = vunpack.c.l.b16 %v3596
    %v4373 = vunpack.c.h.b16 %v3596
    %v4374 = vunpack.c.l.b16 %v3597
    %v4375 = vunpack.c.h.b16 %v3597
    %v4376 = vpack.c.b16 %v3868, %v3864
    %v4377 = vpack.c.b16 %v3869, %v3865
    %v4378 = vpack.c.b16 %v3870, %v3866
    %v4379 = vpack.c.b16 %v3871, %v3867
    %v4380 = vpack.c.b16 %v3876, %v3872
    %v4381 = vpack.c.b16 %v3877, %v3873
    %v4382 = vpack.c.b16 %v3878, %v3874
    %v4383 = vpack.c.b16 %v3879, %v3875
    %v4384 = vpack.c.b16 %v3884, %v3880
    %v4385 = vpack.c.b16 %v3885, %v3881
    %v4386 = vpack.c.b16 %v3886, %v3882
    %v4387 = vpack.c.b16 %v3887, %v3883
    %v4388 = vpack.c.b16 %v3892, %v3888
    %v4389 = vpack.c.b16 %v3893, %v3889
    %v4390 = vpack.c.b16 %v3894, %v3890
    %v4391 = vpack.c.b16 %v3895, %v3891
    %v4392 = vpack.c.b16 %v3900, %v3896
    %v4393 = vpack.c.b16 %v3901, %v3897
    %v4394 = vpack.c.b16 %v3902, %v3898
    %v4395 = vpack.c.b16 %v3903, %v3899
    %v4396 = vpack.c.b16 %v3908, %v3904
    %v4397 = vpack.c.b16 %v3909, %v3905
    %v4398 = vpack.c.b16 %v3910, %v3906
    %v4399 = vpack.c.b16 %v3911, %v3907
    %v4400 = vpack.c.b16 %v3916, %v3912
    %v4401 = vpack.c.b16 %v3917, %v3913
    %v4402 = vpack.c.b16 %v3918, %v3914
    %v4403 = vpack.c.b16 %v3919, %v3915
    %v4404 = vpack.c.b16 %v3924, %v3920
    %v4405 = vpack.c.b16 %v3925, %v3921
    %v4406 = vpack.c.b16 %v3926, %v3922
    %v4407 = vpack.c.b16 %v3927, %v3923
    %v4408 = vpack.c.b16 %v3932, %v3928
    %v4409 = vpack.c.b16 %v3933, %v3929
    %v4410 = vpack.c.b16 %v3934, %v3930
    %v4411 = vpack.c.b16 %v3935, %v3931
    %v4412 = vpack.c.b16 %v3940, %v3936
    %v4413 = vpack.c.b16 %v3941, %v3937
    %v4414 = vpack.c.b16 %v3942, %v3938
    %v4415 = vpack.c.b16 %v3943, %v3939
    %v4416 = vpack.c.b16 %v3948, %v3944
    %v4417 = vpack.c.b16 %v3949, %v3945
    %v4418 = vpack.c.b16 %v3950, %v3946
    %v4419 = vpack.c.b16 %v3951, %v3947
    %v4420 = vpack.c.b16 %v3956, %v3952
    %v4421 = vpack.c.b16 %v3957, %v3953
    %v4422 = vpack.c.b16 %v3958, %v3954
    %v4423 = vpack.c.b16 %v3959, %v3955
    %v4424 = vpack.c.b16 %v3964, %v3960
    %v4425 = vpack.c.b16 %v3965, %v3961
    %v4426 = vpack.c.b16 %v3966, %v3962
    %v4427 = vpack.c.b16 %v3967, %v3963
    %v4428 = vpack.c.b16 %v3972, %v3968
    %v4429 = vpack.c.b16 %v3973, %v3969
    %v4430 = vpack.c.b16 %v3974, %v3970
    %v4431 = vpack.c.b16 %v3975, %v3971
    %v4432 = vpack.c.b16 %v3980, %v3976
    %v4433 = vpack.c.b16 %v3981, %v3977
    %v4434 = vpack.c.b16 %v3982, %v3978
    %v4435 = vpack.c.b16 %v3983, %v3979
    %v4436 = vpack.c.b16 %v3988, %v3984
    %v4437 = vpack.c.b16 %v3989, %v3985
    %v4438 = vpack.c.b16 %v3990, %v3986
    %v4439 = vpack.c.b16 %v3991, %v3987
    %v4440 = vpack.c.b16 %v3996, %v3992
    %v4441 = vpack.c.b16 %v3997, %v3993
    %v4442 = vpack.c.b16 %v3998, %v3994
    %v4443 = vpack.c.b16 %v3999, %v3995
    %v4444 = vpack.c.b16 %v4004, %v4000
    %v4445 = vpack.c.b16 %v4005, %v4001
    %v4446 = vpack.c.b16 %v4006, %v4002
    %v4447 = vpack.c.b16 %v4007, %v4003
    %v4448 = vpack.c.b16 %v4012, %v4008
    %v4449 = vpack.c.b16 %v4013, %v4009
    %v4450 = vpack.c.b16 %v4014, %v4010
    %v4451 = vpack.c.b16 %v4015, %v4011
    %v4452 = vpack.c.b16 %v4020, %v4016
    %v4453 = vpack.c.b16 %v4021, %v4017
    %v4454 = vpack.c.b16 %v4022, %v4018
    %v4455 = vpack.c.b16 %v4023, %v4019
    %v4456 = vpack.c.b16 %v4028, %v4024
    %v4457 = vpack.c.b16 %v4029, %v4025
    %v4458 = vpack.c.b16 %v4030, %v4026
    %v4459 = vpack.c.b16 %v4031, %v4027
    %v4460 = vpack.c.b16 %v4036, %v4032
    %v4461 = vpack.c.b16 %v4037, %v4033
    %v4462 = vpack.c.b16 %v4038, %v4034
    %v4463 = vpack.c.b16 %v4039, %v4035
    %v4464 = vpack.c.b16 %v4044, %v4040
    %v4465 = vpack.c.b16 %v4045, %v4041
    %v4466 = vpack.c.b16 %v4046, %v4042
    %v4467 = vpack.c.b16 %v4047, %v4043
    %v4468 = vpack.c.b16 %v4052, %v4048
    %v4469 = vpack.c.b16 %v4053, %v4049
    %v4470 = vpack.c.b16 %v4054, %v4050
    %v4471 = vpack.c.b16 %v4055, %v4051
    %v4472 = vpack.c.b16 %v4060, %v4056
    %v4473 = vpack.c.b16 %v4061, %v4057
    %v4474 = vpack.c.b16 %v4062, %v4058
    %v4475 = vpack.c.b16 %v4063, %v4059
    %v4476 = vpack.c.b16 %v4068, %v4064
    %v4477 = vpack.c.b16 %v4069, %v4065
    %v4478 = vpack.c.b16 %v4070, %v4066
    %v4479 = vpack.c.b16 %v4071, %v4067
    %v4480 = vpack.c.b16 %v4076, %v4072
    %v4481 = vpack.c.b16 %v4077, %v4073
    %v4482 = vpack.c.b16 %v4078, %v4074
    %v4483 = vpack.c.b16 %v4079, %v4075
    %v4484 = vpack.c.b16 %v4084, %v4080
    %v4485 = vpack.c.b16 %v4085, %v4081
    %v4486 = vpack.c.b16 %v4086, %v4082
    %v4487 = vpack.c.b16 %v4087, %v4083
    %v4488 = vpack.c.b16 %v4092, %v4088
    %v4489 = vpack.c.b16 %v4093, %v4089
    %v4490 = vpack.c.b16 %v4094, %v4090
    %v4491 = vpack.c.b16 %v4095, %v4091
    %v4492 = vpack.c.b16 %v4100, %v4096
    %v4493 = vpack.c.b16 %v4101, %v4097
    %v4494 = vpack.c.b16 %v4102, %v4098
    %v4495 = vpack.c.b16 %v4103, %v4099
    %v4496 = vpack.c.b16 %v4108, %v4104
    %v4497 = vpack.c.b16 %v4109, %v4105
    %v4498 = vpack.c.b16 %v4110, %v4106
    %v4499 = vpack.c.b16 %v4111, %v4107
    %v4500 = vpack.c.b16 %v4116, %v4112
    %v4501 = vpack.c.b16 %v4117, %v4113
    %v4502 = vpack.c.b16 %v4118, %v4114
    %v4503 = vpack.c.b16 %v4119, %v4115
    %v4504 = vpack.c.b16 %v4124, %v4120
    %v4505 = vpack.c.b16 %v4125, %v4121
    %v4506 = vpack.c.b16 %v4126, %v4122
    %v4507 = vpack.c.b16 %v4127, %v4123
    %v4508 = vpack.c.b16 %v4132, %v4128
    %v4509 = vpack.c.b16 %v4133, %v4129
    %v4510 = vpack.c.b16 %v4134, %v4130
    %v4511 = vpack.c.b16 %v4135, %v4131
    %v4512 = vpack.c.b16 %v4140, %v4136
    %v4513 = vpack.c.b16 %v4141, %v4137
    %v4514 = vpack.c.b16 %v4142, %v4138
    %v4515 = vpack.c.b16 %v4143, %v4139
    %v4516 = vpack.c.b16 %v4148, %v4144
    %v4517 = vpack.c.b16 %v4149, %v4145
    %v4518 = vpack.c.b16 %v4150, %v4146
    %v4519 = vpack.c.b16 %v4151, %v4147
    %v4520 = vpack.c.b16 %v4156, %v4152
    %v4521 = vpack.c.b16 %v4157, %v4153
    %v4522 = vpack.c.b16 %v4158, %v4154
    %v4523 = vpack.c.b16 %v4159, %v4155
    %v4524 = vpack.c.b16 %v4164, %v4160
    %v4525 = vpack.c.b16 %v4165, %v4161
    %v4526 = vpack.c.b16 %v4166, %v4162
    %v4527 = vpack.c.b16 %v4167, %v4163
    %v4528 = vpack.c.b16 %v4172, %v4168
    %v4529 = vpack.c.b16 %v4173, %v4169
    %v4530 = vpack.c.b16 %v4174, %v4170
    %v4531 = vpack.c.b16 %v4175, %v4171
    %v4532 = vpack.c.b16 %v4180, %v4176
    %v4533 = vpack.c.b16 %v4181, %v4177
    %v4534 = vpack.c.b16 %v4182, %v4178
    %v4535 = vpack.c.b16 %v4183, %v4179
    %v4536 = vpack.c.b16 %v4188, %v4184
    %v4537 = vpack.c.b16 %v4189, %v4185
    %v4538 = vpack.c.b16 %v4190, %v4186
    %v4539 = vpack.c.b16 %v4191, %v4187
    %v4540 = vpack.c.b16 %v4196, %v4192
    %v4541 = vpack.c.b16 %v4197, %v4193
    %v4542 = vpack.c.b16 %v4198, %v4194
    %v4543 = vpack.c.b16 %v4199, %v4195
    %v4544 = vpack.c.b16 %v4204, %v4200
    %v4545 = vpack.c.b16 %v4205, %v4201
    %v4546 = vpack.c.b16 %v4206, %v4202
    %v4547 = vpack.c.b16 %v4207, %v4203
    %v4548 = vpack.c.b16 %v4212, %v4208
    %v4549 = vpack.c.b16 %v4213, %v4209
    %v4550 = vpack.c.b16 %v4214, %v4210
    %v4551 = vpack.c.b16 %v4215, %v4211
    %v4552 = vpack.c.b16 %v4220, %v4216
    %v4553 = vpack.c.b16 %v4221, %v4217
    %v4554 = vpack.c.b16 %v4222, %v4218
    %v4555 = vpack.c.b16 %v4223, %v4219
    %v4556 = vpack.c.b16 %v4228, %v4224
    %v4557 = vpack.c.b16 %v4229, %v4225
    %v4558 = vpack.c.b16 %v4230, %v4226
    %v4559 = vpack.c.b16 %v4231, %v4227
    %v4560 = vpack.c.b16 %v4236, %v4232
    %v4561 = vpack.c.b16 %v4237, %v4233
    %v4562 = vpack.c.b16 %v4238, %v4234
    %v4563 = vpack.c.b16 %v4239, %v4235
    %v4564 = vpack.c.b16 %v4244, %v4240
    %v4565 = vpack.c.b16 %v4245, %v4241
    %v4566 = vpack.c.b16 %v4246, %v4242
    %v4567 = vpack.c.b16 %v4247, %v4243
    %v4568 = vpack.c.b16 %v4252, %v4248
    %v4569 = vpack.c.b16 %v4253, %v4249
    %v4570 = vpack.c.b16 %v4254, %v4250
    %v4571 = vpack.c.b16 %v4255, %v4251
    %v4572 = vpack.c.b16 %v4260, %v4256
    %v4573 = vpack.c.b16 %v4261, %v4257
    %v4574 = vpack.c.b16 %v4262, %v4258
    %v4575 = vpack.c.b16 %v4263, %v4259
    %v4576 = vpack.c.b16 %v4268, %v4264
    %v4577 = vpack.c.b16 %v4269, %v4265
    %v4578 = vpack.c.b16 %v4270, %v4266
    %v4579 = vpack.c.b16 %v4271, %v4267
    %v4580 = vpack.c.b16 %v4276, %v4272
    %v4581 = vpack.c.b16 %v4277, %v4273
    %v4582 = vpack.c.b16 %v4278, %v4274
    %v4583 = vpack.c.b16 %v4279, %v4275
    %v4584 = vpack.c.b16 %v4284, %v4280
    %v4585 = vpack.c.b16 %v4285, %v4281
    %v4586 = vpack.c.b16 %v4286, %v4282
    %v4587 = vpack.c.b16 %v4287, %v4283
    %v4588 = vpack.c.b16 %v4292, %v4288
    %v4589 = vpack.c.b16 %v4293, %v4289
    %v4590 = vpack.c.b16 %v4294, %v4290
    %v4591 = vpack.c.b16 %v4295, %v4291
    %v4592 = vpack.c.b16 %v4300, %v4296
    %v4593 = vpack.c.b16 %v4301, %v4297
    %v4594 = vpack.c.b16 %v4302, %v4298
    %v4595 = vpack.c.b16 %v4303, %v4299
    %v4596 = vpack.c.b16 %v4308, %v4304
    %v4597 = vpack.c.b16 %v4309, %v4305
    %v4598 = vpack.c.b16 %v4310, %v4306
    %v4599 = vpack.c.b16 %v4311, %v4307
    %v4600 = vpack.c.b16 %v4316, %v4312
    %v4601 = vpack.c.b16 %v4317, %v4313
    %v4602 = vpack.c.b16 %v4318, %v4314
    %v4603 = vpack.c.b16 %v4319, %v4315
    %v4604 = vpack.c.b16 %v4324, %v4320
    %v4605 = vpack.c.b16 %v4325, %v4321
    %v4606 = vpack.c.b16 %v4326, %v4322
    %v4607 = vpack.c.b16 %v4327, %v4323
    %v4608 = vpack.c.b16 %v4332, %v4328
    %v4609 = vpack.c.b16 %v4333, %v4329
    %v4610 = vpack.c.b16 %v4334, %v4330
    %v4611 = vpack.c.b16 %v4335, %v4331
    %v4612 = vpack.c.b16 %v4340, %v4336
    %v4613 = vpack.c.b16 %v4341, %v4337
    %v4614 = vpack.c.b16 %v4342, %v4338
    %v4615 = vpack.c.b16 %v4343, %v4339
    %v4616 = vpack.c.b16 %v4348, %v4344
    %v4617 = vpack.c.b16 %v4349, %v4345
    %v4618 = vpack.c.b16 %v4350, %v4346
    %v4619 = vpack.c.b16 %v4351, %v4347
    %v4620 = vpack.c.b16 %v4356, %v4352
    %v4621 = vpack.c.b16 %v4357, %v4353
    %v4622 = vpack.c.b16 %v4358, %v4354
    %v4623 = vpack.c.b16 %v4359, %v4355
    %v4624 = vpack.c.b16 %v4364, %v4360
    %v4625 = vpack.c.b16 %v4365, %v4361
    %v4626 = vpack.c.b16 %v4366, %v4362
    %v4627 = vpack.c.b16 %v4367, %v4363
    %v4628 = vpack.c.b16 %v4372, %v4368
    %v4629 = vpack.c.b16 %v4373, %v4369
    %v4630 = vpack.c.b16 %v4374, %v4370
    %v4631 = vpack.c.b16 %v4375, %v4371
    %4888 = vmatpush.bf16.msra.mxu0 %v4404
    %4889 = vmatpush.bf16.msra.mxu0 %v4400
    %4890 = vmatpush.bf16.msra.mxu0 %v4396
    %4891 = vmatpush.bf16.msra.mxu0 %v4392
    %4892 = vmatpush.bf16.msra.mxu0 %v4388
    %4893 = vmatpush.bf16.msra.mxu0 %v4384
    %4894 = vmatpush.bf16.msra.mxu0 %v4380
    %4895 = vmatpush.bf16.msra.mxu0 %v4376
    %4896 = vmatmul.bf16.gmra.mxu0 %v3334
    %v4897 = vpop.f32.mrf.mxu0
    %v4898 = vadd.f32 %v3600, %v4897
    %v4899 = vpop.f32.mrf.mxu0
    %4900 = vdwg.mxu0
    %4901 = vmatpush.bf16.msra.mxu0 %v4436
    %4902 = vmatpush.bf16.msra.mxu0 %v4432
    %4903 = vmatpush.bf16.msra.mxu0 %v4428
    %4904 = vmatpush.bf16.msra.mxu0 %v4424
    %4905 = vmatpush.bf16.msra.mxu0 %v4420
    %4906 = vmatpush.bf16.msra.mxu0 %v4416
    %4907 = vmatpush.bf16.msra.mxu0 %v4412
    %4908 = vmatpush.bf16.msra.mxu0 %v4408
    %4909 = vmatmul.bf16.gmra.mxu0 %v3335
    %v4910 = vpop.f32.mrf.mxu0
    %v4911 = vadd.f32 %v4898, %v4910
    %v4912 = vpop.f32.mrf.mxu0
    %4913 = vdwg.mxu0
    %4914 = vmatpush.bf16.msra.mxu0 %v4468
    %4915 = vmatpush.bf16.msra.mxu0 %v4464
    %4916 = vmatpush.bf16.msra.mxu0 %v4460
    %4917 = vmatpush.bf16.msra.mxu0 %v4456
    %4918 = vmatpush.bf16.msra.mxu0 %v4452
    %4919 = vmatpush.bf16.msra.mxu0 %v4448
    %4920 = vmatpush.bf16.msra.mxu0 %v4444
    %4921 = vmatpush.bf16.msra.mxu0 %v4440
    %4922 = vmatmul.bf16.gmra.mxu0 %v3336
    %v4923 = vpop.f32.mrf.mxu0
    %v4924 = vadd.f32 %v4911, %v4923
    %v4925 = vpop.f32.mrf.mxu0
    %4926 = vdwg.mxu0
    %4927 = vmatpush.bf16.msra.mxu0 %v4500
    %4928 = vmatpush.bf16.msra.mxu0 %v4496
    %4929 = vmatpush.bf16.msra.mxu0 %v4492
    %4930 = vmatpush.bf16.msra.mxu0 %v4488
    %4931 = vmatpush.bf16.msra.mxu0 %v4484
    %4932 = vmatpush.bf16.msra.mxu0 %v4480
    %4933 = vmatpush.bf16.msra.mxu0 %v4476
    %4934 = vmatpush.bf16.msra.mxu0 %v4472
    %4935 = vmatmul.bf16.gmra.mxu0 %v3337
    %v4936 = vpop.f32.mrf.mxu0
    %v4937 = vadd.f32 %v4924, %v4936
    %v4938 = vpop.f32.mrf.mxu0
    %4939 = vdwg.mxu0
    %4940 = vmatpush.bf16.msra.mxu0 %v4532
    %4941 = vmatpush.bf16.msra.mxu0 %v4528
    %4942 = vmatpush.bf16.msra.mxu0 %v4524
    %4943 = vmatpush.bf16.msra.mxu0 %v4520
    %4944 = vmatpush.bf16.msra.mxu0 %v4516
    %4945 = vmatpush.bf16.msra.mxu0 %v4512
    %4946 = vmatpush.bf16.msra.mxu0 %v4508
    %4947 = vmatpush.bf16.msra.mxu0 %v4504
    %4948 = vmatmul.bf16.gmra.mxu0 %v3338
    %v4949 = vpop.f32.mrf.mxu0
    %v4950 = vadd.f32 %v4937, %v4949
    %v4951 = vpop.f32.mrf.mxu0
    %4952 = vdwg.mxu0
    %4953 = vmatpush.bf16.msra.mxu0 %v4564
    %4954 = vmatpush.bf16.msra.mxu0 %v4560
    %4955 = vmatpush.bf16.msra.mxu0 %v4556
    %4956 = vmatpush.bf16.msra.mxu0 %v4552
    %4957 = vmatpush.bf16.msra.mxu0 %v4548
    %4958 = vmatpush.bf16.msra.mxu0 %v4544
    %4959 = vmatpush.bf16.msra.mxu0 %v4540
    %4960 = vmatpush.bf16.msra.mxu0 %v4536
    %4961 = vmatmul.bf16.gmra.mxu0 %v3339
    %v4962 = vpop.f32.mrf.mxu0
    %v4963 = vadd.f32 %v4950, %v4962
    %v4964 = vpop.f32.mrf.mxu0
    %4965 = vdwg.mxu0
    %4966 = vmatpush.bf16.msra.mxu0 %v4596
    %4967 = vmatpush.bf16.msra.mxu0 %v4592
    %4968 = vmatpush.bf16.msra.mxu0 %v4588
    %4969 = vmatpush.bf16.msra.mxu0 %v4584
    %4970 = vmatpush.bf16.msra.mxu0 %v4580
    %4971 = vmatpush.bf16.msra.mxu0 %v4576
    %4972 = vmatpush.bf16.msra.mxu0 %v4572
    %4973 = vmatpush.bf16.msra.mxu0 %v4568
    %4974 = vmatmul.bf16.gmra.mxu0 %v3340
    %v4975 = vpop.f32.mrf.mxu0
    %v4976 = vadd.f32 %v4963, %v4975
    %v4977 = vpop.f32.mrf.mxu0
    %4978 = vdwg.mxu0
    %4979 = vmatpush.bf16.msra.mxu0 %v4628
    %4980 = vmatpush.bf16.msra.mxu0 %v4624
    %4981 = vmatpush.bf16.msra.mxu0 %v4620
    %4982 = vmatpush.bf16.msra.mxu0 %v4616
    %4983 = vmatpush.bf16.msra.mxu0 %v4612
    %4984 = vmatpush.bf16.msra.mxu0 %v4608
    %4985 = vmatpush.bf16.msra.mxu0 %v4604
    %4986 = vmatpush.bf16.msra.mxu0 %v4600
    %4987 = vmatmul.bf16.gmra.mxu0 %v3341
    %v4988 = vpop.f32.mrf.mxu0
    %v4989 = vadd.f32 %v4976, %v4988
    %v4990 = vpop.f32.mrf.mxu0
    %4991 = vdwg.mxu0
    %4992 = vmatpush.bf16.msra.mxu0 %v4405
    %4993 = vmatpush.bf16.msra.mxu0 %v4401
    %4994 = vmatpush.bf16.msra.mxu0 %v4397
    %4995 = vmatpush.bf16.msra.mxu0 %v4393
    %4996 = vmatpush.bf16.msra.mxu0 %v4389
    %4997 = vmatpush.bf16.msra.mxu0 %v4385
    %4998 = vmatpush.bf16.msra.mxu0 %v4381
    %4999 = vmatpush.bf16.msra.mxu0 %v4377
    %5000 = vmatmul.bf16.gmra.mxu0 %v3334
    %v5001 = vpop.f32.mrf.mxu0
    %v5002 = vadd.f32 %v3601, %v5001
    %v5003 = vpop.f32.mrf.mxu0
    %5004 = vdwg.mxu0
    %5005 = vmatpush.bf16.msra.mxu0 %v4437
    %5006 = vmatpush.bf16.msra.mxu0 %v4433
    %5007 = vmatpush.bf16.msra.mxu0 %v4429
    %5008 = vmatpush.bf16.msra.mxu0 %v4425
    %5009 = vmatpush.bf16.msra.mxu0 %v4421
    %5010 = vmatpush.bf16.msra.mxu0 %v4417
    %5011 = vmatpush.bf16.msra.mxu0 %v4413
    %5012 = vmatpush.bf16.msra.mxu0 %v4409
    %5013 = vmatmul.bf16.gmra.mxu0 %v3335
    %v5014 = vpop.f32.mrf.mxu0
    %v5015 = vadd.f32 %v5002, %v5014
    %v5016 = vpop.f32.mrf.mxu0
    %5017 = vdwg.mxu0
    %5018 = vmatpush.bf16.msra.mxu0 %v4469
    %5019 = vmatpush.bf16.msra.mxu0 %v4465
    %5020 = vmatpush.bf16.msra.mxu0 %v4461
    %5021 = vmatpush.bf16.msra.mxu0 %v4457
    %5022 = vmatpush.bf16.msra.mxu0 %v4453
    %5023 = vmatpush.bf16.msra.mxu0 %v4449
    %5024 = vmatpush.bf16.msra.mxu0 %v4445
    %5025 = vmatpush.bf16.msra.mxu0 %v4441
    %5026 = vmatmul.bf16.gmra.mxu0 %v3336
    %v5027 = vpop.f32.mrf.mxu0
    %v5028 = vadd.f32 %v5015, %v5027
    %v5029 = vpop.f32.mrf.mxu0
    %5030 = vdwg.mxu0
    %5031 = vmatpush.bf16.msra.mxu0 %v4501
    %5032 = vmatpush.bf16.msra.mxu0 %v4497
    %5033 = vmatpush.bf16.msra.mxu0 %v4493
    %5034 = vmatpush.bf16.msra.mxu0 %v4489
    %5035 = vmatpush.bf16.msra.mxu0 %v4485
    %5036 = vmatpush.bf16.msra.mxu0 %v4481
    %5037 = vmatpush.bf16.msra.mxu0 %v4477
    %5038 = vmatpush.bf16.msra.mxu0 %v4473
    %5039 = vmatmul.bf16.gmra.mxu0 %v3337
    %v5040 = vpop.f32.mrf.mxu0
    %v5041 = vadd.f32 %v5028, %v5040
    %v5042 = vpop.f32.mrf.mxu0
    %5043 = vdwg.mxu0
    %5044 = vmatpush.bf16.msra.mxu0 %v4533
    %5045 = vmatpush.bf16.msra.mxu0 %v4529
    %5046 = vmatpush.bf16.msra.mxu0 %v4525
    %5047 = vmatpush.bf16.msra.mxu0 %v4521
    %5048 = vmatpush.bf16.msra.mxu0 %v4517
    %5049 = vmatpush.bf16.msra.mxu0 %v4513
    %5050 = vmatpush.bf16.msra.mxu0 %v4509
    %5051 = vmatpush.bf16.msra.mxu0 %v4505
    %5052 = vmatmul.bf16.gmra.mxu0 %v3338
    %v5053 = vpop.f32.mrf.mxu0
    %v5054 = vadd.f32 %v5041, %v5053
    %v5055 = vpop.f32.mrf.mxu0
    %5056 = vdwg.mxu0
    %5057 = vmatpush.bf16.msra.mxu0 %v4565
    %5058 = vmatpush.bf16.msra.mxu0 %v4561
    %5059 = vmatpush.bf16.msra.mxu0 %v4557
    %5060 = vmatpush.bf16.msra.mxu0 %v4553
    %5061 = vmatpush.bf16.msra.mxu0 %v4549
    %5062 = vmatpush.bf16.msra.mxu0 %v4545
    %5063 = vmatpush.bf16.msra.mxu0 %v4541
    %5064 = vmatpush.bf16.msra.mxu0 %v4537
    %5065 = vmatmul.bf16.gmra.mxu0 %v3339
    %v5066 = vpop.f32.mrf.mxu0
    %v5067 = vadd.f32 %v5054, %v5066
    %v5068 = vpop.f32.mrf.mxu0
    %5069 = vdwg.mxu0
    %5070 = vmatpush.bf16.msra.mxu0 %v4597
    %5071 = vmatpush.bf16.msra.mxu0 %v4593
    %5072 = vmatpush.bf16.msra.mxu0 %v4589
    %5073 = vmatpush.bf16.msra.mxu0 %v4585
    %5074 = vmatpush.bf16.msra.mxu0 %v4581
    %5075 = vmatpush.bf16.msra.mxu0 %v4577
    %5076 = vmatpush.bf16.msra.mxu0 %v4573
    %5077 = vmatpush.bf16.msra.mxu0 %v4569
    %5078 = vmatmul.bf16.gmra.mxu0 %v3340
    %v5079 = vpop.f32.mrf.mxu0
    %v5080 = vadd.f32 %v5067, %v5079
    %v5081 = vpop.f32.mrf.mxu0
    %5082 = vdwg.mxu0
    %5083 = vmatpush.bf16.msra.mxu0 %v4629
    %5084 = vmatpush.bf16.msra.mxu0 %v4625
    %5085 = vmatpush.bf16.msra.mxu0 %v4621
    %5086 = vmatpush.bf16.msra.mxu0 %v4617
    %5087 = vmatpush.bf16.msra.mxu0 %v4613
    %5088 = vmatpush.bf16.msra.mxu0 %v4609
    %5089 = vmatpush.bf16.msra.mxu0 %v4605
    %5090 = vmatpush.bf16.msra.mxu0 %v4601
    %5091 = vmatmul.bf16.gmra.mxu0 %v3341
    %v5092 = vpop.f32.mrf.mxu0
    %v5093 = vadd.f32 %v5080, %v5092
    %v5094 = vpop.f32.mrf.mxu0
    %5095 = vdwg.mxu0
    %5096 = vmatpush.bf16.msra.mxu0 %v4406
    %5097 = vmatpush.bf16.msra.mxu0 %v4402
    %5098 = vmatpush.bf16.msra.mxu0 %v4398
    %5099 = vmatpush.bf16.msra.mxu0 %v4394
    %5100 = vmatpush.bf16.msra.mxu0 %v4390
    %5101 = vmatpush.bf16.msra.mxu0 %v4386
    %5102 = vmatpush.bf16.msra.mxu0 %v4382
    %5103 = vmatpush.bf16.msra.mxu0 %v4378
    %5104 = vmatmul.bf16.gmra.mxu0 %v3334
    %v5105 = vpop.f32.mrf.mxu0
    %v5106 = vadd.f32 %v3602, %v5105
    %v5107 = vpop.f32.mrf.mxu0
    %5108 = vdwg.mxu0
    %5109 = vmatpush.bf16.msra.mxu0 %v4438
    %5110 = vmatpush.bf16.msra.mxu0 %v4434
    %5111 = vmatpush.bf16.msra.mxu0 %v4430
    %5112 = vmatpush.bf16.msra.mxu0 %v4426
    %5113 = vmatpush.bf16.msra.mxu0 %v4422
    %5114 = vmatpush.bf16.msra.mxu0 %v4418
    %5115 = vmatpush.bf16.msra.mxu0 %v4414
    %5116 = vmatpush.bf16.msra.mxu0 %v4410
    %5117 = vmatmul.bf16.gmra.mxu0 %v3335
    %v5118 = vpop.f32.mrf.mxu0
    %v5119 = vadd.f32 %v5106, %v5118
    %v5120 = vpop.f32.mrf.mxu0
    %5121 = vdwg.mxu0
    %5122 = vmatpush.bf16.msra.mxu0 %v4470
    %5123 = vmatpush.bf16.msra.mxu0 %v4466
    %5124 = vmatpush.bf16.msra.mxu0 %v4462
    %5125 = vmatpush.bf16.msra.mxu0 %v4458
    %5126 = vmatpush.bf16.msra.mxu0 %v4454
    %5127 = vmatpush.bf16.msra.mxu0 %v4450
    %5128 = vmatpush.bf16.msra.mxu0 %v4446
    %5129 = vmatpush.bf16.msra.mxu0 %v4442
    %5130 = vmatmul.bf16.gmra.mxu0 %v3336
    %v5131 = vpop.f32.mrf.mxu0
    %v5132 = vadd.f32 %v5119, %v5131
    %v5133 = vpop.f32.mrf.mxu0
    %5134 = vdwg.mxu0
    %5135 = vmatpush.bf16.msra.mxu0 %v4502
    %5136 = vmatpush.bf16.msra.mxu0 %v4498
    %5137 = vmatpush.bf16.msra.mxu0 %v4494
    %5138 = vmatpush.bf16.msra.mxu0 %v4490
    %5139 = vmatpush.bf16.msra.mxu0 %v4486
    %5140 = vmatpush.bf16.msra.mxu0 %v4482
    %5141 = vmatpush.bf16.msra.mxu0 %v4478
    %5142 = vmatpush.bf16.msra.mxu0 %v4474
    %5143 = vmatmul.bf16.gmra.mxu0 %v3337
    %v5144 = vpop.f32.mrf.mxu0
    %v5145 = vadd.f32 %v5132, %v5144
    %v5146 = vpop.f32.mrf.mxu0
    %5147 = vdwg.mxu0
    %5148 = vmatpush.bf16.msra.mxu0 %v4534
    %5149 = vmatpush.bf16.msra.mxu0 %v4530
    %5150 = vmatpush.bf16.msra.mxu0 %v4526
    %5151 = vmatpush.bf16.msra.mxu0 %v4522
    %5152 = vmatpush.bf16.msra.mxu0 %v4518
    %5153 = vmatpush.bf16.msra.mxu0 %v4514
    %5154 = vmatpush.bf16.msra.mxu0 %v4510
    %5155 = vmatpush.bf16.msra.mxu0 %v4506
    %5156 = vmatmul.bf16.gmra.mxu0 %v3338
    %v5157 = vpop.f32.mrf.mxu0
    %v5158 = vadd.f32 %v5145, %v5157
    %v5159 = vpop.f32.mrf.mxu0
    %5160 = vdwg.mxu0
    %5161 = vmatpush.bf16.msra.mxu0 %v4566
    %5162 = vmatpush.bf16.msra.mxu0 %v4562
    %5163 = vmatpush.bf16.msra.mxu0 %v4558
    %5164 = vmatpush.bf16.msra.mxu0 %v4554
    %5165 = vmatpush.bf16.msra.mxu0 %v4550
    %5166 = vmatpush.bf16.msra.mxu0 %v4546
    %5167 = vmatpush.bf16.msra.mxu0 %v4542
    %5168 = vmatpush.bf16.msra.mxu0 %v4538
    %5169 = vmatmul.bf16.gmra.mxu0 %v3339
    %v5170 = vpop.f32.mrf.mxu0
    %v5171 = vadd.f32 %v5158, %v5170
    %v5172 = vpop.f32.mrf.mxu0
    %5173 = vdwg.mxu0
    %5174 = vmatpush.bf16.msra.mxu0 %v4598
    %5175 = vmatpush.bf16.msra.mxu0 %v4594
    %5176 = vmatpush.bf16.msra.mxu0 %v4590
    %5177 = vmatpush.bf16.msra.mxu0 %v4586
    %5178 = vmatpush.bf16.msra.mxu0 %v4582
    %5179 = vmatpush.bf16.msra.mxu0 %v4578
    %5180 = vmatpush.bf16.msra.mxu0 %v4574
    %5181 = vmatpush.bf16.msra.mxu0 %v4570
    %5182 = vmatmul.bf16.gmra.mxu0 %v3340
    %v5183 = vpop.f32.mrf.mxu0
    %v5184 = vadd.f32 %v5171, %v5183
    %v5185 = vpop.f32.mrf.mxu0
    %5186 = vdwg.mxu0
    %5187 = vmatpush.bf16.msra.mxu0 %v4630
    %5188 = vmatpush.bf16.msra.mxu0 %v4626
    %5189 = vmatpush.bf16.msra.mxu0 %v4622
    %5190 = vmatpush.bf16.msra.mxu0 %v4618
    %5191 = vmatpush.bf16.msra.mxu0 %v4614
    %5192 = vmatpush.bf16.msra.mxu0 %v4610
    %5193 = vmatpush.bf16.msra.mxu0 %v4606
    %5194 = vmatpush.bf16.msra.mxu0 %v4602
    %5195 = vmatmul.bf16.gmra.mxu0 %v3341
    %v5196 = vpop.f32.mrf.mxu0
    %v5197 = vadd.f32 %v5184, %v5196
    %v5198 = vpop.f32.mrf.mxu0
    %5199 = vdwg.mxu0
    %5200 = vmatpush.bf16.msra.mxu0 %v4407
    %5201 = vmatpush.bf16.msra.mxu0 %v4403
    %5202 = vmatpush.bf16.msra.mxu0 %v4399
    %5203 = vmatpush.bf16.msra.mxu0 %v4395
    %5204 = vmatpush.bf16.msra.mxu0 %v4391
    %5205 = vmatpush.bf16.msra.mxu0 %v4387
    %5206 = vmatpush.bf16.msra.mxu0 %v4383
    %5207 = vmatpush.bf16.msra.mxu0 %v4379
    %5208 = vmatmul.bf16.gmra.mxu0 %v3334
    %v5209 = vpop.f32.mrf.mxu0
    %v5210 = vadd.f32 %v3603, %v5209
    %v5211 = vpop.f32.mrf.mxu0
    %5212 = vdwg.mxu0
    %5213 = vmatpush.bf16.msra.mxu0 %v4439
    %5214 = vmatpush.bf16.msra.mxu0 %v4435
    %5215 = vmatpush.bf16.msra.mxu0 %v4431
    %5216 = vmatpush.bf16.msra.mxu0 %v4427
    %5217 = vmatpush.bf16.msra.mxu0 %v4423
    %5218 = vmatpush.bf16.msra.mxu0 %v4419
    %5219 = vmatpush.bf16.msra.mxu0 %v4415
    %5220 = vmatpush.bf16.msra.mxu0 %v4411
    %5221 = vmatmul.bf16.gmra.mxu0 %v3335
    %v5222 = vpop.f32.mrf.mxu0
    %v5223 = vadd.f32 %v5210, %v5222
    %v5224 = vpop.f32.mrf.mxu0
    %5225 = vdwg.mxu0
    %5226 = vmatpush.bf16.msra.mxu0 %v4471
    %5227 = vmatpush.bf16.msra.mxu0 %v4467
    %5228 = vmatpush.bf16.msra.mxu0 %v4463
    %5229 = vmatpush.bf16.msra.mxu0 %v4459
    %5230 = vmatpush.bf16.msra.mxu0 %v4455
    %5231 = vmatpush.bf16.msra.mxu0 %v4451
    %5232 = vmatpush.bf16.msra.mxu0 %v4447
    %5233 = vmatpush.bf16.msra.mxu0 %v4443
    %5234 = vmatmul.bf16.gmra.mxu0 %v3336
    %v5235 = vpop.f32.mrf.mxu0
    %v5236 = vadd.f32 %v5223, %v5235
    %v5237 = vpop.f32.mrf.mxu0
    %5238 = vdwg.mxu0
    %5239 = vmatpush.bf16.msra.mxu0 %v4503
    %5240 = vmatpush.bf16.msra.mxu0 %v4499
    %5241 = vmatpush.bf16.msra.mxu0 %v4495
    %5242 = vmatpush.bf16.msra.mxu0 %v4491
    %5243 = vmatpush.bf16.msra.mxu0 %v4487
    %5244 = vmatpush.bf16.msra.mxu0 %v4483
    %5245 = vmatpush.bf16.msra.mxu0 %v4479
    %5246 = vmatpush.bf16.msra.mxu0 %v4475
    %5247 = vmatmul.bf16.gmra.mxu0 %v3337
    %v5248 = vpop.f32.mrf.mxu0
    %v5249 = vadd.f32 %v5236, %v5248
    %v5250 = vpop.f32.mrf.mxu0
    %5251 = vdwg.mxu0
    %5252 = vmatpush.bf16.msra.mxu0 %v4535
    %5253 = vmatpush.bf16.msra.mxu0 %v4531
    %5254 = vmatpush.bf16.msra.mxu0 %v4527
    %5255 = vmatpush.bf16.msra.mxu0 %v4523
    %5256 = vmatpush.bf16.msra.mxu0 %v4519
    %5257 = vmatpush.bf16.msra.mxu0 %v4515
    %5258 = vmatpush.bf16.msra.mxu0 %v4511
    %5259 = vmatpush.bf16.msra.mxu0 %v4507
    %5260 = vmatmul.bf16.gmra.mxu0 %v3338
    %v5261 = vpop.f32.mrf.mxu0
    %v5262 = vadd.f32 %v5249, %v5261
    %v5263 = vpop.f32.mrf.mxu0
    %5264 = vdwg.mxu0
    %5265 = vmatpush.bf16.msra.mxu0 %v4567
    %5266 = vmatpush.bf16.msra.mxu0 %v4563
    %5267 = vmatpush.bf16.msra.mxu0 %v4559
    %5268 = vmatpush.bf16.msra.mxu0 %v4555
    %5269 = vmatpush.bf16.msra.mxu0 %v4551
    %5270 = vmatpush.bf16.msra.mxu0 %v4547
    %5271 = vmatpush.bf16.msra.mxu0 %v4543
    %5272 = vmatpush.bf16.msra.mxu0 %v4539
    %5273 = vmatmul.bf16.gmra.mxu0 %v3339
    %v5274 = vpop.f32.mrf.mxu0
    %v5275 = vadd.f32 %v5262, %v5274
    %v5276 = vpop.f32.mrf.mxu0
    %5277 = vdwg.mxu0
    %5278 = vmatpush.bf16.msra.mxu0 %v4599
    %5279 = vmatpush.bf16.msra.mxu0 %v4595
    %5280 = vmatpush.bf16.msra.mxu0 %v4591
    %5281 = vmatpush.bf16.msra.mxu0 %v4587
    %5282 = vmatpush.bf16.msra.mxu0 %v4583
    %5283 = vmatpush.bf16.msra.mxu0 %v4579
    %5284 = vmatpush.bf16.msra.mxu0 %v4575
    %5285 = vmatpush.bf16.msra.mxu0 %v4571
    %5286 = vmatmul.bf16.gmra.mxu0 %v3340
    %v5287 = vpop.f32.mrf.mxu0
    %v5288 = vadd.f32 %v5275, %v5287
    %v5289 = vpop.f32.mrf.mxu0
    %5290 = vdwg.mxu0
    %5291 = vmatpush.bf16.msra.mxu0 %v4631
    %5292 = vmatpush.bf16.msra.mxu0 %v4627
    %5293 = vmatpush.bf16.msra.mxu0 %v4623
    %5294 = vmatpush.bf16.msra.mxu0 %v4619
    %5295 = vmatpush.bf16.msra.mxu0 %v4615
    %5296 = vmatpush.bf16.msra.mxu0 %v4611
    %5297 = vmatpush.bf16.msra.mxu0 %v4607
    %5298 = vmatpush.bf16.msra.mxu0 %v4603
    %5299 = vmatmul.bf16.gmra.mxu0 %v3341
    %v5300 = vpop.f32.mrf.mxu0
    %v5301 = vadd.f32 %v5288, %v5300
    %v5302 = vpop.f32.mrf.mxu0
    %5303 = vdwg.mxu0
    %v5304 = vsub.f32 0.0, %v4989
    %v5305 = vsub.f32 0.0, %v5093
    %v5306 = vsub.f32 0.0, %v5197
    %v5307 = vsub.f32 0.0, %v5301
    %v5308 = vmul.f32 %v5304, 1.442695
    %v5309 = vpow.pop %v5308
    %v5310 = vmul.f32 %v5305, 1.442695
    %v5311 = vpow.pop %v5310
    %v5312 = vmul.f32 %v5306, 1.442695
    %v5313 = vpow.pop %v5312
    %v5314 = vmul.f32 %v5307, 1.442695
    %v5315 = vpow.pop %v5314
    %v5316 = vadd.f32 %v5309, 1.0
    %v5317 = vadd.f32 %v5311, 1.0
    %v5318 = vadd.f32 %v5313, 1.0
    %v5319 = vadd.f32 %v5315, 1.0
    %v5320 = vrcp.pop %v5316
    %v5321 = vmul.f32 %v5316, %v5320
    %v5322 = vsub.f32 1.0, %v5321
    %v5323 = vmul.f32 %v5320, %v5322
    %v5324 = vadd.f32 %v5320, %v5323
    %vm5325 = vweird.f32 %v5316
    %vm5326 = vweird.f32 %v5320
    %vm5327 = vmor %vm5325, %vm5326
    %v5328 = vsel %vm5327, %v5320, %v5324
    %v5329 = vand.u32 2147483647, %v5316
    %vm5330 = vcmp.eq.f32.partialorder %v5329, 8.507059e+37
    %v5331 = vand.u32 %v5316, 2147483648
    %v5332 = vor.u32 1.1754944e-38, %v5331
    %v5333 = vsel %vm5330, %v5332, %v5328
    %v5334 = vmul.f32 1.0, %v5333
    %v5335 = vrcp.pop %v5317
    %v5336 = vmul.f32 %v5317, %v5335
    %v5337 = vsub.f32 1.0, %v5336
    %v5338 = vmul.f32 %v5335, %v5337
    %v5339 = vadd.f32 %v5335, %v5338
    %vm5340 = vweird.f32 %v5317
    %vm5341 = vweird.f32 %v5335
    %vm5342 = vmor %vm5340, %vm5341
    %v5343 = vsel %vm5342, %v5335, %v5339
    %v5344 = vand.u32 2147483647, %v5317
    %vm5345 = vcmp.eq.f32.partialorder %v5344, 8.507059e+37
    %v5346 = vand.u32 %v5317, 2147483648
    %v5347 = vor.u32 1.1754944e-38, %v5346
    %v5348 = vsel %vm5345, %v5347, %v5343
    %v5349 = vmul.f32 1.0, %v5348
    %v5350 = vrcp.pop %v5318
    %v5351 = vmul.f32 %v5318, %v5350
    %v5352 = vsub.f32 1.0, %v5351
    %v5353 = vmul.f32 %v5350, %v5352
    %v5354 = vadd.f32 %v5350, %v5353
    %vm5355 = vweird.f32 %v5318
    %vm5356 = vweird.f32 %v5350
    %vm5357 = vmor %vm5355, %vm5356
    %v5358 = vsel %vm5357, %v5350, %v5354
    %v5359 = vand.u32 2147483647, %v5318
    %vm5360 = vcmp.eq.f32.partialorder %v5359, 8.507059e+37
    %v5361 = vand.u32 %v5318, 2147483648
    %v5362 = vor.u32 1.1754944e-38, %v5361
    %v5363 = vsel %vm5360, %v5362, %v5358
    %v5364 = vmul.f32 1.0, %v5363
    %v5365 = vrcp.pop %v5319
    %v5366 = vmul.f32 %v5319, %v5365
    %v5367 = vsub.f32 1.0, %v5366
    %v5368 = vmul.f32 %v5365, %v5367
    %v5369 = vadd.f32 %v5365, %v5368
    %vm5370 = vweird.f32 %v5319
    %vm5371 = vweird.f32 %v5365
    %vm5372 = vmor %vm5370, %vm5371
    %v5373 = vsel %vm5372, %v5365, %v5369
    %v5374 = vand.u32 2147483647, %v5319
    %vm5375 = vcmp.eq.f32.partialorder %v5374, 8.507059e+37
    %v5376 = vand.u32 %v5319, 2147483648
    %v5377 = vor.u32 1.1754944e-38, %v5376
    %v5378 = vsel %vm5375, %v5377, %v5373
    %v5379 = vmul.f32 1.0, %v5378
    %v5380 = vmul.f32 %v4989, %v5334
    %v5381 = vmul.f32 %v5093, %v5349
    %v5382 = vmul.f32 %v5197, %v5364
    %v5383 = vmul.f32 %v5301, %v5379
    %v5384 = vpack.c.bf16 %v5380, %v5380
    %v5385 = vpack.c.bf16 %v5381, %v5381
    %v5386 = vpack.c.bf16 %v5382, %v5382
    %v5387 = vpack.c.bf16 %v5383, %v5383
    %v5388 = vld [vmem:[#allocation10] sm:$0xff]
    %v5389 = vld [vmem:[#allocation10 + $0x8] sm:$0xff]
    %v5390 = vld [vmem:[#allocation10 + $0x10] sm:$0xff]
    %v5391 = vld [vmem:[#allocation10 + $0x18] sm:$0xff]
    %v5392 = vld [vmem:[#allocation10 + $0x20] sm:$0xff]
    %v5393 = vld [vmem:[#allocation10 + $0x28] sm:$0xff]
    %v5394 = vld [vmem:[#allocation10 + $0x30] sm:$0xff]
    %v5395 = vld [vmem:[#allocation10 + $0x38] sm:$0xff]
    %v5396 = vld [vmem:[#allocation10 + $0x40] sm:$0xff]
    %v5397 = vld [vmem:[#allocation10 + $0x48] sm:$0xff]
    %v5398 = vld [vmem:[#allocation10 + $0x50] sm:$0xff]
    %v5399 = vld [vmem:[#allocation10 + $0x58] sm:$0xff]
    %v5400 = vld [vmem:[#allocation10 + $0x60] sm:$0xff]
    %v5401 = vld [vmem:[#allocation10 + $0x68] sm:$0xff]
    %v5402 = vld [vmem:[#allocation10 + $0x70] sm:$0xff]
    %v5403 = vld [vmem:[#allocation10 + $0x78] sm:$0xff]
    %v5404 = vld [vmem:[#allocation10 + $0x80] sm:$0xff]
    %v5405 = vld [vmem:[#allocation10 + $0x88] sm:$0xff]
    %v5406 = vld [vmem:[#allocation10 + $0x90] sm:$0xff]
    %v5407 = vld [vmem:[#allocation10 + $0x98] sm:$0xff]
    %v5408 = vld [vmem:[#allocation10 + $0xa0] sm:$0xff]
    %v5409 = vld [vmem:[#allocation10 + $0xa8] sm:$0xff]
    %v5410 = vld [vmem:[#allocation10 + $0xb0] sm:$0xff]
    %v5411 = vld [vmem:[#allocation10 + $0xb8] sm:$0xff]
    %v5412 = vld [vmem:[#allocation10 + $0xc0] sm:$0xff]
    %v5413 = vld [vmem:[#allocation10 + $0xc8] sm:$0xff]
    %v5414 = vld [vmem:[#allocation10 + $0xd0] sm:$0xff]
    %v5415 = vld [vmem:[#allocation10 + $0xd8] sm:$0xff]
    %v5416 = vld [vmem:[#allocation10 + $0xe0] sm:$0xff]
    %v5417 = vld [vmem:[#allocation10 + $0xe8] sm:$0xff]
    %v5418 = vld [vmem:[#allocation10 + $0xf0] sm:$0xff]
    %v5419 = vld [vmem:[#allocation10 + $0xf8] sm:$0xff]
    %v5420 = vld [vmem:[#allocation10 + $0x100] sm:$0xff]
    %v5421 = vld [vmem:[#allocation10 + $0x108] sm:$0xff]
    %v5422 = vld [vmem:[#allocation10 + $0x110] sm:$0xff]
    %v5423 = vld [vmem:[#allocation10 + $0x118] sm:$0xff]
    %v5424 = vld [vmem:[#allocation10 + $0x120] sm:$0xff]
    %v5425 = vld [vmem:[#allocation10 + $0x128] sm:$0xff]
    %v5426 = vld [vmem:[#allocation10 + $0x130] sm:$0xff]
    %v5427 = vld [vmem:[#allocation10 + $0x138] sm:$0xff]
    %v5428 = vld [vmem:[#allocation10 + $0x140] sm:$0xff]
    %v5429 = vld [vmem:[#allocation10 + $0x148] sm:$0xff]
    %v5430 = vld [vmem:[#allocation10 + $0x150] sm:$0xff]
    %v5431 = vld [vmem:[#allocation10 + $0x158] sm:$0xff]
    %v5432 = vld [vmem:[#allocation10 + $0x160] sm:$0xff]
    %v5433 = vld [vmem:[#allocation10 + $0x168] sm:$0xff]
    %v5434 = vld [vmem:[#allocation10 + $0x170] sm:$0xff]
    %v5435 = vld [vmem:[#allocation10 + $0x178] sm:$0xff]
    %v5436 = vld [vmem:[#allocation10 + $0x180] sm:$0xff]
    %v5437 = vld [vmem:[#allocation10 + $0x188] sm:$0xff]
    %v5438 = vld [vmem:[#allocation10 + $0x190] sm:$0xff]
    %v5439 = vld [vmem:[#allocation10 + $0x198] sm:$0xff]
    %v5440 = vld [vmem:[#allocation10 + $0x1a0] sm:$0xff]
    %v5441 = vld [vmem:[#allocation10 + $0x1a8] sm:$0xff]
    %v5442 = vld [vmem:[#allocation10 + $0x1b0] sm:$0xff]
    %v5443 = vld [vmem:[#allocation10 + $0x1b8] sm:$0xff]
    %v5444 = vld [vmem:[#allocation10 + $0x1c0] sm:$0xff]
    %v5445 = vld [vmem:[#allocation10 + $0x1c8] sm:$0xff]
    %v5446 = vld [vmem:[#allocation10 + $0x1d0] sm:$0xff]
    %v5447 = vld [vmem:[#allocation10 + $0x1d8] sm:$0xff]
    %v5448 = vld [vmem:[#allocation10 + $0x1e0] sm:$0xff]
    %v5449 = vld [vmem:[#allocation10 + $0x1e8] sm:$0xff]
    %v5450 = vld [vmem:[#allocation10 + $0x1f0] sm:$0xff]
    %v5451 = vld [vmem:[#allocation10 + $0x1f8] sm:$0xff]
    %v5452 = vld [vmem:[#allocation10 + $0x200] sm:$0xff]
    %v5453 = vld [vmem:[#allocation10 + $0x208] sm:$0xff]
    %v5454 = vld [vmem:[#allocation10 + $0x210] sm:$0xff]
    %v5455 = vld [vmem:[#allocation10 + $0x218] sm:$0xff]
    %v5456 = vld [vmem:[#allocation10 + $0x220] sm:$0xff]
    %v5457 = vld [vmem:[#allocation10 + $0x228] sm:$0xff]
    %v5458 = vld [vmem:[#allocation10 + $0x230] sm:$0xff]
    %v5459 = vld [vmem:[#allocation10 + $0x238] sm:$0xff]
    %v5460 = vld [vmem:[#allocation10 + $0x240] sm:$0xff]
    %v5461 = vld [vmem:[#allocation10 + $0x248] sm:$0xff]
    %v5462 = vld [vmem:[#allocation10 + $0x250] sm:$0xff]
    %v5463 = vld [vmem:[#allocation10 + $0x258] sm:$0xff]
    %v5464 = vld [vmem:[#allocation10 + $0x260] sm:$0xff]
    %v5465 = vld [vmem:[#allocation10 + $0x268] sm:$0xff]
    %v5466 = vld [vmem:[#allocation10 + $0x270] sm:$0xff]
    %v5467 = vld [vmem:[#allocation10 + $0x278] sm:$0xff]
    %v5468 = vld [vmem:[#allocation10 + $0x280] sm:$0xff]
    %v5469 = vld [vmem:[#allocation10 + $0x288] sm:$0xff]
    %v5470 = vld [vmem:[#allocation10 + $0x290] sm:$0xff]
    %v5471 = vld [vmem:[#allocation10 + $0x298] sm:$0xff]
    %v5472 = vld [vmem:[#allocation10 + $0x2a0] sm:$0xff]
    %v5473 = vld [vmem:[#allocation10 + $0x2a8] sm:$0xff]
    %v5474 = vld [vmem:[#allocation10 + $0x2b0] sm:$0xff]
    %v5475 = vld [vmem:[#allocation10 + $0x2b8] sm:$0xff]
    %v5476 = vld [vmem:[#allocation10 + $0x2c0] sm:$0xff]
    %v5477 = vld [vmem:[#allocation10 + $0x2c8] sm:$0xff]
    %v5478 = vld [vmem:[#allocation10 + $0x2d0] sm:$0xff]
    %v5479 = vld [vmem:[#allocation10 + $0x2d8] sm:$0xff]
    %v5480 = vld [vmem:[#allocation10 + $0x2e0] sm:$0xff]
    %v5481 = vld [vmem:[#allocation10 + $0x2e8] sm:$0xff]
    %v5482 = vld [vmem:[#allocation10 + $0x2f0] sm:$0xff]
    %v5483 = vld [vmem:[#allocation10 + $0x2f8] sm:$0xff]
    %v5484 = vld [vmem:[#allocation10 + $0x300] sm:$0xff]
    %v5485 = vld [vmem:[#allocation10 + $0x308] sm:$0xff]
    %v5486 = vld [vmem:[#allocation10 + $0x310] sm:$0xff]
    %v5487 = vld [vmem:[#allocation10 + $0x318] sm:$0xff]
    %v5488 = vld [vmem:[#allocation10 + $0x320] sm:$0xff]
    %v5489 = vld [vmem:[#allocation10 + $0x328] sm:$0xff]
    %v5490 = vld [vmem:[#allocation10 + $0x330] sm:$0xff]
    %v5491 = vld [vmem:[#allocation10 + $0x338] sm:$0xff]
    %v5492 = vld [vmem:[#allocation10 + $0x340] sm:$0xff]
    %v5493 = vld [vmem:[#allocation10 + $0x348] sm:$0xff]
    %v5494 = vld [vmem:[#allocation10 + $0x350] sm:$0xff]
    %v5495 = vld [vmem:[#allocation10 + $0x358] sm:$0xff]
    %v5496 = vld [vmem:[#allocation10 + $0x360] sm:$0xff]
    %v5497 = vld [vmem:[#allocation10 + $0x368] sm:$0xff]
    %v5498 = vld [vmem:[#allocation10 + $0x370] sm:$0xff]
    %v5499 = vld [vmem:[#allocation10 + $0x378] sm:$0xff]
    %v5500 = vld [vmem:[#allocation10 + $0x380] sm:$0xff]
    %v5501 = vld [vmem:[#allocation10 + $0x388] sm:$0xff]
    %v5502 = vld [vmem:[#allocation10 + $0x390] sm:$0xff]
    %v5503 = vld [vmem:[#allocation10 + $0x398] sm:$0xff]
    %v5504 = vld [vmem:[#allocation10 + $0x3a0] sm:$0xff]
    %v5505 = vld [vmem:[#allocation10 + $0x3a8] sm:$0xff]
    %v5506 = vld [vmem:[#allocation10 + $0x3b0] sm:$0xff]
    %v5507 = vld [vmem:[#allocation10 + $0x3b8] sm:$0xff]
    %v5508 = vld [vmem:[#allocation10 + $0x3c0] sm:$0xff]
    %v5509 = vld [vmem:[#allocation10 + $0x3c8] sm:$0xff]
    %v5510 = vld [vmem:[#allocation10 + $0x3d0] sm:$0xff]
    %v5511 = vld [vmem:[#allocation10 + $0x3d8] sm:$0xff]
    %v5512 = vld [vmem:[#allocation10 + $0x3e0] sm:$0xff]
    %v5513 = vld [vmem:[#allocation10 + $0x3e8] sm:$0xff]
    %v5514 = vld [vmem:[#allocation10 + $0x3f0] sm:$0xff]
    %v5515 = vld [vmem:[#allocation10 + $0x3f8] sm:$0xff]
    %v5516 = vld [vmem:[#allocation10 + $0x400] sm:$0xff]
    %v5517 = vld [vmem:[#allocation10 + $0x408] sm:$0xff]
    %v5518 = vld [vmem:[#allocation10 + $0x410] sm:$0xff]
    %v5519 = vld [vmem:[#allocation10 + $0x418] sm:$0xff]
    %v5520 = vld [vmem:[#allocation10 + $0x420] sm:$0xff]
    %v5521 = vld [vmem:[#allocation10 + $0x428] sm:$0xff]
    %v5522 = vld [vmem:[#allocation10 + $0x430] sm:$0xff]
    %v5523 = vld [vmem:[#allocation10 + $0x438] sm:$0xff]
    %v5524 = vld [vmem:[#allocation10 + $0x440] sm:$0xff]
    %v5525 = vld [vmem:[#allocation10 + $0x448] sm:$0xff]
    %v5526 = vld [vmem:[#allocation10 + $0x450] sm:$0xff]
    %v5527 = vld [vmem:[#allocation10 + $0x458] sm:$0xff]
    %v5528 = vld [vmem:[#allocation10 + $0x460] sm:$0xff]
    %v5529 = vld [vmem:[#allocation10 + $0x468] sm:$0xff]
    %v5530 = vld [vmem:[#allocation10 + $0x470] sm:$0xff]
    %v5531 = vld [vmem:[#allocation10 + $0x478] sm:$0xff]
    %v5532 = vld [vmem:[#allocation10 + $0x480] sm:$0xff]
    %v5533 = vld [vmem:[#allocation10 + $0x488] sm:$0xff]
    %v5534 = vld [vmem:[#allocation10 + $0x490] sm:$0xff]
    %v5535 = vld [vmem:[#allocation10 + $0x498] sm:$0xff]
    %v5536 = vld [vmem:[#allocation10 + $0x4a0] sm:$0xff]
    %v5537 = vld [vmem:[#allocation10 + $0x4a8] sm:$0xff]
    %v5538 = vld [vmem:[#allocation10 + $0x4b0] sm:$0xff]
    %v5539 = vld [vmem:[#allocation10 + $0x4b8] sm:$0xff]
    %v5540 = vld [vmem:[#allocation10 + $0x4c0] sm:$0xff]
    %v5541 = vld [vmem:[#allocation10 + $0x4c8] sm:$0xff]
    %v5542 = vld [vmem:[#allocation10 + $0x4d0] sm:$0xff]
    %v5543 = vld [vmem:[#allocation10 + $0x4d8] sm:$0xff]
    %v5544 = vld [vmem:[#allocation10 + $0x4e0] sm:$0xff]
    %v5545 = vld [vmem:[#allocation10 + $0x4e8] sm:$0xff]
    %v5546 = vld [vmem:[#allocation10 + $0x4f0] sm:$0xff]
    %v5547 = vld [vmem:[#allocation10 + $0x4f8] sm:$0xff]
    %v5548 = vld [vmem:[#allocation10 + $0x500] sm:$0xff]
    %v5549 = vld [vmem:[#allocation10 + $0x508] sm:$0xff]
    %v5550 = vld [vmem:[#allocation10 + $0x510] sm:$0xff]
    %v5551 = vld [vmem:[#allocation10 + $0x518] sm:$0xff]
    %v5552 = vld [vmem:[#allocation10 + $0x520] sm:$0xff]
    %v5553 = vld [vmem:[#allocation10 + $0x528] sm:$0xff]
    %v5554 = vld [vmem:[#allocation10 + $0x530] sm:$0xff]
    %v5555 = vld [vmem:[#allocation10 + $0x538] sm:$0xff]
    %v5556 = vld [vmem:[#allocation10 + $0x540] sm:$0xff]
    %v5557 = vld [vmem:[#allocation10 + $0x548] sm:$0xff]
    %v5558 = vld [vmem:[#allocation10 + $0x550] sm:$0xff]
    %v5559 = vld [vmem:[#allocation10 + $0x558] sm:$0xff]
    %v5560 = vld [vmem:[#allocation10 + $0x560] sm:$0xff]
    %v5561 = vld [vmem:[#allocation10 + $0x568] sm:$0xff]
    %v5562 = vld [vmem:[#allocation10 + $0x570] sm:$0xff]
    %v5563 = vld [vmem:[#allocation10 + $0x578] sm:$0xff]
    %v5564 = vld [vmem:[#allocation10 + $0x580] sm:$0xff]
    %v5565 = vld [vmem:[#allocation10 + $0x588] sm:$0xff]
    %v5566 = vld [vmem:[#allocation10 + $0x590] sm:$0xff]
    %v5567 = vld [vmem:[#allocation10 + $0x598] sm:$0xff]
    %v5568 = vld [vmem:[#allocation10 + $0x5a0] sm:$0xff]
    %v5569 = vld [vmem:[#allocation10 + $0x5a8] sm:$0xff]
    %v5570 = vld [vmem:[#allocation10 + $0x5b0] sm:$0xff]
    %v5571 = vld [vmem:[#allocation10 + $0x5b8] sm:$0xff]
    %v5572 = vld [vmem:[#allocation10 + $0x5c0] sm:$0xff]
    %v5573 = vld [vmem:[#allocation10 + $0x5c8] sm:$0xff]
    %v5574 = vld [vmem:[#allocation10 + $0x5d0] sm:$0xff]
    %v5575 = vld [vmem:[#allocation10 + $0x5d8] sm:$0xff]
    %v5576 = vld [vmem:[#allocation10 + $0x5e0] sm:$0xff]
    %v5577 = vld [vmem:[#allocation10 + $0x5e8] sm:$0xff]
    %v5578 = vld [vmem:[#allocation10 + $0x5f0] sm:$0xff]
    %v5579 = vld [vmem:[#allocation10 + $0x5f8] sm:$0xff]
    %v5580 = vld [vmem:[#allocation10 + $0x600] sm:$0xff]
    %v5581 = vld [vmem:[#allocation10 + $0x608] sm:$0xff]
    %v5582 = vld [vmem:[#allocation10 + $0x610] sm:$0xff]
    %v5583 = vld [vmem:[#allocation10 + $0x618] sm:$0xff]
    %v5584 = vld [vmem:[#allocation10 + $0x620] sm:$0xff]
    %v5585 = vld [vmem:[#allocation10 + $0x628] sm:$0xff]
    %v5586 = vld [vmem:[#allocation10 + $0x630] sm:$0xff]
    %v5587 = vld [vmem:[#allocation10 + $0x638] sm:$0xff]
    %v5588 = vld [vmem:[#allocation10 + $0x640] sm:$0xff]
    %v5589 = vld [vmem:[#allocation10 + $0x648] sm:$0xff]
    %v5590 = vld [vmem:[#allocation10 + $0x650] sm:$0xff]
    %v5591 = vld [vmem:[#allocation10 + $0x658] sm:$0xff]
    %v5592 = vld [vmem:[#allocation10 + $0x660] sm:$0xff]
    %v5593 = vld [vmem:[#allocation10 + $0x668] sm:$0xff]
    %v5594 = vld [vmem:[#allocation10 + $0x670] sm:$0xff]
    %v5595 = vld [vmem:[#allocation10 + $0x678] sm:$0xff]
    %v5596 = vld [vmem:[#allocation10 + $0x680] sm:$0xff]
    %v5597 = vld [vmem:[#allocation10 + $0x688] sm:$0xff]
    %v5598 = vld [vmem:[#allocation10 + $0x690] sm:$0xff]
    %v5599 = vld [vmem:[#allocation10 + $0x698] sm:$0xff]
    %v5600 = vld [vmem:[#allocation10 + $0x6a0] sm:$0xff]
    %v5601 = vld [vmem:[#allocation10 + $0x6a8] sm:$0xff]
    %v5602 = vld [vmem:[#allocation10 + $0x6b0] sm:$0xff]
    %v5603 = vld [vmem:[#allocation10 + $0x6b8] sm:$0xff]
    %v5604 = vld [vmem:[#allocation10 + $0x6c0] sm:$0xff]
    %v5605 = vld [vmem:[#allocation10 + $0x6c8] sm:$0xff]
    %v5606 = vld [vmem:[#allocation10 + $0x6d0] sm:$0xff]
    %v5607 = vld [vmem:[#allocation10 + $0x6d8] sm:$0xff]
    %v5608 = vld [vmem:[#allocation10 + $0x6e0] sm:$0xff]
    %v5609 = vld [vmem:[#allocation10 + $0x6e8] sm:$0xff]
    %v5610 = vld [vmem:[#allocation10 + $0x6f0] sm:$0xff]
    %v5611 = vld [vmem:[#allocation10 + $0x6f8] sm:$0xff]
    %v5612 = vld [vmem:[#allocation10 + $0x700] sm:$0xff]
    %v5613 = vld [vmem:[#allocation10 + $0x708] sm:$0xff]
    %v5614 = vld [vmem:[#allocation10 + $0x710] sm:$0xff]
    %v5615 = vld [vmem:[#allocation10 + $0x718] sm:$0xff]
    %v5616 = vld [vmem:[#allocation10 + $0x720] sm:$0xff]
    %v5617 = vld [vmem:[#allocation10 + $0x728] sm:$0xff]
    %v5618 = vld [vmem:[#allocation10 + $0x730] sm:$0xff]
    %v5619 = vld [vmem:[#allocation10 + $0x738] sm:$0xff]
    %v5620 = vld [vmem:[#allocation10 + $0x740] sm:$0xff]
    %v5621 = vld [vmem:[#allocation10 + $0x748] sm:$0xff]
    %v5622 = vld [vmem:[#allocation10 + $0x750] sm:$0xff]
    %v5623 = vld [vmem:[#allocation10 + $0x758] sm:$0xff]
    %v5624 = vld [vmem:[#allocation10 + $0x760] sm:$0xff]
    %v5625 = vld [vmem:[#allocation10 + $0x768] sm:$0xff]
    %v5626 = vld [vmem:[#allocation10 + $0x770] sm:$0xff]
    %v5627 = vld [vmem:[#allocation10 + $0x778] sm:$0xff]
    %v5628 = vld [vmem:[#allocation10 + $0x780] sm:$0xff]
    %v5629 = vld [vmem:[#allocation10 + $0x788] sm:$0xff]
    %v5630 = vld [vmem:[#allocation10 + $0x790] sm:$0xff]
    %v5631 = vld [vmem:[#allocation10 + $0x798] sm:$0xff]
    %v5632 = vld [vmem:[#allocation10 + $0x7a0] sm:$0xff]
    %v5633 = vld [vmem:[#allocation10 + $0x7a8] sm:$0xff]
    %v5634 = vld [vmem:[#allocation10 + $0x7b0] sm:$0xff]
    %v5635 = vld [vmem:[#allocation10 + $0x7b8] sm:$0xff]
    %v5636 = vld [vmem:[#allocation10 + $0x7c0] sm:$0xff]
    %v5637 = vld [vmem:[#allocation10 + $0x7c8] sm:$0xff]
    %v5638 = vld [vmem:[#allocation10 + $0x7d0] sm:$0xff]
    %v5639 = vld [vmem:[#allocation10 + $0x7d8] sm:$0xff]
    %v5640 = vld [vmem:[#allocation10 + $0x7e0] sm:$0xff]
    %v5641 = vld [vmem:[#allocation10 + $0x7e8] sm:$0xff]
    %v5642 = vld [vmem:[#allocation10 + $0x7f0] sm:$0xff]
    %v5643 = vld [vmem:[#allocation10 + $0x7f8] sm:$0xff]
    %v5644 = vld [vmem:[#allocation10 + $0x800] sm:$0xff]
    %v5645 = vld [vmem:[#allocation10 + $0x808] sm:$0xff]
    %v5646 = vld [vmem:[#allocation10 + $0x810] sm:$0xff]
    %v5647 = vld [vmem:[#allocation10 + $0x818] sm:$0xff]
    %v5648 = vld [vmem:[#allocation10 + $0x820] sm:$0xff]
    %v5649 = vld [vmem:[#allocation10 + $0x828] sm:$0xff]
    %v5650 = vld [vmem:[#allocation10 + $0x830] sm:$0xff]
    %v5651 = vld [vmem:[#allocation10 + $0x838] sm:$0xff]
    %v5652 = vld [vmem:[#allocation10 + $0x840] sm:$0xff]
    %v5653 = vld [vmem:[#allocation10 + $0x848] sm:$0xff]
    %v5654 = vld [vmem:[#allocation10 + $0x850] sm:$0xff]
    %v5655 = vld [vmem:[#allocation10 + $0x858] sm:$0xff]
    %v5656 = vld [vmem:[#allocation10 + $0x860] sm:$0xff]
    %v5657 = vld [vmem:[#allocation10 + $0x868] sm:$0xff]
    %v5658 = vld [vmem:[#allocation10 + $0x870] sm:$0xff]
    %v5659 = vld [vmem:[#allocation10 + $0x878] sm:$0xff]
    %v5660 = vld [vmem:[#allocation10 + $0x880] sm:$0xff]
    %v5661 = vld [vmem:[#allocation10 + $0x888] sm:$0xff]
    %v5662 = vld [vmem:[#allocation10 + $0x890] sm:$0xff]
    %v5663 = vld [vmem:[#allocation10 + $0x898] sm:$0xff]
    %v5664 = vld [vmem:[#allocation10 + $0x8a0] sm:$0xff]
    %v5665 = vld [vmem:[#allocation10 + $0x8a8] sm:$0xff]
    %v5666 = vld [vmem:[#allocation10 + $0x8b0] sm:$0xff]
    %v5667 = vld [vmem:[#allocation10 + $0x8b8] sm:$0xff]
    %v5668 = vld [vmem:[#allocation10 + $0x8c0] sm:$0xff]
    %v5669 = vld [vmem:[#allocation10 + $0x8c8] sm:$0xff]
    %v5670 = vld [vmem:[#allocation10 + $0x8d0] sm:$0xff]
    %v5671 = vld [vmem:[#allocation10 + $0x8d8] sm:$0xff]
    %v5672 = vld [vmem:[#allocation10 + $0x8e0] sm:$0xff]
    %v5673 = vld [vmem:[#allocation10 + $0x8e8] sm:$0xff]
    %v5674 = vld [vmem:[#allocation10 + $0x8f0] sm:$0xff]
    %v5675 = vld [vmem:[#allocation10 + $0x8f8] sm:$0xff]
    %v5676 = vld [vmem:[#allocation10 + $0x900] sm:$0xff]
    %v5677 = vld [vmem:[#allocation10 + $0x908] sm:$0xff]
    %v5678 = vld [vmem:[#allocation10 + $0x910] sm:$0xff]
    %v5679 = vld [vmem:[#allocation10 + $0x918] sm:$0xff]
    %v5680 = vld [vmem:[#allocation10 + $0x920] sm:$0xff]
    %v5681 = vld [vmem:[#allocation10 + $0x928] sm:$0xff]
    %v5682 = vld [vmem:[#allocation10 + $0x930] sm:$0xff]
    %v5683 = vld [vmem:[#allocation10 + $0x938] sm:$0xff]
    %v5684 = vld [vmem:[#allocation10 + $0x940] sm:$0xff]
    %v5685 = vld [vmem:[#allocation10 + $0x948] sm:$0xff]
    %v5686 = vld [vmem:[#allocation10 + $0x950] sm:$0xff]
    %v5687 = vld [vmem:[#allocation10 + $0x958] sm:$0xff]
    %v5688 = vld [vmem:[#allocation10 + $0x960] sm:$0xff]
    %v5689 = vld [vmem:[#allocation10 + $0x968] sm:$0xff]
    %v5690 = vld [vmem:[#allocation10 + $0x970] sm:$0xff]
    %v5691 = vld [vmem:[#allocation10 + $0x978] sm:$0xff]
    %v5692 = vld [vmem:[#allocation10 + $0x980] sm:$0xff]
    %v5693 = vld [vmem:[#allocation10 + $0x988] sm:$0xff]
    %v5694 = vld [vmem:[#allocation10 + $0x990] sm:$0xff]
    %v5695 = vld [vmem:[#allocation10 + $0x998] sm:$0xff]
    %v5696 = vld [vmem:[#allocation10 + $0x9a0] sm:$0xff]
    %v5697 = vld [vmem:[#allocation10 + $0x9a8] sm:$0xff]
    %v5698 = vld [vmem:[#allocation10 + $0x9b0] sm:$0xff]
    %v5699 = vld [vmem:[#allocation10 + $0x9b8] sm:$0xff]
    %v5700 = vld [vmem:[#allocation10 + $0x9c0] sm:$0xff]
    %v5701 = vld [vmem:[#allocation10 + $0x9c8] sm:$0xff]
    %v5702 = vld [vmem:[#allocation10 + $0x9d0] sm:$0xff]
    %v5703 = vld [vmem:[#allocation10 + $0x9d8] sm:$0xff]
    %v5704 = vld [vmem:[#allocation10 + $0x9e0] sm:$0xff]
    %v5705 = vld [vmem:[#allocation10 + $0x9e8] sm:$0xff]
    %v5706 = vld [vmem:[#allocation10 + $0x9f0] sm:$0xff]
    %v5707 = vld [vmem:[#allocation10 + $0x9f8] sm:$0xff]
    %v5708 = vld [vmem:[#allocation10 + $0xa00] sm:$0xff]
    %v5709 = vld [vmem:[#allocation10 + $0xa08] sm:$0xff]
    %v5710 = vld [vmem:[#allocation10 + $0xa10] sm:$0xff]
    %v5711 = vld [vmem:[#allocation10 + $0xa18] sm:$0xff]
    %v5712 = vld [vmem:[#allocation10 + $0xa20] sm:$0xff]
    %v5713 = vld [vmem:[#allocation10 + $0xa28] sm:$0xff]
    %v5714 = vld [vmem:[#allocation10 + $0xa30] sm:$0xff]
    %v5715 = vld [vmem:[#allocation10 + $0xa38] sm:$0xff]
    %v5716 = vld [vmem:[#allocation10 + $0xa40] sm:$0xff]
    %v5717 = vld [vmem:[#allocation10 + $0xa48] sm:$0xff]
    %v5718 = vld [vmem:[#allocation10 + $0xa50] sm:$0xff]
    %v5719 = vld [vmem:[#allocation10 + $0xa58] sm:$0xff]
    %v5720 = vld [vmem:[#allocation10 + $0xa60] sm:$0xff]
    %v5721 = vld [vmem:[#allocation10 + $0xa68] sm:$0xff]
    %v5722 = vld [vmem:[#allocation10 + $0xa70] sm:$0xff]
    %v5723 = vld [vmem:[#allocation10 + $0xa78] sm:$0xff]
    %v5724 = vld [vmem:[#allocation10 + $0xa80] sm:$0xff]
    %v5725 = vld [vmem:[#allocation10 + $0xa88] sm:$0xff]
    %v5726 = vld [vmem:[#allocation10 + $0xa90] sm:$0xff]
    %v5727 = vld [vmem:[#allocation10 + $0xa98] sm:$0xff]
    %v5728 = vld [vmem:[#allocation10 + $0xaa0] sm:$0xff]
    %v5729 = vld [vmem:[#allocation10 + $0xaa8] sm:$0xff]
    %v5730 = vld [vmem:[#allocation10 + $0xab0] sm:$0xff]
    %v5731 = vld [vmem:[#allocation10 + $0xab8] sm:$0xff]
    %v5732 = vld [vmem:[#allocation10 + $0xac0] sm:$0xff]
    %v5733 = vld [vmem:[#allocation10 + $0xac8] sm:$0xff]
    %v5734 = vld [vmem:[#allocation10 + $0xad0] sm:$0xff]
    %v5735 = vld [vmem:[#allocation10 + $0xad8] sm:$0xff]
    %v5736 = vld [vmem:[#allocation10 + $0xae0] sm:$0xff]
    %v5737 = vld [vmem:[#allocation10 + $0xae8] sm:$0xff]
    %v5738 = vld [vmem:[#allocation10 + $0xaf0] sm:$0xff]
    %v5739 = vld [vmem:[#allocation10 + $0xaf8] sm:$0xff]
    %v5740 = vld [vmem:[#allocation10 + $0xb00] sm:$0xff]
    %v5741 = vld [vmem:[#allocation10 + $0xb08] sm:$0xff]
    %v5742 = vld [vmem:[#allocation10 + $0xb10] sm:$0xff]
    %v5743 = vld [vmem:[#allocation10 + $0xb18] sm:$0xff]
    %v5744 = vld [vmem:[#allocation10 + $0xb20] sm:$0xff]
    %v5745 = vld [vmem:[#allocation10 + $0xb28] sm:$0xff]
    %v5746 = vld [vmem:[#allocation10 + $0xb30] sm:$0xff]
    %v5747 = vld [vmem:[#allocation10 + $0xb38] sm:$0xff]
    %v5748 = vld [vmem:[#allocation10 + $0xb40] sm:$0xff]
    %v5749 = vld [vmem:[#allocation10 + $0xb48] sm:$0xff]
    %v5750 = vld [vmem:[#allocation10 + $0xb50] sm:$0xff]
    %v5751 = vld [vmem:[#allocation10 + $0xb58] sm:$0xff]
    %v5752 = vld [vmem:[#allocation10 + $0xb60] sm:$0xff]
    %v5753 = vld [vmem:[#allocation10 + $0xb68] sm:$0xff]
    %v5754 = vld [vmem:[#allocation10 + $0xb70] sm:$0xff]
    %v5755 = vld [vmem:[#allocation10 + $0xb78] sm:$0xff]
    %v5756 = vld [vmem:[#allocation10 + $0xb80] sm:$0xff]
    %v5757 = vld [vmem:[#allocation10 + $0xb88] sm:$0xff]
    %v5758 = vld [vmem:[#allocation10 + $0xb90] sm:$0xff]
    %v5759 = vld [vmem:[#allocation10 + $0xb98] sm:$0xff]
    %v5760 = vld [vmem:[#allocation10 + $0xba0] sm:$0xff]
    %v5761 = vld [vmem:[#allocation10 + $0xba8] sm:$0xff]
    %v5762 = vld [vmem:[#allocation10 + $0xbb0] sm:$0xff]
    %v5763 = vld [vmem:[#allocation10 + $0xbb8] sm:$0xff]
    %v5764 = vld [vmem:[#allocation10 + $0xbc0] sm:$0xff]
    %v5765 = vld [vmem:[#allocation10 + $0xbc8] sm:$0xff]
    %v5766 = vld [vmem:[#allocation10 + $0xbd0] sm:$0xff]
    %v5767 = vld [vmem:[#allocation10 + $0xbd8] sm:$0xff]
    %v5768 = vld [vmem:[#allocation10 + $0xbe0] sm:$0xff]
    %v5769 = vld [vmem:[#allocation10 + $0xbe8] sm:$0xff]
    %v5770 = vld [vmem:[#allocation10 + $0xbf0] sm:$0xff]
    %v5771 = vld [vmem:[#allocation10 + $0xbf8] sm:$0xff]
    %v5772 = vld [vmem:[#allocation11] sm:$0xff]
    %v5773 = vld [vmem:[#allocation11 + $0x8] sm:$0xf]
    %v5776 = vperm.slane %v5772, 0
    %v5777 = vperm.slane %v5772, 1
    %v5778 = vperm.slane %v5772, 2
    %v5779 = vperm.slane %v5772, 3
    %v5780 = vperm.slane %v5772, 4
    %v5781 = vperm.slane %v5772, 5
    %v5782 = vperm.slane %v5772, 6
    %v5783 = vperm.slane %v5772, 7
    %v5784 = vperm.slane %v5773, 0
    %v5785 = vperm.slane %v5773, 1
    %v5786 = vperm.slane %v5773, 2
    %v5787 = vperm.slane %v5773, 3
    %v6184 = vunpack.c.l.b16 %v5388
    %v6185 = vunpack.c.h.b16 %v5388
    %v6186 = vunpack.c.l.b16 %v5389
    %v6187 = vunpack.c.h.b16 %v5389
    %v6188 = vunpack.c.l.b16 %v5390
    %v6189 = vunpack.c.h.b16 %v5390
    %v6190 = vunpack.c.l.b16 %v5391
    %v6191 = vunpack.c.h.b16 %v5391
    %v6192 = vunpack.c.l.b16 %v5392
    %v6193 = vunpack.c.h.b16 %v5392
    %v6194 = vunpack.c.l.b16 %v5393
    %v6195 = vunpack.c.h.b16 %v5393
    %v6196 = vunpack.c.l.b16 %v5394
    %v6197 = vunpack.c.h.b16 %v5394
    %v6198 = vunpack.c.l.b16 %v5395
    %v6199 = vunpack.c.h.b16 %v5395
    %v6200 = vunpack.c.l.b16 %v5396
    %v6201 = vunpack.c.h.b16 %v5396
    %v6202 = vunpack.c.l.b16 %v5397
    %v6203 = vunpack.c.h.b16 %v5397
    %v6204 = vunpack.c.l.b16 %v5398
    %v6205 = vunpack.c.h.b16 %v5398
    %v6206 = vunpack.c.l.b16 %v5399
    %v6207 = vunpack.c.h.b16 %v5399
    %v6208 = vunpack.c.l.b16 %v5400
    %v6209 = vunpack.c.h.b16 %v5400
    %v6210 = vunpack.c.l.b16 %v5401
    %v6211 = vunpack.c.h.b16 %v5401
    %v6212 = vunpack.c.l.b16 %v5402
    %v6213 = vunpack.c.h.b16 %v5402
    %v6214 = vunpack.c.l.b16 %v5403
    %v6215 = vunpack.c.h.b16 %v5403
    %v6216 = vunpack.c.l.b16 %v5404
    %v6217 = vunpack.c.h.b16 %v5404
    %v6218 = vunpack.c.l.b16 %v5405
    %v6219 = vunpack.c.h.b16 %v5405
    %v6220 = vunpack.c.l.b16 %v5406
    %v6221 = vunpack.c.h.b16 %v5406
    %v6222 = vunpack.c.l.b16 %v5407
    %v6223 = vunpack.c.h.b16 %v5407
    %v6224 = vunpack.c.l.b16 %v5408
    %v6225 = vunpack.c.h.b16 %v5408
    %v6226 = vunpack.c.l.b16 %v5409
    %v6227 = vunpack.c.h.b16 %v5409
    %v6228 = vunpack.c.l.b16 %v5410
    %v6229 = vunpack.c.h.b16 %v5410
    %v6230 = vunpack.c.l.b16 %v5411
    %v6231 = vunpack.c.h.b16 %v5411
    %v6232 = vunpack.c.l.b16 %v5412
    %v6233 = vunpack.c.h.b16 %v5412
    %v6234 = vunpack.c.l.b16 %v5413
    %v6235 = vunpack.c.h.b16 %v5413
    %v6236 = vunpack.c.l.b16 %v5414
    %v6237 = vunpack.c.h.b16 %v5414
    %v6238 = vunpack.c.l.b16 %v5415
    %v6239 = vunpack.c.h.b16 %v5415
    %v6240 = vunpack.c.l.b16 %v5416
    %v6241 = vunpack.c.h.b16 %v5416
    %v6242 = vunpack.c.l.b16 %v5417
    %v6243 = vunpack.c.h.b16 %v5417
    %v6244 = vunpack.c.l.b16 %v5418
    %v6245 = vunpack.c.h.b16 %v5418
    %v6246 = vunpack.c.l.b16 %v5419
    %v6247 = vunpack.c.h.b16 %v5419
    %v6248 = vunpack.c.l.b16 %v5420
    %v6249 = vunpack.c.h.b16 %v5420
    %v6250 = vunpack.c.l.b16 %v5421
    %v6251 = vunpack.c.h.b16 %v5421
    %v6252 = vunpack.c.l.b16 %v5422
    %v6253 = vunpack.c.h.b16 %v5422
    %v6254 = vunpack.c.l.b16 %v5423
    %v6255 = vunpack.c.h.b16 %v5423
    %v6256 = vunpack.c.l.b16 %v5424
    %v6257 = vunpack.c.h.b16 %v5424
    %v6258 = vunpack.c.l.b16 %v5425
    %v6259 = vunpack.c.h.b16 %v5425
    %v6260 = vunpack.c.l.b16 %v5426
    %v6261 = vunpack.c.h.b16 %v5426
    %v6262 = vunpack.c.l.b16 %v5427
    %v6263 = vunpack.c.h.b16 %v5427
    %v6264 = vunpack.c.l.b16 %v5428
    %v6265 = vunpack.c.h.b16 %v5428
    %v6266 = vunpack.c.l.b16 %v5429
    %v6267 = vunpack.c.h.b16 %v5429
    %v6268 = vunpack.c.l.b16 %v5430
    %v6269 = vunpack.c.h.b16 %v5430
    %v6270 = vunpack.c.l.b16 %v5431
    %v6271 = vunpack.c.h.b16 %v5431
    %v6272 = vunpack.c.l.b16 %v5432
    %v6273 = vunpack.c.h.b16 %v5432
    %v6274 = vunpack.c.l.b16 %v5433
    %v6275 = vunpack.c.h.b16 %v5433
    %v6276 = vunpack.c.l.b16 %v5434
    %v6277 = vunpack.c.h.b16 %v5434
    %v6278 = vunpack.c.l.b16 %v5435
    %v6279 = vunpack.c.h.b16 %v5435
    %v6280 = vunpack.c.l.b16 %v5436
    %v6281 = vunpack.c.h.b16 %v5436
    %v6282 = vunpack.c.l.b16 %v5437
    %v6283 = vunpack.c.h.b16 %v5437
    %v6284 = vunpack.c.l.b16 %v5438
    %v6285 = vunpack.c.h.b16 %v5438
    %v6286 = vunpack.c.l.b16 %v5439
    %v6287 = vunpack.c.h.b16 %v5439
    %v6288 = vunpack.c.l.b16 %v5440
    %v6289 = vunpack.c.h.b16 %v5440
    %v6290 = vunpack.c.l.b16 %v5441
    %v6291 = vunpack.c.h.b16 %v5441
    %v6292 = vunpack.c.l.b16 %v5442
    %v6293 = vunpack.c.h.b16 %v5442
    %v6294 = vunpack.c.l.b16 %v5443
    %v6295 = vunpack.c.h.b16 %v5443
    %v6296 = vunpack.c.l.b16 %v5444
    %v6297 = vunpack.c.h.b16 %v5444
    %v6298 = vunpack.c.l.b16 %v5445
    %v6299 = vunpack.c.h.b16 %v5445
    %v6300 = vunpack.c.l.b16 %v5446
    %v6301 = vunpack.c.h.b16 %v5446
    %v6302 = vunpack.c.l.b16 %v5447
    %v6303 = vunpack.c.h.b16 %v5447
    %v6304 = vunpack.c.l.b16 %v5448
    %v6305 = vunpack.c.h.b16 %v5448
    %v6306 = vunpack.c.l.b16 %v5449
    %v6307 = vunpack.c.h.b16 %v5449
    %v6308 = vunpack.c.l.b16 %v5450
    %v6309 = vunpack.c.h.b16 %v5450
    %v6310 = vunpack.c.l.b16 %v5451
    %v6311 = vunpack.c.h.b16 %v5451
    %v6312 = vunpack.c.l.b16 %v5452
    %v6313 = vunpack.c.h.b16 %v5452
    %v6314 = vunpack.c.l.b16 %v5453
    %v6315 = vunpack.c.h.b16 %v5453
    %v6316 = vunpack.c.l.b16 %v5454
    %v6317 = vunpack.c.h.b16 %v5454
    %v6318 = vunpack.c.l.b16 %v5455
    %v6319 = vunpack.c.h.b16 %v5455
    %v6320 = vunpack.c.l.b16 %v5456
    %v6321 = vunpack.c.h.b16 %v5456
    %v6322 = vunpack.c.l.b16 %v5457
    %v6323 = vunpack.c.h.b16 %v5457
    %v6324 = vunpack.c.l.b16 %v5458
    %v6325 = vunpack.c.h.b16 %v5458
    %v6326 = vunpack.c.l.b16 %v5459
    %v6327 = vunpack.c.h.b16 %v5459
    %v6328 = vunpack.c.l.b16 %v5460
    %v6329 = vunpack.c.h.b16 %v5460
    %v6330 = vunpack.c.l.b16 %v5461
    %v6331 = vunpack.c.h.b16 %v5461
    %v6332 = vunpack.c.l.b16 %v5462
    %v6333 = vunpack.c.h.b16 %v5462
    %v6334 = vunpack.c.l.b16 %v5463
    %v6335 = vunpack.c.h.b16 %v5463
    %v6336 = vunpack.c.l.b16 %v5464
    %v6337 = vunpack.c.h.b16 %v5464
    %v6338 = vunpack.c.l.b16 %v5465
    %v6339 = vunpack.c.h.b16 %v5465
    %v6340 = vunpack.c.l.b16 %v5466
    %v6341 = vunpack.c.h.b16 %v5466
    %v6342 = vunpack.c.l.b16 %v5467
    %v6343 = vunpack.c.h.b16 %v5467
    %v6344 = vunpack.c.l.b16 %v5468
    %v6345 = vunpack.c.h.b16 %v5468
    %v6346 = vunpack.c.l.b16 %v5469
    %v6347 = vunpack.c.h.b16 %v5469
    %v6348 = vunpack.c.l.b16 %v5470
    %v6349 = vunpack.c.h.b16 %v5470
    %v6350 = vunpack.c.l.b16 %v5471
    %v6351 = vunpack.c.h.b16 %v5471
    %v6352 = vunpack.c.l.b16 %v5472
    %v6353 = vunpack.c.h.b16 %v5472
    %v6354 = vunpack.c.l.b16 %v5473
    %v6355 = vunpack.c.h.b16 %v5473
    %v6356 = vunpack.c.l.b16 %v5474
    %v6357 = vunpack.c.h.b16 %v5474
    %v6358 = vunpack.c.l.b16 %v5475
    %v6359 = vunpack.c.h.b16 %v5475
    %v6360 = vunpack.c.l.b16 %v5476
    %v6361 = vunpack.c.h.b16 %v5476
    %v6362 = vunpack.c.l.b16 %v5477
    %v6363 = vunpack.c.h.b16 %v5477
    %v6364 = vunpack.c.l.b16 %v5478
    %v6365 = vunpack.c.h.b16 %v5478
    %v6366 = vunpack.c.l.b16 %v5479
    %v6367 = vunpack.c.h.b16 %v5479
    %v6368 = vunpack.c.l.b16 %v5480
    %v6369 = vunpack.c.h.b16 %v5480
    %v6370 = vunpack.c.l.b16 %v5481
    %v6371 = vunpack.c.h.b16 %v5481
    %v6372 = vunpack.c.l.b16 %v5482
    %v6373 = vunpack.c.h.b16 %v5482
    %v6374 = vunpack.c.l.b16 %v5483
    %v6375 = vunpack.c.h.b16 %v5483
    %v6376 = vunpack.c.l.b16 %v5484
    %v6377 = vunpack.c.h.b16 %v5484
    %v6378 = vunpack.c.l.b16 %v5485
    %v6379 = vunpack.c.h.b16 %v5485
    %v6380 = vunpack.c.l.b16 %v5486
    %v6381 = vunpack.c.h.b16 %v5486
    %v6382 = vunpack.c.l.b16 %v5487
    %v6383 = vunpack.c.h.b16 %v5487
    %v6384 = vunpack.c.l.b16 %v5488
    %v6385 = vunpack.c.h.b16 %v5488
    %v6386 = vunpack.c.l.b16 %v5489
    %v6387 = vunpack.c.h.b16 %v5489
    %v6388 = vunpack.c.l.b16 %v5490
    %v6389 = vunpack.c.h.b16 %v5490
    %v6390 = vunpack.c.l.b16 %v5491
    %v6391 = vunpack.c.h.b16 %v5491
    %v6392 = vunpack.c.l.b16 %v5492
    %v6393 = vunpack.c.h.b16 %v5492
    %v6394 = vunpack.c.l.b16 %v5493
    %v6395 = vunpack.c.h.b16 %v5493
    %v6396 = vunpack.c.l.b16 %v5494
    %v6397 = vunpack.c.h.b16 %v5494
    %v6398 = vunpack.c.l.b16 %v5495
    %v6399 = vunpack.c.h.b16 %v5495
    %v6400 = vunpack.c.l.b16 %v5496
    %v6401 = vunpack.c.h.b16 %v5496
    %v6402 = vunpack.c.l.b16 %v5497
    %v6403 = vunpack.c.h.b16 %v5497
    %v6404 = vunpack.c.l.b16 %v5498
    %v6405 = vunpack.c.h.b16 %v5498
    %v6406 = vunpack.c.l.b16 %v5499
    %v6407 = vunpack.c.h.b16 %v5499
    %v6408 = vunpack.c.l.b16 %v5500
    %v6409 = vunpack.c.h.b16 %v5500
    %v6410 = vunpack.c.l.b16 %v5501
    %v6411 = vunpack.c.h.b16 %v5501
    %v6412 = vunpack.c.l.b16 %v5502
    %v6413 = vunpack.c.h.b16 %v5502
    %v6414 = vunpack.c.l.b16 %v5503
    %v6415 = vunpack.c.h.b16 %v5503
    %v6416 = vunpack.c.l.b16 %v5504
    %v6417 = vunpack.c.h.b16 %v5504
    %v6418 = vunpack.c.l.b16 %v5505
    %v6419 = vunpack.c.h.b16 %v5505
    %v6420 = vunpack.c.l.b16 %v5506
    %v6421 = vunpack.c.h.b16 %v5506
    %v6422 = vunpack.c.l.b16 %v5507
    %v6423 = vunpack.c.h.b16 %v5507
    %v6424 = vunpack.c.l.b16 %v5508
    %v6425 = vunpack.c.h.b16 %v5508
    %v6426 = vunpack.c.l.b16 %v5509
    %v6427 = vunpack.c.h.b16 %v5509
    %v6428 = vunpack.c.l.b16 %v5510
    %v6429 = vunpack.c.h.b16 %v5510
    %v6430 = vunpack.c.l.b16 %v5511
    %v6431 = vunpack.c.h.b16 %v5511
    %v6432 = vunpack.c.l.b16 %v5512
    %v6433 = vunpack.c.h.b16 %v5512
    %v6434 = vunpack.c.l.b16 %v5513
    %v6435 = vunpack.c.h.b16 %v5513
    %v6436 = vunpack.c.l.b16 %v5514
    %v6437 = vunpack.c.h.b16 %v5514
    %v6438 = vunpack.c.l.b16 %v5515
    %v6439 = vunpack.c.h.b16 %v5515
    %v6440 = vunpack.c.l.b16 %v5516
    %v6441 = vunpack.c.h.b16 %v5516
    %v6442 = vunpack.c.l.b16 %v5517
    %v6443 = vunpack.c.h.b16 %v5517
    %v6444 = vunpack.c.l.b16 %v5518
    %v6445 = vunpack.c.h.b16 %v5518
    %v6446 = vunpack.c.l.b16 %v5519
    %v6447 = vunpack.c.h.b16 %v5519
    %v6448 = vunpack.c.l.b16 %v5520
    %v6449 = vunpack.c.h.b16 %v5520
    %v6450 = vunpack.c.l.b16 %v5521
    %v6451 = vunpack.c.h.b16 %v5521
    %v6452 = vunpack.c.l.b16 %v5522
    %v6453 = vunpack.c.h.b16 %v5522
    %v6454 = vunpack.c.l.b16 %v5523
    %v6455 = vunpack.c.h.b16 %v5523
    %v6456 = vunpack.c.l.b16 %v5524
    %v6457 = vunpack.c.h.b16 %v5524
    %v6458 = vunpack.c.l.b16 %v5525
    %v6459 = vunpack.c.h.b16 %v5525
    %v6460 = vunpack.c.l.b16 %v5526
    %v6461 = vunpack.c.h.b16 %v5526
    %v6462 = vunpack.c.l.b16 %v5527
    %v6463 = vunpack.c.h.b16 %v5527
    %v6464 = vunpack.c.l.b16 %v5528
    %v6465 = vunpack.c.h.b16 %v5528
    %v6466 = vunpack.c.l.b16 %v5529
    %v6467 = vunpack.c.h.b16 %v5529
    %v6468 = vunpack.c.l.b16 %v5530
    %v6469 = vunpack.c.h.b16 %v5530
    %v6470 = vunpack.c.l.b16 %v5531
    %v6471 = vunpack.c.h.b16 %v5531
    %v6472 = vunpack.c.l.b16 %v5532
    %v6473 = vunpack.c.h.b16 %v5532
    %v6474 = vunpack.c.l.b16 %v5533
    %v6475 = vunpack.c.h.b16 %v5533
    %v6476 = vunpack.c.l.b16 %v5534
    %v6477 = vunpack.c.h.b16 %v5534
    %v6478 = vunpack.c.l.b16 %v5535
    %v6479 = vunpack.c.h.b16 %v5535
    %v6480 = vunpack.c.l.b16 %v5536
    %v6481 = vunpack.c.h.b16 %v5536
    %v6482 = vunpack.c.l.b16 %v5537
    %v6483 = vunpack.c.h.b16 %v5537
    %v6484 = vunpack.c.l.b16 %v5538
    %v6485 = vunpack.c.h.b16 %v5538
    %v6486 = vunpack.c.l.b16 %v5539
    %v6487 = vunpack.c.h.b16 %v5539
    %v6488 = vunpack.c.l.b16 %v5540
    %v6489 = vunpack.c.h.b16 %v5540
    %v6490 = vunpack.c.l.b16 %v5541
    %v6491 = vunpack.c.h.b16 %v5541
    %v6492 = vunpack.c.l.b16 %v5542
    %v6493 = vunpack.c.h.b16 %v5542
    %v6494 = vunpack.c.l.b16 %v5543
    %v6495 = vunpack.c.h.b16 %v5543
    %v6496 = vunpack.c.l.b16 %v5544
    %v6497 = vunpack.c.h.b16 %v5544
    %v6498 = vunpack.c.l.b16 %v5545
    %v6499 = vunpack.c.h.b16 %v5545
    %v6500 = vunpack.c.l.b16 %v5546
    %v6501 = vunpack.c.h.b16 %v5546
    %v6502 = vunpack.c.l.b16 %v5547
    %v6503 = vunpack.c.h.b16 %v5547
    %v6504 = vunpack.c.l.b16 %v5548
    %v6505 = vunpack.c.h.b16 %v5548
    %v6506 = vunpack.c.l.b16 %v5549
    %v6507 = vunpack.c.h.b16 %v5549
    %v6508 = vunpack.c.l.b16 %v5550
    %v6509 = vunpack.c.h.b16 %v5550
    %v6510 = vunpack.c.l.b16 %v5551
    %v6511 = vunpack.c.h.b16 %v5551
    %v6512 = vunpack.c.l.b16 %v5552
    %v6513 = vunpack.c.h.b16 %v5552
    %v6514 = vunpack.c.l.b16 %v5553
    %v6515 = vunpack.c.h.b16 %v5553
    %v6516 = vunpack.c.l.b16 %v5554
    %v6517 = vunpack.c.h.b16 %v5554
    %v6518 = vunpack.c.l.b16 %v5555
    %v6519 = vunpack.c.h.b16 %v5555
    %v6520 = vunpack.c.l.b16 %v5556
    %v6521 = vunpack.c.h.b16 %v5556
    %v6522 = vunpack.c.l.b16 %v5557
    %v6523 = vunpack.c.h.b16 %v5557
    %v6524 = vunpack.c.l.b16 %v5558
    %v6525 = vunpack.c.h.b16 %v5558
    %v6526 = vunpack.c.l.b16 %v5559
    %v6527 = vunpack.c.h.b16 %v5559
    %v6528 = vunpack.c.l.b16 %v5560
    %v6529 = vunpack.c.h.b16 %v5560
    %v6530 = vunpack.c.l.b16 %v5561
    %v6531 = vunpack.c.h.b16 %v5561
    %v6532 = vunpack.c.l.b16 %v5562
    %v6533 = vunpack.c.h.b16 %v5562
    %v6534 = vunpack.c.l.b16 %v5563
    %v6535 = vunpack.c.h.b16 %v5563
    %v6536 = vunpack.c.l.b16 %v5564
    %v6537 = vunpack.c.h.b16 %v5564
    %v6538 = vunpack.c.l.b16 %v5565
    %v6539 = vunpack.c.h.b16 %v5565
    %v6540 = vunpack.c.l.b16 %v5566
    %v6541 = vunpack.c.h.b16 %v5566
    %v6542 = vunpack.c.l.b16 %v5567
    %v6543 = vunpack.c.h.b16 %v5567
    %v6544 = vunpack.c.l.b16 %v5568
    %v6545 = vunpack.c.h.b16 %v5568
    %v6546 = vunpack.c.l.b16 %v5569
    %v6547 = vunpack.c.h.b16 %v5569
    %v6548 = vunpack.c.l.b16 %v5570
    %v6549 = vunpack.c.h.b16 %v5570
    %v6550 = vunpack.c.l.b16 %v5571
    %v6551 = vunpack.c.h.b16 %v5571
    %v6552 = vunpack.c.l.b16 %v5572
    %v6553 = vunpack.c.h.b16 %v5572
    %v6554 = vunpack.c.l.b16 %v5573
    %v6555 = vunpack.c.h.b16 %v5573
    %v6556 = vunpack.c.l.b16 %v5574
    %v6557 = vunpack.c.h.b16 %v5574
    %v6558 = vunpack.c.l.b16 %v5575
    %v6559 = vunpack.c.h.b16 %v5575
    %v6560 = vunpack.c.l.b16 %v5576
    %v6561 = vunpack.c.h.b16 %v5576
    %v6562 = vunpack.c.l.b16 %v5577
    %v6563 = vunpack.c.h.b16 %v5577
    %v6564 = vunpack.c.l.b16 %v5578
    %v6565 = vunpack.c.h.b16 %v5578
    %v6566 = vunpack.c.l.b16 %v5579
    %v6567 = vunpack.c.h.b16 %v5579
    %v6568 = vunpack.c.l.b16 %v5580
    %v6569 = vunpack.c.h.b16 %v5580
    %v6570 = vunpack.c.l.b16 %v5581
    %v6571 = vunpack.c.h.b16 %v5581
    %v6572 = vunpack.c.l.b16 %v5582
    %v6573 = vunpack.c.h.b16 %v5582
    %v6574 = vunpack.c.l.b16 %v5583
    %v6575 = vunpack.c.h.b16 %v5583
    %v6576 = vunpack.c.l.b16 %v5584
    %v6577 = vunpack.c.h.b16 %v5584
    %v6578 = vunpack.c.l.b16 %v5585
    %v6579 = vunpack.c.h.b16 %v5585
    %v6580 = vunpack.c.l.b16 %v5586
    %v6581 = vunpack.c.h.b16 %v5586
    %v6582 = vunpack.c.l.b16 %v5587
    %v6583 = vunpack.c.h.b16 %v5587
    %v6584 = vunpack.c.l.b16 %v5588
    %v6585 = vunpack.c.h.b16 %v5588
    %v6586 = vunpack.c.l.b16 %v5589
    %v6587 = vunpack.c.h.b16 %v5589
    %v6588 = vunpack.c.l.b16 %v5590
    %v6589 = vunpack.c.h.b16 %v5590
    %v6590 = vunpack.c.l.b16 %v5591
    %v6591 = vunpack.c.h.b16 %v5591
    %v6592 = vunpack.c.l.b16 %v5592
    %v6593 = vunpack.c.h.b16 %v5592
    %v6594 = vunpack.c.l.b16 %v5593
    %v6595 = vunpack.c.h.b16 %v5593
    %v6596 = vunpack.c.l.b16 %v5594
    %v6597 = vunpack.c.h.b16 %v5594
    %v6598 = vunpack.c.l.b16 %v5595
    %v6599 = vunpack.c.h.b16 %v5595
    %v6600 = vunpack.c.l.b16 %v5596
    %v6601 = vunpack.c.h.b16 %v5596
    %v6602 = vunpack.c.l.b16 %v5597
    %v6603 = vunpack.c.h.b16 %v5597
    %v6604 = vunpack.c.l.b16 %v5598
    %v6605 = vunpack.c.h.b16 %v5598
    %v6606 = vunpack.c.l.b16 %v5599
    %v6607 = vunpack.c.h.b16 %v5599
    %v6608 = vunpack.c.l.b16 %v5600
    %v6609 = vunpack.c.h.b16 %v5600
    %v6610 = vunpack.c.l.b16 %v5601
    %v6611 = vunpack.c.h.b16 %v5601
    %v6612 = vunpack.c.l.b16 %v5602
    %v6613 = vunpack.c.h.b16 %v5602
    %v6614 = vunpack.c.l.b16 %v5603
    %v6615 = vunpack.c.h.b16 %v5603
    %v6616 = vunpack.c.l.b16 %v5604
    %v6617 = vunpack.c.h.b16 %v5604
    %v6618 = vunpack.c.l.b16 %v5605
    %v6619 = vunpack.c.h.b16 %v5605
    %v6620 = vunpack.c.l.b16 %v5606
    %v6621 = vunpack.c.h.b16 %v5606
    %v6622 = vunpack.c.l.b16 %v5607
    %v6623 = vunpack.c.h.b16 %v5607
    %v6624 = vunpack.c.l.b16 %v5608
    %v6625 = vunpack.c.h.b16 %v5608
    %v6626 = vunpack.c.l.b16 %v5609
    %v6627 = vunpack.c.h.b16 %v5609
    %v6628 = vunpack.c.l.b16 %v5610
    %v6629 = vunpack.c.h.b16 %v5610
    %v6630 = vunpack.c.l.b16 %v5611
    %v6631 = vunpack.c.h.b16 %v5611
    %v6632 = vunpack.c.l.b16 %v5612
    %v6633 = vunpack.c.h.b16 %v5612
    %v6634 = vunpack.c.l.b16 %v5613
    %v6635 = vunpack.c.h.b16 %v5613
    %v6636 = vunpack.c.l.b16 %v5614
    %v6637 = vunpack.c.h.b16 %v5614
    %v6638 = vunpack.c.l.b16 %v5615
    %v6639 = vunpack.c.h.b16 %v5615
    %v6640 = vunpack.c.l.b16 %v5616
    %v6641 = vunpack.c.h.b16 %v5616
    %v6642 = vunpack.c.l.b16 %v5617
    %v6643 = vunpack.c.h.b16 %v5617
    %v6644 = vunpack.c.l.b16 %v5618
    %v6645 = vunpack.c.h.b16 %v5618
    %v6646 = vunpack.c.l.b16 %v5619
    %v6647 = vunpack.c.h.b16 %v5619
    %v6648 = vunpack.c.l.b16 %v5620
    %v6649 = vunpack.c.h.b16 %v5620
    %v6650 = vunpack.c.l.b16 %v5621
    %v6651 = vunpack.c.h.b16 %v5621
    %v6652 = vunpack.c.l.b16 %v5622
    %v6653 = vunpack.c.h.b16 %v5622
    %v6654 = vunpack.c.l.b16 %v5623
    %v6655 = vunpack.c.h.b16 %v5623
    %v6656 = vunpack.c.l.b16 %v5624
    %v6657 = vunpack.c.h.b16 %v5624
    %v6658 = vunpack.c.l.b16 %v5625
    %v6659 = vunpack.c.h.b16 %v5625
    %v6660 = vunpack.c.l.b16 %v5626
    %v6661 = vunpack.c.h.b16 %v5626
    %v6662 = vunpack.c.l.b16 %v5627
    %v6663 = vunpack.c.h.b16 %v5627
    %v6664 = vunpack.c.l.b16 %v5628
    %v6665 = vunpack.c.h.b16 %v5628
    %v6666 = vunpack.c.l.b16 %v5629
    %v6667 = vunpack.c.h.b16 %v5629
    %v6668 = vunpack.c.l.b16 %v5630
    %v6669 = vunpack.c.h.b16 %v5630
    %v6670 = vunpack.c.l.b16 %v5631
    %v6671 = vunpack.c.h.b16 %v5631
    %v6672 = vunpack.c.l.b16 %v5632
    %v6673 = vunpack.c.h.b16 %v5632
    %v6674 = vunpack.c.l.b16 %v5633
    %v6675 = vunpack.c.h.b16 %v5633
    %v6676 = vunpack.c.l.b16 %v5634
    %v6677 = vunpack.c.h.b16 %v5634
    %v6678 = vunpack.c.l.b16 %v5635
    %v6679 = vunpack.c.h.b16 %v5635
    %v6680 = vunpack.c.l.b16 %v5636
    %v6681 = vunpack.c.h.b16 %v5636
    %v6682 = vunpack.c.l.b16 %v5637
    %v6683 = vunpack.c.h.b16 %v5637
    %v6684 = vunpack.c.l.b16 %v5638
    %v6685 = vunpack.c.h.b16 %v5638
    %v6686 = vunpack.c.l.b16 %v5639
    %v6687 = vunpack.c.h.b16 %v5639
    %v6688 = vunpack.c.l.b16 %v5640
    %v6689 = vunpack.c.h.b16 %v5640
    %v6690 = vunpack.c.l.b16 %v5641
    %v6691 = vunpack.c.h.b16 %v5641
    %v6692 = vunpack.c.l.b16 %v5642
    %v6693 = vunpack.c.h.b16 %v5642
    %v6694 = vunpack.c.l.b16 %v5643
    %v6695 = vunpack.c.h.b16 %v5643
    %v6696 = vunpack.c.l.b16 %v5644
    %v6697 = vunpack.c.h.b16 %v5644
    %v6698 = vunpack.c.l.b16 %v5645
    %v6699 = vunpack.c.h.b16 %v5645
    %v6700 = vunpack.c.l.b16 %v5646
    %v6701 = vunpack.c.h.b16 %v5646
    %v6702 = vunpack.c.l.b16 %v5647
    %v6703 = vunpack.c.h.b16 %v5647
    %v6704 = vunpack.c.l.b16 %v5648
    %v6705 = vunpack.c.h.b16 %v5648
    %v6706 = vunpack.c.l.b16 %v5649
    %v6707 = vunpack.c.h.b16 %v5649
    %v6708 = vunpack.c.l.b16 %v5650
    %v6709 = vunpack.c.h.b16 %v5650
    %v6710 = vunpack.c.l.b16 %v5651
    %v6711 = vunpack.c.h.b16 %v5651
    %v6712 = vunpack.c.l.b16 %v5652
    %v6713 = vunpack.c.h.b16 %v5652
    %v6714 = vunpack.c.l.b16 %v5653
    %v6715 = vunpack.c.h.b16 %v5653
    %v6716 = vunpack.c.l.b16 %v5654
    %v6717 = vunpack.c.h.b16 %v5654
    %v6718 = vunpack.c.l.b16 %v5655
    %v6719 = vunpack.c.h.b16 %v5655
    %v6720 = vunpack.c.l.b16 %v5656
    %v6721 = vunpack.c.h.b16 %v5656
    %v6722 = vunpack.c.l.b16 %v5657
    %v6723 = vunpack.c.h.b16 %v5657
    %v6724 = vunpack.c.l.b16 %v5658
    %v6725 = vunpack.c.h.b16 %v5658
    %v6726 = vunpack.c.l.b16 %v5659
    %v6727 = vunpack.c.h.b16 %v5659
    %v6728 = vunpack.c.l.b16 %v5660
    %v6729 = vunpack.c.h.b16 %v5660
    %v6730 = vunpack.c.l.b16 %v5661
    %v6731 = vunpack.c.h.b16 %v5661
    %v6732 = vunpack.c.l.b16 %v5662
    %v6733 = vunpack.c.h.b16 %v5662
    %v6734 = vunpack.c.l.b16 %v5663
    %v6735 = vunpack.c.h.b16 %v5663
    %v6736 = vunpack.c.l.b16 %v5664
    %v6737 = vunpack.c.h.b16 %v5664
    %v6738 = vunpack.c.l.b16 %v5665
    %v6739 = vunpack.c.h.b16 %v5665
    %v6740 = vunpack.c.l.b16 %v5666
    %v6741 = vunpack.c.h.b16 %v5666
    %v6742 = vunpack.c.l.b16 %v5667
    %v6743 = vunpack.c.h.b16 %v5667
    %v6744 = vunpack.c.l.b16 %v5668
    %v6745 = vunpack.c.h.b16 %v5668
    %v6746 = vunpack.c.l.b16 %v5669
    %v6747 = vunpack.c.h.b16 %v5669
    %v6748 = vunpack.c.l.b16 %v5670
    %v6749 = vunpack.c.h.b16 %v5670
    %v6750 = vunpack.c.l.b16 %v5671
    %v6751 = vunpack.c.h.b16 %v5671
    %v6752 = vunpack.c.l.b16 %v5672
    %v6753 = vunpack.c.h.b16 %v5672
    %v6754 = vunpack.c.l.b16 %v5673
    %v6755 = vunpack.c.h.b16 %v5673
    %v6756 = vunpack.c.l.b16 %v5674
    %v6757 = vunpack.c.h.b16 %v5674
    %v6758 = vunpack.c.l.b16 %v5675
    %v6759 = vunpack.c.h.b16 %v5675
    %v6760 = vunpack.c.l.b16 %v5676
    %v6761 = vunpack.c.h.b16 %v5676
    %v6762 = vunpack.c.l.b16 %v5677
    %v6763 = vunpack.c.h.b16 %v5677
    %v6764 = vunpack.c.l.b16 %v5678
    %v6765 = vunpack.c.h.b16 %v5678
    %v6766 = vunpack.c.l.b16 %v5679
    %v6767 = vunpack.c.h.b16 %v5679
    %v6768 = vunpack.c.l.b16 %v5680
    %v6769 = vunpack.c.h.b16 %v5680
    %v6770 = vunpack.c.l.b16 %v5681
    %v6771 = vunpack.c.h.b16 %v5681
    %v6772 = vunpack.c.l.b16 %v5682
    %v6773 = vunpack.c.h.b16 %v5682
    %v6774 = vunpack.c.l.b16 %v5683
    %v6775 = vunpack.c.h.b16 %v5683
    %v6776 = vunpack.c.l.b16 %v5684
    %v6777 = vunpack.c.h.b16 %v5684
    %v6778 = vunpack.c.l.b16 %v5685
    %v6779 = vunpack.c.h.b16 %v5685
    %v6780 = vunpack.c.l.b16 %v5686
    %v6781 = vunpack.c.h.b16 %v5686
    %v6782 = vunpack.c.l.b16 %v5687
    %v6783 = vunpack.c.h.b16 %v5687
    %v6784 = vunpack.c.l.b16 %v5688
    %v6785 = vunpack.c.h.b16 %v5688
    %v6786 = vunpack.c.l.b16 %v5689
    %v6787 = vunpack.c.h.b16 %v5689
    %v6788 = vunpack.c.l.b16 %v5690
    %v6789 = vunpack.c.h.b16 %v5690
    %v6790 = vunpack.c.l.b16 %v5691
    %v6791 = vunpack.c.h.b16 %v5691
    %v6792 = vunpack.c.l.b16 %v5692
    %v6793 = vunpack.c.h.b16 %v5692
    %v6794 = vunpack.c.l.b16 %v5693
    %v6795 = vunpack.c.h.b16 %v5693
    %v6796 = vunpack.c.l.b16 %v5694
    %v6797 = vunpack.c.h.b16 %v5694
    %v6798 = vunpack.c.l.b16 %v5695
    %v6799 = vunpack.c.h.b16 %v5695
    %v6800 = vunpack.c.l.b16 %v5696
    %v6801 = vunpack.c.h.b16 %v5696
    %v6802 = vunpack.c.l.b16 %v5697
    %v6803 = vunpack.c.h.b16 %v5697
    %v6804 = vunpack.c.l.b16 %v5698
    %v6805 = vunpack.c.h.b16 %v5698
    %v6806 = vunpack.c.l.b16 %v5699
    %v6807 = vunpack.c.h.b16 %v5699
    %v6808 = vunpack.c.l.b16 %v5700
    %v6809 = vunpack.c.h.b16 %v5700
    %v6810 = vunpack.c.l.b16 %v5701
    %v6811 = vunpack.c.h.b16 %v5701
    %v6812 = vunpack.c.l.b16 %v5702
    %v6813 = vunpack.c.h.b16 %v5702
    %v6814 = vunpack.c.l.b16 %v5703
    %v6815 = vunpack.c.h.b16 %v5703
    %v6816 = vunpack.c.l.b16 %v5704
    %v6817 = vunpack.c.h.b16 %v5704
    %v6818 = vunpack.c.l.b16 %v5705
    %v6819 = vunpack.c.h.b16 %v5705
    %v6820 = vunpack.c.l.b16 %v5706
    %v6821 = vunpack.c.h.b16 %v5706
    %v6822 = vunpack.c.l.b16 %v5707
    %v6823 = vunpack.c.h.b16 %v5707
    %v6824 = vunpack.c.l.b16 %v5708
    %v6825 = vunpack.c.h.b16 %v5708
    %v6826 = vunpack.c.l.b16 %v5709
    %v6827 = vunpack.c.h.b16 %v5709
    %v6828 = vunpack.c.l.b16 %v5710
    %v6829 = vunpack.c.h.b16 %v5710
    %v6830 = vunpack.c.l.b16 %v5711
    %v6831 = vunpack.c.h.b16 %v5711
    %v6832 = vunpack.c.l.b16 %v5712
    %v6833 = vunpack.c.h.b16 %v5712
    %v6834 = vunpack.c.l.b16 %v5713
    %v6835 = vunpack.c.h.b16 %v5713
    %v6836 = vunpack.c.l.b16 %v5714
    %v6837 = vunpack.c.h.b16 %v5714
    %v6838 = vunpack.c.l.b16 %v5715
    %v6839 = vunpack.c.h.b16 %v5715
    %v6840 = vunpack.c.l.b16 %v5716
    %v6841 = vunpack.c.h.b16 %v5716
    %v6842 = vunpack.c.l.b16 %v5717
    %v6843 = vunpack.c.h.b16 %v5717
    %v6844 = vunpack.c.l.b16 %v5718
    %v6845 = vunpack.c.h.b16 %v5718
    %v6846 = vunpack.c.l.b16 %v5719
    %v6847 = vunpack.c.h.b16 %v5719
    %v6848 = vunpack.c.l.b16 %v5720
    %v6849 = vunpack.c.h.b16 %v5720
    %v6850 = vunpack.c.l.b16 %v5721
    %v6851 = vunpack.c.h.b16 %v5721
    %v6852 = vunpack.c.l.b16 %v5722
    %v6853 = vunpack.c.h.b16 %v5722
    %v6854 = vunpack.c.l.b16 %v5723
    %v6855 = vunpack.c.h.b16 %v5723
    %v6856 = vunpack.c.l.b16 %v5724
    %v6857 = vunpack.c.h.b16 %v5724
    %v6858 = vunpack.c.l.b16 %v5725
    %v6859 = vunpack.c.h.b16 %v5725
    %v6860 = vunpack.c.l.b16 %v5726
    %v6861 = vunpack.c.h.b16 %v5726
    %v6862 = vunpack.c.l.b16 %v5727
    %v6863 = vunpack.c.h.b16 %v5727
    %v6864 = vunpack.c.l.b16 %v5728
    %v6865 = vunpack.c.h.b16 %v5728
    %v6866 = vunpack.c.l.b16 %v5729
    %v6867 = vunpack.c.h.b16 %v5729
    %v6868 = vunpack.c.l.b16 %v5730
    %v6869 = vunpack.c.h.b16 %v5730
    %v6870 = vunpack.c.l.b16 %v5731
    %v6871 = vunpack.c.h.b16 %v5731
    %v6872 = vunpack.c.l.b16 %v5732
    %v6873 = vunpack.c.h.b16 %v5732
    %v6874 = vunpack.c.l.b16 %v5733
    %v6875 = vunpack.c.h.b16 %v5733
    %v6876 = vunpack.c.l.b16 %v5734
    %v6877 = vunpack.c.h.b16 %v5734
    %v6878 = vunpack.c.l.b16 %v5735
    %v6879 = vunpack.c.h.b16 %v5735
    %v6880 = vunpack.c.l.b16 %v5736
    %v6881 = vunpack.c.h.b16 %v5736
    %v6882 = vunpack.c.l.b16 %v5737
    %v6883 = vunpack.c.h.b16 %v5737
    %v6884 = vunpack.c.l.b16 %v5738
    %v6885 = vunpack.c.h.b16 %v5738
    %v6886 = vunpack.c.l.b16 %v5739
    %v6887 = vunpack.c.h.b16 %v5739
    %v6888 = vunpack.c.l.b16 %v5740
    %v6889 = vunpack.c.h.b16 %v5740
    %v6890 = vunpack.c.l.b16 %v5741
    %v6891 = vunpack.c.h.b16 %v5741
    %v6892 = vunpack.c.l.b16 %v5742
    %v6893 = vunpack.c.h.b16 %v5742
    %v6894 = vunpack.c.l.b16 %v5743
    %v6895 = vunpack.c.h.b16 %v5743
    %v6896 = vunpack.c.l.b16 %v5744
    %v6897 = vunpack.c.h.b16 %v5744
    %v6898 = vunpack.c.l.b16 %v5745
    %v6899 = vunpack.c.h.b16 %v5745
    %v6900 = vunpack.c.l.b16 %v5746
    %v6901 = vunpack.c.h.b16 %v5746
    %v6902 = vunpack.c.l.b16 %v5747
    %v6903 = vunpack.c.h.b16 %v5747
    %v6904 = vunpack.c.l.b16 %v5748
    %v6905 = vunpack.c.h.b16 %v5748
    %v6906 = vunpack.c.l.b16 %v5749
    %v6907 = vunpack.c.h.b16 %v5749
    %v6908 = vunpack.c.l.b16 %v5750
    %v6909 = vunpack.c.h.b16 %v5750
    %v6910 = vunpack.c.l.b16 %v5751
    %v6911 = vunpack.c.h.b16 %v5751
    %v6912 = vunpack.c.l.b16 %v5752
    %v6913 = vunpack.c.h.b16 %v5752
    %v6914 = vunpack.c.l.b16 %v5753
    %v6915 = vunpack.c.h.b16 %v5753
    %v6916 = vunpack.c.l.b16 %v5754
    %v6917 = vunpack.c.h.b16 %v5754
    %v6918 = vunpack.c.l.b16 %v5755
    %v6919 = vunpack.c.h.b16 %v5755
    %v6920 = vunpack.c.l.b16 %v5756
    %v6921 = vunpack.c.h.b16 %v5756
    %v6922 = vunpack.c.l.b16 %v5757
    %v6923 = vunpack.c.h.b16 %v5757
    %v6924 = vunpack.c.l.b16 %v5758
    %v6925 = vunpack.c.h.b16 %v5758
    %v6926 = vunpack.c.l.b16 %v5759
    %v6927 = vunpack.c.h.b16 %v5759
    %v6928 = vunpack.c.l.b16 %v5760
    %v6929 = vunpack.c.h.b16 %v5760
    %v6930 = vunpack.c.l.b16 %v5761
    %v6931 = vunpack.c.h.b16 %v5761
    %v6932 = vunpack.c.l.b16 %v5762
    %v6933 = vunpack.c.h.b16 %v5762
    %v6934 = vunpack.c.l.b16 %v5763
    %v6935 = vunpack.c.h.b16 %v5763
    %v6936 = vunpack.c.l.b16 %v5764
    %v6937 = vunpack.c.h.b16 %v5764
    %v6938 = vunpack.c.l.b16 %v5765
    %v6939 = vunpack.c.h.b16 %v5765
    %v6940 = vunpack.c.l.b16 %v5766
    %v6941 = vunpack.c.h.b16 %v5766
    %v6942 = vunpack.c.l.b16 %v5767
    %v6943 = vunpack.c.h.b16 %v5767
    %v6944 = vunpack.c.l.b16 %v5768
    %v6945 = vunpack.c.h.b16 %v5768
    %v6946 = vunpack.c.l.b16 %v5769
    %v6947 = vunpack.c.h.b16 %v5769
    %v6948 = vunpack.c.l.b16 %v5770
    %v6949 = vunpack.c.h.b16 %v5770
    %v6950 = vunpack.c.l.b16 %v5771
    %v6951 = vunpack.c.h.b16 %v5771
    %v6952 = vpack.c.b16 %v6196, %v6184
    %v6953 = vpack.c.b16 %v6197, %v6185
    %v6954 = vpack.c.b16 %v6198, %v6186
    %v6955 = vpack.c.b16 %v6199, %v6187
    %v6956 = vpack.c.b16 %v6200, %v6188
    %v6957 = vpack.c.b16 %v6201, %v6189
    %v6958 = vpack.c.b16 %v6202, %v6190
    %v6959 = vpack.c.b16 %v6203, %v6191
    %v6960 = vpack.c.b16 %v6204, %v6192
    %v6961 = vpack.c.b16 %v6205, %v6193
    %v6962 = vpack.c.b16 %v6206, %v6194
    %v6963 = vpack.c.b16 %v6207, %v6195
    %v6964 = vpack.c.b16 %v6220, %v6208
    %v6965 = vpack.c.b16 %v6221, %v6209
    %v6966 = vpack.c.b16 %v6222, %v6210
    %v6967 = vpack.c.b16 %v6223, %v6211
    %v6968 = vpack.c.b16 %v6224, %v6212
    %v6969 = vpack.c.b16 %v6225, %v6213
    %v6970 = vpack.c.b16 %v6226, %v6214
    %v6971 = vpack.c.b16 %v6227, %v6215
    %v6972 = vpack.c.b16 %v6228, %v6216
    %v6973 = vpack.c.b16 %v6229, %v6217
    %v6974 = vpack.c.b16 %v6230, %v6218
    %v6975 = vpack.c.b16 %v6231, %v6219
    %v6976 = vpack.c.b16 %v6244, %v6232
    %v6977 = vpack.c.b16 %v6245, %v6233
    %v6978 = vpack.c.b16 %v6246, %v6234
    %v6979 = vpack.c.b16 %v6247, %v6235
    %v6980 = vpack.c.b16 %v6248, %v6236
    %v6981 = vpack.c.b16 %v6249, %v6237
    %v6982 = vpack.c.b16 %v6250, %v6238
    %v6983 = vpack.c.b16 %v6251, %v6239
    %v6984 = vpack.c.b16 %v6252, %v6240
    %v6985 = vpack.c.b16 %v6253, %v6241
    %v6986 = vpack.c.b16 %v6254, %v6242
    %v6987 = vpack.c.b16 %v6255, %v6243
    %v6988 = vpack.c.b16 %v6268, %v6256
    %v6989 = vpack.c.b16 %v6269, %v6257
    %v6990 = vpack.c.b16 %v6270, %v6258
    %v6991 = vpack.c.b16 %v6271, %v6259
    %v6992 = vpack.c.b16 %v6272, %v6260
    %v6993 = vpack.c.b16 %v6273, %v6261
    %v6994 = vpack.c.b16 %v6274, %v6262
    %v6995 = vpack.c.b16 %v6275, %v6263
    %v6996 = vpack.c.b16 %v6276, %v6264
    %v6997 = vpack.c.b16 %v6277, %v6265
    %v6998 = vpack.c.b16 %v6278, %v6266
    %v6999 = vpack.c.b16 %v6279, %v6267
    %v7000 = vpack.c.b16 %v6292, %v6280
    %v7001 = vpack.c.b16 %v6293, %v6281
    %v7002 = vpack.c.b16 %v6294, %v6282
    %v7003 = vpack.c.b16 %v6295, %v6283
    %v7004 = vpack.c.b16 %v6296, %v6284
    %v7005 = vpack.c.b16 %v6297, %v6285
    %v7006 = vpack.c.b16 %v6298, %v6286
    %v7007 = vpack.c.b16 %v6299, %v6287
    %v7008 = vpack.c.b16 %v6300, %v6288
    %v7009 = vpack.c.b16 %v6301, %v6289
    %v7010 = vpack.c.b16 %v6302, %v6290
    %v7011 = vpack.c.b16 %v6303, %v6291
    %v7012 = vpack.c.b16 %v6316, %v6304
    %v7013 = vpack.c.b16 %v6317, %v6305
    %v7014 = vpack.c.b16 %v6318, %v6306
    %v7015 = vpack.c.b16 %v6319, %v6307
    %v7016 = vpack.c.b16 %v6320, %v6308
    %v7017 = vpack.c.b16 %v6321, %v6309
    %v7018 = vpack.c.b16 %v6322, %v6310
    %v7019 = vpack.c.b16 %v6323, %v6311
    %v7020 = vpack.c.b16 %v6324, %v6312
    %v7021 = vpack.c.b16 %v6325, %v6313
    %v7022 = vpack.c.b16 %v6326, %v6314
    %v7023 = vpack.c.b16 %v6327, %v6315
    %v7024 = vpack.c.b16 %v6340, %v6328
    %v7025 = vpack.c.b16 %v6341, %v6329
    %v7026 = vpack.c.b16 %v6342, %v6330
    %v7027 = vpack.c.b16 %v6343, %v6331
    %v7028 = vpack.c.b16 %v6344, %v6332
    %v7029 = vpack.c.b16 %v6345, %v6333
    %v7030 = vpack.c.b16 %v6346, %v6334
    %v7031 = vpack.c.b16 %v6347, %v6335
    %v7032 = vpack.c.b16 %v6348, %v6336
    %v7033 = vpack.c.b16 %v6349, %v6337
    %v7034 = vpack.c.b16 %v6350, %v6338
    %v7035 = vpack.c.b16 %v6351, %v6339
    %v7036 = vpack.c.b16 %v6364, %v6352
    %v7037 = vpack.c.b16 %v6365, %v6353
    %v7038 = vpack.c.b16 %v6366, %v6354
    %v7039 = vpack.c.b16 %v6367, %v6355
    %v7040 = vpack.c.b16 %v6368, %v6356
    %v7041 = vpack.c.b16 %v6369, %v6357
    %v7042 = vpack.c.b16 %v6370, %v6358
    %v7043 = vpack.c.b16 %v6371, %v6359
    %v7044 = vpack.c.b16 %v6372, %v6360
    %v7045 = vpack.c.b16 %v6373, %v6361
    %v7046 = vpack.c.b16 %v6374, %v6362
    %v7047 = vpack.c.b16 %v6375, %v6363
    %v7048 = vpack.c.b16 %v6388, %v6376
    %v7049 = vpack.c.b16 %v6389, %v6377
    %v7050 = vpack.c.b16 %v6390, %v6378
    %v7051 = vpack.c.b16 %v6391, %v6379
    %v7052 = vpack.c.b16 %v6392, %v6380
    %v7053 = vpack.c.b16 %v6393, %v6381
    %v7054 = vpack.c.b16 %v6394, %v6382
    %v7055 = vpack.c.b16 %v6395, %v6383
    %v7056 = vpack.c.b16 %v6396, %v6384
    %v7057 = vpack.c.b16 %v6397, %v6385
    %v7058 = vpack.c.b16 %v6398, %v6386
    %v7059 = vpack.c.b16 %v6399, %v6387
    %v7060 = vpack.c.b16 %v6412, %v6400
    %v7061 = vpack.c.b16 %v6413, %v6401
    %v7062 = vpack.c.b16 %v6414, %v6402
    %v7063 = vpack.c.b16 %v6415, %v6403
    %v7064 = vpack.c.b16 %v6416, %v6404
    %v7065 = vpack.c.b16 %v6417, %v6405
    %v7066 = vpack.c.b16 %v6418, %v6406
    %v7067 = vpack.c.b16 %v6419, %v6407
    %v7068 = vpack.c.b16 %v6420, %v6408
    %v7069 = vpack.c.b16 %v6421, %v6409
    %v7070 = vpack.c.b16 %v6422, %v6410
    %v7071 = vpack.c.b16 %v6423, %v6411
    %v7072 = vpack.c.b16 %v6436, %v6424
    %v7073 = vpack.c.b16 %v6437, %v6425
    %v7074 = vpack.c.b16 %v6438, %v6426
    %v7075 = vpack.c.b16 %v6439, %v6427
    %v7076 = vpack.c.b16 %v6440, %v6428
    %v7077 = vpack.c.b16 %v6441, %v6429
    %v7078 = vpack.c.b16 %v6442, %v6430
    %v7079 = vpack.c.b16 %v6443, %v6431
    %v7080 = vpack.c.b16 %v6444, %v6432
    %v7081 = vpack.c.b16 %v6445, %v6433
    %v7082 = vpack.c.b16 %v6446, %v6434
    %v7083 = vpack.c.b16 %v6447, %v6435
    %v7084 = vpack.c.b16 %v6460, %v6448
    %v7085 = vpack.c.b16 %v6461, %v6449
    %v7086 = vpack.c.b16 %v6462, %v6450
    %v7087 = vpack.c.b16 %v6463, %v6451
    %v7088 = vpack.c.b16 %v6464, %v6452
    %v7089 = vpack.c.b16 %v6465, %v6453
    %v7090 = vpack.c.b16 %v6466, %v6454
    %v7091 = vpack.c.b16 %v6467, %v6455
    %v7092 = vpack.c.b16 %v6468, %v6456
    %v7093 = vpack.c.b16 %v6469, %v6457
    %v7094 = vpack.c.b16 %v6470, %v6458
    %v7095 = vpack.c.b16 %v6471, %v6459
    %v7096 = vpack.c.b16 %v6484, %v6472
    %v7097 = vpack.c.b16 %v6485, %v6473
    %v7098 = vpack.c.b16 %v6486, %v6474
    %v7099 = vpack.c.b16 %v6487, %v6475
    %v7100 = vpack.c.b16 %v6488, %v6476
    %v7101 = vpack.c.b16 %v6489, %v6477
    %v7102 = vpack.c.b16 %v6490, %v6478
    %v7103 = vpack.c.b16 %v6491, %v6479
    %v7104 = vpack.c.b16 %v6492, %v6480
    %v7105 = vpack.c.b16 %v6493, %v6481
    %v7106 = vpack.c.b16 %v6494, %v6482
    %v7107 = vpack.c.b16 %v6495, %v6483
    %v7108 = vpack.c.b16 %v6508, %v6496
    %v7109 = vpack.c.b16 %v6509, %v6497
    %v7110 = vpack.c.b16 %v6510, %v6498
    %v7111 = vpack.c.b16 %v6511, %v6499
    %v7112 = vpack.c.b16 %v6512, %v6500
    %v7113 = vpack.c.b16 %v6513, %v6501
    %v7114 = vpack.c.b16 %v6514, %v6502
    %v7115 = vpack.c.b16 %v6515, %v6503
    %v7116 = vpack.c.b16 %v6516, %v6504
    %v7117 = vpack.c.b16 %v6517, %v6505
    %v7118 = vpack.c.b16 %v6518, %v6506
    %v7119 = vpack.c.b16 %v6519, %v6507
    %v7120 = vpack.c.b16 %v6532, %v6520
    %v7121 = vpack.c.b16 %v6533, %v6521
    %v7122 = vpack.c.b16 %v6534, %v6522
    %v7123 = vpack.c.b16 %v6535, %v6523
    %v7124 = vpack.c.b16 %v6536, %v6524
    %v7125 = vpack.c.b16 %v6537, %v6525
    %v7126 = vpack.c.b16 %v6538, %v6526
    %v7127 = vpack.c.b16 %v6539, %v6527
    %v7128 = vpack.c.b16 %v6540, %v6528
    %v7129 = vpack.c.b16 %v6541, %v6529
    %v7130 = vpack.c.b16 %v6542, %v6530
    %v7131 = vpack.c.b16 %v6543, %v6531
    %v7132 = vpack.c.b16 %v6556, %v6544
    %v7133 = vpack.c.b16 %v6557, %v6545
    %v7134 = vpack.c.b16 %v6558, %v6546
    %v7135 = vpack.c.b16 %v6559, %v6547
    %v7136 = vpack.c.b16 %v6560, %v6548
    %v7137 = vpack.c.b16 %v6561, %v6549
    %v7138 = vpack.c.b16 %v6562, %v6550
    %v7139 = vpack.c.b16 %v6563, %v6551
    %v7140 = vpack.c.b16 %v6564, %v6552
    %v7141 = vpack.c.b16 %v6565, %v6553
    %v7142 = vpack.c.b16 %v6566, %v6554
    %v7143 = vpack.c.b16 %v6567, %v6555
    %v7144 = vpack.c.b16 %v6580, %v6568
    %v7145 = vpack.c.b16 %v6581, %v6569
    %v7146 = vpack.c.b16 %v6582, %v6570
    %v7147 = vpack.c.b16 %v6583, %v6571
    %v7148 = vpack.c.b16 %v6584, %v6572
    %v7149 = vpack.c.b16 %v6585, %v6573
    %v7150 = vpack.c.b16 %v6586, %v6574
    %v7151 = vpack.c.b16 %v6587, %v6575
    %v7152 = vpack.c.b16 %v6588, %v6576
    %v7153 = vpack.c.b16 %v6589, %v6577
    %v7154 = vpack.c.b16 %v6590, %v6578
    %v7155 = vpack.c.b16 %v6591, %v6579
    %v7156 = vpack.c.b16 %v6604, %v6592
    %v7157 = vpack.c.b16 %v6605, %v6593
    %v7158 = vpack.c.b16 %v6606, %v6594
    %v7159 = vpack.c.b16 %v6607, %v6595
    %v7160 = vpack.c.b16 %v6608, %v6596
    %v7161 = vpack.c.b16 %v6609, %v6597
    %v7162 = vpack.c.b16 %v6610, %v6598
    %v7163 = vpack.c.b16 %v6611, %v6599
    %v7164 = vpack.c.b16 %v6612, %v6600
    %v7165 = vpack.c.b16 %v6613, %v6601
    %v7166 = vpack.c.b16 %v6614, %v6602
    %v7167 = vpack.c.b16 %v6615, %v6603
    %v7168 = vpack.c.b16 %v6628, %v6616
    %v7169 = vpack.c.b16 %v6629, %v6617
    %v7170 = vpack.c.b16 %v6630, %v6618
    %v7171 = vpack.c.b16 %v6631, %v6619
    %v7172 = vpack.c.b16 %v6632, %v6620
    %v7173 = vpack.c.b16 %v6633, %v6621
    %v7174 = vpack.c.b16 %v6634, %v6622
    %v7175 = vpack.c.b16 %v6635, %v6623
    %v7176 = vpack.c.b16 %v6636, %v6624
    %v7177 = vpack.c.b16 %v6637, %v6625
    %v7178 = vpack.c.b16 %v6638, %v6626
    %v7179 = vpack.c.b16 %v6639, %v6627
    %v7180 = vpack.c.b16 %v6652, %v6640
    %v7181 = vpack.c.b16 %v6653, %v6641
    %v7182 = vpack.c.b16 %v6654, %v6642
    %v7183 = vpack.c.b16 %v6655, %v6643
    %v7184 = vpack.c.b16 %v6656, %v6644
    %v7185 = vpack.c.b16 %v6657, %v6645
    %v7186 = vpack.c.b16 %v6658, %v6646
    %v7187 = vpack.c.b16 %v6659, %v6647
    %v7188 = vpack.c.b16 %v6660, %v6648
    %v7189 = vpack.c.b16 %v6661, %v6649
    %v7190 = vpack.c.b16 %v6662, %v6650
    %v7191 = vpack.c.b16 %v6663, %v6651
    %v7192 = vpack.c.b16 %v6676, %v6664
    %v7193 = vpack.c.b16 %v6677, %v6665
    %v7194 = vpack.c.b16 %v6678, %v6666
    %v7195 = vpack.c.b16 %v6679, %v6667
    %v7196 = vpack.c.b16 %v6680, %v6668
    %v7197 = vpack.c.b16 %v6681, %v6669
    %v7198 = vpack.c.b16 %v6682, %v6670
    %v7199 = vpack.c.b16 %v6683, %v6671
    %v7200 = vpack.c.b16 %v6684, %v6672
    %v7201 = vpack.c.b16 %v6685, %v6673
    %v7202 = vpack.c.b16 %v6686, %v6674
    %v7203 = vpack.c.b16 %v6687, %v6675
    %v7204 = vpack.c.b16 %v6700, %v6688
    %v7205 = vpack.c.b16 %v6701, %v6689
    %v7206 = vpack.c.b16 %v6702, %v6690
    %v7207 = vpack.c.b16 %v6703, %v6691
    %v7208 = vpack.c.b16 %v6704, %v6692
    %v7209 = vpack.c.b16 %v6705, %v6693
    %v7210 = vpack.c.b16 %v6706, %v6694
    %v7211 = vpack.c.b16 %v6707, %v6695
    %v7212 = vpack.c.b16 %v6708, %v6696
    %v7213 = vpack.c.b16 %v6709, %v6697
    %v7214 = vpack.c.b16 %v6710, %v6698
    %v7215 = vpack.c.b16 %v6711, %v6699
    %v7216 = vpack.c.b16 %v6724, %v6712
    %v7217 = vpack.c.b16 %v6725, %v6713
    %v7218 = vpack.c.b16 %v6726, %v6714
    %v7219 = vpack.c.b16 %v6727, %v6715
    %v7220 = vpack.c.b16 %v6728, %v6716
    %v7221 = vpack.c.b16 %v6729, %v6717
    %v7222 = vpack.c.b16 %v6730, %v6718
    %v7223 = vpack.c.b16 %v6731, %v6719
    %v7224 = vpack.c.b16 %v6732, %v6720
    %v7225 = vpack.c.b16 %v6733, %v6721
    %v7226 = vpack.c.b16 %v6734, %v6722
    %v7227 = vpack.c.b16 %v6735, %v6723
    %v7228 = vpack.c.b16 %v6748, %v6736
    %v7229 = vpack.c.b16 %v6749, %v6737
    %v7230 = vpack.c.b16 %v6750, %v6738
    %v7231 = vpack.c.b16 %v6751, %v6739
    %v7232 = vpack.c.b16 %v6752, %v6740
    %v7233 = vpack.c.b16 %v6753, %v6741
    %v7234 = vpack.c.b16 %v6754, %v6742
    %v7235 = vpack.c.b16 %v6755, %v6743
    %v7236 = vpack.c.b16 %v6756, %v6744
    %v7237 = vpack.c.b16 %v6757, %v6745
    %v7238 = vpack.c.b16 %v6758, %v6746
    %v7239 = vpack.c.b16 %v6759, %v6747
    %v7240 = vpack.c.b16 %v6772, %v6760
    %v7241 = vpack.c.b16 %v6773, %v6761
    %v7242 = vpack.c.b16 %v6774, %v6762
    %v7243 = vpack.c.b16 %v6775, %v6763
    %v7244 = vpack.c.b16 %v6776, %v6764
    %v7245 = vpack.c.b16 %v6777, %v6765
    %v7246 = vpack.c.b16 %v6778, %v6766
    %v7247 = vpack.c.b16 %v6779, %v6767
    %v7248 = vpack.c.b16 %v6780, %v6768
    %v7249 = vpack.c.b16 %v6781, %v6769
    %v7250 = vpack.c.b16 %v6782, %v6770
    %v7251 = vpack.c.b16 %v6783, %v6771
    %v7252 = vpack.c.b16 %v6796, %v6784
    %v7253 = vpack.c.b16 %v6797, %v6785
    %v7254 = vpack.c.b16 %v6798, %v6786
    %v7255 = vpack.c.b16 %v6799, %v6787
    %v7256 = vpack.c.b16 %v6800, %v6788
    %v7257 = vpack.c.b16 %v6801, %v6789
    %v7258 = vpack.c.b16 %v6802, %v6790
    %v7259 = vpack.c.b16 %v6803, %v6791
    %v7260 = vpack.c.b16 %v6804, %v6792
    %v7261 = vpack.c.b16 %v6805, %v6793
    %v7262 = vpack.c.b16 %v6806, %v6794
    %v7263 = vpack.c.b16 %v6807, %v6795
    %v7264 = vpack.c.b16 %v6820, %v6808
    %v7265 = vpack.c.b16 %v6821, %v6809
    %v7266 = vpack.c.b16 %v6822, %v6810
    %v7267 = vpack.c.b16 %v6823, %v6811
    %v7268 = vpack.c.b16 %v6824, %v6812
    %v7269 = vpack.c.b16 %v6825, %v6813
    %v7270 = vpack.c.b16 %v6826, %v6814
    %v7271 = vpack.c.b16 %v6827, %v6815
    %v7272 = vpack.c.b16 %v6828, %v6816
    %v7273 = vpack.c.b16 %v6829, %v6817
    %v7274 = vpack.c.b16 %v6830, %v6818
    %v7275 = vpack.c.b16 %v6831, %v6819
    %v7276 = vpack.c.b16 %v6844, %v6832
    %v7277 = vpack.c.b16 %v6845, %v6833
    %v7278 = vpack.c.b16 %v6846, %v6834
    %v7279 = vpack.c.b16 %v6847, %v6835
    %v7280 = vpack.c.b16 %v6848, %v6836
    %v7281 = vpack.c.b16 %v6849, %v6837
    %v7282 = vpack.c.b16 %v6850, %v6838
    %v7283 = vpack.c.b16 %v6851, %v6839
    %v7284 = vpack.c.b16 %v6852, %v6840
    %v7285 = vpack.c.b16 %v6853, %v6841
    %v7286 = vpack.c.b16 %v6854, %v6842
    %v7287 = vpack.c.b16 %v6855, %v6843
    %v7288 = vpack.c.b16 %v6868, %v6856
    %v7289 = vpack.c.b16 %v6869, %v6857
    %v7290 = vpack.c.b16 %v6870, %v6858
    %v7291 = vpack.c.b16 %v6871, %v6859
    %v7292 = vpack.c.b16 %v6872, %v6860
    %v7293 = vpack.c.b16 %v6873, %v6861
    %v7294 = vpack.c.b16 %v6874, %v6862
    %v7295 = vpack.c.b16 %v6875, %v6863
    %v7296 = vpack.c.b16 %v6876, %v6864
    %v7297 = vpack.c.b16 %v6877, %v6865
    %v7298 = vpack.c.b16 %v6878, %v6866
    %v7299 = vpack.c.b16 %v6879, %v6867
    %v7300 = vpack.c.b16 %v6892, %v6880
    %v7301 = vpack.c.b16 %v6893, %v6881
    %v7302 = vpack.c.b16 %v6894, %v6882
    %v7303 = vpack.c.b16 %v6895, %v6883
    %v7304 = vpack.c.b16 %v6896, %v6884
    %v7305 = vpack.c.b16 %v6897, %v6885
    %v7306 = vpack.c.b16 %v6898, %v6886
    %v7307 = vpack.c.b16 %v6899, %v6887
    %v7308 = vpack.c.b16 %v6900, %v6888
    %v7309 = vpack.c.b16 %v6901, %v6889
    %v7310 = vpack.c.b16 %v6902, %v6890
    %v7311 = vpack.c.b16 %v6903, %v6891
    %v7312 = vpack.c.b16 %v6916, %v6904
    %v7313 = vpack.c.b16 %v6917, %v6905
    %v7314 = vpack.c.b16 %v6918, %v6906
    %v7315 = vpack.c.b16 %v6919, %v6907
    %v7316 = vpack.c.b16 %v6920, %v6908
    %v7317 = vpack.c.b16 %v6921, %v6909
    %v7318 = vpack.c.b16 %v6922, %v6910
    %v7319 = vpack.c.b16 %v6923, %v6911
    %v7320 = vpack.c.b16 %v6924, %v6912
    %v7321 = vpack.c.b16 %v6925, %v6913
    %v7322 = vpack.c.b16 %v6926, %v6914
    %v7323 = vpack.c.b16 %v6927, %v6915
    %v7324 = vpack.c.b16 %v6940, %v6928
    %v7325 = vpack.c.b16 %v6941, %v6929
    %v7326 = vpack.c.b16 %v6942, %v6930
    %v7327 = vpack.c.b16 %v6943, %v6931
    %v7328 = vpack.c.b16 %v6944, %v6932
    %v7329 = vpack.c.b16 %v6945, %v6933
    %v7330 = vpack.c.b16 %v6946, %v6934
    %v7331 = vpack.c.b16 %v6947, %v6935
    %v7332 = vpack.c.b16 %v6948, %v6936
    %v7333 = vpack.c.b16 %v6949, %v6937
    %v7334 = vpack.c.b16 %v6950, %v6938
    %v7335 = vpack.c.b16 %v6951, %v6939
    %7720 = vmatpush.bf16.msra.mxu0 %v7036
    %7721 = vmatpush.bf16.msra.mxu0 %v7024
    %7722 = vmatpush.bf16.msra.mxu0 %v7012
    %7723 = vmatpush.bf16.msra.mxu0 %v7000
    %7724 = vmatpush.bf16.msra.mxu0 %v6988
    %7725 = vmatpush.bf16.msra.mxu0 %v6976
    %7726 = vmatpush.bf16.msra.mxu0 %v6964
    %7727 = vmatpush.bf16.msra.mxu0 %v6952
    %7728 = vmatmul.bf16.gmra.mxu0 %v5384
    %v7729 = vpop.f32.mrf.mxu0
    %v7730 = vadd.f32 %v5776, %v7729
    %v7731 = vpop.f32.mrf.mxu0
    %7732 = vdwg.mxu0
    %7733 = vmatpush.bf16.msra.mxu0 %v7132
    %7734 = vmatpush.bf16.msra.mxu0 %v7120
    %7735 = vmatpush.bf16.msra.mxu0 %v7108
    %7736 = vmatpush.bf16.msra.mxu0 %v7096
    %7737 = vmatpush.bf16.msra.mxu0 %v7084
    %7738 = vmatpush.bf16.msra.mxu0 %v7072
    %7739 = vmatpush.bf16.msra.mxu0 %v7060
    %7740 = vmatpush.bf16.msra.mxu0 %v7048
    %7741 = vmatmul.bf16.gmra.mxu0 %v5385
    %v7742 = vpop.f32.mrf.mxu0
    %v7743 = vadd.f32 %v7730, %v7742
    %v7744 = vpop.f32.mrf.mxu0
    %7745 = vdwg.mxu0
    %7746 = vmatpush.bf16.msra.mxu0 %v7228
    %7747 = vmatpush.bf16.msra.mxu0 %v7216
    %7748 = vmatpush.bf16.msra.mxu0 %v7204
    %7749 = vmatpush.bf16.msra.mxu0 %v7192
    %7750 = vmatpush.bf16.msra.mxu0 %v7180
    %7751 = vmatpush.bf16.msra.mxu0 %v7168
    %7752 = vmatpush.bf16.msra.mxu0 %v7156
    %7753 = vmatpush.bf16.msra.mxu0 %v7144
    %7754 = vmatmul.bf16.gmra.mxu0 %v5386
    %v7755 = vpop.f32.mrf.mxu0
    %v7756 = vadd.f32 %v7743, %v7755
    %v7757 = vpop.f32.mrf.mxu0
    %7758 = vdwg.mxu0
    %7759 = vmatpush.bf16.msra.mxu0 %v7324
    %7760 = vmatpush.bf16.msra.mxu0 %v7312
    %7761 = vmatpush.bf16.msra.mxu0 %v7300
    %7762 = vmatpush.bf16.msra.mxu0 %v7288
    %7763 = vmatpush.bf16.msra.mxu0 %v7276
    %7764 = vmatpush.bf16.msra.mxu0 %v7264
    %7765 = vmatpush.bf16.msra.mxu0 %v7252
    %7766 = vmatpush.bf16.msra.mxu0 %v7240
    %7767 = vmatmul.bf16.gmra.mxu0 %v5387
    %v7768 = vpop.f32.mrf.mxu0
    %v7769 = vadd.f32 %v7756, %v7768
    %v7770 = vpop.f32.mrf.mxu0
    %7771 = vdwg.mxu0
    %7772 = vmatpush.bf16.msra.mxu0 %v7037
    %7773 = vmatpush.bf16.msra.mxu0 %v7025
    %7774 = vmatpush.bf16.msra.mxu0 %v7013
    %7775 = vmatpush.bf16.msra.mxu0 %v7001
    %7776 = vmatpush.bf16.msra.mxu0 %v6989
    %7777 = vmatpush.bf16.msra.mxu0 %v6977
    %7778 = vmatpush.bf16.msra.mxu0 %v6965
    %7779 = vmatpush.bf16.msra.mxu0 %v6953
    %7780 = vmatmul.bf16.gmra.mxu0 %v5384
    %v7781 = vpop.f32.mrf.mxu0
    %v7782 = vadd.f32 %v5777, %v7781
    %v7783 = vpop.f32.mrf.mxu0
    %7784 = vdwg.mxu0
    %7785 = vmatpush.bf16.msra.mxu0 %v7133
    %7786 = vmatpush.bf16.msra.mxu0 %v7121
    %7787 = vmatpush.bf16.msra.mxu0 %v7109
    %7788 = vmatpush.bf16.msra.mxu0 %v7097
    %7789 = vmatpush.bf16.msra.mxu0 %v7085
    %7790 = vmatpush.bf16.msra.mxu0 %v7073
    %7791 = vmatpush.bf16.msra.mxu0 %v7061
    %7792 = vmatpush.bf16.msra.mxu0 %v7049
    %7793 = vmatmul.bf16.gmra.mxu0 %v5385
    %v7794 = vpop.f32.mrf.mxu0
    %v7795 = vadd.f32 %v7782, %v7794
    %v7796 = vpop.f32.mrf.mxu0
    %7797 = vdwg.mxu0
    %7798 = vmatpush.bf16.msra.mxu0 %v7229
    %7799 = vmatpush.bf16.msra.mxu0 %v7217
    %7800 = vmatpush.bf16.msra.mxu0 %v7205
    %7801 = vmatpush.bf16.msra.mxu0 %v7193
    %7802 = vmatpush.bf16.msra.mxu0 %v7181
    %7803 = vmatpush.bf16.msra.mxu0 %v7169
    %7804 = vmatpush.bf16.msra.mxu0 %v7157
    %7805 = vmatpush.bf16.msra.mxu0 %v7145
    %7806 = vmatmul.bf16.gmra.mxu0 %v5386
    %v7807 = vpop.f32.mrf.mxu0
    %v7808 = vadd.f32 %v7795, %v7807
    %v7809 = vpop.f32.mrf.mxu0
    %7810 = vdwg.mxu0
    %7811 = vmatpush.bf16.msra.mxu0 %v7325
    %7812 = vmatpush.bf16.msra.mxu0 %v7313
    %7813 = vmatpush.bf16.msra.mxu0 %v7301
    %7814 = vmatpush.bf16.msra.mxu0 %v7289
    %7815 = vmatpush.bf16.msra.mxu0 %v7277
    %7816 = vmatpush.bf16.msra.mxu0 %v7265
    %7817 = vmatpush.bf16.msra.mxu0 %v7253
    %7818 = vmatpush.bf16.msra.mxu0 %v7241
    %7819 = vmatmul.bf16.gmra.mxu0 %v5387
    %v7820 = vpop.f32.mrf.mxu0
    %v7821 = vadd.f32 %v7808, %v7820
    %v7822 = vpop.f32.mrf.mxu0
    %7823 = vdwg.mxu0
    %7824 = vmatpush.bf16.msra.mxu0 %v7038
    %7825 = vmatpush.bf16.msra.mxu0 %v7026
    %7826 = vmatpush.bf16.msra.mxu0 %v7014
    %7827 = vmatpush.bf16.msra.mxu0 %v7002
    %7828 = vmatpush.bf16.msra.mxu0 %v6990
    %7829 = vmatpush.bf16.msra.mxu0 %v6978
    %7830 = vmatpush.bf16.msra.mxu0 %v6966
    %7831 = vmatpush.bf16.msra.mxu0 %v6954
    %7832 = vmatmul.bf16.gmra.mxu0 %v5384
    %v7833 = vpop.f32.mrf.mxu0
    %v7834 = vadd.f32 %v5778, %v7833
    %v7835 = vpop.f32.mrf.mxu0
    %7836 = vdwg.mxu0
    %7837 = vmatpush.bf16.msra.mxu0 %v7134
    %7838 = vmatpush.bf16.msra.mxu0 %v7122
    %7839 = vmatpush.bf16.msra.mxu0 %v7110
    %7840 = vmatpush.bf16.msra.mxu0 %v7098
    %7841 = vmatpush.bf16.msra.mxu0 %v7086
    %7842 = vmatpush.bf16.msra.mxu0 %v7074
    %7843 = vmatpush.bf16.msra.mxu0 %v7062
    %7844 = vmatpush.bf16.msra.mxu0 %v7050
    %7845 = vmatmul.bf16.gmra.mxu0 %v5385
    %v7846 = vpop.f32.mrf.mxu0
    %v7847 = vadd.f32 %v7834, %v7846
    %v7848 = vpop.f32.mrf.mxu0
    %7849 = vdwg.mxu0
    %7850 = vmatpush.bf16.msra.mxu0 %v7230
    %7851 = vmatpush.bf16.msra.mxu0 %v7218
    %7852 = vmatpush.bf16.msra.mxu0 %v7206
    %7853 = vmatpush.bf16.msra.mxu0 %v7194
    %7854 = vmatpush.bf16.msra.mxu0 %v7182
    %7855 = vmatpush.bf16.msra.mxu0 %v7170
    %7856 = vmatpush.bf16.msra.mxu0 %v7158
    %7857 = vmatpush.bf16.msra.mxu0 %v7146
    %7858 = vmatmul.bf16.gmra.mxu0 %v5386
    %v7859 = vpop.f32.mrf.mxu0
    %v7860 = vadd.f32 %v7847, %v7859
    %v7861 = vpop.f32.mrf.mxu0
    %7862 = vdwg.mxu0
    %7863 = vmatpush.bf16.msra.mxu0 %v7326
    %7864 = vmatpush.bf16.msra.mxu0 %v7314
    %7865 = vmatpush.bf16.msra.mxu0 %v7302
    %7866 = vmatpush.bf16.msra.mxu0 %v7290
    %7867 = vmatpush.bf16.msra.mxu0 %v7278
    %7868 = vmatpush.bf16.msra.mxu0 %v7266
    %7869 = vmatpush.bf16.msra.mxu0 %v7254
    %7870 = vmatpush.bf16.msra.mxu0 %v7242
    %7871 = vmatmul.bf16.gmra.mxu0 %v5387
    %v7872 = vpop.f32.mrf.mxu0
    %v7873 = vadd.f32 %v7860, %v7872
    %v7874 = vpop.f32.mrf.mxu0
    %7875 = vdwg.mxu0
    %7876 = vmatpush.bf16.msra.mxu0 %v7039
    %7877 = vmatpush.bf16.msra.mxu0 %v7027
    %7878 = vmatpush.bf16.msra.mxu0 %v7015
    %7879 = vmatpush.bf16.msra.mxu0 %v7003
    %7880 = vmatpush.bf16.msra.mxu0 %v6991
    %7881 = vmatpush.bf16.msra.mxu0 %v6979
    %7882 = vmatpush.bf16.msra.mxu0 %v6967
    %7883 = vmatpush.bf16.msra.mxu0 %v6955
    %7884 = vmatmul.bf16.gmra.mxu0 %v5384
    %v7885 = vpop.f32.mrf.mxu0
    %v7886 = vadd.f32 %v5779, %v7885
    %v7887 = vpop.f32.mrf.mxu0
    %7888 = vdwg.mxu0
    %7889 = vmatpush.bf16.msra.mxu0 %v7135
    %7890 = vmatpush.bf16.msra.mxu0 %v7123
    %7891 = vmatpush.bf16.msra.mxu0 %v7111
    %7892 = vmatpush.bf16.msra.mxu0 %v7099
    %7893 = vmatpush.bf16.msra.mxu0 %v7087
    %7894 = vmatpush.bf16.msra.mxu0 %v7075
    %7895 = vmatpush.bf16.msra.mxu0 %v7063
    %7896 = vmatpush.bf16.msra.mxu0 %v7051
    %7897 = vmatmul.bf16.gmra.mxu0 %v5385
    %v7898 = vpop.f32.mrf.mxu0
    %v7899 = vadd.f32 %v7886, %v7898
    %v7900 = vpop.f32.mrf.mxu0
    %7901 = vdwg.mxu0
    %7902 = vmatpush.bf16.msra.mxu0 %v7231
    %7903 = vmatpush.bf16.msra.mxu0 %v7219
    %7904 = vmatpush.bf16.msra.mxu0 %v7207
    %7905 = vmatpush.bf16.msra.mxu0 %v7195
    %7906 = vmatpush.bf16.msra.mxu0 %v7183
    %7907 = vmatpush.bf16.msra.mxu0 %v7171
    %7908 = vmatpush.bf16.msra.mxu0 %v7159
    %7909 = vmatpush.bf16.msra.mxu0 %v7147
    %7910 = vmatmul.bf16.gmra.mxu0 %v5386
    %v7911 = vpop.f32.mrf.mxu0
    %v7912 = vadd.f32 %v7899, %v7911
    %v7913 = vpop.f32.mrf.mxu0
    %7914 = vdwg.mxu0
    %7915 = vmatpush.bf16.msra.mxu0 %v7327
    %7916 = vmatpush.bf16.msra.mxu0 %v7315
    %7917 = vmatpush.bf16.msra.mxu0 %v7303
    %7918 = vmatpush.bf16.msra.mxu0 %v7291
    %7919 = vmatpush.bf16.msra.mxu0 %v7279
    %7920 = vmatpush.bf16.msra.mxu0 %v7267
    %7921 = vmatpush.bf16.msra.mxu0 %v7255
    %7922 = vmatpush.bf16.msra.mxu0 %v7243
    %7923 = vmatmul.bf16.gmra.mxu0 %v5387
    %v7924 = vpop.f32.mrf.mxu0
    %v7925 = vadd.f32 %v7912, %v7924
    %v7926 = vpop.f32.mrf.mxu0
    %7927 = vdwg.mxu0
    %7928 = vmatpush.bf16.msra.mxu0 %v7040
    %7929 = vmatpush.bf16.msra.mxu0 %v7028
    %7930 = vmatpush.bf16.msra.mxu0 %v7016
    %7931 = vmatpush.bf16.msra.mxu0 %v7004
    %7932 = vmatpush.bf16.msra.mxu0 %v6992
    %7933 = vmatpush.bf16.msra.mxu0 %v6980
    %7934 = vmatpush.bf16.msra.mxu0 %v6968
    %7935 = vmatpush.bf16.msra.mxu0 %v6956
    %7936 = vmatmul.bf16.gmra.mxu0 %v5384
    %v7937 = vpop.f32.mrf.mxu0
    %v7938 = vadd.f32 %v5780, %v7937
    %v7939 = vpop.f32.mrf.mxu0
    %7940 = vdwg.mxu0
    %7941 = vmatpush.bf16.msra.mxu0 %v7136
    %7942 = vmatpush.bf16.msra.mxu0 %v7124
    %7943 = vmatpush.bf16.msra.mxu0 %v7112
    %7944 = vmatpush.bf16.msra.mxu0 %v7100
    %7945 = vmatpush.bf16.msra.mxu0 %v7088
    %7946 = vmatpush.bf16.msra.mxu0 %v7076
    %7947 = vmatpush.bf16.msra.mxu0 %v7064
    %7948 = vmatpush.bf16.msra.mxu0 %v7052
    %7949 = vmatmul.bf16.gmra.mxu0 %v5385
    %v7950 = vpop.f32.mrf.mxu0
    %v7951 = vadd.f32 %v7938, %v7950
    %v7952 = vpop.f32.mrf.mxu0
    %7953 = vdwg.mxu0
    %7954 = vmatpush.bf16.msra.mxu0 %v7232
    %7955 = vmatpush.bf16.msra.mxu0 %v7220
    %7956 = vmatpush.bf16.msra.mxu0 %v7208
    %7957 = vmatpush.bf16.msra.mxu0 %v7196
    %7958 = vmatpush.bf16.msra.mxu0 %v7184
    %7959 = vmatpush.bf16.msra.mxu0 %v7172
    %7960 = vmatpush.bf16.msra.mxu0 %v7160
    %7961 = vmatpush.bf16.msra.mxu0 %v7148
    %7962 = vmatmul.bf16.gmra.mxu0 %v5386
    %v7963 = vpop.f32.mrf.mxu0
    %v7964 = vadd.f32 %v7951, %v7963
    %v7965 = vpop.f32.mrf.mxu0
    %7966 = vdwg.mxu0
    %7967 = vmatpush.bf16.msra.mxu0 %v7328
    %7968 = vmatpush.bf16.msra.mxu0 %v7316
    %7969 = vmatpush.bf16.msra.mxu0 %v7304
    %7970 = vmatpush.bf16.msra.mxu0 %v7292
    %7971 = vmatpush.bf16.msra.mxu0 %v7280
    %7972 = vmatpush.bf16.msra.mxu0 %v7268
    %7973 = vmatpush.bf16.msra.mxu0 %v7256
    %7974 = vmatpush.bf16.msra.mxu0 %v7244
    %7975 = vmatmul.bf16.gmra.mxu0 %v5387
    %v7976 = vpop.f32.mrf.mxu0
    %v7977 = vadd.f32 %v7964, %v7976
    %v7978 = vpop.f32.mrf.mxu0
    %7979 = vdwg.mxu0
    %7980 = vmatpush.bf16.msra.mxu0 %v7041
    %7981 = vmatpush.bf16.msra.mxu0 %v7029
    %7982 = vmatpush.bf16.msra.mxu0 %v7017
    %7983 = vmatpush.bf16.msra.mxu0 %v7005
    %7984 = vmatpush.bf16.msra.mxu0 %v6993
    %7985 = vmatpush.bf16.msra.mxu0 %v6981
    %7986 = vmatpush.bf16.msra.mxu0 %v6969
    %7987 = vmatpush.bf16.msra.mxu0 %v6957
    %7988 = vmatmul.bf16.gmra.mxu0 %v5384
    %v7989 = vpop.f32.mrf.mxu0
    %v7990 = vadd.f32 %v5781, %v7989
    %v7991 = vpop.f32.mrf.mxu0
    %7992 = vdwg.mxu0
    %7993 = vmatpush.bf16.msra.mxu0 %v7137
    %7994 = vmatpush.bf16.msra.mxu0 %v7125
    %7995 = vmatpush.bf16.msra.mxu0 %v7113
    %7996 = vmatpush.bf16.msra.mxu0 %v7101
    %7997 = vmatpush.bf16.msra.mxu0 %v7089
    %7998 = vmatpush.bf16.msra.mxu0 %v7077
    %7999 = vmatpush.bf16.msra.mxu0 %v7065
    %8000 = vmatpush.bf16.msra.mxu0 %v7053
    %8001 = vmatmul.bf16.gmra.mxu0 %v5385
    %v8002 = vpop.f32.mrf.mxu0
    %v8003 = vadd.f32 %v7990, %v8002
    %v8004 = vpop.f32.mrf.mxu0
    %8005 = vdwg.mxu0
    %8006 = vmatpush.bf16.msra.mxu0 %v7233
    %8007 = vmatpush.bf16.msra.mxu0 %v7221
    %8008 = vmatpush.bf16.msra.mxu0 %v7209
    %8009 = vmatpush.bf16.msra.mxu0 %v7197
    %8010 = vmatpush.bf16.msra.mxu0 %v7185
    %8011 = vmatpush.bf16.msra.mxu0 %v7173
    %8012 = vmatpush.bf16.msra.mxu0 %v7161
    %8013 = vmatpush.bf16.msra.mxu0 %v7149
    %8014 = vmatmul.bf16.gmra.mxu0 %v5386
    %v8015 = vpop.f32.mrf.mxu0
    %v8016 = vadd.f32 %v8003, %v8015
    %v8017 = vpop.f32.mrf.mxu0
    %8018 = vdwg.mxu0
    %8019 = vmatpush.bf16.msra.mxu0 %v7329
    %8020 = vmatpush.bf16.msra.mxu0 %v7317
    %8021 = vmatpush.bf16.msra.mxu0 %v7305
    %8022 = vmatpush.bf16.msra.mxu0 %v7293
    %8023 = vmatpush.bf16.msra.mxu0 %v7281
    %8024 = vmatpush.bf16.msra.mxu0 %v7269
    %8025 = vmatpush.bf16.msra.mxu0 %v7257
    %8026 = vmatpush.bf16.msra.mxu0 %v7245
    %8027 = vmatmul.bf16.gmra.mxu0 %v5387
    %v8028 = vpop.f32.mrf.mxu0
    %v8029 = vadd.f32 %v8016, %v8028
    %v8030 = vpop.f32.mrf.mxu0
    %8031 = vdwg.mxu0
    %8032 = vmatpush.bf16.msra.mxu0 %v7042
    %8033 = vmatpush.bf16.msra.mxu0 %v7030
    %8034 = vmatpush.bf16.msra.mxu0 %v7018
    %8035 = vmatpush.bf16.msra.mxu0 %v7006
    %8036 = vmatpush.bf16.msra.mxu0 %v6994
    %8037 = vmatpush.bf16.msra.mxu0 %v6982
    %8038 = vmatpush.bf16.msra.mxu0 %v6970
    %8039 = vmatpush.bf16.msra.mxu0 %v6958
    %8040 = vmatmul.bf16.gmra.mxu0 %v5384
    %v8041 = vpop.f32.mrf.mxu0
    %v8042 = vadd.f32 %v5782, %v8041
    %v8043 = vpop.f32.mrf.mxu0
    %8044 = vdwg.mxu0
    %8045 = vmatpush.bf16.msra.mxu0 %v7138
    %8046 = vmatpush.bf16.msra.mxu0 %v7126
    %8047 = vmatpush.bf16.msra.mxu0 %v7114
    %8048 = vmatpush.bf16.msra.mxu0 %v7102
    %8049 = vmatpush.bf16.msra.mxu0 %v7090
    %8050 = vmatpush.bf16.msra.mxu0 %v7078
    %8051 = vmatpush.bf16.msra.mxu0 %v7066
    %8052 = vmatpush.bf16.msra.mxu0 %v7054
    %8053 = vmatmul.bf16.gmra.mxu0 %v5385
    %v8054 = vpop.f32.mrf.mxu0
    %v8055 = vadd.f32 %v8042, %v8054
    %v8056 = vpop.f32.mrf.mxu0
    %8057 = vdwg.mxu0
    %8058 = vmatpush.bf16.msra.mxu0 %v7234
    %8059 = vmatpush.bf16.msra.mxu0 %v7222
    %8060 = vmatpush.bf16.msra.mxu0 %v7210
    %8061 = vmatpush.bf16.msra.mxu0 %v7198
    %8062 = vmatpush.bf16.msra.mxu0 %v7186
    %8063 = vmatpush.bf16.msra.mxu0 %v7174
    %8064 = vmatpush.bf16.msra.mxu0 %v7162
    %8065 = vmatpush.bf16.msra.mxu0 %v7150
    %8066 = vmatmul.bf16.gmra.mxu0 %v5386
    %v8067 = vpop.f32.mrf.mxu0
    %v8068 = vadd.f32 %v8055, %v8067
    %v8069 = vpop.f32.mrf.mxu0
    %8070 = vdwg.mxu0
    %8071 = vmatpush.bf16.msra.mxu0 %v7330
    %8072 = vmatpush.bf16.msra.mxu0 %v7318
    %8073 = vmatpush.bf16.msra.mxu0 %v7306
    %8074 = vmatpush.bf16.msra.mxu0 %v7294
    %8075 = vmatpush.bf16.msra.mxu0 %v7282
    %8076 = vmatpush.bf16.msra.mxu0 %v7270
    %8077 = vmatpush.bf16.msra.mxu0 %v7258
    %8078 = vmatpush.bf16.msra.mxu0 %v7246
    %8079 = vmatmul.bf16.gmra.mxu0 %v5387
    %v8080 = vpop.f32.mrf.mxu0
    %v8081 = vadd.f32 %v8068, %v8080
    %v8082 = vpop.f32.mrf.mxu0
    %8083 = vdwg.mxu0
    %8084 = vmatpush.bf16.msra.mxu0 %v7043
    %8085 = vmatpush.bf16.msra.mxu0 %v7031
    %8086 = vmatpush.bf16.msra.mxu0 %v7019
    %8087 = vmatpush.bf16.msra.mxu0 %v7007
    %8088 = vmatpush.bf16.msra.mxu0 %v6995
    %8089 = vmatpush.bf16.msra.mxu0 %v6983
    %8090 = vmatpush.bf16.msra.mxu0 %v6971
    %8091 = vmatpush.bf16.msra.mxu0 %v6959
    %8092 = vmatmul.bf16.gmra.mxu0 %v5384
    %v8093 = vpop.f32.mrf.mxu0
    %v8094 = vadd.f32 %v5783, %v8093
    %v8095 = vpop.f32.mrf.mxu0
    %8096 = vdwg.mxu0
    %8097 = vmatpush.bf16.msra.mxu0 %v7139
    %8098 = vmatpush.bf16.msra.mxu0 %v7127
    %8099 = vmatpush.bf16.msra.mxu0 %v7115
    %8100 = vmatpush.bf16.msra.mxu0 %v7103
    %8101 = vmatpush.bf16.msra.mxu0 %v7091
    %8102 = vmatpush.bf16.msra.mxu0 %v7079
    %8103 = vmatpush.bf16.msra.mxu0 %v7067
    %8104 = vmatpush.bf16.msra.mxu0 %v7055
    %8105 = vmatmul.bf16.gmra.mxu0 %v5385
    %v8106 = vpop.f32.mrf.mxu0
    %v8107 = vadd.f32 %v8094, %v8106
    %v8108 = vpop.f32.mrf.mxu0
    %8109 = vdwg.mxu0
    %8110 = vmatpush.bf16.msra.mxu0 %v7235
    %8111 = vmatpush.bf16.msra.mxu0 %v7223
    %8112 = vmatpush.bf16.msra.mxu0 %v7211
    %8113 = vmatpush.bf16.msra.mxu0 %v7199
    %8114 = vmatpush.bf16.msra.mxu0 %v7187
    %8115 = vmatpush.bf16.msra.mxu0 %v7175
    %8116 = vmatpush.bf16.msra.mxu0 %v7163
    %8117 = vmatpush.bf16.msra.mxu0 %v7151
    %8118 = vmatmul.bf16.gmra.mxu0 %v5386
    %v8119 = vpop.f32.mrf.mxu0
    %v8120 = vadd.f32 %v8107, %v8119
    %v8121 = vpop.f32.mrf.mxu0
    %8122 = vdwg.mxu0
    %8123 = vmatpush.bf16.msra.mxu0 %v7331
    %8124 = vmatpush.bf16.msra.mxu0 %v7319
    %8125 = vmatpush.bf16.msra.mxu0 %v7307
    %8126 = vmatpush.bf16.msra.mxu0 %v7295
    %8127 = vmatpush.bf16.msra.mxu0 %v7283
    %8128 = vmatpush.bf16.msra.mxu0 %v7271
    %8129 = vmatpush.bf16.msra.mxu0 %v7259
    %8130 = vmatpush.bf16.msra.mxu0 %v7247
    %8131 = vmatmul.bf16.gmra.mxu0 %v5387
    %v8132 = vpop.f32.mrf.mxu0
    %v8133 = vadd.f32 %v8120, %v8132
    %v8134 = vpop.f32.mrf.mxu0
    %8135 = vdwg.mxu0
    %8136 = vmatpush.bf16.msra.mxu0 %v7044
    %8137 = vmatpush.bf16.msra.mxu0 %v7032
    %8138 = vmatpush.bf16.msra.mxu0 %v7020
    %8139 = vmatpush.bf16.msra.mxu0 %v7008
    %8140 = vmatpush.bf16.msra.mxu0 %v6996
    %8141 = vmatpush.bf16.msra.mxu0 %v6984
    %8142 = vmatpush.bf16.msra.mxu0 %v6972
    %8143 = vmatpush.bf16.msra.mxu0 %v6960
    %8144 = vmatmul.bf16.gmra.mxu0 %v5384
    %v8145 = vpop.f32.mrf.mxu0
    %v8146 = vadd.f32 %v5784, %v8145
    %v8147 = vpop.f32.mrf.mxu0
    %8148 = vdwg.mxu0
    %8149 = vmatpush.bf16.msra.mxu0 %v7140
    %8150 = vmatpush.bf16.msra.mxu0 %v7128
    %8151 = vmatpush.bf16.msra.mxu0 %v7116
    %8152 = vmatpush.bf16.msra.mxu0 %v7104
    %8153 = vmatpush.bf16.msra.mxu0 %v7092
    %8154 = vmatpush.bf16.msra.mxu0 %v7080
    %8155 = vmatpush.bf16.msra.mxu0 %v7068
    %8156 = vmatpush.bf16.msra.mxu0 %v7056
    %8157 = vmatmul.bf16.gmra.mxu0 %v5385
    %v8158 = vpop.f32.mrf.mxu0
    %v8159 = vadd.f32 %v8146, %v8158
    %v8160 = vpop.f32.mrf.mxu0
    %8161 = vdwg.mxu0
    %8162 = vmatpush.bf16.msra.mxu0 %v7236
    %8163 = vmatpush.bf16.msra.mxu0 %v7224
    %8164 = vmatpush.bf16.msra.mxu0 %v7212
    %8165 = vmatpush.bf16.msra.mxu0 %v7200
    %8166 = vmatpush.bf16.msra.mxu0 %v7188
    %8167 = vmatpush.bf16.msra.mxu0 %v7176
    %8168 = vmatpush.bf16.msra.mxu0 %v7164
    %8169 = vmatpush.bf16.msra.mxu0 %v7152
    %8170 = vmatmul.bf16.gmra.mxu0 %v5386
    %v8171 = vpop.f32.mrf.mxu0
    %v8172 = vadd.f32 %v8159, %v8171
    %v8173 = vpop.f32.mrf.mxu0
    %8174 = vdwg.mxu0
    %8175 = vmatpush.bf16.msra.mxu0 %v7332
    %8176 = vmatpush.bf16.msra.mxu0 %v7320
    %8177 = vmatpush.bf16.msra.mxu0 %v7308
    %8178 = vmatpush.bf16.msra.mxu0 %v7296
    %8179 = vmatpush.bf16.msra.mxu0 %v7284
    %8180 = vmatpush.bf16.msra.mxu0 %v7272
    %8181 = vmatpush.bf16.msra.mxu0 %v7260
    %8182 = vmatpush.bf16.msra.mxu0 %v7248
    %8183 = vmatmul.bf16.gmra.mxu0 %v5387
    %v8184 = vpop.f32.mrf.mxu0
    %v8185 = vadd.f32 %v8172, %v8184
    %v8186 = vpop.f32.mrf.mxu0
    %8187 = vdwg.mxu0
    %8188 = vmatpush.bf16.msra.mxu0 %v7045
    %8189 = vmatpush.bf16.msra.mxu0 %v7033
    %8190 = vmatpush.bf16.msra.mxu0 %v7021
    %8191 = vmatpush.bf16.msra.mxu0 %v7009
    %8192 = vmatpush.bf16.msra.mxu0 %v6997
    %8193 = vmatpush.bf16.msra.mxu0 %v6985
    %8194 = vmatpush.bf16.msra.mxu0 %v6973
    %8195 = vmatpush.bf16.msra.mxu0 %v6961
    %8196 = vmatmul.bf16.gmra.mxu0 %v5384
    %v8197 = vpop.f32.mrf.mxu0
    %v8198 = vadd.f32 %v5785, %v8197
    %v8199 = vpop.f32.mrf.mxu0
    %8200 = vdwg.mxu0
    %8201 = vmatpush.bf16.msra.mxu0 %v7141
    %8202 = vmatpush.bf16.msra.mxu0 %v7129
    %8203 = vmatpush.bf16.msra.mxu0 %v7117
    %8204 = vmatpush.bf16.msra.mxu0 %v7105
    %8205 = vmatpush.bf16.msra.mxu0 %v7093
    %8206 = vmatpush.bf16.msra.mxu0 %v7081
    %8207 = vmatpush.bf16.msra.mxu0 %v7069
    %8208 = vmatpush.bf16.msra.mxu0 %v7057
    %8209 = vmatmul.bf16.gmra.mxu0 %v5385
    %v8210 = vpop.f32.mrf.mxu0
    %v8211 = vadd.f32 %v8198, %v8210
    %v8212 = vpop.f32.mrf.mxu0
    %8213 = vdwg.mxu0
    %8214 = vmatpush.bf16.msra.mxu0 %v7237
    %8215 = vmatpush.bf16.msra.mxu0 %v7225
    %8216 = vmatpush.bf16.msra.mxu0 %v7213
    %8217 = vmatpush.bf16.msra.mxu0 %v7201
    %8218 = vmatpush.bf16.msra.mxu0 %v7189
    %8219 = vmatpush.bf16.msra.mxu0 %v7177
    %8220 = vmatpush.bf16.msra.mxu0 %v7165
    %8221 = vmatpush.bf16.msra.mxu0 %v7153
    %8222 = vmatmul.bf16.gmra.mxu0 %v5386
    %v8223 = vpop.f32.mrf.mxu0
    %v8224 = vadd.f32 %v8211, %v8223
    %v8225 = vpop.f32.mrf.mxu0
    %8226 = vdwg.mxu0
    %8227 = vmatpush.bf16.msra.mxu0 %v7333
    %8228 = vmatpush.bf16.msra.mxu0 %v7321
    %8229 = vmatpush.bf16.msra.mxu0 %v7309
    %8230 = vmatpush.bf16.msra.mxu0 %v7297
    %8231 = vmatpush.bf16.msra.mxu0 %v7285
    %8232 = vmatpush.bf16.msra.mxu0 %v7273
    %8233 = vmatpush.bf16.msra.mxu0 %v7261
    %8234 = vmatpush.bf16.msra.mxu0 %v7249
    %8235 = vmatmul.bf16.gmra.mxu0 %v5387
    %v8236 = vpop.f32.mrf.mxu0
    %v8237 = vadd.f32 %v8224, %v8236
    %v8238 = vpop.f32.mrf.mxu0
    %8239 = vdwg.mxu0
    %8240 = vmatpush.bf16.msra.mxu0 %v7046
    %8241 = vmatpush.bf16.msra.mxu0 %v7034
    %8242 = vmatpush.bf16.msra.mxu0 %v7022
    %8243 = vmatpush.bf16.msra.mxu0 %v7010
    %8244 = vmatpush.bf16.msra.mxu0 %v6998
    %8245 = vmatpush.bf16.msra.mxu0 %v6986
    %8246 = vmatpush.bf16.msra.mxu0 %v6974
    %8247 = vmatpush.bf16.msra.mxu0 %v6962
    %8248 = vmatmul.bf16.gmra.mxu0 %v5384
    %v8249 = vpop.f32.mrf.mxu0
    %v8250 = vadd.f32 %v5786, %v8249
    %v8251 = vpop.f32.mrf.mxu0
    %8252 = vdwg.mxu0
    %8253 = vmatpush.bf16.msra.mxu0 %v7142
    %8254 = vmatpush.bf16.msra.mxu0 %v7130
    %8255 = vmatpush.bf16.msra.mxu0 %v7118
    %8256 = vmatpush.bf16.msra.mxu0 %v7106
    %8257 = vmatpush.bf16.msra.mxu0 %v7094
    %8258 = vmatpush.bf16.msra.mxu0 %v7082
    %8259 = vmatpush.bf16.msra.mxu0 %v7070
    %8260 = vmatpush.bf16.msra.mxu0 %v7058
    %8261 = vmatmul.bf16.gmra.mxu0 %v5385
    %v8262 = vpop.f32.mrf.mxu0
    %v8263 = vadd.f32 %v8250, %v8262
    %v8264 = vpop.f32.mrf.mxu0
    %8265 = vdwg.mxu0
    %8266 = vmatpush.bf16.msra.mxu0 %v7238
    %8267 = vmatpush.bf16.msra.mxu0 %v7226
    %8268 = vmatpush.bf16.msra.mxu0 %v7214
    %8269 = vmatpush.bf16.msra.mxu0 %v7202
    %8270 = vmatpush.bf16.msra.mxu0 %v7190
    %8271 = vmatpush.bf16.msra.mxu0 %v7178
    %8272 = vmatpush.bf16.msra.mxu0 %v7166
    %8273 = vmatpush.bf16.msra.mxu0 %v7154
    %8274 = vmatmul.bf16.gmra.mxu0 %v5386
    %v8275 = vpop.f32.mrf.mxu0
    %v8276 = vadd.f32 %v8263, %v8275
    %v8277 = vpop.f32.mrf.mxu0
    %8278 = vdwg.mxu0
    %8279 = vmatpush.bf16.msra.mxu0 %v7334
    %8280 = vmatpush.bf16.msra.mxu0 %v7322
    %8281 = vmatpush.bf16.msra.mxu0 %v7310
    %8282 = vmatpush.bf16.msra.mxu0 %v7298
    %8283 = vmatpush.bf16.msra.mxu0 %v7286
    %8284 = vmatpush.bf16.msra.mxu0 %v7274
    %8285 = vmatpush.bf16.msra.mxu0 %v7262
    %8286 = vmatpush.bf16.msra.mxu0 %v7250
    %8287 = vmatmul.bf16.gmra.mxu0 %v5387
    %v8288 = vpop.f32.mrf.mxu0
    %v8289 = vadd.f32 %v8276, %v8288
    %v8290 = vpop.f32.mrf.mxu0
    %8291 = vdwg.mxu0
    %8292 = vmatpush.bf16.msra.mxu0 %v7047
    %8293 = vmatpush.bf16.msra.mxu0 %v7035
    %8294 = vmatpush.bf16.msra.mxu0 %v7023
    %8295 = vmatpush.bf16.msra.mxu0 %v7011
    %8296 = vmatpush.bf16.msra.mxu0 %v6999
    %8297 = vmatpush.bf16.msra.mxu0 %v6987
    %8298 = vmatpush.bf16.msra.mxu0 %v6975
    %8299 = vmatpush.bf16.msra.mxu0 %v6963
    %8300 = vmatmul.bf16.gmra.mxu0 %v5384
    %v8301 = vpop.f32.mrf.mxu0
    %v8302 = vadd.f32 %v5787, %v8301
    %v8303 = vpop.f32.mrf.mxu0
    %8304 = vdwg.mxu0
    %8305 = vmatpush.bf16.msra.mxu0 %v7143
    %8306 = vmatpush.bf16.msra.mxu0 %v7131
    %8307 = vmatpush.bf16.msra.mxu0 %v7119
    %8308 = vmatpush.bf16.msra.mxu0 %v7107
    %8309 = vmatpush.bf16.msra.mxu0 %v7095
    %8310 = vmatpush.bf16.msra.mxu0 %v7083
    %8311 = vmatpush.bf16.msra.mxu0 %v7071
    %8312 = vmatpush.bf16.msra.mxu0 %v7059
    %8313 = vmatmul.bf16.gmra.mxu0 %v5385
    %v8314 = vpop.f32.mrf.mxu0
    %v8315 = vadd.f32 %v8302, %v8314
    %v8316 = vpop.f32.mrf.mxu0
    %8317 = vdwg.mxu0
    %8318 = vmatpush.bf16.msra.mxu0 %v7239
    %8319 = vmatpush.bf16.msra.mxu0 %v7227
    %8320 = vmatpush.bf16.msra.mxu0 %v7215
    %8321 = vmatpush.bf16.msra.mxu0 %v7203
    %8322 = vmatpush.bf16.msra.mxu0 %v7191
    %8323 = vmatpush.bf16.msra.mxu0 %v7179
    %8324 = vmatpush.bf16.msra.mxu0 %v7167
    %8325 = vmatpush.bf16.msra.mxu0 %v7155
    %8326 = vmatmul.bf16.gmra.mxu0 %v5386
    %v8327 = vpop.f32.mrf.mxu0
    %v8328 = vadd.f32 %v8315, %v8327
    %v8329 = vpop.f32.mrf.mxu0
    %8330 = vdwg.mxu0
    %8331 = vmatpush.bf16.msra.mxu0 %v7335
    %8332 = vmatpush.bf16.msra.mxu0 %v7323
    %8333 = vmatpush.bf16.msra.mxu0 %v7311
    %8334 = vmatpush.bf16.msra.mxu0 %v7299
    %8335 = vmatpush.bf16.msra.mxu0 %v7287
    %8336 = vmatpush.bf16.msra.mxu0 %v7275
    %8337 = vmatpush.bf16.msra.mxu0 %v7263
    %8338 = vmatpush.bf16.msra.mxu0 %v7251
    %8339 = vmatmul.bf16.gmra.mxu0 %v5387
    %v8340 = vpop.f32.mrf.mxu0
    %v8341 = vadd.f32 %v8328, %v8340
    %v8342 = vpop.f32.mrf.mxu0
    %8343 = vdwg.mxu0
    %v8344 = vsub.f32 0.0, %v7769
    %v8345 = vsub.f32 0.0, %v7821
    %v8346 = vsub.f32 0.0, %v7873
    %v8347 = vsub.f32 0.0, %v7925
    %v8348 = vsub.f32 0.0, %v7977
    %v8349 = vsub.f32 0.0, %v8029
    %v8350 = vsub.f32 0.0, %v8081
    %v8351 = vsub.f32 0.0, %v8133
    %v8352 = vsub.f32 0.0, %v8185
    %v8353 = vsub.f32 0.0, %v8237
    %v8354 = vsub.f32 0.0, %v8289
    %v8355 = vsub.f32 0.0, %v8341
    %v8356 = vmul.f32 %v8344, 1.442695
    %v8357 = vpow.pop %v8356
    %v8358 = vmul.f32 %v8345, 1.442695
    %v8359 = vpow.pop %v8358
    %v8360 = vmul.f32 %v8346, 1.442695
    %v8361 = vpow.pop %v8360
    %v8362 = vmul.f32 %v8347, 1.442695
    %v8363 = vpow.pop %v8362
    %v8364 = vmul.f32 %v8348, 1.442695
    %v8365 = vpow.pop %v8364
    %v8366 = vmul.f32 %v8349, 1.442695
    %v8367 = vpow.pop %v8366
    %v8368 = vmul.f32 %v8350, 1.442695
    %v8369 = vpow.pop %v8368
    %v8370 = vmul.f32 %v8351, 1.442695
    %v8371 = vpow.pop %v8370
    %v8372 = vmul.f32 %v8352, 1.442695
    %v8373 = vpow.pop %v8372
    %v8374 = vmul.f32 %v8353, 1.442695
    %v8375 = vpow.pop %v8374
    %v8376 = vmul.f32 %v8354, 1.442695
    %v8377 = vpow.pop %v8376
    %v8378 = vmul.f32 %v8355, 1.442695
    %v8379 = vpow.pop %v8378
    %v8380 = vadd.f32 %v8357, 1.0
    %v8381 = vadd.f32 %v8359, 1.0
    %v8382 = vadd.f32 %v8361, 1.0
    %v8383 = vadd.f32 %v8363, 1.0
    %v8384 = vadd.f32 %v8365, 1.0
    %v8385 = vadd.f32 %v8367, 1.0
    %v8386 = vadd.f32 %v8369, 1.0
    %v8387 = vadd.f32 %v8371, 1.0
    %v8388 = vadd.f32 %v8373, 1.0
    %v8389 = vadd.f32 %v8375, 1.0
    %v8390 = vadd.f32 %v8377, 1.0
    %v8391 = vadd.f32 %v8379, 1.0
    %v8392 = vrcp.pop %v8380
    %v8393 = vmul.f32 %v8380, %v8392
    %v8394 = vsub.f32 1.0, %v8393
    %v8395 = vmul.f32 %v8392, %v8394
    %v8396 = vadd.f32 %v8392, %v8395
    %vm8397 = vweird.f32 %v8380
    %vm8398 = vweird.f32 %v8392
    %vm8399 = vmor %vm8397, %vm8398
    %v8400 = vsel %vm8399, %v8392, %v8396
    %v8401 = vand.u32 2147483647, %v8380
    %vm8402 = vcmp.eq.f32.partialorder %v8401, 8.507059e+37
    %v8403 = vand.u32 %v8380, 2147483648
    %v8404 = vor.u32 1.1754944e-38, %v8403
    %v8405 = vsel %vm8402, %v8404, %v8400
    %v8406 = vmul.f32 1.0, %v8405
    %v8407 = vrcp.pop %v8381
    %v8408 = vmul.f32 %v8381, %v8407
    %v8409 = vsub.f32 1.0, %v8408
    %v8410 = vmul.f32 %v8407, %v8409
    %v8411 = vadd.f32 %v8407, %v8410
    %vm8412 = vweird.f32 %v8381
    %vm8413 = vweird.f32 %v8407
    %vm8414 = vmor %vm8412, %vm8413
    %v8415 = vsel %vm8414, %v8407, %v8411
    %v8416 = vand.u32 2147483647, %v8381
    %vm8417 = vcmp.eq.f32.partialorder %v8416, 8.507059e+37
    %v8418 = vand.u32 %v8381, 2147483648
    %v8419 = vor.u32 1.1754944e-38, %v8418
    %v8420 = vsel %vm8417, %v8419, %v8415
    %v8421 = vmul.f32 1.0, %v8420
    %v8422 = vrcp.pop %v8382
    %v8423 = vmul.f32 %v8382, %v8422
    %v8424 = vsub.f32 1.0, %v8423
    %v8425 = vmul.f32 %v8422, %v8424
    %v8426 = vadd.f32 %v8422, %v8425
    %vm8427 = vweird.f32 %v8382
    %vm8428 = vweird.f32 %v8422
    %vm8429 = vmor %vm8427, %vm8428
    %v8430 = vsel %vm8429, %v8422, %v8426
    %v8431 = vand.u32 2147483647, %v8382
    %vm8432 = vcmp.eq.f32.partialorder %v8431, 8.507059e+37
    %v8433 = vand.u32 %v8382, 2147483648
    %v8434 = vor.u32 1.1754944e-38, %v8433
    %v8435 = vsel %vm8432, %v8434, %v8430
    %v8436 = vmul.f32 1.0, %v8435
    %v8437 = vrcp.pop %v8383
    %v8438 = vmul.f32 %v8383, %v8437
    %v8439 = vsub.f32 1.0, %v8438
    %v8440 = vmul.f32 %v8437, %v8439
    %v8441 = vadd.f32 %v8437, %v8440
    %vm8442 = vweird.f32 %v8383
    %vm8443 = vweird.f32 %v8437
    %vm8444 = vmor %vm8442, %vm8443
    %v8445 = vsel %vm8444, %v8437, %v8441
    %v8446 = vand.u32 2147483647, %v8383
    %vm8447 = vcmp.eq.f32.partialorder %v8446, 8.507059e+37
    %v8448 = vand.u32 %v8383, 2147483648
    %v8449 = vor.u32 1.1754944e-38, %v8448
    %v8450 = vsel %vm8447, %v8449, %v8445
    %v8451 = vmul.f32 1.0, %v8450
    %v8452 = vrcp.pop %v8384
    %v8453 = vmul.f32 %v8384, %v8452
    %v8454 = vsub.f32 1.0, %v8453
    %v8455 = vmul.f32 %v8452, %v8454
    %v8456 = vadd.f32 %v8452, %v8455
    %vm8457 = vweird.f32 %v8384
    %vm8458 = vweird.f32 %v8452
    %vm8459 = vmor %vm8457, %vm8458
    %v8460 = vsel %vm8459, %v8452, %v8456
    %v8461 = vand.u32 2147483647, %v8384
    %vm8462 = vcmp.eq.f32.partialorder %v8461, 8.507059e+37
    %v8463 = vand.u32 %v8384, 2147483648
    %v8464 = vor.u32 1.1754944e-38, %v8463
    %v8465 = vsel %vm8462, %v8464, %v8460
    %v8466 = vmul.f32 1.0, %v8465
    %v8467 = vrcp.pop %v8385
    %v8468 = vmul.f32 %v8385, %v8467
    %v8469 = vsub.f32 1.0, %v8468
    %v8470 = vmul.f32 %v8467, %v8469
    %v8471 = vadd.f32 %v8467, %v8470
    %vm8472 = vweird.f32 %v8385
    %vm8473 = vweird.f32 %v8467
    %vm8474 = vmor %vm8472, %vm8473
    %v8475 = vsel %vm8474, %v8467, %v8471
    %v8476 = vand.u32 2147483647, %v8385
    %vm8477 = vcmp.eq.f32.partialorder %v8476, 8.507059e+37
    %v8478 = vand.u32 %v8385, 2147483648
    %v8479 = vor.u32 1.1754944e-38, %v8478
    %v8480 = vsel %vm8477, %v8479, %v8475
    %v8481 = vmul.f32 1.0, %v8480
    %v8482 = vrcp.pop %v8386
    %v8483 = vmul.f32 %v8386, %v8482
    %v8484 = vsub.f32 1.0, %v8483
    %v8485 = vmul.f32 %v8482, %v8484
    %v8486 = vadd.f32 %v8482, %v8485
    %vm8487 = vweird.f32 %v8386
    %vm8488 = vweird.f32 %v8482
    %vm8489 = vmor %vm8487, %vm8488
    %v8490 = vsel %vm8489, %v8482, %v8486
    %v8491 = vand.u32 2147483647, %v8386
    %vm8492 = vcmp.eq.f32.partialorder %v8491, 8.507059e+37
    %v8493 = vand.u32 %v8386, 2147483648
    %v8494 = vor.u32 1.1754944e-38, %v8493
    %v8495 = vsel %vm8492, %v8494, %v8490
    %v8496 = vmul.f32 1.0, %v8495
    %v8497 = vrcp.pop %v8387
    %v8498 = vmul.f32 %v8387, %v8497
    %v8499 = vsub.f32 1.0, %v8498
    %v8500 = vmul.f32 %v8497, %v8499
    %v8501 = vadd.f32 %v8497, %v8500
    %vm8502 = vweird.f32 %v8387
    %vm8503 = vweird.f32 %v8497
    %vm8504 = vmor %vm8502, %vm8503
    %v8505 = vsel %vm8504, %v8497, %v8501
    %v8506 = vand.u32 2147483647, %v8387
    %vm8507 = vcmp.eq.f32.partialorder %v8506, 8.507059e+37
    %v8508 = vand.u32 %v8387, 2147483648
    %v8509 = vor.u32 1.1754944e-38, %v8508
    %v8510 = vsel %vm8507, %v8509, %v8505
    %v8511 = vmul.f32 1.0, %v8510
    %v8512 = vrcp.pop %v8388
    %v8513 = vmul.f32 %v8388, %v8512
    %v8514 = vsub.f32 1.0, %v8513
    %v8515 = vmul.f32 %v8512, %v8514
    %v8516 = vadd.f32 %v8512, %v8515
    %vm8517 = vweird.f32 %v8388
    %vm8518 = vweird.f32 %v8512
    %vm8519 = vmor %vm8517, %vm8518
    %v8520 = vsel %vm8519, %v8512, %v8516
    %v8521 = vand.u32 2147483647, %v8388
    %vm8522 = vcmp.eq.f32.partialorder %v8521, 8.507059e+37
    %v8523 = vand.u32 %v8388, 2147483648
    %v8524 = vor.u32 1.1754944e-38, %v8523
    %v8525 = vsel %vm8522, %v8524, %v8520
    %v8526 = vmul.f32 1.0, %v8525
    %v8527 = vrcp.pop %v8389
    %v8528 = vmul.f32 %v8389, %v8527
    %v8529 = vsub.f32 1.0, %v8528
    %v8530 = vmul.f32 %v8527, %v8529
    %v8531 = vadd.f32 %v8527, %v8530
    %vm8532 = vweird.f32 %v8389
    %vm8533 = vweird.f32 %v8527
    %vm8534 = vmor %vm8532, %vm8533
    %v8535 = vsel %vm8534, %v8527, %v8531
    %v8536 = vand.u32 2147483647, %v8389
    %vm8537 = vcmp.eq.f32.partialorder %v8536, 8.507059e+37
    %v8538 = vand.u32 %v8389, 2147483648
    %v8539 = vor.u32 1.1754944e-38, %v8538
    %v8540 = vsel %vm8537, %v8539, %v8535
    %v8541 = vmul.f32 1.0, %v8540
    %v8542 = vrcp.pop %v8390
    %v8543 = vmul.f32 %v8390, %v8542
    %v8544 = vsub.f32 1.0, %v8543
    %v8545 = vmul.f32 %v8542, %v8544
    %v8546 = vadd.f32 %v8542, %v8545
    %vm8547 = vweird.f32 %v8390
    %vm8548 = vweird.f32 %v8542
    %vm8549 = vmor %vm8547, %vm8548
    %v8550 = vsel %vm8549, %v8542, %v8546
    %v8551 = vand.u32 2147483647, %v8390
    %vm8552 = vcmp.eq.f32.partialorder %v8551, 8.507059e+37
    %v8553 = vand.u32 %v8390, 2147483648
    %v8554 = vor.u32 1.1754944e-38, %v8553
    %v8555 = vsel %vm8552, %v8554, %v8550
    %v8556 = vmul.f32 1.0, %v8555
    %v8557 = vrcp.pop %v8391
    %v8558 = vmul.f32 %v8391, %v8557
    %v8559 = vsub.f32 1.0, %v8558
    %v8560 = vmul.f32 %v8557, %v8559
    %v8561 = vadd.f32 %v8557, %v8560
    %vm8562 = vweird.f32 %v8391
    %vm8563 = vweird.f32 %v8557
    %vm8564 = vmor %vm8562, %vm8563
    %v8565 = vsel %vm8564, %v8557, %v8561
    %v8566 = vand.u32 2147483647, %v8391
    %vm8567 = vcmp.eq.f32.partialorder %v8566, 8.507059e+37
    %v8568 = vand.u32 %v8391, 2147483648
    %v8569 = vor.u32 1.1754944e-38, %v8568
    %v8570 = vsel %vm8567, %v8569, %v8565
    %v8571 = vmul.f32 1.0, %v8570
    %v8572 = vmul.f32 %v7769, %v8406
    %v8573 = vmul.f32 %v7821, %v8421
    %v8574 = vmul.f32 %v7873, %v8436
    %v8575 = vmul.f32 %v7925, %v8451
    %v8576 = vmul.f32 %v7977, %v8466
    %v8577 = vmul.f32 %v8029, %v8481
    %v8578 = vmul.f32 %v8081, %v8496
    %v8579 = vmul.f32 %v8133, %v8511
    %v8580 = vmul.f32 %v8185, %v8526
    %v8581 = vmul.f32 %v8237, %v8541
    %v8582 = vmul.f32 %v8289, %v8556
    %v8583 = vmul.f32 %v8341, %v8571
    %v8584 = vpack.c.bf16 %v8572, %v8572
    %v8585 = vpack.c.bf16 %v8573, %v8573
    %v8586 = vpack.c.bf16 %v8574, %v8574
    %v8587 = vpack.c.bf16 %v8575, %v8575
    %v8588 = vpack.c.bf16 %v8576, %v8576
    %v8589 = vpack.c.bf16 %v8577, %v8577
    %v8590 = vpack.c.bf16 %v8578, %v8578
    %v8591 = vpack.c.bf16 %v8579, %v8579
    %v8592 = vpack.c.bf16 %v8580, %v8580
    %v8593 = vpack.c.bf16 %v8581, %v8581
    %v8594 = vpack.c.bf16 %v8582, %v8582
    %v8595 = vpack.c.bf16 %v8583, %v8583
    %v8596 = vld [vmem:[#allocation13] sm:$0xff]
    %v8597 = vld [vmem:[#allocation13 + $0x8] sm:$0xff]
    %v8598 = vld [vmem:[#allocation13 + $0x10] sm:$0xff]
    %v8599 = vld [vmem:[#allocation13 + $0x18] sm:$0xff]
    %v8600 = vld [vmem:[#allocation13 + $0x20] sm:$0xff]
    %v8601 = vld [vmem:[#allocation13 + $0x28] sm:$0xff]
    %v8602 = vld [vmem:[#allocation13 + $0x30] sm:$0xff]
    %v8603 = vld [vmem:[#allocation13 + $0x38] sm:$0xff]
    %v8604 = vld [vmem:[#allocation13 + $0x40] sm:$0xff]
    %v8605 = vld [vmem:[#allocation13 + $0x48] sm:$0xff]
    %v8606 = vld [vmem:[#allocation13 + $0x50] sm:$0xff]
    %v8607 = vld [vmem:[#allocation13 + $0x58] sm:$0xff]
    %v8608 = vld [vmem:[#allocation13 + $0x60] sm:$0xff]
    %v8609 = vld [vmem:[#allocation13 + $0x68] sm:$0xff]
    %v8610 = vld [vmem:[#allocation13 + $0x70] sm:$0xff]
    %v8611 = vld [vmem:[#allocation13 + $0x78] sm:$0xff]
    %v8612 = vld [vmem:[#allocation13 + $0x80] sm:$0xff]
    %v8613 = vld [vmem:[#allocation13 + $0x88] sm:$0xff]
    %v8614 = vld [vmem:[#allocation13 + $0x90] sm:$0xff]
    %v8615 = vld [vmem:[#allocation13 + $0x98] sm:$0xff]
    %v8616 = vld [vmem:[#allocation13 + $0xa0] sm:$0xff]
    %v8617 = vld [vmem:[#allocation13 + $0xa8] sm:$0xff]
    %v8618 = vld [vmem:[#allocation13 + $0xb0] sm:$0xff]
    %v8619 = vld [vmem:[#allocation13 + $0xb8] sm:$0xff]
    %v8620 = vld [vmem:[#allocation13 + $0xc0] sm:$0xff]
    %v8621 = vld [vmem:[#allocation13 + $0xc8] sm:$0xff]
    %v8622 = vld [vmem:[#allocation13 + $0xd0] sm:$0xff]
    %v8623 = vld [vmem:[#allocation13 + $0xd8] sm:$0xff]
    %v8624 = vld [vmem:[#allocation13 + $0xe0] sm:$0xff]
    %v8625 = vld [vmem:[#allocation13 + $0xe8] sm:$0xff]
    %v8626 = vld [vmem:[#allocation13 + $0xf0] sm:$0xff]
    %v8627 = vld [vmem:[#allocation13 + $0xf8] sm:$0xff]
    %v8628 = vld [vmem:[#allocation13 + $0x100] sm:$0xff]
    %v8629 = vld [vmem:[#allocation13 + $0x108] sm:$0xff]
    %v8630 = vld [vmem:[#allocation13 + $0x110] sm:$0xff]
    %v8631 = vld [vmem:[#allocation13 + $0x118] sm:$0xff]
    %v8632 = vld [vmem:[#allocation13 + $0x120] sm:$0xff]
    %v8633 = vld [vmem:[#allocation13 + $0x128] sm:$0xff]
    %v8634 = vld [vmem:[#allocation13 + $0x130] sm:$0xff]
    %v8635 = vld [vmem:[#allocation13 + $0x138] sm:$0xff]
    %v8636 = vld [vmem:[#allocation13 + $0x140] sm:$0xff]
    %v8637 = vld [vmem:[#allocation13 + $0x148] sm:$0xff]
    %v8638 = vld [vmem:[#allocation13 + $0x150] sm:$0xff]
    %v8639 = vld [vmem:[#allocation13 + $0x158] sm:$0xff]
    %v8640 = vld [vmem:[#allocation13 + $0x160] sm:$0xff]
    %v8641 = vld [vmem:[#allocation13 + $0x168] sm:$0xff]
    %v8642 = vld [vmem:[#allocation13 + $0x170] sm:$0xff]
    %v8643 = vld [vmem:[#allocation13 + $0x178] sm:$0xff]
    %v8644 = vld [vmem:[#allocation13 + $0x180] sm:$0xff]
    %v8645 = vld [vmem:[#allocation13 + $0x188] sm:$0xff]
    %v8646 = vld [vmem:[#allocation13 + $0x190] sm:$0xff]
    %v8647 = vld [vmem:[#allocation13 + $0x198] sm:$0xff]
    %v8648 = vld [vmem:[#allocation13 + $0x1a0] sm:$0xff]
    %v8649 = vld [vmem:[#allocation13 + $0x1a8] sm:$0xff]
    %v8650 = vld [vmem:[#allocation13 + $0x1b0] sm:$0xff]
    %v8651 = vld [vmem:[#allocation13 + $0x1b8] sm:$0xff]
    %v8652 = vld [vmem:[#allocation13 + $0x1c0] sm:$0xff]
    %v8653 = vld [vmem:[#allocation13 + $0x1c8] sm:$0xff]
    %v8654 = vld [vmem:[#allocation13 + $0x1d0] sm:$0xff]
    %v8655 = vld [vmem:[#allocation13 + $0x1d8] sm:$0xff]
    %v8656 = vld [vmem:[#allocation13 + $0x1e0] sm:$0xff]
    %v8657 = vld [vmem:[#allocation13 + $0x1e8] sm:$0xff]
    %v8658 = vld [vmem:[#allocation13 + $0x1f0] sm:$0xff]
    %v8659 = vld [vmem:[#allocation13 + $0x1f8] sm:$0xff]
    %v8660 = vld [vmem:[#allocation13 + $0x200] sm:$0xff]
    %v8661 = vld [vmem:[#allocation13 + $0x208] sm:$0xff]
    %v8662 = vld [vmem:[#allocation13 + $0x210] sm:$0xff]
    %v8663 = vld [vmem:[#allocation13 + $0x218] sm:$0xff]
    %v8664 = vld [vmem:[#allocation13 + $0x220] sm:$0xff]
    %v8665 = vld [vmem:[#allocation13 + $0x228] sm:$0xff]
    %v8666 = vld [vmem:[#allocation13 + $0x230] sm:$0xff]
    %v8667 = vld [vmem:[#allocation13 + $0x238] sm:$0xff]
    %v8668 = vld [vmem:[#allocation13 + $0x240] sm:$0xff]
    %v8669 = vld [vmem:[#allocation13 + $0x248] sm:$0xff]
    %v8670 = vld [vmem:[#allocation13 + $0x250] sm:$0xff]
    %v8671 = vld [vmem:[#allocation13 + $0x258] sm:$0xff]
    %v8672 = vld [vmem:[#allocation13 + $0x260] sm:$0xff]
    %v8673 = vld [vmem:[#allocation13 + $0x268] sm:$0xff]
    %v8674 = vld [vmem:[#allocation13 + $0x270] sm:$0xff]
    %v8675 = vld [vmem:[#allocation13 + $0x278] sm:$0xff]
    %v8676 = vld [vmem:[#allocation13 + $0x280] sm:$0xff]
    %v8677 = vld [vmem:[#allocation13 + $0x288] sm:$0xff]
    %v8678 = vld [vmem:[#allocation13 + $0x290] sm:$0xff]
    %v8679 = vld [vmem:[#allocation13 + $0x298] sm:$0xff]
    %v8680 = vld [vmem:[#allocation13 + $0x2a0] sm:$0xff]
    %v8681 = vld [vmem:[#allocation13 + $0x2a8] sm:$0xff]
    %v8682 = vld [vmem:[#allocation13 + $0x2b0] sm:$0xff]
    %v8683 = vld [vmem:[#allocation13 + $0x2b8] sm:$0xff]
    %v8684 = vld [vmem:[#allocation13 + $0x2c0] sm:$0xff]
    %v8685 = vld [vmem:[#allocation13 + $0x2c8] sm:$0xff]
    %v8686 = vld [vmem:[#allocation13 + $0x2d0] sm:$0xff]
    %v8687 = vld [vmem:[#allocation13 + $0x2d8] sm:$0xff]
    %v8688 = vld [vmem:[#allocation13 + $0x2e0] sm:$0xff]
    %v8689 = vld [vmem:[#allocation13 + $0x2e8] sm:$0xff]
    %v8690 = vld [vmem:[#allocation13 + $0x2f0] sm:$0xff]
    %v8691 = vld [vmem:[#allocation13 + $0x2f8] sm:$0xff]
    %v8692 = vld [vmem:[#allocation13 + $0x300] sm:$0xff]
    %v8693 = vld [vmem:[#allocation13 + $0x308] sm:$0xff]
    %v8694 = vld [vmem:[#allocation13 + $0x310] sm:$0xff]
    %v8695 = vld [vmem:[#allocation13 + $0x318] sm:$0xff]
    %v8696 = vld [vmem:[#allocation13 + $0x320] sm:$0xff]
    %v8697 = vld [vmem:[#allocation13 + $0x328] sm:$0xff]
    %v8698 = vld [vmem:[#allocation13 + $0x330] sm:$0xff]
    %v8699 = vld [vmem:[#allocation13 + $0x338] sm:$0xff]
    %v8700 = vld [vmem:[#allocation13 + $0x340] sm:$0xff]
    %v8701 = vld [vmem:[#allocation13 + $0x348] sm:$0xff]
    %v8702 = vld [vmem:[#allocation13 + $0x350] sm:$0xff]
    %v8703 = vld [vmem:[#allocation13 + $0x358] sm:$0xff]
    %v8704 = vld [vmem:[#allocation13 + $0x360] sm:$0xff]
    %v8705 = vld [vmem:[#allocation13 + $0x368] sm:$0xff]
    %v8706 = vld [vmem:[#allocation13 + $0x370] sm:$0xff]
    %v8707 = vld [vmem:[#allocation13 + $0x378] sm:$0xff]
    %v8708 = vld [vmem:[#allocation13 + $0x380] sm:$0xff]
    %v8709 = vld [vmem:[#allocation13 + $0x388] sm:$0xff]
    %v8710 = vld [vmem:[#allocation13 + $0x390] sm:$0xff]
    %v8711 = vld [vmem:[#allocation13 + $0x398] sm:$0xff]
    %v8712 = vld [vmem:[#allocation13 + $0x3a0] sm:$0xff]
    %v8713 = vld [vmem:[#allocation13 + $0x3a8] sm:$0xff]
    %v8714 = vld [vmem:[#allocation13 + $0x3b0] sm:$0xff]
    %v8715 = vld [vmem:[#allocation13 + $0x3b8] sm:$0xff]
    %v8716 = vld [vmem:[#allocation13 + $0x3c0] sm:$0xff]
    %v8717 = vld [vmem:[#allocation13 + $0x3c8] sm:$0xff]
    %v8718 = vld [vmem:[#allocation13 + $0x3d0] sm:$0xff]
    %v8719 = vld [vmem:[#allocation13 + $0x3d8] sm:$0xff]
    %v8720 = vld [vmem:[#allocation13 + $0x3e0] sm:$0xff]
    %v8721 = vld [vmem:[#allocation13 + $0x3e8] sm:$0xff]
    %v8722 = vld [vmem:[#allocation13 + $0x3f0] sm:$0xff]
    %v8723 = vld [vmem:[#allocation13 + $0x3f8] sm:$0xff]
    %v8724 = vld [vmem:[#allocation13 + $0x400] sm:$0xff]
    %v8725 = vld [vmem:[#allocation13 + $0x408] sm:$0xff]
    %v8726 = vld [vmem:[#allocation13 + $0x410] sm:$0xff]
    %v8727 = vld [vmem:[#allocation13 + $0x418] sm:$0xff]
    %v8728 = vld [vmem:[#allocation13 + $0x420] sm:$0xff]
    %v8729 = vld [vmem:[#allocation13 + $0x428] sm:$0xff]
    %v8730 = vld [vmem:[#allocation13 + $0x430] sm:$0xff]
    %v8731 = vld [vmem:[#allocation13 + $0x438] sm:$0xff]
    %v8732 = vld [vmem:[#allocation13 + $0x440] sm:$0xff]
    %v8733 = vld [vmem:[#allocation13 + $0x448] sm:$0xff]
    %v8734 = vld [vmem:[#allocation13 + $0x450] sm:$0xff]
    %v8735 = vld [vmem:[#allocation13 + $0x458] sm:$0xff]
    %v8736 = vld [vmem:[#allocation13 + $0x460] sm:$0xff]
    %v8737 = vld [vmem:[#allocation13 + $0x468] sm:$0xff]
    %v8738 = vld [vmem:[#allocation13 + $0x470] sm:$0xff]
    %v8739 = vld [vmem:[#allocation13 + $0x478] sm:$0xff]
    %v8740 = vld [vmem:[#allocation13 + $0x480] sm:$0xff]
    %v8741 = vld [vmem:[#allocation13 + $0x488] sm:$0xff]
    %v8742 = vld [vmem:[#allocation13 + $0x490] sm:$0xff]
    %v8743 = vld [vmem:[#allocation13 + $0x498] sm:$0xff]
    %v8744 = vld [vmem:[#allocation13 + $0x4a0] sm:$0xff]
    %v8745 = vld [vmem:[#allocation13 + $0x4a8] sm:$0xff]
    %v8746 = vld [vmem:[#allocation13 + $0x4b0] sm:$0xff]
    %v8747 = vld [vmem:[#allocation13 + $0x4b8] sm:$0xff]
    %v8748 = vld [vmem:[#allocation13 + $0x4c0] sm:$0xff]
    %v8749 = vld [vmem:[#allocation13 + $0x4c8] sm:$0xff]
    %v8750 = vld [vmem:[#allocation13 + $0x4d0] sm:$0xff]
    %v8751 = vld [vmem:[#allocation13 + $0x4d8] sm:$0xff]
    %v8752 = vld [vmem:[#allocation13 + $0x4e0] sm:$0xff]
    %v8753 = vld [vmem:[#allocation13 + $0x4e8] sm:$0xff]
    %v8754 = vld [vmem:[#allocation13 + $0x4f0] sm:$0xff]
    %v8755 = vld [vmem:[#allocation13 + $0x4f8] sm:$0xff]
    %v8756 = vld [vmem:[#allocation13 + $0x500] sm:$0xff]
    %v8757 = vld [vmem:[#allocation13 + $0x508] sm:$0xff]
    %v8758 = vld [vmem:[#allocation13 + $0x510] sm:$0xff]
    %v8759 = vld [vmem:[#allocation13 + $0x518] sm:$0xff]
    %v8760 = vld [vmem:[#allocation13 + $0x520] sm:$0xff]
    %v8761 = vld [vmem:[#allocation13 + $0x528] sm:$0xff]
    %v8762 = vld [vmem:[#allocation13 + $0x530] sm:$0xff]
    %v8763 = vld [vmem:[#allocation13 + $0x538] sm:$0xff]
    %v8764 = vld [vmem:[#allocation13 + $0x540] sm:$0xff]
    %v8765 = vld [vmem:[#allocation13 + $0x548] sm:$0xff]
    %v8766 = vld [vmem:[#allocation13 + $0x550] sm:$0xff]
    %v8767 = vld [vmem:[#allocation13 + $0x558] sm:$0xff]
    %v8768 = vld [vmem:[#allocation13 + $0x560] sm:$0xff]
    %v8769 = vld [vmem:[#allocation13 + $0x568] sm:$0xff]
    %v8770 = vld [vmem:[#allocation13 + $0x570] sm:$0xff]
    %v8771 = vld [vmem:[#allocation13 + $0x578] sm:$0xff]
    %v8772 = vld [vmem:[#allocation13 + $0x580] sm:$0xff]
    %v8773 = vld [vmem:[#allocation13 + $0x588] sm:$0xff]
    %v8774 = vld [vmem:[#allocation13 + $0x590] sm:$0xff]
    %v8775 = vld [vmem:[#allocation13 + $0x598] sm:$0xff]
    %v8776 = vld [vmem:[#allocation13 + $0x5a0] sm:$0xff]
    %v8777 = vld [vmem:[#allocation13 + $0x5a8] sm:$0xff]
    %v8778 = vld [vmem:[#allocation13 + $0x5b0] sm:$0xff]
    %v8779 = vld [vmem:[#allocation13 + $0x5b8] sm:$0xff]
    %v8780 = vld [vmem:[#allocation13 + $0x5c0] sm:$0xff]
    %v8781 = vld [vmem:[#allocation13 + $0x5c8] sm:$0xff]
    %v8782 = vld [vmem:[#allocation13 + $0x5d0] sm:$0xff]
    %v8783 = vld [vmem:[#allocation13 + $0x5d8] sm:$0xff]
    %v8784 = vld [vmem:[#allocation13 + $0x5e0] sm:$0xff]
    %v8785 = vld [vmem:[#allocation13 + $0x5e8] sm:$0xff]
    %v8786 = vld [vmem:[#allocation13 + $0x5f0] sm:$0xff]
    %v8787 = vld [vmem:[#allocation13 + $0x5f8] sm:$0xff]
    %v8788 = vld [vmem:[#allocation13 + $0x600] sm:$0xff]
    %v8789 = vld [vmem:[#allocation13 + $0x608] sm:$0xff]
    %v8790 = vld [vmem:[#allocation13 + $0x610] sm:$0xff]
    %v8791 = vld [vmem:[#allocation13 + $0x618] sm:$0xff]
    %v8792 = vld [vmem:[#allocation13 + $0x620] sm:$0xff]
    %v8793 = vld [vmem:[#allocation13 + $0x628] sm:$0xff]
    %v8794 = vld [vmem:[#allocation13 + $0x630] sm:$0xff]
    %v8795 = vld [vmem:[#allocation13 + $0x638] sm:$0xff]
    %v8796 = vld [vmem:[#allocation13 + $0x640] sm:$0xff]
    %v8797 = vld [vmem:[#allocation13 + $0x648] sm:$0xff]
    %v8798 = vld [vmem:[#allocation13 + $0x650] sm:$0xff]
    %v8799 = vld [vmem:[#allocation13 + $0x658] sm:$0xff]
    %v8800 = vld [vmem:[#allocation13 + $0x660] sm:$0xff]
    %v8801 = vld [vmem:[#allocation13 + $0x668] sm:$0xff]
    %v8802 = vld [vmem:[#allocation13 + $0x670] sm:$0xff]
    %v8803 = vld [vmem:[#allocation13 + $0x678] sm:$0xff]
    %v8804 = vld [vmem:[#allocation13 + $0x680] sm:$0xff]
    %v8805 = vld [vmem:[#allocation13 + $0x688] sm:$0xff]
    %v8806 = vld [vmem:[#allocation13 + $0x690] sm:$0xff]
    %v8807 = vld [vmem:[#allocation13 + $0x698] sm:$0xff]
    %v8808 = vld [vmem:[#allocation13 + $0x6a0] sm:$0xff]
    %v8809 = vld [vmem:[#allocation13 + $0x6a8] sm:$0xff]
    %v8810 = vld [vmem:[#allocation13 + $0x6b0] sm:$0xff]
    %v8811 = vld [vmem:[#allocation13 + $0x6b8] sm:$0xff]
    %v8812 = vld [vmem:[#allocation13 + $0x6c0] sm:$0xff]
    %v8813 = vld [vmem:[#allocation13 + $0x6c8] sm:$0xff]
    %v8814 = vld [vmem:[#allocation13 + $0x6d0] sm:$0xff]
    %v8815 = vld [vmem:[#allocation13 + $0x6d8] sm:$0xff]
    %v8816 = vld [vmem:[#allocation13 + $0x6e0] sm:$0xff]
    %v8817 = vld [vmem:[#allocation13 + $0x6e8] sm:$0xff]
    %v8818 = vld [vmem:[#allocation13 + $0x6f0] sm:$0xff]
    %v8819 = vld [vmem:[#allocation13 + $0x6f8] sm:$0xff]
    %v8820 = vld [vmem:[#allocation13 + $0x700] sm:$0xff]
    %v8821 = vld [vmem:[#allocation13 + $0x708] sm:$0xff]
    %v8822 = vld [vmem:[#allocation13 + $0x710] sm:$0xff]
    %v8823 = vld [vmem:[#allocation13 + $0x718] sm:$0xff]
    %v8824 = vld [vmem:[#allocation13 + $0x720] sm:$0xff]
    %v8825 = vld [vmem:[#allocation13 + $0x728] sm:$0xff]
    %v8826 = vld [vmem:[#allocation13 + $0x730] sm:$0xff]
    %v8827 = vld [vmem:[#allocation13 + $0x738] sm:$0xff]
    %v8828 = vld [vmem:[#allocation13 + $0x740] sm:$0xff]
    %v8829 = vld [vmem:[#allocation13 + $0x748] sm:$0xff]
    %v8830 = vld [vmem:[#allocation13 + $0x750] sm:$0xff]
    %v8831 = vld [vmem:[#allocation13 + $0x758] sm:$0xff]
    %v8832 = vld [vmem:[#allocation13 + $0x760] sm:$0xff]
    %v8833 = vld [vmem:[#allocation13 + $0x768] sm:$0xff]
    %v8834 = vld [vmem:[#allocation13 + $0x770] sm:$0xff]
    %v8835 = vld [vmem:[#allocation13 + $0x778] sm:$0xff]
    %v8836 = vld [vmem:[#allocation13 + $0x780] sm:$0xff]
    %v8837 = vld [vmem:[#allocation13 + $0x788] sm:$0xff]
    %v8838 = vld [vmem:[#allocation13 + $0x790] sm:$0xff]
    %v8839 = vld [vmem:[#allocation13 + $0x798] sm:$0xff]
    %v8840 = vld [vmem:[#allocation13 + $0x7a0] sm:$0xff]
    %v8841 = vld [vmem:[#allocation13 + $0x7a8] sm:$0xff]
    %v8842 = vld [vmem:[#allocation13 + $0x7b0] sm:$0xff]
    %v8843 = vld [vmem:[#allocation13 + $0x7b8] sm:$0xff]
    %v8844 = vld [vmem:[#allocation13 + $0x7c0] sm:$0xff]
    %v8845 = vld [vmem:[#allocation13 + $0x7c8] sm:$0xff]
    %v8846 = vld [vmem:[#allocation13 + $0x7d0] sm:$0xff]
    %v8847 = vld [vmem:[#allocation13 + $0x7d8] sm:$0xff]
    %v8848 = vld [vmem:[#allocation13 + $0x7e0] sm:$0xff]
    %v8849 = vld [vmem:[#allocation13 + $0x7e8] sm:$0xff]
    %v8850 = vld [vmem:[#allocation13 + $0x7f0] sm:$0xff]
    %v8851 = vld [vmem:[#allocation13 + $0x7f8] sm:$0xff]
    %v8852 = vld [vmem:[#allocation13 + $0x800] sm:$0xff]
    %v8853 = vld [vmem:[#allocation13 + $0x808] sm:$0xff]
    %v8854 = vld [vmem:[#allocation13 + $0x810] sm:$0xff]
    %v8855 = vld [vmem:[#allocation13 + $0x818] sm:$0xff]
    %v8856 = vld [vmem:[#allocation13 + $0x820] sm:$0xff]
    %v8857 = vld [vmem:[#allocation13 + $0x828] sm:$0xff]
    %v8858 = vld [vmem:[#allocation13 + $0x830] sm:$0xff]
    %v8859 = vld [vmem:[#allocation13 + $0x838] sm:$0xff]
    %v8860 = vld [vmem:[#allocation13 + $0x840] sm:$0xff]
    %v8861 = vld [vmem:[#allocation13 + $0x848] sm:$0xff]
    %v8862 = vld [vmem:[#allocation13 + $0x850] sm:$0xff]
    %v8863 = vld [vmem:[#allocation13 + $0x858] sm:$0xff]
    %v8864 = vld [vmem:[#allocation13 + $0x860] sm:$0xff]
    %v8865 = vld [vmem:[#allocation13 + $0x868] sm:$0xff]
    %v8866 = vld [vmem:[#allocation13 + $0x870] sm:$0xff]
    %v8867 = vld [vmem:[#allocation13 + $0x878] sm:$0xff]
    %v8868 = vld [vmem:[#allocation13 + $0x880] sm:$0xff]
    %v8869 = vld [vmem:[#allocation13 + $0x888] sm:$0xff]
    %v8870 = vld [vmem:[#allocation13 + $0x890] sm:$0xff]
    %v8871 = vld [vmem:[#allocation13 + $0x898] sm:$0xff]
    %v8872 = vld [vmem:[#allocation13 + $0x8a0] sm:$0xff]
    %v8873 = vld [vmem:[#allocation13 + $0x8a8] sm:$0xff]
    %v8874 = vld [vmem:[#allocation13 + $0x8b0] sm:$0xff]
    %v8875 = vld [vmem:[#allocation13 + $0x8b8] sm:$0xff]
    %v8876 = vld [vmem:[#allocation13 + $0x8c0] sm:$0xff]
    %v8877 = vld [vmem:[#allocation13 + $0x8c8] sm:$0xff]
    %v8878 = vld [vmem:[#allocation13 + $0x8d0] sm:$0xff]
    %v8879 = vld [vmem:[#allocation13 + $0x8d8] sm:$0xff]
    %v8880 = vld [vmem:[#allocation13 + $0x8e0] sm:$0xff]
    %v8881 = vld [vmem:[#allocation13 + $0x8e8] sm:$0xff]
    %v8882 = vld [vmem:[#allocation13 + $0x8f0] sm:$0xff]
    %v8883 = vld [vmem:[#allocation13 + $0x8f8] sm:$0xff]
    %v8884 = vld [vmem:[#allocation13 + $0x900] sm:$0xff]
    %v8885 = vld [vmem:[#allocation13 + $0x908] sm:$0xff]
    %v8886 = vld [vmem:[#allocation13 + $0x910] sm:$0xff]
    %v8887 = vld [vmem:[#allocation13 + $0x918] sm:$0xff]
    %v8888 = vld [vmem:[#allocation13 + $0x920] sm:$0xff]
    %v8889 = vld [vmem:[#allocation13 + $0x928] sm:$0xff]
    %v8890 = vld [vmem:[#allocation13 + $0x930] sm:$0xff]
    %v8891 = vld [vmem:[#allocation13 + $0x938] sm:$0xff]
    %v8892 = vld [vmem:[#allocation13 + $0x940] sm:$0xff]
    %v8893 = vld [vmem:[#allocation13 + $0x948] sm:$0xff]
    %v8894 = vld [vmem:[#allocation13 + $0x950] sm:$0xff]
    %v8895 = vld [vmem:[#allocation13 + $0x958] sm:$0xff]
    %v8896 = vld [vmem:[#allocation13 + $0x960] sm:$0xff]
    %v8897 = vld [vmem:[#allocation13 + $0x968] sm:$0xff]
    %v8898 = vld [vmem:[#allocation13 + $0x970] sm:$0xff]
    %v8899 = vld [vmem:[#allocation13 + $0x978] sm:$0xff]
    %v8900 = vld [vmem:[#allocation13 + $0x980] sm:$0xff]
    %v8901 = vld [vmem:[#allocation13 + $0x988] sm:$0xff]
    %v8902 = vld [vmem:[#allocation13 + $0x990] sm:$0xff]
    %v8903 = vld [vmem:[#allocation13 + $0x998] sm:$0xff]
    %v8904 = vld [vmem:[#allocation13 + $0x9a0] sm:$0xff]
    %v8905 = vld [vmem:[#allocation13 + $0x9a8] sm:$0xff]
    %v8906 = vld [vmem:[#allocation13 + $0x9b0] sm:$0xff]
    %v8907 = vld [vmem:[#allocation13 + $0x9b8] sm:$0xff]
    %v8908 = vld [vmem:[#allocation13 + $0x9c0] sm:$0xff]
    %v8909 = vld [vmem:[#allocation13 + $0x9c8] sm:$0xff]
    %v8910 = vld [vmem:[#allocation13 + $0x9d0] sm:$0xff]
    %v8911 = vld [vmem:[#allocation13 + $0x9d8] sm:$0xff]
    %v8912 = vld [vmem:[#allocation13 + $0x9e0] sm:$0xff]
    %v8913 = vld [vmem:[#allocation13 + $0x9e8] sm:$0xff]
    %v8914 = vld [vmem:[#allocation13 + $0x9f0] sm:$0xff]
    %v8915 = vld [vmem:[#allocation13 + $0x9f8] sm:$0xff]
    %v8916 = vld [vmem:[#allocation13 + $0xa00] sm:$0xff]
    %v8917 = vld [vmem:[#allocation13 + $0xa08] sm:$0xff]
    %v8918 = vld [vmem:[#allocation13 + $0xa10] sm:$0xff]
    %v8919 = vld [vmem:[#allocation13 + $0xa18] sm:$0xff]
    %v8920 = vld [vmem:[#allocation13 + $0xa20] sm:$0xff]
    %v8921 = vld [vmem:[#allocation13 + $0xa28] sm:$0xff]
    %v8922 = vld [vmem:[#allocation13 + $0xa30] sm:$0xff]
    %v8923 = vld [vmem:[#allocation13 + $0xa38] sm:$0xff]
    %v8924 = vld [vmem:[#allocation13 + $0xa40] sm:$0xff]
    %v8925 = vld [vmem:[#allocation13 + $0xa48] sm:$0xff]
    %v8926 = vld [vmem:[#allocation13 + $0xa50] sm:$0xff]
    %v8927 = vld [vmem:[#allocation13 + $0xa58] sm:$0xff]
    %v8928 = vld [vmem:[#allocation13 + $0xa60] sm:$0xff]
    %v8929 = vld [vmem:[#allocation13 + $0xa68] sm:$0xff]
    %v8930 = vld [vmem:[#allocation13 + $0xa70] sm:$0xff]
    %v8931 = vld [vmem:[#allocation13 + $0xa78] sm:$0xff]
    %v8932 = vld [vmem:[#allocation13 + $0xa80] sm:$0xff]
    %v8933 = vld [vmem:[#allocation13 + $0xa88] sm:$0xff]
    %v8934 = vld [vmem:[#allocation13 + $0xa90] sm:$0xff]
    %v8935 = vld [vmem:[#allocation13 + $0xa98] sm:$0xff]
    %v8936 = vld [vmem:[#allocation13 + $0xaa0] sm:$0xff]
    %v8937 = vld [vmem:[#allocation13 + $0xaa8] sm:$0xff]
    %v8938 = vld [vmem:[#allocation13 + $0xab0] sm:$0xff]
    %v8939 = vld [vmem:[#allocation13 + $0xab8] sm:$0xff]
    %v8940 = vld [vmem:[#allocation13 + $0xac0] sm:$0xff]
    %v8941 = vld [vmem:[#allocation13 + $0xac8] sm:$0xff]
    %v8942 = vld [vmem:[#allocation13 + $0xad0] sm:$0xff]
    %v8943 = vld [vmem:[#allocation13 + $0xad8] sm:$0xff]
    %v8944 = vld [vmem:[#allocation13 + $0xae0] sm:$0xff]
    %v8945 = vld [vmem:[#allocation13 + $0xae8] sm:$0xff]
    %v8946 = vld [vmem:[#allocation13 + $0xaf0] sm:$0xff]
    %v8947 = vld [vmem:[#allocation13 + $0xaf8] sm:$0xff]
    %v8948 = vld [vmem:[#allocation13 + $0xb00] sm:$0xff]
    %v8949 = vld [vmem:[#allocation13 + $0xb08] sm:$0xff]
    %v8950 = vld [vmem:[#allocation13 + $0xb10] sm:$0xff]
    %v8951 = vld [vmem:[#allocation13 + $0xb18] sm:$0xff]
    %v8952 = vld [vmem:[#allocation13 + $0xb20] sm:$0xff]
    %v8953 = vld [vmem:[#allocation13 + $0xb28] sm:$0xff]
    %v8954 = vld [vmem:[#allocation13 + $0xb30] sm:$0xff]
    %v8955 = vld [vmem:[#allocation13 + $0xb38] sm:$0xff]
    %v8956 = vld [vmem:[#allocation13 + $0xb40] sm:$0xff]
    %v8957 = vld [vmem:[#allocation13 + $0xb48] sm:$0xff]
    %v8958 = vld [vmem:[#allocation13 + $0xb50] sm:$0xff]
    %v8959 = vld [vmem:[#allocation13 + $0xb58] sm:$0xff]
    %v8960 = vld [vmem:[#allocation13 + $0xb60] sm:$0xff]
    %v8961 = vld [vmem:[#allocation13 + $0xb68] sm:$0xff]
    %v8962 = vld [vmem:[#allocation13 + $0xb70] sm:$0xff]
    %v8963 = vld [vmem:[#allocation13 + $0xb78] sm:$0xff]
    %v8964 = vld [vmem:[#allocation13 + $0xb80] sm:$0xff]
    %v8965 = vld [vmem:[#allocation13 + $0xb88] sm:$0xff]
    %v8966 = vld [vmem:[#allocation13 + $0xb90] sm:$0xff]
    %v8967 = vld [vmem:[#allocation13 + $0xb98] sm:$0xff]
    %v8968 = vld [vmem:[#allocation13 + $0xba0] sm:$0xff]
    %v8969 = vld [vmem:[#allocation13 + $0xba8] sm:$0xff]
    %v8970 = vld [vmem:[#allocation13 + $0xbb0] sm:$0xff]
    %v8971 = vld [vmem:[#allocation13 + $0xbb8] sm:$0xff]
    %v8972 = vld [vmem:[#allocation13 + $0xbc0] sm:$0xff]
    %v8973 = vld [vmem:[#allocation13 + $0xbc8] sm:$0xff]
    %v8974 = vld [vmem:[#allocation13 + $0xbd0] sm:$0xff]
    %v8975 = vld [vmem:[#allocation13 + $0xbd8] sm:$0xff]
    %v8976 = vld [vmem:[#allocation13 + $0xbe0] sm:$0xff]
    %v8977 = vld [vmem:[#allocation13 + $0xbe8] sm:$0xff]
    %v8978 = vld [vmem:[#allocation13 + $0xbf0] sm:$0xff]
    %v8979 = vld [vmem:[#allocation13 + $0xbf8] sm:$0xff]
    %v8980 = vld [vmem:[#allocation13 + $0xc00] sm:$0xff]
    %v8981 = vld [vmem:[#allocation13 + $0xc08] sm:$0xff]
    %v8982 = vld [vmem:[#allocation13 + $0xc10] sm:$0xff]
    %v8983 = vld [vmem:[#allocation13 + $0xc18] sm:$0xff]
    %v8984 = vld [vmem:[#allocation13 + $0xc20] sm:$0xff]
    %v8985 = vld [vmem:[#allocation13 + $0xc28] sm:$0xff]
    %v8986 = vld [vmem:[#allocation13 + $0xc30] sm:$0xff]
    %v8987 = vld [vmem:[#allocation13 + $0xc38] sm:$0xff]
    %v8988 = vld [vmem:[#allocation13 + $0xc40] sm:$0xff]
    %v8989 = vld [vmem:[#allocation13 + $0xc48] sm:$0xff]
    %v8990 = vld [vmem:[#allocation13 + $0xc50] sm:$0xff]
    %v8991 = vld [vmem:[#allocation13 + $0xc58] sm:$0xff]
    %v8992 = vld [vmem:[#allocation13 + $0xc60] sm:$0xff]
    %v8993 = vld [vmem:[#allocation13 + $0xc68] sm:$0xff]
    %v8994 = vld [vmem:[#allocation13 + $0xc70] sm:$0xff]
    %v8995 = vld [vmem:[#allocation13 + $0xc78] sm:$0xff]
    %v8996 = vld [vmem:[#allocation13 + $0xc80] sm:$0xff]
    %v8997 = vld [vmem:[#allocation13 + $0xc88] sm:$0xff]
    %v8998 = vld [vmem:[#allocation13 + $0xc90] sm:$0xff]
    %v8999 = vld [vmem:[#allocation13 + $0xc98] sm:$0xff]
    %v9000 = vld [vmem:[#allocation13 + $0xca0] sm:$0xff]
    %v9001 = vld [vmem:[#allocation13 + $0xca8] sm:$0xff]
    %v9002 = vld [vmem:[#allocation13 + $0xcb0] sm:$0xff]
    %v9003 = vld [vmem:[#allocation13 + $0xcb8] sm:$0xff]
    %v9004 = vld [vmem:[#allocation13 + $0xcc0] sm:$0xff]
    %v9005 = vld [vmem:[#allocation13 + $0xcc8] sm:$0xff]
    %v9006 = vld [vmem:[#allocation13 + $0xcd0] sm:$0xff]
    %v9007 = vld [vmem:[#allocation13 + $0xcd8] sm:$0xff]
    %v9008 = vld [vmem:[#allocation13 + $0xce0] sm:$0xff]
    %v9009 = vld [vmem:[#allocation13 + $0xce8] sm:$0xff]
    %v9010 = vld [vmem:[#allocation13 + $0xcf0] sm:$0xff]
    %v9011 = vld [vmem:[#allocation13 + $0xcf8] sm:$0xff]
    %v9012 = vld [vmem:[#allocation13 + $0xd00] sm:$0xff]
    %v9013 = vld [vmem:[#allocation13 + $0xd08] sm:$0xff]
    %v9014 = vld [vmem:[#allocation13 + $0xd10] sm:$0xff]
    %v9015 = vld [vmem:[#allocation13 + $0xd18] sm:$0xff]
    %v9016 = vld [vmem:[#allocation13 + $0xd20] sm:$0xff]
    %v9017 = vld [vmem:[#allocation13 + $0xd28] sm:$0xff]
    %v9018 = vld [vmem:[#allocation13 + $0xd30] sm:$0xff]
    %v9019 = vld [vmem:[#allocation13 + $0xd38] sm:$0xff]
    %v9020 = vld [vmem:[#allocation13 + $0xd40] sm:$0xff]
    %v9021 = vld [vmem:[#allocation13 + $0xd48] sm:$0xff]
    %v9022 = vld [vmem:[#allocation13 + $0xd50] sm:$0xff]
    %v9023 = vld [vmem:[#allocation13 + $0xd58] sm:$0xff]
    %v9024 = vld [vmem:[#allocation13 + $0xd60] sm:$0xff]
    %v9025 = vld [vmem:[#allocation13 + $0xd68] sm:$0xff]
    %v9026 = vld [vmem:[#allocation13 + $0xd70] sm:$0xff]
    %v9027 = vld [vmem:[#allocation13 + $0xd78] sm:$0xff]
    %v9028 = vld [vmem:[#allocation13 + $0xd80] sm:$0xff]
    %v9029 = vld [vmem:[#allocation13 + $0xd88] sm:$0xff]
    %v9030 = vld [vmem:[#allocation13 + $0xd90] sm:$0xff]
    %v9031 = vld [vmem:[#allocation13 + $0xd98] sm:$0xff]
    %v9032 = vld [vmem:[#allocation13 + $0xda0] sm:$0xff]
    %v9033 = vld [vmem:[#allocation13 + $0xda8] sm:$0xff]
    %v9034 = vld [vmem:[#allocation13 + $0xdb0] sm:$0xff]
    %v9035 = vld [vmem:[#allocation13 + $0xdb8] sm:$0xff]
    %v9036 = vld [vmem:[#allocation13 + $0xdc0] sm:$0xff]
    %v9037 = vld [vmem:[#allocation13 + $0xdc8] sm:$0xff]
    %v9038 = vld [vmem:[#allocation13 + $0xdd0] sm:$0xff]
    %v9039 = vld [vmem:[#allocation13 + $0xdd8] sm:$0xff]
    %v9040 = vld [vmem:[#allocation13 + $0xde0] sm:$0xff]
    %v9041 = vld [vmem:[#allocation13 + $0xde8] sm:$0xff]
    %v9042 = vld [vmem:[#allocation13 + $0xdf0] sm:$0xff]
    %v9043 = vld [vmem:[#allocation13 + $0xdf8] sm:$0xff]
    %v9044 = vld [vmem:[#allocation13 + $0xe00] sm:$0xff]
    %v9045 = vld [vmem:[#allocation13 + $0xe08] sm:$0xff]
    %v9046 = vld [vmem:[#allocation13 + $0xe10] sm:$0xff]
    %v9047 = vld [vmem:[#allocation13 + $0xe18] sm:$0xff]
    %v9048 = vld [vmem:[#allocation13 + $0xe20] sm:$0xff]
    %v9049 = vld [vmem:[#allocation13 + $0xe28] sm:$0xff]
    %v9050 = vld [vmem:[#allocation13 + $0xe30] sm:$0xff]
    %v9051 = vld [vmem:[#allocation13 + $0xe38] sm:$0xff]
    %v9052 = vld [vmem:[#allocation13 + $0xe40] sm:$0xff]
    %v9053 = vld [vmem:[#allocation13 + $0xe48] sm:$0xff]
    %v9054 = vld [vmem:[#allocation13 + $0xe50] sm:$0xff]
    %v9055 = vld [vmem:[#allocation13 + $0xe58] sm:$0xff]
    %v9056 = vld [vmem:[#allocation13 + $0xe60] sm:$0xff]
    %v9057 = vld [vmem:[#allocation13 + $0xe68] sm:$0xff]
    %v9058 = vld [vmem:[#allocation13 + $0xe70] sm:$0xff]
    %v9059 = vld [vmem:[#allocation13 + $0xe78] sm:$0xff]
    %v9060 = vld [vmem:[#allocation13 + $0xe80] sm:$0xff]
    %v9061 = vld [vmem:[#allocation13 + $0xe88] sm:$0xff]
    %v9062 = vld [vmem:[#allocation13 + $0xe90] sm:$0xff]
    %v9063 = vld [vmem:[#allocation13 + $0xe98] sm:$0xff]
    %v9064 = vld [vmem:[#allocation13 + $0xea0] sm:$0xff]
    %v9065 = vld [vmem:[#allocation13 + $0xea8] sm:$0xff]
    %v9066 = vld [vmem:[#allocation13 + $0xeb0] sm:$0xff]
    %v9067 = vld [vmem:[#allocation13 + $0xeb8] sm:$0xff]
    %v9068 = vld [vmem:[#allocation13 + $0xec0] sm:$0xff]
    %v9069 = vld [vmem:[#allocation13 + $0xec8] sm:$0xff]
    %v9070 = vld [vmem:[#allocation13 + $0xed0] sm:$0xff]
    %v9071 = vld [vmem:[#allocation13 + $0xed8] sm:$0xff]
    %v9072 = vld [vmem:[#allocation13 + $0xee0] sm:$0xff]
    %v9073 = vld [vmem:[#allocation13 + $0xee8] sm:$0xff]
    %v9074 = vld [vmem:[#allocation13 + $0xef0] sm:$0xff]
    %v9075 = vld [vmem:[#allocation13 + $0xef8] sm:$0xff]
    %v9076 = vld [vmem:[#allocation13 + $0xf00] sm:$0xff]
    %v9077 = vld [vmem:[#allocation13 + $0xf08] sm:$0xff]
    %v9078 = vld [vmem:[#allocation13 + $0xf10] sm:$0xff]
    %v9079 = vld [vmem:[#allocation13 + $0xf18] sm:$0xff]
    %v9080 = vld [vmem:[#allocation13 + $0xf20] sm:$0xff]
    %v9081 = vld [vmem:[#allocation13 + $0xf28] sm:$0xff]
    %v9082 = vld [vmem:[#allocation13 + $0xf30] sm:$0xff]
    %v9083 = vld [vmem:[#allocation13 + $0xf38] sm:$0xff]
    %v9084 = vld [vmem:[#allocation13 + $0xf40] sm:$0xff]
    %v9085 = vld [vmem:[#allocation13 + $0xf48] sm:$0xff]
    %v9086 = vld [vmem:[#allocation13 + $0xf50] sm:$0xff]
    %v9087 = vld [vmem:[#allocation13 + $0xf58] sm:$0xff]
    %v9088 = vld [vmem:[#allocation13 + $0xf60] sm:$0xff]
    %v9089 = vld [vmem:[#allocation13 + $0xf68] sm:$0xff]
    %v9090 = vld [vmem:[#allocation13 + $0xf70] sm:$0xff]
    %v9091 = vld [vmem:[#allocation13 + $0xf78] sm:$0xff]
    %v9092 = vld [vmem:[#allocation13 + $0xf80] sm:$0xff]
    %v9093 = vld [vmem:[#allocation13 + $0xf88] sm:$0xff]
    %v9094 = vld [vmem:[#allocation13 + $0xf90] sm:$0xff]
    %v9095 = vld [vmem:[#allocation13 + $0xf98] sm:$0xff]
    %v9096 = vld [vmem:[#allocation13 + $0xfa0] sm:$0xff]
    %v9097 = vld [vmem:[#allocation13 + $0xfa8] sm:$0xff]
    %v9098 = vld [vmem:[#allocation13 + $0xfb0] sm:$0xff]
    %v9099 = vld [vmem:[#allocation13 + $0xfb8] sm:$0xff]
    %v9100 = vld [vmem:[#allocation13 + $0xfc0] sm:$0xff]
    %v9101 = vld [vmem:[#allocation13 + $0xfc8] sm:$0xff]
    %v9102 = vld [vmem:[#allocation13 + $0xfd0] sm:$0xff]
    %v9103 = vld [vmem:[#allocation13 + $0xfd8] sm:$0xff]
    %v9104 = vld [vmem:[#allocation13 + $0xfe0] sm:$0xff]
    %v9105 = vld [vmem:[#allocation13 + $0xfe8] sm:$0xff]
    %v9106 = vld [vmem:[#allocation13 + $0xff0] sm:$0xff]
    %v9107 = vld [vmem:[#allocation13 + $0xff8] sm:$0xff]
    %v9108 = vld [vmem:[#allocation13 + $0x1000] sm:$0xff]
    %v9109 = vld [vmem:[#allocation13 + $0x1008] sm:$0xff]
    %v9110 = vld [vmem:[#allocation13 + $0x1010] sm:$0xff]
    %v9111 = vld [vmem:[#allocation13 + $0x1018] sm:$0xff]
    %v9112 = vld [vmem:[#allocation13 + $0x1020] sm:$0xff]
    %v9113 = vld [vmem:[#allocation13 + $0x1028] sm:$0xff]
    %v9114 = vld [vmem:[#allocation13 + $0x1030] sm:$0xff]
    %v9115 = vld [vmem:[#allocation13 + $0x1038] sm:$0xff]
    %v9116 = vld [vmem:[#allocation13 + $0x1040] sm:$0xff]
    %v9117 = vld [vmem:[#allocation13 + $0x1048] sm:$0xff]
    %v9118 = vld [vmem:[#allocation13 + $0x1050] sm:$0xff]
    %v9119 = vld [vmem:[#allocation13 + $0x1058] sm:$0xff]
    %v9120 = vld [vmem:[#allocation13 + $0x1060] sm:$0xff]
    %v9121 = vld [vmem:[#allocation13 + $0x1068] sm:$0xff]
    %v9122 = vld [vmem:[#allocation13 + $0x1070] sm:$0xff]
    %v9123 = vld [vmem:[#allocation13 + $0x1078] sm:$0xff]
    %v9124 = vld [vmem:[#allocation13 + $0x1080] sm:$0xff]
    %v9125 = vld [vmem:[#allocation13 + $0x1088] sm:$0xff]
    %v9126 = vld [vmem:[#allocation13 + $0x1090] sm:$0xff]
    %v9127 = vld [vmem:[#allocation13 + $0x1098] sm:$0xff]
    %v9128 = vld [vmem:[#allocation13 + $0x10a0] sm:$0xff]
    %v9129 = vld [vmem:[#allocation13 + $0x10a8] sm:$0xff]
    %v9130 = vld [vmem:[#allocation13 + $0x10b0] sm:$0xff]
    %v9131 = vld [vmem:[#allocation13 + $0x10b8] sm:$0xff]
    %v9132 = vld [vmem:[#allocation13 + $0x10c0] sm:$0xff]
    %v9133 = vld [vmem:[#allocation13 + $0x10c8] sm:$0xff]
    %v9134 = vld [vmem:[#allocation13 + $0x10d0] sm:$0xff]
    %v9135 = vld [vmem:[#allocation13 + $0x10d8] sm:$0xff]
    %v9136 = vld [vmem:[#allocation13 + $0x10e0] sm:$0xff]
    %v9137 = vld [vmem:[#allocation13 + $0x10e8] sm:$0xff]
    %v9138 = vld [vmem:[#allocation13 + $0x10f0] sm:$0xff]
    %v9139 = vld [vmem:[#allocation13 + $0x10f8] sm:$0xff]
    %v9140 = vld [vmem:[#allocation13 + $0x1100] sm:$0xff]
    %v9141 = vld [vmem:[#allocation13 + $0x1108] sm:$0xff]
    %v9142 = vld [vmem:[#allocation13 + $0x1110] sm:$0xff]
    %v9143 = vld [vmem:[#allocation13 + $0x1118] sm:$0xff]
    %v9144 = vld [vmem:[#allocation13 + $0x1120] sm:$0xff]
    %v9145 = vld [vmem:[#allocation13 + $0x1128] sm:$0xff]
    %v9146 = vld [vmem:[#allocation13 + $0x1130] sm:$0xff]
    %v9147 = vld [vmem:[#allocation13 + $0x1138] sm:$0xff]
    %v9148 = vld [vmem:[#allocation13 + $0x1140] sm:$0xff]
    %v9149 = vld [vmem:[#allocation13 + $0x1148] sm:$0xff]
    %v9150 = vld [vmem:[#allocation13 + $0x1150] sm:$0xff]
    %v9151 = vld [vmem:[#allocation13 + $0x1158] sm:$0xff]
    %v9152 = vld [vmem:[#allocation13 + $0x1160] sm:$0xff]
    %v9153 = vld [vmem:[#allocation13 + $0x1168] sm:$0xff]
    %v9154 = vld [vmem:[#allocation13 + $0x1170] sm:$0xff]
    %v9155 = vld [vmem:[#allocation13 + $0x1178] sm:$0xff]
    %v9156 = vld [vmem:[#allocation13 + $0x1180] sm:$0xff]
    %v9157 = vld [vmem:[#allocation13 + $0x1188] sm:$0xff]
    %v9158 = vld [vmem:[#allocation13 + $0x1190] sm:$0xff]
    %v9159 = vld [vmem:[#allocation13 + $0x1198] sm:$0xff]
    %v9160 = vld [vmem:[#allocation13 + $0x11a0] sm:$0xff]
    %v9161 = vld [vmem:[#allocation13 + $0x11a8] sm:$0xff]
    %v9162 = vld [vmem:[#allocation13 + $0x11b0] sm:$0xff]
    %v9163 = vld [vmem:[#allocation13 + $0x11b8] sm:$0xff]
    %v9164 = vld [vmem:[#allocation13 + $0x11c0] sm:$0xff]
    %v9165 = vld [vmem:[#allocation13 + $0x11c8] sm:$0xff]
    %v9166 = vld [vmem:[#allocation13 + $0x11d0] sm:$0xff]
    %v9167 = vld [vmem:[#allocation13 + $0x11d8] sm:$0xff]
    %v9168 = vld [vmem:[#allocation13 + $0x11e0] sm:$0xff]
    %v9169 = vld [vmem:[#allocation13 + $0x11e8] sm:$0xff]
    %v9170 = vld [vmem:[#allocation13 + $0x11f0] sm:$0xff]
    %v9171 = vld [vmem:[#allocation13 + $0x11f8] sm:$0xff]
    %v9172 = vld [vmem:[#allocation14] sm:$0x3f]
    %v9174 = vperm.slane %v9172, 0
    %v9175 = vperm.slane %v9172, 1
    %v9176 = vperm.slane %v9172, 2
    %v9177 = vperm.slane %v9172, 3
    %v9178 = vperm.slane %v9172, 4
    %v9179 = vperm.slane %v9172, 5
    %v9762 = vunpack.c.l.b16 %v8596
    %v9763 = vunpack.c.h.b16 %v8596
    %v9764 = vunpack.c.l.b16 %v8597
    %v9765 = vunpack.c.h.b16 %v8597
    %v9766 = vunpack.c.l.b16 %v8598
    %v9767 = vunpack.c.h.b16 %v8598
    %v9768 = vunpack.c.l.b16 %v8599
    %v9769 = vunpack.c.h.b16 %v8599
    %v9770 = vunpack.c.l.b16 %v8600
    %v9771 = vunpack.c.h.b16 %v8600
    %v9772 = vunpack.c.l.b16 %v8601
    %v9773 = vunpack.c.h.b16 %v8601
    %v9774 = vunpack.c.l.b16 %v8602
    %v9775 = vunpack.c.h.b16 %v8602
    %v9776 = vunpack.c.l.b16 %v8603
    %v9777 = vunpack.c.h.b16 %v8603
    %v9778 = vunpack.c.l.b16 %v8604
    %v9779 = vunpack.c.h.b16 %v8604
    %v9780 = vunpack.c.l.b16 %v8605
    %v9781 = vunpack.c.h.b16 %v8605
    %v9782 = vunpack.c.l.b16 %v8606
    %v9783 = vunpack.c.h.b16 %v8606
    %v9784 = vunpack.c.l.b16 %v8607
    %v9785 = vunpack.c.h.b16 %v8607
    %v9786 = vunpack.c.l.b16 %v8608
    %v9787 = vunpack.c.h.b16 %v8608
    %v9788 = vunpack.c.l.b16 %v8609
    %v9789 = vunpack.c.h.b16 %v8609
    %v9790 = vunpack.c.l.b16 %v8610
    %v9791 = vunpack.c.h.b16 %v8610
    %v9792 = vunpack.c.l.b16 %v8611
    %v9793 = vunpack.c.h.b16 %v8611
    %v9794 = vunpack.c.l.b16 %v8612
    %v9795 = vunpack.c.h.b16 %v8612
    %v9796 = vunpack.c.l.b16 %v8613
    %v9797 = vunpack.c.h.b16 %v8613
    %v9798 = vunpack.c.l.b16 %v8614
    %v9799 = vunpack.c.h.b16 %v8614
    %v9800 = vunpack.c.l.b16 %v8615
    %v9801 = vunpack.c.h.b16 %v8615
    %v9802 = vunpack.c.l.b16 %v8616
    %v9803 = vunpack.c.h.b16 %v8616
    %v9804 = vunpack.c.l.b16 %v8617
    %v9805 = vunpack.c.h.b16 %v8617
    %v9806 = vunpack.c.l.b16 %v8618
    %v9807 = vunpack.c.h.b16 %v8618
    %v9808 = vunpack.c.l.b16 %v8619
    %v9809 = vunpack.c.h.b16 %v8619
    %v9810 = vunpack.c.l.b16 %v8620
    %v9811 = vunpack.c.h.b16 %v8620
    %v9812 = vunpack.c.l.b16 %v8621
    %v9813 = vunpack.c.h.b16 %v8621
    %v9814 = vunpack.c.l.b16 %v8622
    %v9815 = vunpack.c.h.b16 %v8622
    %v9816 = vunpack.c.l.b16 %v8623
    %v9817 = vunpack.c.h.b16 %v8623
    %v9818 = vunpack.c.l.b16 %v8624
    %v9819 = vunpack.c.h.b16 %v8624
    %v9820 = vunpack.c.l.b16 %v8625
    %v9821 = vunpack.c.h.b16 %v8625
    %v9822 = vunpack.c.l.b16 %v8626
    %v9823 = vunpack.c.h.b16 %v8626
    %v9824 = vunpack.c.l.b16 %v8627
    %v9825 = vunpack.c.h.b16 %v8627
    %v9826 = vunpack.c.l.b16 %v8628
    %v9827 = vunpack.c.h.b16 %v8628
    %v9828 = vunpack.c.l.b16 %v8629
    %v9829 = vunpack.c.h.b16 %v8629
    %v9830 = vunpack.c.l.b16 %v8630
    %v9831 = vunpack.c.h.b16 %v8630
    %v9832 = vunpack.c.l.b16 %v8631
    %v9833 = vunpack.c.h.b16 %v8631
    %v9834 = vunpack.c.l.b16 %v8632
    %v9835 = vunpack.c.h.b16 %v8632
    %v9836 = vunpack.c.l.b16 %v8633
    %v9837 = vunpack.c.h.b16 %v8633
    %v9838 = vunpack.c.l.b16 %v8634
    %v9839 = vunpack.c.h.b16 %v8634
    %v9840 = vunpack.c.l.b16 %v8635
    %v9841 = vunpack.c.h.b16 %v8635
    %v9842 = vunpack.c.l.b16 %v8636
    %v9843 = vunpack.c.h.b16 %v8636
    %v9844 = vunpack.c.l.b16 %v8637
    %v9845 = vunpack.c.h.b16 %v8637
    %v9846 = vunpack.c.l.b16 %v8638
    %v9847 = vunpack.c.h.b16 %v8638
    %v9848 = vunpack.c.l.b16 %v8639
    %v9849 = vunpack.c.h.b16 %v8639
    %v9850 = vunpack.c.l.b16 %v8640
    %v9851 = vunpack.c.h.b16 %v8640
    %v9852 = vunpack.c.l.b16 %v8641
    %v9853 = vunpack.c.h.b16 %v8641
    %v9854 = vunpack.c.l.b16 %v8642
    %v9855 = vunpack.c.h.b16 %v8642
    %v9856 = vunpack.c.l.b16 %v8643
    %v9857 = vunpack.c.h.b16 %v8643
    %v9858 = vunpack.c.l.b16 %v8644
    %v9859 = vunpack.c.h.b16 %v8644
    %v9860 = vunpack.c.l.b16 %v8645
    %v9861 = vunpack.c.h.b16 %v8645
    %v9862 = vunpack.c.l.b16 %v8646
    %v9863 = vunpack.c.h.b16 %v8646
    %v9864 = vunpack.c.l.b16 %v8647
    %v9865 = vunpack.c.h.b16 %v8647
    %v9866 = vunpack.c.l.b16 %v8648
    %v9867 = vunpack.c.h.b16 %v8648
    %v9868 = vunpack.c.l.b16 %v8649
    %v9869 = vunpack.c.h.b16 %v8649
    %v9870 = vunpack.c.l.b16 %v8650
    %v9871 = vunpack.c.h.b16 %v8650
    %v9872 = vunpack.c.l.b16 %v8651
    %v9873 = vunpack.c.h.b16 %v8651
    %v9874 = vunpack.c.l.b16 %v8652
    %v9875 = vunpack.c.h.b16 %v8652
    %v9876 = vunpack.c.l.b16 %v8653
    %v9877 = vunpack.c.h.b16 %v8653
    %v9878 = vunpack.c.l.b16 %v8654
    %v9879 = vunpack.c.h.b16 %v8654
    %v9880 = vunpack.c.l.b16 %v8655
    %v9881 = vunpack.c.h.b16 %v8655
    %v9882 = vunpack.c.l.b16 %v8656
    %v9883 = vunpack.c.h.b16 %v8656
    %v9884 = vunpack.c.l.b16 %v8657
    %v9885 = vunpack.c.h.b16 %v8657
    %v9886 = vunpack.c.l.b16 %v8658
    %v9887 = vunpack.c.h.b16 %v8658
    %v9888 = vunpack.c.l.b16 %v8659
    %v9889 = vunpack.c.h.b16 %v8659
    %v9890 = vunpack.c.l.b16 %v8660
    %v9891 = vunpack.c.h.b16 %v8660
    %v9892 = vunpack.c.l.b16 %v8661
    %v9893 = vunpack.c.h.b16 %v8661
    %v9894 = vunpack.c.l.b16 %v8662
    %v9895 = vunpack.c.h.b16 %v8662
    %v9896 = vunpack.c.l.b16 %v8663
    %v9897 = vunpack.c.h.b16 %v8663
    %v9898 = vunpack.c.l.b16 %v8664
    %v9899 = vunpack.c.h.b16 %v8664
    %v9900 = vunpack.c.l.b16 %v8665
    %v9901 = vunpack.c.h.b16 %v8665
    %v9902 = vunpack.c.l.b16 %v8666
    %v9903 = vunpack.c.h.b16 %v8666
    %v9904 = vunpack.c.l.b16 %v8667
    %v9905 = vunpack.c.h.b16 %v8667
    %v9906 = vunpack.c.l.b16 %v8668
    %v9907 = vunpack.c.h.b16 %v8668
    %v9908 = vunpack.c.l.b16 %v8669
    %v9909 = vunpack.c.h.b16 %v8669
    %v9910 = vunpack.c.l.b16 %v8670
    %v9911 = vunpack.c.h.b16 %v8670
    %v9912 = vunpack.c.l.b16 %v8671
    %v9913 = vunpack.c.h.b16 %v8671
    %v9914 = vunpack.c.l.b16 %v8672
    %v9915 = vunpack.c.h.b16 %v8672
    %v9916 = vunpack.c.l.b16 %v8673
    %v9917 = vunpack.c.h.b16 %v8673
    %v9918 = vunpack.c.l.b16 %v8674
    %v9919 = vunpack.c.h.b16 %v8674
    %v9920 = vunpack.c.l.b16 %v8675
    %v9921 = vunpack.c.h.b16 %v8675
    %v9922 = vunpack.c.l.b16 %v8676
    %v9923 = vunpack.c.h.b16 %v8676
    %v9924 = vunpack.c.l.b16 %v8677
    %v9925 = vunpack.c.h.b16 %v8677
    %v9926 = vunpack.c.l.b16 %v8678
    %v9927 = vunpack.c.h.b16 %v8678
    %v9928 = vunpack.c.l.b16 %v8679
    %v9929 = vunpack.c.h.b16 %v8679
    %v9930 = vunpack.c.l.b16 %v8680
    %v9931 = vunpack.c.h.b16 %v8680
    %v9932 = vunpack.c.l.b16 %v8681
    %v9933 = vunpack.c.h.b16 %v8681
    %v9934 = vunpack.c.l.b16 %v8682
    %v9935 = vunpack.c.h.b16 %v8682
    %v9936 = vunpack.c.l.b16 %v8683
    %v9937 = vunpack.c.h.b16 %v8683
    %v9938 = vunpack.c.l.b16 %v8684
    %v9939 = vunpack.c.h.b16 %v8684
    %v9940 = vunpack.c.l.b16 %v8685
    %v9941 = vunpack.c.h.b16 %v8685
    %v9942 = vunpack.c.l.b16 %v8686
    %v9943 = vunpack.c.h.b16 %v8686
    %v9944 = vunpack.c.l.b16 %v8687
    %v9945 = vunpack.c.h.b16 %v8687
    %v9946 = vunpack.c.l.b16 %v8688
    %v9947 = vunpack.c.h.b16 %v8688
    %v9948 = vunpack.c.l.b16 %v8689
    %v9949 = vunpack.c.h.b16 %v8689
    %v9950 = vunpack.c.l.b16 %v8690
    %v9951 = vunpack.c.h.b16 %v8690
    %v9952 = vunpack.c.l.b16 %v8691
    %v9953 = vunpack.c.h.b16 %v8691
    %v9954 = vunpack.c.l.b16 %v8692
    %v9955 = vunpack.c.h.b16 %v8692
    %v9956 = vunpack.c.l.b16 %v8693
    %v9957 = vunpack.c.h.b16 %v8693
    %v9958 = vunpack.c.l.b16 %v8694
    %v9959 = vunpack.c.h.b16 %v8694
    %v9960 = vunpack.c.l.b16 %v8695
    %v9961 = vunpack.c.h.b16 %v8695
    %v9962 = vunpack.c.l.b16 %v8696
    %v9963 = vunpack.c.h.b16 %v8696
    %v9964 = vunpack.c.l.b16 %v8697
    %v9965 = vunpack.c.h.b16 %v8697
    %v9966 = vunpack.c.l.b16 %v8698
    %v9967 = vunpack.c.h.b16 %v8698
    %v9968 = vunpack.c.l.b16 %v8699
    %v9969 = vunpack.c.h.b16 %v8699
    %v9970 = vunpack.c.l.b16 %v8700
    %v9971 = vunpack.c.h.b16 %v8700
    %v9972 = vunpack.c.l.b16 %v8701
    %v9973 = vunpack.c.h.b16 %v8701
    %v9974 = vunpack.c.l.b16 %v8702
    %v9975 = vunpack.c.h.b16 %v8702
    %v9976 = vunpack.c.l.b16 %v8703
    %v9977 = vunpack.c.h.b16 %v8703
    %v9978 = vunpack.c.l.b16 %v8704
    %v9979 = vunpack.c.h.b16 %v8704
    %v9980 = vunpack.c.l.b16 %v8705
    %v9981 = vunpack.c.h.b16 %v8705
    %v9982 = vunpack.c.l.b16 %v8706
    %v9983 = vunpack.c.h.b16 %v8706
    %v9984 = vunpack.c.l.b16 %v8707
    %v9985 = vunpack.c.h.b16 %v8707
    %v9986 = vunpack.c.l.b16 %v8708
    %v9987 = vunpack.c.h.b16 %v8708
    %v9988 = vunpack.c.l.b16 %v8709
    %v9989 = vunpack.c.h.b16 %v8709
    %v9990 = vunpack.c.l.b16 %v8710
    %v9991 = vunpack.c.h.b16 %v8710
    %v9992 = vunpack.c.l.b16 %v8711
    %v9993 = vunpack.c.h.b16 %v8711
    %v9994 = vunpack.c.l.b16 %v8712
    %v9995 = vunpack.c.h.b16 %v8712
    %v9996 = vunpack.c.l.b16 %v8713
    %v9997 = vunpack.c.h.b16 %v8713
    %v9998 = vunpack.c.l.b16 %v8714
    %v9999 = vunpack.c.h.b16 %v8714
    %v10000 = vunpack.c.l.b16 %v8715
    %v10001 = vunpack.c.h.b16 %v8715
    %v10002 = vunpack.c.l.b16 %v8716
    %v10003 = vunpack.c.h.b16 %v8716
    %v10004 = vunpack.c.l.b16 %v8717
    %v10005 = vunpack.c.h.b16 %v8717
    %v10006 = vunpack.c.l.b16 %v8718
    %v10007 = vunpack.c.h.b16 %v8718
    %v10008 = vunpack.c.l.b16 %v8719
    %v10009 = vunpack.c.h.b16 %v8719
    %v10010 = vunpack.c.l.b16 %v8720
    %v10011 = vunpack.c.h.b16 %v8720
    %v10012 = vunpack.c.l.b16 %v8721
    %v10013 = vunpack.c.h.b16 %v8721
    %v10014 = vunpack.c.l.b16 %v8722
    %v10015 = vunpack.c.h.b16 %v8722
    %v10016 = vunpack.c.l.b16 %v8723
    %v10017 = vunpack.c.h.b16 %v8723
    %v10018 = vunpack.c.l.b16 %v8724
    %v10019 = vunpack.c.h.b16 %v8724
    %v10020 = vunpack.c.l.b16 %v8725
    %v10021 = vunpack.c.h.b16 %v8725
    %v10022 = vunpack.c.l.b16 %v8726
    %v10023 = vunpack.c.h.b16 %v8726
    %v10024 = vunpack.c.l.b16 %v8727
    %v10025 = vunpack.c.h.b16 %v8727
    %v10026 = vunpack.c.l.b16 %v8728
    %v10027 = vunpack.c.h.b16 %v8728
    %v10028 = vunpack.c.l.b16 %v8729
    %v10029 = vunpack.c.h.b16 %v8729
    %v10030 = vunpack.c.l.b16 %v8730
    %v10031 = vunpack.c.h.b16 %v8730
    %v10032 = vunpack.c.l.b16 %v8731
    %v10033 = vunpack.c.h.b16 %v8731
    %v10034 = vunpack.c.l.b16 %v8732
    %v10035 = vunpack.c.h.b16 %v8732
    %v10036 = vunpack.c.l.b16 %v8733
    %v10037 = vunpack.c.h.b16 %v8733
    %v10038 = vunpack.c.l.b16 %v8734
    %v10039 = vunpack.c.h.b16 %v8734
    %v10040 = vunpack.c.l.b16 %v8735
    %v10041 = vunpack.c.h.b16 %v8735
    %v10042 = vunpack.c.l.b16 %v8736
    %v10043 = vunpack.c.h.b16 %v8736
    %v10044 = vunpack.c.l.b16 %v8737
    %v10045 = vunpack.c.h.b16 %v8737
    %v10046 = vunpack.c.l.b16 %v8738
    %v10047 = vunpack.c.h.b16 %v8738
    %v10048 = vunpack.c.l.b16 %v8739
    %v10049 = vunpack.c.h.b16 %v8739
    %v10050 = vunpack.c.l.b16 %v8740
    %v10051 = vunpack.c.h.b16 %v8740
    %v10052 = vunpack.c.l.b16 %v8741
    %v10053 = vunpack.c.h.b16 %v8741
    %v10054 = vunpack.c.l.b16 %v8742
    %v10055 = vunpack.c.h.b16 %v8742
    %v10056 = vunpack.c.l.b16 %v8743
    %v10057 = vunpack.c.h.b16 %v8743
    %v10058 = vunpack.c.l.b16 %v8744
    %v10059 = vunpack.c.h.b16 %v8744
    %v10060 = vunpack.c.l.b16 %v8745
    %v10061 = vunpack.c.h.b16 %v8745
    %v10062 = vunpack.c.l.b16 %v8746
    %v10063 = vunpack.c.h.b16 %v8746
    %v10064 = vunpack.c.l.b16 %v8747
    %v10065 = vunpack.c.h.b16 %v8747
    %v10066 = vunpack.c.l.b16 %v8748
    %v10067 = vunpack.c.h.b16 %v8748
    %v10068 = vunpack.c.l.b16 %v8749
    %v10069 = vunpack.c.h.b16 %v8749
    %v10070 = vunpack.c.l.b16 %v8750
    %v10071 = vunpack.c.h.b16 %v8750
    %v10072 = vunpack.c.l.b16 %v8751
    %v10073 = vunpack.c.h.b16 %v8751
    %v10074 = vunpack.c.l.b16 %v8752
    %v10075 = vunpack.c.h.b16 %v8752
    %v10076 = vunpack.c.l.b16 %v8753
    %v10077 = vunpack.c.h.b16 %v8753
    %v10078 = vunpack.c.l.b16 %v8754
    %v10079 = vunpack.c.h.b16 %v8754
    %v10080 = vunpack.c.l.b16 %v8755
    %v10081 = vunpack.c.h.b16 %v8755
    %v10082 = vunpack.c.l.b16 %v8756
    %v10083 = vunpack.c.h.b16 %v8756
    %v10084 = vunpack.c.l.b16 %v8757
    %v10085 = vunpack.c.h.b16 %v8757
    %v10086 = vunpack.c.l.b16 %v8758
    %v10087 = vunpack.c.h.b16 %v8758
    %v10088 = vunpack.c.l.b16 %v8759
    %v10089 = vunpack.c.h.b16 %v8759
    %v10090 = vunpack.c.l.b16 %v8760
    %v10091 = vunpack.c.h.b16 %v8760
    %v10092 = vunpack.c.l.b16 %v8761
    %v10093 = vunpack.c.h.b16 %v8761
    %v10094 = vunpack.c.l.b16 %v8762
    %v10095 = vunpack.c.h.b16 %v8762
    %v10096 = vunpack.c.l.b16 %v8763
    %v10097 = vunpack.c.h.b16 %v8763
    %v10098 = vunpack.c.l.b16 %v8764
    %v10099 = vunpack.c.h.b16 %v8764
    %v10100 = vunpack.c.l.b16 %v8765
    %v10101 = vunpack.c.h.b16 %v8765
    %v10102 = vunpack.c.l.b16 %v8766
    %v10103 = vunpack.c.h.b16 %v8766
    %v10104 = vunpack.c.l.b16 %v8767
    %v10105 = vunpack.c.h.b16 %v8767
    %v10106 = vunpack.c.l.b16 %v8768
    %v10107 = vunpack.c.h.b16 %v8768
    %v10108 = vunpack.c.l.b16 %v8769
    %v10109 = vunpack.c.h.b16 %v8769
    %v10110 = vunpack.c.l.b16 %v8770
    %v10111 = vunpack.c.h.b16 %v8770
    %v10112 = vunpack.c.l.b16 %v8771
    %v10113 = vunpack.c.h.b16 %v8771
    %v10114 = vunpack.c.l.b16 %v8772
    %v10115 = vunpack.c.h.b16 %v8772
    %v10116 = vunpack.c.l.b16 %v8773
    %v10117 = vunpack.c.h.b16 %v8773
    %v10118 = vunpack.c.l.b16 %v8774
    %v10119 = vunpack.c.h.b16 %v8774
    %v10120 = vunpack.c.l.b16 %v8775
    %v10121 = vunpack.c.h.b16 %v8775
    %v10122 = vunpack.c.l.b16 %v8776
    %v10123 = vunpack.c.h.b16 %v8776
    %v10124 = vunpack.c.l.b16 %v8777
    %v10125 = vunpack.c.h.b16 %v8777
    %v10126 = vunpack.c.l.b16 %v8778
    %v10127 = vunpack.c.h.b16 %v8778
    %v10128 = vunpack.c.l.b16 %v8779
    %v10129 = vunpack.c.h.b16 %v8779
    %v10130 = vunpack.c.l.b16 %v8780
    %v10131 = vunpack.c.h.b16 %v8780
    %v10132 = vunpack.c.l.b16 %v8781
    %v10133 = vunpack.c.h.b16 %v8781
    %v10134 = vunpack.c.l.b16 %v8782
    %v10135 = vunpack.c.h.b16 %v8782
    %v10136 = vunpack.c.l.b16 %v8783
    %v10137 = vunpack.c.h.b16 %v8783
    %v10138 = vunpack.c.l.b16 %v8784
    %v10139 = vunpack.c.h.b16 %v8784
    %v10140 = vunpack.c.l.b16 %v8785
    %v10141 = vunpack.c.h.b16 %v8785
    %v10142 = vunpack.c.l.b16 %v8786
    %v10143 = vunpack.c.h.b16 %v8786
    %v10144 = vunpack.c.l.b16 %v8787
    %v10145 = vunpack.c.h.b16 %v8787
    %v10146 = vunpack.c.l.b16 %v8788
    %v10147 = vunpack.c.h.b16 %v8788
    %v10148 = vunpack.c.l.b16 %v8789
    %v10149 = vunpack.c.h.b16 %v8789
    %v10150 = vunpack.c.l.b16 %v8790
    %v10151 = vunpack.c.h.b16 %v8790
    %v10152 = vunpack.c.l.b16 %v8791
    %v10153 = vunpack.c.h.b16 %v8791
    %v10154 = vunpack.c.l.b16 %v8792
    %v10155 = vunpack.c.h.b16 %v8792
    %v10156 = vunpack.c.l.b16 %v8793
    %v10157 = vunpack.c.h.b16 %v8793
    %v10158 = vunpack.c.l.b16 %v8794
    %v10159 = vunpack.c.h.b16 %v8794
    %v10160 = vunpack.c.l.b16 %v8795
    %v10161 = vunpack.c.h.b16 %v8795
    %v10162 = vunpack.c.l.b16 %v8796
    %v10163 = vunpack.c.h.b16 %v8796
    %v10164 = vunpack.c.l.b16 %v8797
    %v10165 = vunpack.c.h.b16 %v8797
    %v10166 = vunpack.c.l.b16 %v8798
    %v10167 = vunpack.c.h.b16 %v8798
    %v10168 = vunpack.c.l.b16 %v8799
    %v10169 = vunpack.c.h.b16 %v8799
    %v10170 = vunpack.c.l.b16 %v8800
    %v10171 = vunpack.c.h.b16 %v8800
    %v10172 = vunpack.c.l.b16 %v8801
    %v10173 = vunpack.c.h.b16 %v8801
    %v10174 = vunpack.c.l.b16 %v8802
    %v10175 = vunpack.c.h.b16 %v8802
    %v10176 = vunpack.c.l.b16 %v8803
    %v10177 = vunpack.c.h.b16 %v8803
    %v10178 = vunpack.c.l.b16 %v8804
    %v10179 = vunpack.c.h.b16 %v8804
    %v10180 = vunpack.c.l.b16 %v8805
    %v10181 = vunpack.c.h.b16 %v8805
    %v10182 = vunpack.c.l.b16 %v8806
    %v10183 = vunpack.c.h.b16 %v8806
    %v10184 = vunpack.c.l.b16 %v8807
    %v10185 = vunpack.c.h.b16 %v8807
    %v10186 = vunpack.c.l.b16 %v8808
    %v10187 = vunpack.c.h.b16 %v8808
    %v10188 = vunpack.c.l.b16 %v8809
    %v10189 = vunpack.c.h.b16 %v8809
    %v10190 = vunpack.c.l.b16 %v8810
    %v10191 = vunpack.c.h.b16 %v8810
    %v10192 = vunpack.c.l.b16 %v8811
    %v10193 = vunpack.c.h.b16 %v8811
    %v10194 = vunpack.c.l.b16 %v8812
    %v10195 = vunpack.c.h.b16 %v8812
    %v10196 = vunpack.c.l.b16 %v8813
    %v10197 = vunpack.c.h.b16 %v8813
    %v10198 = vunpack.c.l.b16 %v8814
    %v10199 = vunpack.c.h.b16 %v8814
    %v10200 = vunpack.c.l.b16 %v8815
    %v10201 = vunpack.c.h.b16 %v8815
    %v10202 = vunpack.c.l.b16 %v8816
    %v10203 = vunpack.c.h.b16 %v8816
    %v10204 = vunpack.c.l.b16 %v8817
    %v10205 = vunpack.c.h.b16 %v8817
    %v10206 = vunpack.c.l.b16 %v8818
    %v10207 = vunpack.c.h.b16 %v8818
    %v10208 = vunpack.c.l.b16 %v8819
    %v10209 = vunpack.c.h.b16 %v8819
    %v10210 = vunpack.c.l.b16 %v8820
    %v10211 = vunpack.c.h.b16 %v8820
    %v10212 = vunpack.c.l.b16 %v8821
    %v10213 = vunpack.c.h.b16 %v8821
    %v10214 = vunpack.c.l.b16 %v8822
    %v10215 = vunpack.c.h.b16 %v8822
    %v10216 = vunpack.c.l.b16 %v8823
    %v10217 = vunpack.c.h.b16 %v8823
    %v10218 = vunpack.c.l.b16 %v8824
    %v10219 = vunpack.c.h.b16 %v8824
    %v10220 = vunpack.c.l.b16 %v8825
    %v10221 = vunpack.c.h.b16 %v8825
    %v10222 = vunpack.c.l.b16 %v8826
    %v10223 = vunpack.c.h.b16 %v8826
    %v10224 = vunpack.c.l.b16 %v8827
    %v10225 = vunpack.c.h.b16 %v8827
    %v10226 = vunpack.c.l.b16 %v8828
    %v10227 = vunpack.c.h.b16 %v8828
    %v10228 = vunpack.c.l.b16 %v8829
    %v10229 = vunpack.c.h.b16 %v8829
    %v10230 = vunpack.c.l.b16 %v8830
    %v10231 = vunpack.c.h.b16 %v8830
    %v10232 = vunpack.c.l.b16 %v8831
    %v10233 = vunpack.c.h.b16 %v8831
    %v10234 = vunpack.c.l.b16 %v8832
    %v10235 = vunpack.c.h.b16 %v8832
    %v10236 = vunpack.c.l.b16 %v8833
    %v10237 = vunpack.c.h.b16 %v8833
    %v10238 = vunpack.c.l.b16 %v8834
    %v10239 = vunpack.c.h.b16 %v8834
    %v10240 = vunpack.c.l.b16 %v8835
    %v10241 = vunpack.c.h.b16 %v8835
    %v10242 = vunpack.c.l.b16 %v8836
    %v10243 = vunpack.c.h.b16 %v8836
    %v10244 = vunpack.c.l.b16 %v8837
    %v10245 = vunpack.c.h.b16 %v8837
    %v10246 = vunpack.c.l.b16 %v8838
    %v10247 = vunpack.c.h.b16 %v8838
    %v10248 = vunpack.c.l.b16 %v8839
    %v10249 = vunpack.c.h.b16 %v8839
    %v10250 = vunpack.c.l.b16 %v8840
    %v10251 = vunpack.c.h.b16 %v8840
    %v10252 = vunpack.c.l.b16 %v8841
    %v10253 = vunpack.c.h.b16 %v8841
    %v10254 = vunpack.c.l.b16 %v8842
    %v10255 = vunpack.c.h.b16 %v8842
    %v10256 = vunpack.c.l.b16 %v8843
    %v10257 = vunpack.c.h.b16 %v8843
    %v10258 = vunpack.c.l.b16 %v8844
    %v10259 = vunpack.c.h.b16 %v8844
    %v10260 = vunpack.c.l.b16 %v8845
    %v10261 = vunpack.c.h.b16 %v8845
    %v10262 = vunpack.c.l.b16 %v8846
    %v10263 = vunpack.c.h.b16 %v8846
    %v10264 = vunpack.c.l.b16 %v8847
    %v10265 = vunpack.c.h.b16 %v8847
    %v10266 = vunpack.c.l.b16 %v8848
    %v10267 = vunpack.c.h.b16 %v8848
    %v10268 = vunpack.c.l.b16 %v8849
    %v10269 = vunpack.c.h.b16 %v8849
    %v10270 = vunpack.c.l.b16 %v8850
    %v10271 = vunpack.c.h.b16 %v8850
    %v10272 = vunpack.c.l.b16 %v8851
    %v10273 = vunpack.c.h.b16 %v8851
    %v10274 = vunpack.c.l.b16 %v8852
    %v10275 = vunpack.c.h.b16 %v8852
    %v10276 = vunpack.c.l.b16 %v8853
    %v10277 = vunpack.c.h.b16 %v8853
    %v10278 = vunpack.c.l.b16 %v8854
    %v10279 = vunpack.c.h.b16 %v8854
    %v10280 = vunpack.c.l.b16 %v8855
    %v10281 = vunpack.c.h.b16 %v8855
    %v10282 = vunpack.c.l.b16 %v8856
    %v10283 = vunpack.c.h.b16 %v8856
    %v10284 = vunpack.c.l.b16 %v8857
    %v10285 = vunpack.c.h.b16 %v8857
    %v10286 = vunpack.c.l.b16 %v8858
    %v10287 = vunpack.c.h.b16 %v8858
    %v10288 = vunpack.c.l.b16 %v8859
    %v10289 = vunpack.c.h.b16 %v8859
    %v10290 = vunpack.c.l.b16 %v8860
    %v10291 = vunpack.c.h.b16 %v8860
    %v10292 = vunpack.c.l.b16 %v8861
    %v10293 = vunpack.c.h.b16 %v8861
    %v10294 = vunpack.c.l.b16 %v8862
    %v10295 = vunpack.c.h.b16 %v8862
    %v10296 = vunpack.c.l.b16 %v8863
    %v10297 = vunpack.c.h.b16 %v8863
    %v10298 = vunpack.c.l.b16 %v8864
    %v10299 = vunpack.c.h.b16 %v8864
    %v10300 = vunpack.c.l.b16 %v8865
    %v10301 = vunpack.c.h.b16 %v8865
    %v10302 = vunpack.c.l.b16 %v8866
    %v10303 = vunpack.c.h.b16 %v8866
    %v10304 = vunpack.c.l.b16 %v8867
    %v10305 = vunpack.c.h.b16 %v8867
    %v10306 = vunpack.c.l.b16 %v8868
    %v10307 = vunpack.c.h.b16 %v8868
    %v10308 = vunpack.c.l.b16 %v8869
    %v10309 = vunpack.c.h.b16 %v8869
    %v10310 = vunpack.c.l.b16 %v8870
    %v10311 = vunpack.c.h.b16 %v8870
    %v10312 = vunpack.c.l.b16 %v8871
    %v10313 = vunpack.c.h.b16 %v8871
    %v10314 = vunpack.c.l.b16 %v8872
    %v10315 = vunpack.c.h.b16 %v8872
    %v10316 = vunpack.c.l.b16 %v8873
    %v10317 = vunpack.c.h.b16 %v8873
    %v10318 = vunpack.c.l.b16 %v8874
    %v10319 = vunpack.c.h.b16 %v8874
    %v10320 = vunpack.c.l.b16 %v8875
    %v10321 = vunpack.c.h.b16 %v8875
    %v10322 = vunpack.c.l.b16 %v8876
    %v10323 = vunpack.c.h.b16 %v8876
    %v10324 = vunpack.c.l.b16 %v8877
    %v10325 = vunpack.c.h.b16 %v8877
    %v10326 = vunpack.c.l.b16 %v8878
    %v10327 = vunpack.c.h.b16 %v8878
    %v10328 = vunpack.c.l.b16 %v8879
    %v10329 = vunpack.c.h.b16 %v8879
    %v10330 = vunpack.c.l.b16 %v8880
    %v10331 = vunpack.c.h.b16 %v8880
    %v10332 = vunpack.c.l.b16 %v8881
    %v10333 = vunpack.c.h.b16 %v8881
    %v10334 = vunpack.c.l.b16 %v8882
    %v10335 = vunpack.c.h.b16 %v8882
    %v10336 = vunpack.c.l.b16 %v8883
    %v10337 = vunpack.c.h.b16 %v8883
    %v10338 = vunpack.c.l.b16 %v8884
    %v10339 = vunpack.c.h.b16 %v8884
    %v10340 = vunpack.c.l.b16 %v8885
    %v10341 = vunpack.c.h.b16 %v8885
    %v10342 = vunpack.c.l.b16 %v8886
    %v10343 = vunpack.c.h.b16 %v8886
    %v10344 = vunpack.c.l.b16 %v8887
    %v10345 = vunpack.c.h.b16 %v8887
    %v10346 = vunpack.c.l.b16 %v8888
    %v10347 = vunpack.c.h.b16 %v8888
    %v10348 = vunpack.c.l.b16 %v8889
    %v10349 = vunpack.c.h.b16 %v8889
    %v10350 = vunpack.c.l.b16 %v8890
    %v10351 = vunpack.c.h.b16 %v8890
    %v10352 = vunpack.c.l.b16 %v8891
    %v10353 = vunpack.c.h.b16 %v8891
    %v10354 = vunpack.c.l.b16 %v8892
    %v10355 = vunpack.c.h.b16 %v8892
    %v10356 = vunpack.c.l.b16 %v8893
    %v10357 = vunpack.c.h.b16 %v8893
    %v10358 = vunpack.c.l.b16 %v8894
    %v10359 = vunpack.c.h.b16 %v8894
    %v10360 = vunpack.c.l.b16 %v8895
    %v10361 = vunpack.c.h.b16 %v8895
    %v10362 = vunpack.c.l.b16 %v8896
    %v10363 = vunpack.c.h.b16 %v8896
    %v10364 = vunpack.c.l.b16 %v8897
    %v10365 = vunpack.c.h.b16 %v8897
    %v10366 = vunpack.c.l.b16 %v8898
    %v10367 = vunpack.c.h.b16 %v8898
    %v10368 = vunpack.c.l.b16 %v8899
    %v10369 = vunpack.c.h.b16 %v8899
    %v10370 = vunpack.c.l.b16 %v8900
    %v10371 = vunpack.c.h.b16 %v8900
    %v10372 = vunpack.c.l.b16 %v8901
    %v10373 = vunpack.c.h.b16 %v8901
    %v10374 = vunpack.c.l.b16 %v8902
    %v10375 = vunpack.c.h.b16 %v8902
    %v10376 = vunpack.c.l.b16 %v8903
    %v10377 = vunpack.c.h.b16 %v8903
    %v10378 = vunpack.c.l.b16 %v8904
    %v10379 = vunpack.c.h.b16 %v8904
    %v10380 = vunpack.c.l.b16 %v8905
    %v10381 = vunpack.c.h.b16 %v8905
    %v10382 = vunpack.c.l.b16 %v8906
    %v10383 = vunpack.c.h.b16 %v8906
    %v10384 = vunpack.c.l.b16 %v8907
    %v10385 = vunpack.c.h.b16 %v8907
    %v10386 = vunpack.c.l.b16 %v8908
    %v10387 = vunpack.c.h.b16 %v8908
    %v10388 = vunpack.c.l.b16 %v8909
    %v10389 = vunpack.c.h.b16 %v8909
    %v10390 = vunpack.c.l.b16 %v8910
    %v10391 = vunpack.c.h.b16 %v8910
    %v10392 = vunpack.c.l.b16 %v8911
    %v10393 = vunpack.c.h.b16 %v8911
    %v10394 = vunpack.c.l.b16 %v8912
    %v10395 = vunpack.c.h.b16 %v8912
    %v10396 = vunpack.c.l.b16 %v8913
    %v10397 = vunpack.c.h.b16 %v8913
    %v10398 = vunpack.c.l.b16 %v8914
    %v10399 = vunpack.c.h.b16 %v8914
    %v10400 = vunpack.c.l.b16 %v8915
    %v10401 = vunpack.c.h.b16 %v8915
    %v10402 = vunpack.c.l.b16 %v8916
    %v10403 = vunpack.c.h.b16 %v8916
    %v10404 = vunpack.c.l.b16 %v8917
    %v10405 = vunpack.c.h.b16 %v8917
    %v10406 = vunpack.c.l.b16 %v8918
    %v10407 = vunpack.c.h.b16 %v8918
    %v10408 = vunpack.c.l.b16 %v8919
    %v10409 = vunpack.c.h.b16 %v8919
    %v10410 = vunpack.c.l.b16 %v8920
    %v10411 = vunpack.c.h.b16 %v8920
    %v10412 = vunpack.c.l.b16 %v8921
    %v10413 = vunpack.c.h.b16 %v8921
    %v10414 = vunpack.c.l.b16 %v8922
    %v10415 = vunpack.c.h.b16 %v8922
    %v10416 = vunpack.c.l.b16 %v8923
    %v10417 = vunpack.c.h.b16 %v8923
    %v10418 = vunpack.c.l.b16 %v8924
    %v10419 = vunpack.c.h.b16 %v8924
    %v10420 = vunpack.c.l.b16 %v8925
    %v10421 = vunpack.c.h.b16 %v8925
    %v10422 = vunpack.c.l.b16 %v8926
    %v10423 = vunpack.c.h.b16 %v8926
    %v10424 = vunpack.c.l.b16 %v8927
    %v10425 = vunpack.c.h.b16 %v8927
    %v10426 = vunpack.c.l.b16 %v8928
    %v10427 = vunpack.c.h.b16 %v8928
    %v10428 = vunpack.c.l.b16 %v8929
    %v10429 = vunpack.c.h.b16 %v8929
    %v10430 = vunpack.c.l.b16 %v8930
    %v10431 = vunpack.c.h.b16 %v8930
    %v10432 = vunpack.c.l.b16 %v8931
    %v10433 = vunpack.c.h.b16 %v8931
    %v10434 = vunpack.c.l.b16 %v8932
    %v10435 = vunpack.c.h.b16 %v8932
    %v10436 = vunpack.c.l.b16 %v8933
    %v10437 = vunpack.c.h.b16 %v8933
    %v10438 = vunpack.c.l.b16 %v8934
    %v10439 = vunpack.c.h.b16 %v8934
    %v10440 = vunpack.c.l.b16 %v8935
    %v10441 = vunpack.c.h.b16 %v8935
    %v10442 = vunpack.c.l.b16 %v8936
    %v10443 = vunpack.c.h.b16 %v8936
    %v10444 = vunpack.c.l.b16 %v8937
    %v10445 = vunpack.c.h.b16 %v8937
    %v10446 = vunpack.c.l.b16 %v8938
    %v10447 = vunpack.c.h.b16 %v8938
    %v10448 = vunpack.c.l.b16 %v8939
    %v10449 = vunpack.c.h.b16 %v8939
    %v10450 = vunpack.c.l.b16 %v8940
    %v10451 = vunpack.c.h.b16 %v8940
    %v10452 = vunpack.c.l.b16 %v8941
    %v10453 = vunpack.c.h.b16 %v8941
    %v10454 = vunpack.c.l.b16 %v8942
    %v10455 = vunpack.c.h.b16 %v8942
    %v10456 = vunpack.c.l.b16 %v8943
    %v10457 = vunpack.c.h.b16 %v8943
    %v10458 = vunpack.c.l.b16 %v8944
    %v10459 = vunpack.c.h.b16 %v8944
    %v10460 = vunpack.c.l.b16 %v8945
    %v10461 = vunpack.c.h.b16 %v8945
    %v10462 = vunpack.c.l.b16 %v8946
    %v10463 = vunpack.c.h.b16 %v8946
    %v10464 = vunpack.c.l.b16 %v8947
    %v10465 = vunpack.c.h.b16 %v8947
    %v10466 = vunpack.c.l.b16 %v8948
    %v10467 = vunpack.c.h.b16 %v8948
    %v10468 = vunpack.c.l.b16 %v8949
    %v10469 = vunpack.c.h.b16 %v8949
    %v10470 = vunpack.c.l.b16 %v8950
    %v10471 = vunpack.c.h.b16 %v8950
    %v10472 = vunpack.c.l.b16 %v8951
    %v10473 = vunpack.c.h.b16 %v8951
    %v10474 = vunpack.c.l.b16 %v8952
    %v10475 = vunpack.c.h.b16 %v8952
    %v10476 = vunpack.c.l.b16 %v8953
    %v10477 = vunpack.c.h.b16 %v8953
    %v10478 = vunpack.c.l.b16 %v8954
    %v10479 = vunpack.c.h.b16 %v8954
    %v10480 = vunpack.c.l.b16 %v8955
    %v10481 = vunpack.c.h.b16 %v8955
    %v10482 = vunpack.c.l.b16 %v8956
    %v10483 = vunpack.c.h.b16 %v8956
    %v10484 = vunpack.c.l.b16 %v8957
    %v10485 = vunpack.c.h.b16 %v8957
    %v10486 = vunpack.c.l.b16 %v8958
    %v10487 = vunpack.c.h.b16 %v8958
    %v10488 = vunpack.c.l.b16 %v8959
    %v10489 = vunpack.c.h.b16 %v8959
    %v10490 = vunpack.c.l.b16 %v8960
    %v10491 = vunpack.c.h.b16 %v8960
    %v10492 = vunpack.c.l.b16 %v8961
    %v10493 = vunpack.c.h.b16 %v8961
    %v10494 = vunpack.c.l.b16 %v8962
    %v10495 = vunpack.c.h.b16 %v8962
    %v10496 = vunpack.c.l.b16 %v8963
    %v10497 = vunpack.c.h.b16 %v8963
    %v10498 = vunpack.c.l.b16 %v8964
    %v10499 = vunpack.c.h.b16 %v8964
    %v10500 = vunpack.c.l.b16 %v8965
    %v10501 = vunpack.c.h.b16 %v8965
    %v10502 = vunpack.c.l.b16 %v8966
    %v10503 = vunpack.c.h.b16 %v8966
    %v10504 = vunpack.c.l.b16 %v8967
    %v10505 = vunpack.c.h.b16 %v8967
    %v10506 = vunpack.c.l.b16 %v8968
    %v10507 = vunpack.c.h.b16 %v8968
    %v10508 = vunpack.c.l.b16 %v8969
    %v10509 = vunpack.c.h.b16 %v8969
    %v10510 = vunpack.c.l.b16 %v8970
    %v10511 = vunpack.c.h.b16 %v8970
    %v10512 = vunpack.c.l.b16 %v8971
    %v10513 = vunpack.c.h.b16 %v8971
    %v10514 = vunpack.c.l.b16 %v8972
    %v10515 = vunpack.c.h.b16 %v8972
    %v10516 = vunpack.c.l.b16 %v8973
    %v10517 = vunpack.c.h.b16 %v8973
    %v10518 = vunpack.c.l.b16 %v8974
    %v10519 = vunpack.c.h.b16 %v8974
    %v10520 = vunpack.c.l.b16 %v8975
    %v10521 = vunpack.c.h.b16 %v8975
    %v10522 = vunpack.c.l.b16 %v8976
    %v10523 = vunpack.c.h.b16 %v8976
    %v10524 = vunpack.c.l.b16 %v8977
    %v10525 = vunpack.c.h.b16 %v8977
    %v10526 = vunpack.c.l.b16 %v8978
    %v10527 = vunpack.c.h.b16 %v8978
    %v10528 = vunpack.c.l.b16 %v8979
    %v10529 = vunpack.c.h.b16 %v8979
    %v10530 = vunpack.c.l.b16 %v8980
    %v10531 = vunpack.c.h.b16 %v8980
    %v10532 = vunpack.c.l.b16 %v8981
    %v10533 = vunpack.c.h.b16 %v8981
    %v10534 = vunpack.c.l.b16 %v8982
    %v10535 = vunpack.c.h.b16 %v8982
    %v10536 = vunpack.c.l.b16 %v8983
    %v10537 = vunpack.c.h.b16 %v8983
    %v10538 = vunpack.c.l.b16 %v8984
    %v10539 = vunpack.c.h.b16 %v8984
    %v10540 = vunpack.c.l.b16 %v8985
    %v10541 = vunpack.c.h.b16 %v8985
    %v10542 = vunpack.c.l.b16 %v8986
    %v10543 = vunpack.c.h.b16 %v8986
    %v10544 = vunpack.c.l.b16 %v8987
    %v10545 = vunpack.c.h.b16 %v8987
    %v10546 = vunpack.c.l.b16 %v8988
    %v10547 = vunpack.c.h.b16 %v8988
    %v10548 = vunpack.c.l.b16 %v8989
    %v10549 = vunpack.c.h.b16 %v8989
    %v10550 = vunpack.c.l.b16 %v8990
    %v10551 = vunpack.c.h.b16 %v8990
    %v10552 = vunpack.c.l.b16 %v8991
    %v10553 = vunpack.c.h.b16 %v8991
    %v10554 = vunpack.c.l.b16 %v8992
    %v10555 = vunpack.c.h.b16 %v8992
    %v10556 = vunpack.c.l.b16 %v8993
    %v10557 = vunpack.c.h.b16 %v8993
    %v10558 = vunpack.c.l.b16 %v8994
    %v10559 = vunpack.c.h.b16 %v8994
    %v10560 = vunpack.c.l.b16 %v8995
    %v10561 = vunpack.c.h.b16 %v8995
    %v10562 = vunpack.c.l.b16 %v8996
    %v10563 = vunpack.c.h.b16 %v8996
    %v10564 = vunpack.c.l.b16 %v8997
    %v10565 = vunpack.c.h.b16 %v8997
    %v10566 = vunpack.c.l.b16 %v8998
    %v10567 = vunpack.c.h.b16 %v8998
    %v10568 = vunpack.c.l.b16 %v8999
    %v10569 = vunpack.c.h.b16 %v8999
    %v10570 = vunpack.c.l.b16 %v9000
    %v10571 = vunpack.c.h.b16 %v9000
    %v10572 = vunpack.c.l.b16 %v9001
    %v10573 = vunpack.c.h.b16 %v9001
    %v10574 = vunpack.c.l.b16 %v9002
    %v10575 = vunpack.c.h.b16 %v9002
    %v10576 = vunpack.c.l.b16 %v9003
    %v10577 = vunpack.c.h.b16 %v9003
    %v10578 = vunpack.c.l.b16 %v9004
    %v10579 = vunpack.c.h.b16 %v9004
    %v10580 = vunpack.c.l.b16 %v9005
    %v10581 = vunpack.c.h.b16 %v9005
    %v10582 = vunpack.c.l.b16 %v9006
    %v10583 = vunpack.c.h.b16 %v9006
    %v10584 = vunpack.c.l.b16 %v9007
    %v10585 = vunpack.c.h.b16 %v9007
    %v10586 = vunpack.c.l.b16 %v9008
    %v10587 = vunpack.c.h.b16 %v9008
    %v10588 = vunpack.c.l.b16 %v9009
    %v10589 = vunpack.c.h.b16 %v9009
    %v10590 = vunpack.c.l.b16 %v9010
    %v10591 = vunpack.c.h.b16 %v9010
    %v10592 = vunpack.c.l.b16 %v9011
    %v10593 = vunpack.c.h.b16 %v9011
    %v10594 = vunpack.c.l.b16 %v9012
    %v10595 = vunpack.c.h.b16 %v9012
    %v10596 = vunpack.c.l.b16 %v9013
    %v10597 = vunpack.c.h.b16 %v9013
    %v10598 = vunpack.c.l.b16 %v9014
    %v10599 = vunpack.c.h.b16 %v9014
    %v10600 = vunpack.c.l.b16 %v9015
    %v10601 = vunpack.c.h.b16 %v9015
    %v10602 = vunpack.c.l.b16 %v9016
    %v10603 = vunpack.c.h.b16 %v9016
    %v10604 = vunpack.c.l.b16 %v9017
    %v10605 = vunpack.c.h.b16 %v9017
    %v10606 = vunpack.c.l.b16 %v9018
    %v10607 = vunpack.c.h.b16 %v9018
    %v10608 = vunpack.c.l.b16 %v9019
    %v10609 = vunpack.c.h.b16 %v9019
    %v10610 = vunpack.c.l.b16 %v9020
    %v10611 = vunpack.c.h.b16 %v9020
    %v10612 = vunpack.c.l.b16 %v9021
    %v10613 = vunpack.c.h.b16 %v9021
    %v10614 = vunpack.c.l.b16 %v9022
    %v10615 = vunpack.c.h.b16 %v9022
    %v10616 = vunpack.c.l.b16 %v9023
    %v10617 = vunpack.c.h.b16 %v9023
    %v10618 = vunpack.c.l.b16 %v9024
    %v10619 = vunpack.c.h.b16 %v9024
    %v10620 = vunpack.c.l.b16 %v9025
    %v10621 = vunpack.c.h.b16 %v9025
    %v10622 = vunpack.c.l.b16 %v9026
    %v10623 = vunpack.c.h.b16 %v9026
    %v10624 = vunpack.c.l.b16 %v9027
    %v10625 = vunpack.c.h.b16 %v9027
    %v10626 = vunpack.c.l.b16 %v9028
    %v10627 = vunpack.c.h.b16 %v9028
    %v10628 = vunpack.c.l.b16 %v9029
    %v10629 = vunpack.c.h.b16 %v9029
    %v10630 = vunpack.c.l.b16 %v9030
    %v10631 = vunpack.c.h.b16 %v9030
    %v10632 = vunpack.c.l.b16 %v9031
    %v10633 = vunpack.c.h.b16 %v9031
    %v10634 = vunpack.c.l.b16 %v9032
    %v10635 = vunpack.c.h.b16 %v9032
    %v10636 = vunpack.c.l.b16 %v9033
    %v10637 = vunpack.c.h.b16 %v9033
    %v10638 = vunpack.c.l.b16 %v9034
    %v10639 = vunpack.c.h.b16 %v9034
    %v10640 = vunpack.c.l.b16 %v9035
    %v10641 = vunpack.c.h.b16 %v9035
    %v10642 = vunpack.c.l.b16 %v9036
    %v10643 = vunpack.c.h.b16 %v9036
    %v10644 = vunpack.c.l.b16 %v9037
    %v10645 = vunpack.c.h.b16 %v9037
    %v10646 = vunpack.c.l.b16 %v9038
    %v10647 = vunpack.c.h.b16 %v9038
    %v10648 = vunpack.c.l.b16 %v9039
    %v10649 = vunpack.c.h.b16 %v9039
    %v10650 = vunpack.c.l.b16 %v9040
    %v10651 = vunpack.c.h.b16 %v9040
    %v10652 = vunpack.c.l.b16 %v9041
    %v10653 = vunpack.c.h.b16 %v9041
    %v10654 = vunpack.c.l.b16 %v9042
    %v10655 = vunpack.c.h.b16 %v9042
    %v10656 = vunpack.c.l.b16 %v9043
    %v10657 = vunpack.c.h.b16 %v9043
    %v10658 = vunpack.c.l.b16 %v9044
    %v10659 = vunpack.c.h.b16 %v9044
    %v10660 = vunpack.c.l.b16 %v9045
    %v10661 = vunpack.c.h.b16 %v9045
    %v10662 = vunpack.c.l.b16 %v9046
    %v10663 = vunpack.c.h.b16 %v9046
    %v10664 = vunpack.c.l.b16 %v9047
    %v10665 = vunpack.c.h.b16 %v9047
    %v10666 = vunpack.c.l.b16 %v9048
    %v10667 = vunpack.c.h.b16 %v9048
    %v10668 = vunpack.c.l.b16 %v9049
    %v10669 = vunpack.c.h.b16 %v9049
    %v10670 = vunpack.c.l.b16 %v9050
    %v10671 = vunpack.c.h.b16 %v9050
    %v10672 = vunpack.c.l.b16 %v9051
    %v10673 = vunpack.c.h.b16 %v9051
    %v10674 = vunpack.c.l.b16 %v9052
    %v10675 = vunpack.c.h.b16 %v9052
    %v10676 = vunpack.c.l.b16 %v9053
    %v10677 = vunpack.c.h.b16 %v9053
    %v10678 = vunpack.c.l.b16 %v9054
    %v10679 = vunpack.c.h.b16 %v9054
    %v10680 = vunpack.c.l.b16 %v9055
    %v10681 = vunpack.c.h.b16 %v9055
    %v10682 = vunpack.c.l.b16 %v9056
    %v10683 = vunpack.c.h.b16 %v9056
    %v10684 = vunpack.c.l.b16 %v9057
    %v10685 = vunpack.c.h.b16 %v9057
    %v10686 = vunpack.c.l.b16 %v9058
    %v10687 = vunpack.c.h.b16 %v9058
    %v10688 = vunpack.c.l.b16 %v9059
    %v10689 = vunpack.c.h.b16 %v9059
    %v10690 = vunpack.c.l.b16 %v9060
    %v10691 = vunpack.c.h.b16 %v9060
    %v10692 = vunpack.c.l.b16 %v9061
    %v10693 = vunpack.c.h.b16 %v9061
    %v10694 = vunpack.c.l.b16 %v9062
    %v10695 = vunpack.c.h.b16 %v9062
    %v10696 = vunpack.c.l.b16 %v9063
    %v10697 = vunpack.c.h.b16 %v9063
    %v10698 = vunpack.c.l.b16 %v9064
    %v10699 = vunpack.c.h.b16 %v9064
    %v10700 = vunpack.c.l.b16 %v9065
    %v10701 = vunpack.c.h.b16 %v9065
    %v10702 = vunpack.c.l.b16 %v9066
    %v10703 = vunpack.c.h.b16 %v9066
    %v10704 = vunpack.c.l.b16 %v9067
    %v10705 = vunpack.c.h.b16 %v9067
    %v10706 = vunpack.c.l.b16 %v9068
    %v10707 = vunpack.c.h.b16 %v9068
    %v10708 = vunpack.c.l.b16 %v9069
    %v10709 = vunpack.c.h.b16 %v9069
    %v10710 = vunpack.c.l.b16 %v9070
    %v10711 = vunpack.c.h.b16 %v9070
    %v10712 = vunpack.c.l.b16 %v9071
    %v10713 = vunpack.c.h.b16 %v9071
    %v10714 = vunpack.c.l.b16 %v9072
    %v10715 = vunpack.c.h.b16 %v9072
    %v10716 = vunpack.c.l.b16 %v9073
    %v10717 = vunpack.c.h.b16 %v9073
    %v10718 = vunpack.c.l.b16 %v9074
    %v10719 = vunpack.c.h.b16 %v9074
    %v10720 = vunpack.c.l.b16 %v9075
    %v10721 = vunpack.c.h.b16 %v9075
    %v10722 = vunpack.c.l.b16 %v9076
    %v10723 = vunpack.c.h.b16 %v9076
    %v10724 = vunpack.c.l.b16 %v9077
    %v10725 = vunpack.c.h.b16 %v9077
    %v10726 = vunpack.c.l.b16 %v9078
    %v10727 = vunpack.c.h.b16 %v9078
    %v10728 = vunpack.c.l.b16 %v9079
    %v10729 = vunpack.c.h.b16 %v9079
    %v10730 = vunpack.c.l.b16 %v9080
    %v10731 = vunpack.c.h.b16 %v9080
    %v10732 = vunpack.c.l.b16 %v9081
    %v10733 = vunpack.c.h.b16 %v9081
    %v10734 = vunpack.c.l.b16 %v9082
    %v10735 = vunpack.c.h.b16 %v9082
    %v10736 = vunpack.c.l.b16 %v9083
    %v10737 = vunpack.c.h.b16 %v9083
    %v10738 = vunpack.c.l.b16 %v9084
    %v10739 = vunpack.c.h.b16 %v9084
    %v10740 = vunpack.c.l.b16 %v9085
    %v10741 = vunpack.c.h.b16 %v9085
    %v10742 = vunpack.c.l.b16 %v9086
    %v10743 = vunpack.c.h.b16 %v9086
    %v10744 = vunpack.c.l.b16 %v9087
    %v10745 = vunpack.c.h.b16 %v9087
    %v10746 = vunpack.c.l.b16 %v9088
    %v10747 = vunpack.c.h.b16 %v9088
    %v10748 = vunpack.c.l.b16 %v9089
    %v10749 = vunpack.c.h.b16 %v9089
    %v10750 = vunpack.c.l.b16 %v9090
    %v10751 = vunpack.c.h.b16 %v9090
    %v10752 = vunpack.c.l.b16 %v9091
    %v10753 = vunpack.c.h.b16 %v9091
    %v10754 = vunpack.c.l.b16 %v9092
    %v10755 = vunpack.c.h.b16 %v9092
    %v10756 = vunpack.c.l.b16 %v9093
    %v10757 = vunpack.c.h.b16 %v9093
    %v10758 = vunpack.c.l.b16 %v9094
    %v10759 = vunpack.c.h.b16 %v9094
    %v10760 = vunpack.c.l.b16 %v9095
    %v10761 = vunpack.c.h.b16 %v9095
    %v10762 = vunpack.c.l.b16 %v9096
    %v10763 = vunpack.c.h.b16 %v9096
    %v10764 = vunpack.c.l.b16 %v9097
    %v10765 = vunpack.c.h.b16 %v9097
    %v10766 = vunpack.c.l.b16 %v9098
    %v10767 = vunpack.c.h.b16 %v9098
    %v10768 = vunpack.c.l.b16 %v9099
    %v10769 = vunpack.c.h.b16 %v9099
    %v10770 = vunpack.c.l.b16 %v9100
    %v10771 = vunpack.c.h.b16 %v9100
    %v10772 = vunpack.c.l.b16 %v9101
    %v10773 = vunpack.c.h.b16 %v9101
    %v10774 = vunpack.c.l.b16 %v9102
    %v10775 = vunpack.c.h.b16 %v9102
    %v10776 = vunpack.c.l.b16 %v9103
    %v10777 = vunpack.c.h.b16 %v9103
    %v10778 = vunpack.c.l.b16 %v9104
    %v10779 = vunpack.c.h.b16 %v9104
    %v10780 = vunpack.c.l.b16 %v9105
    %v10781 = vunpack.c.h.b16 %v9105
    %v10782 = vunpack.c.l.b16 %v9106
    %v10783 = vunpack.c.h.b16 %v9106
    %v10784 = vunpack.c.l.b16 %v9107
    %v10785 = vunpack.c.h.b16 %v9107
    %v10786 = vunpack.c.l.b16 %v9108
    %v10787 = vunpack.c.h.b16 %v9108
    %v10788 = vunpack.c.l.b16 %v9109
    %v10789 = vunpack.c.h.b16 %v9109
    %v10790 = vunpack.c.l.b16 %v9110
    %v10791 = vunpack.c.h.b16 %v9110
    %v10792 = vunpack.c.l.b16 %v9111
    %v10793 = vunpack.c.h.b16 %v9111
    %v10794 = vunpack.c.l.b16 %v9112
    %v10795 = vunpack.c.h.b16 %v9112
    %v10796 = vunpack.c.l.b16 %v9113
    %v10797 = vunpack.c.h.b16 %v9113
    %v10798 = vunpack.c.l.b16 %v9114
    %v10799 = vunpack.c.h.b16 %v9114
    %v10800 = vunpack.c.l.b16 %v9115
    %v10801 = vunpack.c.h.b16 %v9115
    %v10802 = vunpack.c.l.b16 %v9116
    %v10803 = vunpack.c.h.b16 %v9116
    %v10804 = vunpack.c.l.b16 %v9117
    %v10805 = vunpack.c.h.b16 %v9117
    %v10806 = vunpack.c.l.b16 %v9118
    %v10807 = vunpack.c.h.b16 %v9118
    %v10808 = vunpack.c.l.b16 %v9119
    %v10809 = vunpack.c.h.b16 %v9119
    %v10810 = vunpack.c.l.b16 %v9120
    %v10811 = vunpack.c.h.b16 %v9120
    %v10812 = vunpack.c.l.b16 %v9121
    %v10813 = vunpack.c.h.b16 %v9121
    %v10814 = vunpack.c.l.b16 %v9122
    %v10815 = vunpack.c.h.b16 %v9122
    %v10816 = vunpack.c.l.b16 %v9123
    %v10817 = vunpack.c.h.b16 %v9123
    %v10818 = vunpack.c.l.b16 %v9124
    %v10819 = vunpack.c.h.b16 %v9124
    %v10820 = vunpack.c.l.b16 %v9125
    %v10821 = vunpack.c.h.b16 %v9125
    %v10822 = vunpack.c.l.b16 %v9126
    %v10823 = vunpack.c.h.b16 %v9126
    %v10824 = vunpack.c.l.b16 %v9127
    %v10825 = vunpack.c.h.b16 %v9127
    %v10826 = vunpack.c.l.b16 %v9128
    %v10827 = vunpack.c.h.b16 %v9128
    %v10828 = vunpack.c.l.b16 %v9129
    %v10829 = vunpack.c.h.b16 %v9129
    %v10830 = vunpack.c.l.b16 %v9130
    %v10831 = vunpack.c.h.b16 %v9130
    %v10832 = vunpack.c.l.b16 %v9131
    %v10833 = vunpack.c.h.b16 %v9131
    %v10834 = vunpack.c.l.b16 %v9132
    %v10835 = vunpack.c.h.b16 %v9132
    %v10836 = vunpack.c.l.b16 %v9133
    %v10837 = vunpack.c.h.b16 %v9133
    %v10838 = vunpack.c.l.b16 %v9134
    %v10839 = vunpack.c.h.b16 %v9134
    %v10840 = vunpack.c.l.b16 %v9135
    %v10841 = vunpack.c.h.b16 %v9135
    %v10842 = vunpack.c.l.b16 %v9136
    %v10843 = vunpack.c.h.b16 %v9136
    %v10844 = vunpack.c.l.b16 %v9137
    %v10845 = vunpack.c.h.b16 %v9137
    %v10846 = vunpack.c.l.b16 %v9138
    %v10847 = vunpack.c.h.b16 %v9138
    %v10848 = vunpack.c.l.b16 %v9139
    %v10849 = vunpack.c.h.b16 %v9139
    %v10850 = vunpack.c.l.b16 %v9140
    %v10851 = vunpack.c.h.b16 %v9140
    %v10852 = vunpack.c.l.b16 %v9141
    %v10853 = vunpack.c.h.b16 %v9141
    %v10854 = vunpack.c.l.b16 %v9142
    %v10855 = vunpack.c.h.b16 %v9142
    %v10856 = vunpack.c.l.b16 %v9143
    %v10857 = vunpack.c.h.b16 %v9143
    %v10858 = vunpack.c.l.b16 %v9144
    %v10859 = vunpack.c.h.b16 %v9144
    %v10860 = vunpack.c.l.b16 %v9145
    %v10861 = vunpack.c.h.b16 %v9145
    %v10862 = vunpack.c.l.b16 %v9146
    %v10863 = vunpack.c.h.b16 %v9146
    %v10864 = vunpack.c.l.b16 %v9147
    %v10865 = vunpack.c.h.b16 %v9147
    %v10866 = vunpack.c.l.b16 %v9148
    %v10867 = vunpack.c.h.b16 %v9148
    %v10868 = vunpack.c.l.b16 %v9149
    %v10869 = vunpack.c.h.b16 %v9149
    %v10870 = vunpack.c.l.b16 %v9150
    %v10871 = vunpack.c.h.b16 %v9150
    %v10872 = vunpack.c.l.b16 %v9151
    %v10873 = vunpack.c.h.b16 %v9151
    %v10874 = vunpack.c.l.b16 %v9152
    %v10875 = vunpack.c.h.b16 %v9152
    %v10876 = vunpack.c.l.b16 %v9153
    %v10877 = vunpack.c.h.b16 %v9153
    %v10878 = vunpack.c.l.b16 %v9154
    %v10879 = vunpack.c.h.b16 %v9154
    %v10880 = vunpack.c.l.b16 %v9155
    %v10881 = vunpack.c.h.b16 %v9155
    %v10882 = vunpack.c.l.b16 %v9156
    %v10883 = vunpack.c.h.b16 %v9156
    %v10884 = vunpack.c.l.b16 %v9157
    %v10885 = vunpack.c.h.b16 %v9157
    %v10886 = vunpack.c.l.b16 %v9158
    %v10887 = vunpack.c.h.b16 %v9158
    %v10888 = vunpack.c.l.b16 %v9159
    %v10889 = vunpack.c.h.b16 %v9159
    %v10890 = vunpack.c.l.b16 %v9160
    %v10891 = vunpack.c.h.b16 %v9160
    %v10892 = vunpack.c.l.b16 %v9161
    %v10893 = vunpack.c.h.b16 %v9161
    %v10894 = vunpack.c.l.b16 %v9162
    %v10895 = vunpack.c.h.b16 %v9162
    %v10896 = vunpack.c.l.b16 %v9163
    %v10897 = vunpack.c.h.b16 %v9163
    %v10898 = vunpack.c.l.b16 %v9164
    %v10899 = vunpack.c.h.b16 %v9164
    %v10900 = vunpack.c.l.b16 %v9165
    %v10901 = vunpack.c.h.b16 %v9165
    %v10902 = vunpack.c.l.b16 %v9166
    %v10903 = vunpack.c.h.b16 %v9166
    %v10904 = vunpack.c.l.b16 %v9167
    %v10905 = vunpack.c.h.b16 %v9167
    %v10906 = vunpack.c.l.b16 %v9168
    %v10907 = vunpack.c.h.b16 %v9168
    %v10908 = vunpack.c.l.b16 %v9169
    %v10909 = vunpack.c.h.b16 %v9169
    %v10910 = vunpack.c.l.b16 %v9170
    %v10911 = vunpack.c.h.b16 %v9170
    %v10912 = vunpack.c.l.b16 %v9171
    %v10913 = vunpack.c.h.b16 %v9171
    %v10914 = vpack.c.b16 %v9768, %v9762
    %v10915 = vpack.c.b16 %v9769, %v9763
    %v10916 = vpack.c.b16 %v9770, %v9764
    %v10917 = vpack.c.b16 %v9771, %v9765
    %v10918 = vpack.c.b16 %v9772, %v9766
    %v10919 = vpack.c.b16 %v9773, %v9767
    %v10920 = vpack.c.b16 %v9780, %v9774
    %v10921 = vpack.c.b16 %v9781, %v9775
    %v10922 = vpack.c.b16 %v9782, %v9776
    %v10923 = vpack.c.b16 %v9783, %v9777
    %v10924 = vpack.c.b16 %v9784, %v9778
    %v10925 = vpack.c.b16 %v9785, %v9779
    %v10926 = vpack.c.b16 %v9792, %v9786
    %v10927 = vpack.c.b16 %v9793, %v9787
    %v10928 = vpack.c.b16 %v9794, %v9788
    %v10929 = vpack.c.b16 %v9795, %v9789
    %v10930 = vpack.c.b16 %v9796, %v9790
    %v10931 = vpack.c.b16 %v9797, %v9791
    %v10932 = vpack.c.b16 %v9804, %v9798
    %v10933 = vpack.c.b16 %v9805, %v9799
    %v10934 = vpack.c.b16 %v9806, %v9800
    %v10935 = vpack.c.b16 %v9807, %v9801
    %v10936 = vpack.c.b16 %v9808, %v9802
    %v10937 = vpack.c.b16 %v9809, %v9803
    %v10938 = vpack.c.b16 %v9816, %v9810
    %v10939 = vpack.c.b16 %v9817, %v9811
    %v10940 = vpack.c.b16 %v9818, %v9812
    %v10941 = vpack.c.b16 %v9819, %v9813
    %v10942 = vpack.c.b16 %v9820, %v9814
    %v10943 = vpack.c.b16 %v9821, %v9815
    %v10944 = vpack.c.b16 %v9828, %v9822
    %v10945 = vpack.c.b16 %v9829, %v9823
    %v10946 = vpack.c.b16 %v9830, %v9824
    %v10947 = vpack.c.b16 %v9831, %v9825
    %v10948 = vpack.c.b16 %v9832, %v9826
    %v10949 = vpack.c.b16 %v9833, %v9827
    %v10950 = vpack.c.b16 %v9840, %v9834
    %v10951 = vpack.c.b16 %v9841, %v9835
    %v10952 = vpack.c.b16 %v9842, %v9836
    %v10953 = vpack.c.b16 %v9843, %v9837
    %v10954 = vpack.c.b16 %v9844, %v9838
    %v10955 = vpack.c.b16 %v9845, %v9839
    %v10956 = vpack.c.b16 %v9852, %v9846
    %v10957 = vpack.c.b16 %v9853, %v9847
    %v10958 = vpack.c.b16 %v9854, %v9848
    %v10959 = vpack.c.b16 %v9855, %v9849
    %v10960 = vpack.c.b16 %v9856, %v9850
    %v10961 = vpack.c.b16 %v9857, %v9851
    %v10962 = vpack.c.b16 %v9864, %v9858
    %v10963 = vpack.c.b16 %v9865, %v9859
    %v10964 = vpack.c.b16 %v9866, %v9860
    %v10965 = vpack.c.b16 %v9867, %v9861
    %v10966 = vpack.c.b16 %v9868, %v9862
    %v10967 = vpack.c.b16 %v9869, %v9863
    %v10968 = vpack.c.b16 %v9876, %v9870
    %v10969 = vpack.c.b16 %v9877, %v9871
    %v10970 = vpack.c.b16 %v9878, %v9872
    %v10971 = vpack.c.b16 %v9879, %v9873
    %v10972 = vpack.c.b16 %v9880, %v9874
    %v10973 = vpack.c.b16 %v9881, %v9875
    %v10974 = vpack.c.b16 %v9888, %v9882
    %v10975 = vpack.c.b16 %v9889, %v9883
    %v10976 = vpack.c.b16 %v9890, %v9884
    %v10977 = vpack.c.b16 %v9891, %v9885
    %v10978 = vpack.c.b16 %v9892, %v9886
    %v10979 = vpack.c.b16 %v9893, %v9887
    %v10980 = vpack.c.b16 %v9900, %v9894
    %v10981 = vpack.c.b16 %v9901, %v9895
    %v10982 = vpack.c.b16 %v9902, %v9896
    %v10983 = vpack.c.b16 %v9903, %v9897
    %v10984 = vpack.c.b16 %v9904, %v9898
    %v10985 = vpack.c.b16 %v9905, %v9899
    %v10986 = vpack.c.b16 %v9912, %v9906
    %v10987 = vpack.c.b16 %v9913, %v9907
    %v10988 = vpack.c.b16 %v9914, %v9908
    %v10989 = vpack.c.b16 %v9915, %v9909
    %v10990 = vpack.c.b16 %v9916, %v9910
    %v10991 = vpack.c.b16 %v9917, %v9911
    %v10992 = vpack.c.b16 %v9924, %v9918
    %v10993 = vpack.c.b16 %v9925, %v9919
    %v10994 = vpack.c.b16 %v9926, %v9920
    %v10995 = vpack.c.b16 %v9927, %v9921
    %v10996 = vpack.c.b16 %v9928, %v9922
    %v10997 = vpack.c.b16 %v9929, %v9923
    %v10998 = vpack.c.b16 %v9936, %v9930
    %v10999 = vpack.c.b16 %v9937, %v9931
    %v11000 = vpack.c.b16 %v9938, %v9932
    %v11001 = vpack.c.b16 %v9939, %v9933
    %v11002 = vpack.c.b16 %v9940, %v9934
    %v11003 = vpack.c.b16 %v9941, %v9935
    %v11004 = vpack.c.b16 %v9948, %v9942
    %v11005 = vpack.c.b16 %v9949, %v9943
    %v11006 = vpack.c.b16 %v9950, %v9944
    %v11007 = vpack.c.b16 %v9951, %v9945
    %v11008 = vpack.c.b16 %v9952, %v9946
    %v11009 = vpack.c.b16 %v9953, %v9947
    %v11010 = vpack.c.b16 %v9960, %v9954
    %v11011 = vpack.c.b16 %v9961, %v9955
    %v11012 = vpack.c.b16 %v9962, %v9956
    %v11013 = vpack.c.b16 %v9963, %v9957
    %v11014 = vpack.c.b16 %v9964, %v9958
    %v11015 = vpack.c.b16 %v9965, %v9959
    %v11016 = vpack.c.b16 %v9972, %v9966
    %v11017 = vpack.c.b16 %v9973, %v9967
    %v11018 = vpack.c.b16 %v9974, %v9968
    %v11019 = vpack.c.b16 %v9975, %v9969
    %v11020 = vpack.c.b16 %v9976, %v9970
    %v11021 = vpack.c.b16 %v9977, %v9971
    %v11022 = vpack.c.b16 %v9984, %v9978
    %v11023 = vpack.c.b16 %v9985, %v9979
    %v11024 = vpack.c.b16 %v9986, %v9980
    %v11025 = vpack.c.b16 %v9987, %v9981
    %v11026 = vpack.c.b16 %v9988, %v9982
    %v11027 = vpack.c.b16 %v9989, %v9983
    %v11028 = vpack.c.b16 %v9996, %v9990
    %v11029 = vpack.c.b16 %v9997, %v9991
    %v11030 = vpack.c.b16 %v9998, %v9992
    %v11031 = vpack.c.b16 %v9999, %v9993
    %v11032 = vpack.c.b16 %v10000, %v9994
    %v11033 = vpack.c.b16 %v10001, %v9995
    %v11034 = vpack.c.b16 %v10008, %v10002
    %v11035 = vpack.c.b16 %v10009, %v10003
    %v11036 = vpack.c.b16 %v10010, %v10004
    %v11037 = vpack.c.b16 %v10011, %v10005
    %v11038 = vpack.c.b16 %v10012, %v10006
    %v11039 = vpack.c.b16 %v10013, %v10007
    %v11040 = vpack.c.b16 %v10020, %v10014
    %v11041 = vpack.c.b16 %v10021, %v10015
    %v11042 = vpack.c.b16 %v10022, %v10016
    %v11043 = vpack.c.b16 %v10023, %v10017
    %v11044 = vpack.c.b16 %v10024, %v10018
    %v11045 = vpack.c.b16 %v10025, %v10019
    %v11046 = vpack.c.b16 %v10032, %v10026
    %v11047 = vpack.c.b16 %v10033, %v10027
    %v11048 = vpack.c.b16 %v10034, %v10028
    %v11049 = vpack.c.b16 %v10035, %v10029
    %v11050 = vpack.c.b16 %v10036, %v10030
    %v11051 = vpack.c.b16 %v10037, %v10031
    %v11052 = vpack.c.b16 %v10044, %v10038
    %v11053 = vpack.c.b16 %v10045, %v10039
    %v11054 = vpack.c.b16 %v10046, %v10040
    %v11055 = vpack.c.b16 %v10047, %v10041
    %v11056 = vpack.c.b16 %v10048, %v10042
    %v11057 = vpack.c.b16 %v10049, %v10043
    %v11058 = vpack.c.b16 %v10056, %v10050
    %v11059 = vpack.c.b16 %v10057, %v10051
    %v11060 = vpack.c.b16 %v10058, %v10052
    %v11061 = vpack.c.b16 %v10059, %v10053
    %v11062 = vpack.c.b16 %v10060, %v10054
    %v11063 = vpack.c.b16 %v10061, %v10055
    %v11064 = vpack.c.b16 %v10068, %v10062
    %v11065 = vpack.c.b16 %v10069, %v10063
    %v11066 = vpack.c.b16 %v10070, %v10064
    %v11067 = vpack.c.b16 %v10071, %v10065
    %v11068 = vpack.c.b16 %v10072, %v10066
    %v11069 = vpack.c.b16 %v10073, %v10067
    %v11070 = vpack.c.b16 %v10080, %v10074
    %v11071 = vpack.c.b16 %v10081, %v10075
    %v11072 = vpack.c.b16 %v10082, %v10076
    %v11073 = vpack.c.b16 %v10083, %v10077
    %v11074 = vpack.c.b16 %v10084, %v10078
    %v11075 = vpack.c.b16 %v10085, %v10079
    %v11076 = vpack.c.b16 %v10092, %v10086
    %v11077 = vpack.c.b16 %v10093, %v10087
    %v11078 = vpack.c.b16 %v10094, %v10088
    %v11079 = vpack.c.b16 %v10095, %v10089
    %v11080 = vpack.c.b16 %v10096, %v10090
    %v11081 = vpack.c.b16 %v10097, %v10091
    %v11082 = vpack.c.b16 %v10104, %v10098
    %v11083 = vpack.c.b16 %v10105, %v10099
    %v11084 = vpack.c.b16 %v10106, %v10100
    %v11085 = vpack.c.b16 %v10107, %v10101
    %v11086 = vpack.c.b16 %v10108, %v10102
    %v11087 = vpack.c.b16 %v10109, %v10103
    %v11088 = vpack.c.b16 %v10116, %v10110
    %v11089 = vpack.c.b16 %v10117, %v10111
    %v11090 = vpack.c.b16 %v10118, %v10112
    %v11091 = vpack.c.b16 %v10119, %v10113
    %v11092 = vpack.c.b16 %v10120, %v10114
    %v11093 = vpack.c.b16 %v10121, %v10115
    %v11094 = vpack.c.b16 %v10128, %v10122
    %v11095 = vpack.c.b16 %v10129, %v10123
    %v11096 = vpack.c.b16 %v10130, %v10124
    %v11097 = vpack.c.b16 %v10131, %v10125
    %v11098 = vpack.c.b16 %v10132, %v10126
    %v11099 = vpack.c.b16 %v10133, %v10127
    %v11100 = vpack.c.b16 %v10140, %v10134
    %v11101 = vpack.c.b16 %v10141, %v10135
    %v11102 = vpack.c.b16 %v10142, %v10136
    %v11103 = vpack.c.b16 %v10143, %v10137
    %v11104 = vpack.c.b16 %v10144, %v10138
    %v11105 = vpack.c.b16 %v10145, %v10139
    %v11106 = vpack.c.b16 %v10152, %v10146
    %v11107 = vpack.c.b16 %v10153, %v10147
    %v11108 = vpack.c.b16 %v10154, %v10148
    %v11109 = vpack.c.b16 %v10155, %v10149
    %v11110 = vpack.c.b16 %v10156, %v10150
    %v11111 = vpack.c.b16 %v10157, %v10151
    %v11112 = vpack.c.b16 %v10164, %v10158
    %v11113 = vpack.c.b16 %v10165, %v10159
    %v11114 = vpack.c.b16 %v10166, %v10160
    %v11115 = vpack.c.b16 %v10167, %v10161
    %v11116 = vpack.c.b16 %v10168, %v10162
    %v11117 = vpack.c.b16 %v10169, %v10163
    %v11118 = vpack.c.b16 %v10176, %v10170
    %v11119 = vpack.c.b16 %v10177, %v10171
    %v11120 = vpack.c.b16 %v10178, %v10172
    %v11121 = vpack.c.b16 %v10179, %v10173
    %v11122 = vpack.c.b16 %v10180, %v10174
    %v11123 = vpack.c.b16 %v10181, %v10175
    %v11124 = vpack.c.b16 %v10188, %v10182
    %v11125 = vpack.c.b16 %v10189, %v10183
    %v11126 = vpack.c.b16 %v10190, %v10184
    %v11127 = vpack.c.b16 %v10191, %v10185
    %v11128 = vpack.c.b16 %v10192, %v10186
    %v11129 = vpack.c.b16 %v10193, %v10187
    %v11130 = vpack.c.b16 %v10200, %v10194
    %v11131 = vpack.c.b16 %v10201, %v10195
    %v11132 = vpack.c.b16 %v10202, %v10196
    %v11133 = vpack.c.b16 %v10203, %v10197
    %v11134 = vpack.c.b16 %v10204, %v10198
    %v11135 = vpack.c.b16 %v10205, %v10199
    %v11136 = vpack.c.b16 %v10212, %v10206
    %v11137 = vpack.c.b16 %v10213, %v10207
    %v11138 = vpack.c.b16 %v10214, %v10208
    %v11139 = vpack.c.b16 %v10215, %v10209
    %v11140 = vpack.c.b16 %v10216, %v10210
    %v11141 = vpack.c.b16 %v10217, %v10211
    %v11142 = vpack.c.b16 %v10224, %v10218
    %v11143 = vpack.c.b16 %v10225, %v10219
    %v11144 = vpack.c.b16 %v10226, %v10220
    %v11145 = vpack.c.b16 %v10227, %v10221
    %v11146 = vpack.c.b16 %v10228, %v10222
    %v11147 = vpack.c.b16 %v10229, %v10223
    %v11148 = vpack.c.b16 %v10236, %v10230
    %v11149 = vpack.c.b16 %v10237, %v10231
    %v11150 = vpack.c.b16 %v10238, %v10232
    %v11151 = vpack.c.b16 %v10239, %v10233
    %v11152 = vpack.c.b16 %v10240, %v10234
    %v11153 = vpack.c.b16 %v10241, %v10235
    %v11154 = vpack.c.b16 %v10248, %v10242
    %v11155 = vpack.c.b16 %v10249, %v10243
    %v11156 = vpack.c.b16 %v10250, %v10244
    %v11157 = vpack.c.b16 %v10251, %v10245
    %v11158 = vpack.c.b16 %v10252, %v10246
    %v11159 = vpack.c.b16 %v10253, %v10247
    %v11160 = vpack.c.b16 %v10260, %v10254
    %v11161 = vpack.c.b16 %v10261, %v10255
    %v11162 = vpack.c.b16 %v10262, %v10256
    %v11163 = vpack.c.b16 %v10263, %v10257
    %v11164 = vpack.c.b16 %v10264, %v10258
    %v11165 = vpack.c.b16 %v10265, %v10259
    %v11166 = vpack.c.b16 %v10272, %v10266
    %v11167 = vpack.c.b16 %v10273, %v10267
    %v11168 = vpack.c.b16 %v10274, %v10268
    %v11169 = vpack.c.b16 %v10275, %v10269
    %v11170 = vpack.c.b16 %v10276, %v10270
    %v11171 = vpack.c.b16 %v10277, %v10271
    %v11172 = vpack.c.b16 %v10284, %v10278
    %v11173 = vpack.c.b16 %v10285, %v10279
    %v11174 = vpack.c.b16 %v10286, %v10280
    %v11175 = vpack.c.b16 %v10287, %v10281
    %v11176 = vpack.c.b16 %v10288, %v10282
    %v11177 = vpack.c.b16 %v10289, %v10283
    %v11178 = vpack.c.b16 %v10296, %v10290
    %v11179 = vpack.c.b16 %v10297, %v10291
    %v11180 = vpack.c.b16 %v10298, %v10292
    %v11181 = vpack.c.b16 %v10299, %v10293
    %v11182 = vpack.c.b16 %v10300, %v10294
    %v11183 = vpack.c.b16 %v10301, %v10295
    %v11184 = vpack.c.b16 %v10308, %v10302
    %v11185 = vpack.c.b16 %v10309, %v10303
    %v11186 = vpack.c.b16 %v10310, %v10304
    %v11187 = vpack.c.b16 %v10311, %v10305
    %v11188 = vpack.c.b16 %v10312, %v10306
    %v11189 = vpack.c.b16 %v10313, %v10307
    %v11190 = vpack.c.b16 %v10320, %v10314
    %v11191 = vpack.c.b16 %v10321, %v10315
    %v11192 = vpack.c.b16 %v10322, %v10316
    %v11193 = vpack.c.b16 %v10323, %v10317
    %v11194 = vpack.c.b16 %v10324, %v10318
    %v11195 = vpack.c.b16 %v10325, %v10319
    %v11196 = vpack.c.b16 %v10332, %v10326
    %v11197 = vpack.c.b16 %v10333, %v10327
    %v11198 = vpack.c.b16 %v10334, %v10328
    %v11199 = vpack.c.b16 %v10335, %v10329
    %v11200 = vpack.c.b16 %v10336, %v10330
    %v11201 = vpack.c.b16 %v10337, %v10331
    %v11202 = vpack.c.b16 %v10344, %v10338
    %v11203 = vpack.c.b16 %v10345, %v10339
    %v11204 = vpack.c.b16 %v10346, %v10340
    %v11205 = vpack.c.b16 %v10347, %v10341
    %v11206 = vpack.c.b16 %v10348, %v10342
    %v11207 = vpack.c.b16 %v10349, %v10343
    %v11208 = vpack.c.b16 %v10356, %v10350
    %v11209 = vpack.c.b16 %v10357, %v10351
    %v11210 = vpack.c.b16 %v10358, %v10352
    %v11211 = vpack.c.b16 %v10359, %v10353
    %v11212 = vpack.c.b16 %v10360, %v10354
    %v11213 = vpack.c.b16 %v10361, %v10355
    %v11214 = vpack.c.b16 %v10368, %v10362
    %v11215 = vpack.c.b16 %v10369, %v10363
    %v11216 = vpack.c.b16 %v10370, %v10364
    %v11217 = vpack.c.b16 %v10371, %v10365
    %v11218 = vpack.c.b16 %v10372, %v10366
    %v11219 = vpack.c.b16 %v10373, %v10367
    %v11220 = vpack.c.b16 %v10380, %v10374
    %v11221 = vpack.c.b16 %v10381, %v10375
    %v11222 = vpack.c.b16 %v10382, %v10376
    %v11223 = vpack.c.b16 %v10383, %v10377
    %v11224 = vpack.c.b16 %v10384, %v10378
    %v11225 = vpack.c.b16 %v10385, %v10379
    %v11226 = vpack.c.b16 %v10392, %v10386
    %v11227 = vpack.c.b16 %v10393, %v10387
    %v11228 = vpack.c.b16 %v10394, %v10388
    %v11229 = vpack.c.b16 %v10395, %v10389
    %v11230 = vpack.c.b16 %v10396, %v10390
    %v11231 = vpack.c.b16 %v10397, %v10391
    %v11232 = vpack.c.b16 %v10404, %v10398
    %v11233 = vpack.c.b16 %v10405, %v10399
    %v11234 = vpack.c.b16 %v10406, %v10400
    %v11235 = vpack.c.b16 %v10407, %v10401
    %v11236 = vpack.c.b16 %v10408, %v10402
    %v11237 = vpack.c.b16 %v10409, %v10403
    %v11238 = vpack.c.b16 %v10416, %v10410
    %v11239 = vpack.c.b16 %v10417, %v10411
    %v11240 = vpack.c.b16 %v10418, %v10412
    %v11241 = vpack.c.b16 %v10419, %v10413
    %v11242 = vpack.c.b16 %v10420, %v10414
    %v11243 = vpack.c.b16 %v10421, %v10415
    %v11244 = vpack.c.b16 %v10428, %v10422
    %v11245 = vpack.c.b16 %v10429, %v10423
    %v11246 = vpack.c.b16 %v10430, %v10424
    %v11247 = vpack.c.b16 %v10431, %v10425
    %v11248 = vpack.c.b16 %v10432, %v10426
    %v11249 = vpack.c.b16 %v10433, %v10427
    %v11250 = vpack.c.b16 %v10440, %v10434
    %v11251 = vpack.c.b16 %v10441, %v10435
    %v11252 = vpack.c.b16 %v10442, %v10436
    %v11253 = vpack.c.b16 %v10443, %v10437
    %v11254 = vpack.c.b16 %v10444, %v10438
    %v11255 = vpack.c.b16 %v10445, %v10439
    %v11256 = vpack.c.b16 %v10452, %v10446
    %v11257 = vpack.c.b16 %v10453, %v10447
    %v11258 = vpack.c.b16 %v10454, %v10448
    %v11259 = vpack.c.b16 %v10455, %v10449
    %v11260 = vpack.c.b16 %v10456, %v10450
    %v11261 = vpack.c.b16 %v10457, %v10451
    %v11262 = vpack.c.b16 %v10464, %v10458
    %v11263 = vpack.c.b16 %v10465, %v10459
    %v11264 = vpack.c.b16 %v10466, %v10460
    %v11265 = vpack.c.b16 %v10467, %v10461
    %v11266 = vpack.c.b16 %v10468, %v10462
    %v11267 = vpack.c.b16 %v10469, %v10463
    %v11268 = vpack.c.b16 %v10476, %v10470
    %v11269 = vpack.c.b16 %v10477, %v10471
    %v11270 = vpack.c.b16 %v10478, %v10472
    %v11271 = vpack.c.b16 %v10479, %v10473
    %v11272 = vpack.c.b16 %v10480, %v10474
    %v11273 = vpack.c.b16 %v10481, %v10475
    %v11274 = vpack.c.b16 %v10488, %v10482
    %v11275 = vpack.c.b16 %v10489, %v10483
    %v11276 = vpack.c.b16 %v10490, %v10484
    %v11277 = vpack.c.b16 %v10491, %v10485
    %v11278 = vpack.c.b16 %v10492, %v10486
    %v11279 = vpack.c.b16 %v10493, %v10487
    %v11280 = vpack.c.b16 %v10500, %v10494
    %v11281 = vpack.c.b16 %v10501, %v10495
    %v11282 = vpack.c.b16 %v10502, %v10496
    %v11283 = vpack.c.b16 %v10503, %v10497
    %v11284 = vpack.c.b16 %v10504, %v10498
    %v11285 = vpack.c.b16 %v10505, %v10499
    %v11286 = vpack.c.b16 %v10512, %v10506
    %v11287 = vpack.c.b16 %v10513, %v10507
    %v11288 = vpack.c.b16 %v10514, %v10508
    %v11289 = vpack.c.b16 %v10515, %v10509
    %v11290 = vpack.c.b16 %v10516, %v10510
    %v11291 = vpack.c.b16 %v10517, %v10511
    %v11292 = vpack.c.b16 %v10524, %v10518
    %v11293 = vpack.c.b16 %v10525, %v10519
    %v11294 = vpack.c.b16 %v10526, %v10520
    %v11295 = vpack.c.b16 %v10527, %v10521
    %v11296 = vpack.c.b16 %v10528, %v10522
    %v11297 = vpack.c.b16 %v10529, %v10523
    %v11298 = vpack.c.b16 %v10536, %v10530
    %v11299 = vpack.c.b16 %v10537, %v10531
    %v11300 = vpack.c.b16 %v10538, %v10532
    %v11301 = vpack.c.b16 %v10539, %v10533
    %v11302 = vpack.c.b16 %v10540, %v10534
    %v11303 = vpack.c.b16 %v10541, %v10535
    %v11304 = vpack.c.b16 %v10548, %v10542
    %v11305 = vpack.c.b16 %v10549, %v10543
    %v11306 = vpack.c.b16 %v10550, %v10544
    %v11307 = vpack.c.b16 %v10551, %v10545
    %v11308 = vpack.c.b16 %v10552, %v10546
    %v11309 = vpack.c.b16 %v10553, %v10547
    %v11310 = vpack.c.b16 %v10560, %v10554
    %v11311 = vpack.c.b16 %v10561, %v10555
    %v11312 = vpack.c.b16 %v10562, %v10556
    %v11313 = vpack.c.b16 %v10563, %v10557
    %v11314 = vpack.c.b16 %v10564, %v10558
    %v11315 = vpack.c.b16 %v10565, %v10559
    %v11316 = vpack.c.b16 %v10572, %v10566
    %v11317 = vpack.c.b16 %v10573, %v10567
    %v11318 = vpack.c.b16 %v10574, %v10568
    %v11319 = vpack.c.b16 %v10575, %v10569
    %v11320 = vpack.c.b16 %v10576, %v10570
    %v11321 = vpack.c.b16 %v10577, %v10571
    %v11322 = vpack.c.b16 %v10584, %v10578
    %v11323 = vpack.c.b16 %v10585, %v10579
    %v11324 = vpack.c.b16 %v10586, %v10580
    %v11325 = vpack.c.b16 %v10587, %v10581
    %v11326 = vpack.c.b16 %v10588, %v10582
    %v11327 = vpack.c.b16 %v10589, %v10583
    %v11328 = vpack.c.b16 %v10596, %v10590
    %v11329 = vpack.c.b16 %v10597, %v10591
    %v11330 = vpack.c.b16 %v10598, %v10592
    %v11331 = vpack.c.b16 %v10599, %v10593
    %v11332 = vpack.c.b16 %v10600, %v10594
    %v11333 = vpack.c.b16 %v10601, %v10595
    %v11334 = vpack.c.b16 %v10608, %v10602
    %v11335 = vpack.c.b16 %v10609, %v10603
    %v11336 = vpack.c.b16 %v10610, %v10604
    %v11337 = vpack.c.b16 %v10611, %v10605
    %v11338 = vpack.c.b16 %v10612, %v10606
    %v11339 = vpack.c.b16 %v10613, %v10607
    %v11340 = vpack.c.b16 %v10620, %v10614
    %v11341 = vpack.c.b16 %v10621, %v10615
    %v11342 = vpack.c.b16 %v10622, %v10616
    %v11343 = vpack.c.b16 %v10623, %v10617
    %v11344 = vpack.c.b16 %v10624, %v10618
    %v11345 = vpack.c.b16 %v10625, %v10619
    %v11346 = vpack.c.b16 %v10632, %v10626
    %v11347 = vpack.c.b16 %v10633, %v10627
    %v11348 = vpack.c.b16 %v10634, %v10628
    %v11349 = vpack.c.b16 %v10635, %v10629
    %v11350 = vpack.c.b16 %v10636, %v10630
    %v11351 = vpack.c.b16 %v10637, %v10631
    %v11352 = vpack.c.b16 %v10644, %v10638
    %v11353 = vpack.c.b16 %v10645, %v10639
    %v11354 = vpack.c.b16 %v10646, %v10640
    %v11355 = vpack.c.b16 %v10647, %v10641
    %v11356 = vpack.c.b16 %v10648, %v10642
    %v11357 = vpack.c.b16 %v10649, %v10643
    %v11358 = vpack.c.b16 %v10656, %v10650
    %v11359 = vpack.c.b16 %v10657, %v10651
    %v11360 = vpack.c.b16 %v10658, %v10652
    %v11361 = vpack.c.b16 %v10659, %v10653
    %v11362 = vpack.c.b16 %v10660, %v10654
    %v11363 = vpack.c.b16 %v10661, %v10655
    %v11364 = vpack.c.b16 %v10668, %v10662
    %v11365 = vpack.c.b16 %v10669, %v10663
    %v11366 = vpack.c.b16 %v10670, %v10664
    %v11367 = vpack.c.b16 %v10671, %v10665
    %v11368 = vpack.c.b16 %v10672, %v10666
    %v11369 = vpack.c.b16 %v10673, %v10667
    %v11370 = vpack.c.b16 %v10680, %v10674
    %v11371 = vpack.c.b16 %v10681, %v10675
    %v11372 = vpack.c.b16 %v10682, %v10676
    %v11373 = vpack.c.b16 %v10683, %v10677
    %v11374 = vpack.c.b16 %v10684, %v10678
    %v11375 = vpack.c.b16 %v10685, %v10679
    %v11376 = vpack.c.b16 %v10692, %v10686
    %v11377 = vpack.c.b16 %v10693, %v10687
    %v11378 = vpack.c.b16 %v10694, %v10688
    %v11379 = vpack.c.b16 %v10695, %v10689
    %v11380 = vpack.c.b16 %v10696, %v10690
    %v11381 = vpack.c.b16 %v10697, %v10691
    %v11382 = vpack.c.b16 %v10704, %v10698
    %v11383 = vpack.c.b16 %v10705, %v10699
    %v11384 = vpack.c.b16 %v10706, %v10700
    %v11385 = vpack.c.b16 %v10707, %v10701
    %v11386 = vpack.c.b16 %v10708, %v10702
    %v11387 = vpack.c.b16 %v10709, %v10703
    %v11388 = vpack.c.b16 %v10716, %v10710
    %v11389 = vpack.c.b16 %v10717, %v10711
    %v11390 = vpack.c.b16 %v10718, %v10712
    %v11391 = vpack.c.b16 %v10719, %v10713
    %v11392 = vpack.c.b16 %v10720, %v10714
    %v11393 = vpack.c.b16 %v10721, %v10715
    %v11394 = vpack.c.b16 %v10728, %v10722
    %v11395 = vpack.c.b16 %v10729, %v10723
    %v11396 = vpack.c.b16 %v10730, %v10724
    %v11397 = vpack.c.b16 %v10731, %v10725
    %v11398 = vpack.c.b16 %v10732, %v10726
    %v11399 = vpack.c.b16 %v10733, %v10727
    %v11400 = vpack.c.b16 %v10740, %v10734
    %v11401 = vpack.c.b16 %v10741, %v10735
    %v11402 = vpack.c.b16 %v10742, %v10736
    %v11403 = vpack.c.b16 %v10743, %v10737
    %v11404 = vpack.c.b16 %v10744, %v10738
    %v11405 = vpack.c.b16 %v10745, %v10739
    %v11406 = vpack.c.b16 %v10752, %v10746
    %v11407 = vpack.c.b16 %v10753, %v10747
    %v11408 = vpack.c.b16 %v10754, %v10748
    %v11409 = vpack.c.b16 %v10755, %v10749
    %v11410 = vpack.c.b16 %v10756, %v10750
    %v11411 = vpack.c.b16 %v10757, %v10751
    %v11412 = vpack.c.b16 %v10764, %v10758
    %v11413 = vpack.c.b16 %v10765, %v10759
    %v11414 = vpack.c.b16 %v10766, %v10760
    %v11415 = vpack.c.b16 %v10767, %v10761
    %v11416 = vpack.c.b16 %v10768, %v10762
    %v11417 = vpack.c.b16 %v10769, %v10763
    %v11418 = vpack.c.b16 %v10776, %v10770
    %v11419 = vpack.c.b16 %v10777, %v10771
    %v11420 = vpack.c.b16 %v10778, %v10772
    %v11421 = vpack.c.b16 %v10779, %v10773
    %v11422 = vpack.c.b16 %v10780, %v10774
    %v11423 = vpack.c.b16 %v10781, %v10775
    %v11424 = vpack.c.b16 %v10788, %v10782
    %v11425 = vpack.c.b16 %v10789, %v10783
    %v11426 = vpack.c.b16 %v10790, %v10784
    %v11427 = vpack.c.b16 %v10791, %v10785
    %v11428 = vpack.c.b16 %v10792, %v10786
    %v11429 = vpack.c.b16 %v10793, %v10787
    %v11430 = vpack.c.b16 %v10800, %v10794
    %v11431 = vpack.c.b16 %v10801, %v10795
    %v11432 = vpack.c.b16 %v10802, %v10796
    %v11433 = vpack.c.b16 %v10803, %v10797
    %v11434 = vpack.c.b16 %v10804, %v10798
    %v11435 = vpack.c.b16 %v10805, %v10799
    %v11436 = vpack.c.b16 %v10812, %v10806
    %v11437 = vpack.c.b16 %v10813, %v10807
    %v11438 = vpack.c.b16 %v10814, %v10808
    %v11439 = vpack.c.b16 %v10815, %v10809
    %v11440 = vpack.c.b16 %v10816, %v10810
    %v11441 = vpack.c.b16 %v10817, %v10811
    %v11442 = vpack.c.b16 %v10824, %v10818
    %v11443 = vpack.c.b16 %v10825, %v10819
    %v11444 = vpack.c.b16 %v10826, %v10820
    %v11445 = vpack.c.b16 %v10827, %v10821
    %v11446 = vpack.c.b16 %v10828, %v10822
    %v11447 = vpack.c.b16 %v10829, %v10823
    %v11448 = vpack.c.b16 %v10836, %v10830
    %v11449 = vpack.c.b16 %v10837, %v10831
    %v11450 = vpack.c.b16 %v10838, %v10832
    %v11451 = vpack.c.b16 %v10839, %v10833
    %v11452 = vpack.c.b16 %v10840, %v10834
    %v11453 = vpack.c.b16 %v10841, %v10835
    %v11454 = vpack.c.b16 %v10848, %v10842
    %v11455 = vpack.c.b16 %v10849, %v10843
    %v11456 = vpack.c.b16 %v10850, %v10844
    %v11457 = vpack.c.b16 %v10851, %v10845
    %v11458 = vpack.c.b16 %v10852, %v10846
    %v11459 = vpack.c.b16 %v10853, %v10847
    %v11460 = vpack.c.b16 %v10860, %v10854
    %v11461 = vpack.c.b16 %v10861, %v10855
    %v11462 = vpack.c.b16 %v10862, %v10856
    %v11463 = vpack.c.b16 %v10863, %v10857
    %v11464 = vpack.c.b16 %v10864, %v10858
    %v11465 = vpack.c.b16 %v10865, %v10859
    %v11466 = vpack.c.b16 %v10872, %v10866
    %v11467 = vpack.c.b16 %v10873, %v10867
    %v11468 = vpack.c.b16 %v10874, %v10868
    %v11469 = vpack.c.b16 %v10875, %v10869
    %v11470 = vpack.c.b16 %v10876, %v10870
    %v11471 = vpack.c.b16 %v10877, %v10871
    %v11472 = vpack.c.b16 %v10884, %v10878
    %v11473 = vpack.c.b16 %v10885, %v10879
    %v11474 = vpack.c.b16 %v10886, %v10880
    %v11475 = vpack.c.b16 %v10887, %v10881
    %v11476 = vpack.c.b16 %v10888, %v10882
    %v11477 = vpack.c.b16 %v10889, %v10883
    %v11478 = vpack.c.b16 %v10896, %v10890
    %v11479 = vpack.c.b16 %v10897, %v10891
    %v11480 = vpack.c.b16 %v10898, %v10892
    %v11481 = vpack.c.b16 %v10899, %v10893
    %v11482 = vpack.c.b16 %v10900, %v10894
    %v11483 = vpack.c.b16 %v10901, %v10895
    %v11484 = vpack.c.b16 %v10908, %v10902
    %v11485 = vpack.c.b16 %v10909, %v10903
    %v11486 = vpack.c.b16 %v10910, %v10904
    %v11487 = vpack.c.b16 %v10911, %v10905
    %v11488 = vpack.c.b16 %v10912, %v10906
    %v11489 = vpack.c.b16 %v10913, %v10907
    %12066 = vmatpush.bf16.msra.mxu0 %v10956
    %12067 = vmatpush.bf16.msra.mxu0 %v10950
    %12068 = vmatpush.bf16.msra.mxu0 %v10944
    %12069 = vmatpush.bf16.msra.mxu0 %v10938
    %12070 = vmatpush.bf16.msra.mxu0 %v10932
    %12071 = vmatpush.bf16.msra.mxu0 %v10926
    %12072 = vmatpush.bf16.msra.mxu0 %v10920
    %12073 = vmatpush.bf16.msra.mxu0 %v10914
    %12074 = vmatmul.bf16.gmra.mxu0 %v8584
    %v12075 = vpop.f32.mrf.mxu0
    %v12076 = vadd.f32 %v9174, %v12075
    %v12077 = vpop.f32.mrf.mxu0
    %12078 = vdwg.mxu0
    %12079 = vmatpush.bf16.msra.mxu0 %v11004
    %12080 = vmatpush.bf16.msra.mxu0 %v10998
    %12081 = vmatpush.bf16.msra.mxu0 %v10992
    %12082 = vmatpush.bf16.msra.mxu0 %v10986
    %12083 = vmatpush.bf16.msra.mxu0 %v10980
    %12084 = vmatpush.bf16.msra.mxu0 %v10974
    %12085 = vmatpush.bf16.msra.mxu0 %v10968
    %12086 = vmatpush.bf16.msra.mxu0 %v10962
    %12087 = vmatmul.bf16.gmra.mxu0 %v8585
    %v12088 = vpop.f32.mrf.mxu0
    %v12089 = vadd.f32 %v12076, %v12088
    %v12090 = vpop.f32.mrf.mxu0
    %12091 = vdwg.mxu0
    %12092 = vmatpush.bf16.msra.mxu0 %v11052
    %12093 = vmatpush.bf16.msra.mxu0 %v11046
    %12094 = vmatpush.bf16.msra.mxu0 %v11040
    %12095 = vmatpush.bf16.msra.mxu0 %v11034
    %12096 = vmatpush.bf16.msra.mxu0 %v11028
    %12097 = vmatpush.bf16.msra.mxu0 %v11022
    %12098 = vmatpush.bf16.msra.mxu0 %v11016
    %12099 = vmatpush.bf16.msra.mxu0 %v11010
    %12100 = vmatmul.bf16.gmra.mxu0 %v8586
    %v12101 = vpop.f32.mrf.mxu0
    %v12102 = vadd.f32 %v12089, %v12101
    %v12103 = vpop.f32.mrf.mxu0
    %12104 = vdwg.mxu0
    %12105 = vmatpush.bf16.msra.mxu0 %v11100
    %12106 = vmatpush.bf16.msra.mxu0 %v11094
    %12107 = vmatpush.bf16.msra.mxu0 %v11088
    %12108 = vmatpush.bf16.msra.mxu0 %v11082
    %12109 = vmatpush.bf16.msra.mxu0 %v11076
    %12110 = vmatpush.bf16.msra.mxu0 %v11070
    %12111 = vmatpush.bf16.msra.mxu0 %v11064
    %12112 = vmatpush.bf16.msra.mxu0 %v11058
    %12113 = vmatmul.bf16.gmra.mxu0 %v8587
    %v12114 = vpop.f32.mrf.mxu0
    %v12115 = vadd.f32 %v12102, %v12114
    %v12116 = vpop.f32.mrf.mxu0
    %12117 = vdwg.mxu0
    %12118 = vmatpush.bf16.msra.mxu0 %v11148
    %12119 = vmatpush.bf16.msra.mxu0 %v11142
    %12120 = vmatpush.bf16.msra.mxu0 %v11136
    %12121 = vmatpush.bf16.msra.mxu0 %v11130
    %12122 = vmatpush.bf16.msra.mxu0 %v11124
    %12123 = vmatpush.bf16.msra.mxu0 %v11118
    %12124 = vmatpush.bf16.msra.mxu0 %v11112
    %12125 = vmatpush.bf16.msra.mxu0 %v11106
    %12126 = vmatmul.bf16.gmra.mxu0 %v8588
    %v12127 = vpop.f32.mrf.mxu0
    %v12128 = vadd.f32 %v12115, %v12127
    %v12129 = vpop.f32.mrf.mxu0
    %12130 = vdwg.mxu0
    %12131 = vmatpush.bf16.msra.mxu0 %v11196
    %12132 = vmatpush.bf16.msra.mxu0 %v11190
    %12133 = vmatpush.bf16.msra.mxu0 %v11184
    %12134 = vmatpush.bf16.msra.mxu0 %v11178
    %12135 = vmatpush.bf16.msra.mxu0 %v11172
    %12136 = vmatpush.bf16.msra.mxu0 %v11166
    %12137 = vmatpush.bf16.msra.mxu0 %v11160
    %12138 = vmatpush.bf16.msra.mxu0 %v11154
    %12139 = vmatmul.bf16.gmra.mxu0 %v8589
    %v12140 = vpop.f32.mrf.mxu0
    %v12141 = vadd.f32 %v12128, %v12140
    %v12142 = vpop.f32.mrf.mxu0
    %12143 = vdwg.mxu0
    %12144 = vmatpush.bf16.msra.mxu0 %v11244
    %12145 = vmatpush.bf16.msra.mxu0 %v11238
    %12146 = vmatpush.bf16.msra.mxu0 %v11232
    %12147 = vmatpush.bf16.msra.mxu0 %v11226
    %12148 = vmatpush.bf16.msra.mxu0 %v11220
    %12149 = vmatpush.bf16.msra.mxu0 %v11214
    %12150 = vmatpush.bf16.msra.mxu0 %v11208
    %12151 = vmatpush.bf16.msra.mxu0 %v11202
    %12152 = vmatmul.bf16.gmra.mxu0 %v8590
    %v12153 = vpop.f32.mrf.mxu0
    %v12154 = vadd.f32 %v12141, %v12153
    %v12155 = vpop.f32.mrf.mxu0
    %12156 = vdwg.mxu0
    %12157 = vmatpush.bf16.msra.mxu0 %v11292
    %12158 = vmatpush.bf16.msra.mxu0 %v11286
    %12159 = vmatpush.bf16.msra.mxu0 %v11280
    %12160 = vmatpush.bf16.msra.mxu0 %v11274
    %12161 = vmatpush.bf16.msra.mxu0 %v11268
    %12162 = vmatpush.bf16.msra.mxu0 %v11262
    %12163 = vmatpush.bf16.msra.mxu0 %v11256
    %12164 = vmatpush.bf16.msra.mxu0 %v11250
    %12165 = vmatmul.bf16.gmra.mxu0 %v8591
    %v12166 = vpop.f32.mrf.mxu0
    %v12167 = vadd.f32 %v12154, %v12166
    %v12168 = vpop.f32.mrf.mxu0
    %12169 = vdwg.mxu0
    %12170 = vmatpush.bf16.msra.mxu0 %v11340
    %12171 = vmatpush.bf16.msra.mxu0 %v11334
    %12172 = vmatpush.bf16.msra.mxu0 %v11328
    %12173 = vmatpush.bf16.msra.mxu0 %v11322
    %12174 = vmatpush.bf16.msra.mxu0 %v11316
    %12175 = vmatpush.bf16.msra.mxu0 %v11310
    %12176 = vmatpush.bf16.msra.mxu0 %v11304
    %12177 = vmatpush.bf16.msra.mxu0 %v11298
    %12178 = vmatmul.bf16.gmra.mxu0 %v8592
    %v12179 = vpop.f32.mrf.mxu0
    %v12180 = vadd.f32 %v12167, %v12179
    %v12181 = vpop.f32.mrf.mxu0
    %12182 = vdwg.mxu0
    %12183 = vmatpush.bf16.msra.mxu0 %v11388
    %12184 = vmatpush.bf16.msra.mxu0 %v11382
    %12185 = vmatpush.bf16.msra.mxu0 %v11376
    %12186 = vmatpush.bf16.msra.mxu0 %v11370
    %12187 = vmatpush.bf16.msra.mxu0 %v11364
    %12188 = vmatpush.bf16.msra.mxu0 %v11358
    %12189 = vmatpush.bf16.msra.mxu0 %v11352
    %12190 = vmatpush.bf16.msra.mxu0 %v11346
    %12191 = vmatmul.bf16.gmra.mxu0 %v8593
    %v12192 = vpop.f32.mrf.mxu0
    %v12193 = vadd.f32 %v12180, %v12192
    %v12194 = vpop.f32.mrf.mxu0
    %12195 = vdwg.mxu0
    %12196 = vmatpush.bf16.msra.mxu0 %v11436
    %12197 = vmatpush.bf16.msra.mxu0 %v11430
    %12198 = vmatpush.bf16.msra.mxu0 %v11424
    %12199 = vmatpush.bf16.msra.mxu0 %v11418
    %12200 = vmatpush.bf16.msra.mxu0 %v11412
    %12201 = vmatpush.bf16.msra.mxu0 %v11406
    %12202 = vmatpush.bf16.msra.mxu0 %v11400
    %12203 = vmatpush.bf16.msra.mxu0 %v11394
    %12204 = vmatmul.bf16.gmra.mxu0 %v8594
    %v12205 = vpop.f32.mrf.mxu0
    %v12206 = vadd.f32 %v12193, %v12205
    %v12207 = vpop.f32.mrf.mxu0
    %12208 = vdwg.mxu0
    %12209 = vmatpush.bf16.msra.mxu0 %v11484
    %12210 = vmatpush.bf16.msra.mxu0 %v11478
    %12211 = vmatpush.bf16.msra.mxu0 %v11472
    %12212 = vmatpush.bf16.msra.mxu0 %v11466
    %12213 = vmatpush.bf16.msra.mxu0 %v11460
    %12214 = vmatpush.bf16.msra.mxu0 %v11454
    %12215 = vmatpush.bf16.msra.mxu0 %v11448
    %12216 = vmatpush.bf16.msra.mxu0 %v11442
    %12217 = vmatmul.bf16.gmra.mxu0 %v8595
    %v12218 = vpop.f32.mrf.mxu0
    %v12219 = vadd.f32 %v12206, %v12218
    %v12220 = vpop.f32.mrf.mxu0
    %12221 = vdwg.mxu0
    %12222 = vmatpush.bf16.msra.mxu0 %v10957
    %12223 = vmatpush.bf16.msra.mxu0 %v10951
    %12224 = vmatpush.bf16.msra.mxu0 %v10945
    %12225 = vmatpush.bf16.msra.mxu0 %v10939
    %12226 = vmatpush.bf16.msra.mxu0 %v10933
    %12227 = vmatpush.bf16.msra.mxu0 %v10927
    %12228 = vmatpush.bf16.msra.mxu0 %v10921
    %12229 = vmatpush.bf16.msra.mxu0 %v10915
    %12230 = vmatmul.bf16.gmra.mxu0 %v8584
    %v12231 = vpop.f32.mrf.mxu0
    %v12232 = vadd.f32 %v9175, %v12231
    %v12233 = vpop.f32.mrf.mxu0
    %12234 = vdwg.mxu0
    %12235 = vmatpush.bf16.msra.mxu0 %v11005
    %12236 = vmatpush.bf16.msra.mxu0 %v10999
    %12237 = vmatpush.bf16.msra.mxu0 %v10993
    %12238 = vmatpush.bf16.msra.mxu0 %v10987
    %12239 = vmatpush.bf16.msra.mxu0 %v10981
    %12240 = vmatpush.bf16.msra.mxu0 %v10975
    %12241 = vmatpush.bf16.msra.mxu0 %v10969
    %12242 = vmatpush.bf16.msra.mxu0 %v10963
    %12243 = vmatmul.bf16.gmra.mxu0 %v8585
    %v12244 = vpop.f32.mrf.mxu0
    %v12245 = vadd.f32 %v12232, %v12244
    %v12246 = vpop.f32.mrf.mxu0
    %12247 = vdwg.mxu0
    %12248 = vmatpush.bf16.msra.mxu0 %v11053
    %12249 = vmatpush.bf16.msra.mxu0 %v11047
    %12250 = vmatpush.bf16.msra.mxu0 %v11041
    %12251 = vmatpush.bf16.msra.mxu0 %v11035
    %12252 = vmatpush.bf16.msra.mxu0 %v11029
    %12253 = vmatpush.bf16.msra.mxu0 %v11023
    %12254 = vmatpush.bf16.msra.mxu0 %v11017
    %12255 = vmatpush.bf16.msra.mxu0 %v11011
    %12256 = vmatmul.bf16.gmra.mxu0 %v8586
    %v12257 = vpop.f32.mrf.mxu0
    %v12258 = vadd.f32 %v12245, %v12257
    %v12259 = vpop.f32.mrf.mxu0
    %12260 = vdwg.mxu0
    %12261 = vmatpush.bf16.msra.mxu0 %v11101
    %12262 = vmatpush.bf16.msra.mxu0 %v11095
    %12263 = vmatpush.bf16.msra.mxu0 %v11089
    %12264 = vmatpush.bf16.msra.mxu0 %v11083
    %12265 = vmatpush.bf16.msra.mxu0 %v11077
    %12266 = vmatpush.bf16.msra.mxu0 %v11071
    %12267 = vmatpush.bf16.msra.mxu0 %v11065
    %12268 = vmatpush.bf16.msra.mxu0 %v11059
    %12269 = vmatmul.bf16.gmra.mxu0 %v8587
    %v12270 = vpop.f32.mrf.mxu0
    %v12271 = vadd.f32 %v12258, %v12270
    %v12272 = vpop.f32.mrf.mxu0
    %12273 = vdwg.mxu0
    %12274 = vmatpush.bf16.msra.mxu0 %v11149
    %12275 = vmatpush.bf16.msra.mxu0 %v11143
    %12276 = vmatpush.bf16.msra.mxu0 %v11137
    %12277 = vmatpush.bf16.msra.mxu0 %v11131
    %12278 = vmatpush.bf16.msra.mxu0 %v11125
    %12279 = vmatpush.bf16.msra.mxu0 %v11119
    %12280 = vmatpush.bf16.msra.mxu0 %v11113
    %12281 = vmatpush.bf16.msra.mxu0 %v11107
    %12282 = vmatmul.bf16.gmra.mxu0 %v8588
    %v12283 = vpop.f32.mrf.mxu0
    %v12284 = vadd.f32 %v12271, %v12283
    %v12285 = vpop.f32.mrf.mxu0
    %12286 = vdwg.mxu0
    %12287 = vmatpush.bf16.msra.mxu0 %v11197
    %12288 = vmatpush.bf16.msra.mxu0 %v11191
    %12289 = vmatpush.bf16.msra.mxu0 %v11185
    %12290 = vmatpush.bf16.msra.mxu0 %v11179
    %12291 = vmatpush.bf16.msra.mxu0 %v11173
    %12292 = vmatpush.bf16.msra.mxu0 %v11167
    %12293 = vmatpush.bf16.msra.mxu0 %v11161
    %12294 = vmatpush.bf16.msra.mxu0 %v11155
    %12295 = vmatmul.bf16.gmra.mxu0 %v8589
    %v12296 = vpop.f32.mrf.mxu0
    %v12297 = vadd.f32 %v12284, %v12296
    %v12298 = vpop.f32.mrf.mxu0
    %12299 = vdwg.mxu0
    %12300 = vmatpush.bf16.msra.mxu0 %v11245
    %12301 = vmatpush.bf16.msra.mxu0 %v11239
    %12302 = vmatpush.bf16.msra.mxu0 %v11233
    %12303 = vmatpush.bf16.msra.mxu0 %v11227
    %12304 = vmatpush.bf16.msra.mxu0 %v11221
    %12305 = vmatpush.bf16.msra.mxu0 %v11215
    %12306 = vmatpush.bf16.msra.mxu0 %v11209
    %12307 = vmatpush.bf16.msra.mxu0 %v11203
    %12308 = vmatmul.bf16.gmra.mxu0 %v8590
    %v12309 = vpop.f32.mrf.mxu0
    %v12310 = vadd.f32 %v12297, %v12309
    %v12311 = vpop.f32.mrf.mxu0
    %12312 = vdwg.mxu0
    %12313 = vmatpush.bf16.msra.mxu0 %v11293
    %12314 = vmatpush.bf16.msra.mxu0 %v11287
    %12315 = vmatpush.bf16.msra.mxu0 %v11281
    %12316 = vmatpush.bf16.msra.mxu0 %v11275
    %12317 = vmatpush.bf16.msra.mxu0 %v11269
    %12318 = vmatpush.bf16.msra.mxu0 %v11263
    %12319 = vmatpush.bf16.msra.mxu0 %v11257
    %12320 = vmatpush.bf16.msra.mxu0 %v11251
    %12321 = vmatmul.bf16.gmra.mxu0 %v8591
    %v12322 = vpop.f32.mrf.mxu0
    %v12323 = vadd.f32 %v12310, %v12322
    %v12324 = vpop.f32.mrf.mxu0
    %12325 = vdwg.mxu0
    %12326 = vmatpush.bf16.msra.mxu0 %v11341
    %12327 = vmatpush.bf16.msra.mxu0 %v11335
    %12328 = vmatpush.bf16.msra.mxu0 %v11329
    %12329 = vmatpush.bf16.msra.mxu0 %v11323
    %12330 = vmatpush.bf16.msra.mxu0 %v11317
    %12331 = vmatpush.bf16.msra.mxu0 %v11311
    %12332 = vmatpush.bf16.msra.mxu0 %v11305
    %12333 = vmatpush.bf16.msra.mxu0 %v11299
    %12334 = vmatmul.bf16.gmra.mxu0 %v8592
    %v12335 = vpop.f32.mrf.mxu0
    %v12336 = vadd.f32 %v12323, %v12335
    %v12337 = vpop.f32.mrf.mxu0
    %12338 = vdwg.mxu0
    %12339 = vmatpush.bf16.msra.mxu0 %v11389
    %12340 = vmatpush.bf16.msra.mxu0 %v11383
    %12341 = vmatpush.bf16.msra.mxu0 %v11377
    %12342 = vmatpush.bf16.msra.mxu0 %v11371
    %12343 = vmatpush.bf16.msra.mxu0 %v11365
    %12344 = vmatpush.bf16.msra.mxu0 %v11359
    %12345 = vmatpush.bf16.msra.mxu0 %v11353
    %12346 = vmatpush.bf16.msra.mxu0 %v11347
    %12347 = vmatmul.bf16.gmra.mxu0 %v8593
    %v12348 = vpop.f32.mrf.mxu0
    %v12349 = vadd.f32 %v12336, %v12348
    %v12350 = vpop.f32.mrf.mxu0
    %12351 = vdwg.mxu0
    %12352 = vmatpush.bf16.msra.mxu0 %v11437
    %12353 = vmatpush.bf16.msra.mxu0 %v11431
    %12354 = vmatpush.bf16.msra.mxu0 %v11425
    %12355 = vmatpush.bf16.msra.mxu0 %v11419
    %12356 = vmatpush.bf16.msra.mxu0 %v11413
    %12357 = vmatpush.bf16.msra.mxu0 %v11407
    %12358 = vmatpush.bf16.msra.mxu0 %v11401
    %12359 = vmatpush.bf16.msra.mxu0 %v11395
    %12360 = vmatmul.bf16.gmra.mxu0 %v8594
    %v12361 = vpop.f32.mrf.mxu0
    %v12362 = vadd.f32 %v12349, %v12361
    %v12363 = vpop.f32.mrf.mxu0
    %12364 = vdwg.mxu0
    %12365 = vmatpush.bf16.msra.mxu0 %v11485
    %12366 = vmatpush.bf16.msra.mxu0 %v11479
    %12367 = vmatpush.bf16.msra.mxu0 %v11473
    %12368 = vmatpush.bf16.msra.mxu0 %v11467
    %12369 = vmatpush.bf16.msra.mxu0 %v11461
    %12370 = vmatpush.bf16.msra.mxu0 %v11455
    %12371 = vmatpush.bf16.msra.mxu0 %v11449
    %12372 = vmatpush.bf16.msra.mxu0 %v11443
    %12373 = vmatmul.bf16.gmra.mxu0 %v8595
    %v12374 = vpop.f32.mrf.mxu0
    %v12375 = vadd.f32 %v12362, %v12374
    %v12376 = vpop.f32.mrf.mxu0
    %12377 = vdwg.mxu0
    %12378 = vmatpush.bf16.msra.mxu0 %v10958
    %12379 = vmatpush.bf16.msra.mxu0 %v10952
    %12380 = vmatpush.bf16.msra.mxu0 %v10946
    %12381 = vmatpush.bf16.msra.mxu0 %v10940
    %12382 = vmatpush.bf16.msra.mxu0 %v10934
    %12383 = vmatpush.bf16.msra.mxu0 %v10928
    %12384 = vmatpush.bf16.msra.mxu0 %v10922
    %12385 = vmatpush.bf16.msra.mxu0 %v10916
    %12386 = vmatmul.bf16.gmra.mxu0 %v8584
    %v12387 = vpop.f32.mrf.mxu0
    %v12388 = vadd.f32 %v9176, %v12387
    %v12389 = vpop.f32.mrf.mxu0
    %12390 = vdwg.mxu0
    %12391 = vmatpush.bf16.msra.mxu0 %v11006
    %12392 = vmatpush.bf16.msra.mxu0 %v11000
    %12393 = vmatpush.bf16.msra.mxu0 %v10994
    %12394 = vmatpush.bf16.msra.mxu0 %v10988
    %12395 = vmatpush.bf16.msra.mxu0 %v10982
    %12396 = vmatpush.bf16.msra.mxu0 %v10976
    %12397 = vmatpush.bf16.msra.mxu0 %v10970
    %12398 = vmatpush.bf16.msra.mxu0 %v10964
    %12399 = vmatmul.bf16.gmra.mxu0 %v8585
    %v12400 = vpop.f32.mrf.mxu0
    %v12401 = vadd.f32 %v12388, %v12400
    %v12402 = vpop.f32.mrf.mxu0
    %12403 = vdwg.mxu0
    %12404 = vmatpush.bf16.msra.mxu0 %v11054
    %12405 = vmatpush.bf16.msra.mxu0 %v11048
    %12406 = vmatpush.bf16.msra.mxu0 %v11042
    %12407 = vmatpush.bf16.msra.mxu0 %v11036
    %12408 = vmatpush.bf16.msra.mxu0 %v11030
    %12409 = vmatpush.bf16.msra.mxu0 %v11024
    %12410 = vmatpush.bf16.msra.mxu0 %v11018
    %12411 = vmatpush.bf16.msra.mxu0 %v11012
    %12412 = vmatmul.bf16.gmra.mxu0 %v8586
    %v12413 = vpop.f32.mrf.mxu0
    %v12414 = vadd.f32 %v12401, %v12413
    %v12415 = vpop.f32.mrf.mxu0
    %12416 = vdwg.mxu0
    %12417 = vmatpush.bf16.msra.mxu0 %v11102
    %12418 = vmatpush.bf16.msra.mxu0 %v11096
    %12419 = vmatpush.bf16.msra.mxu0 %v11090
    %12420 = vmatpush.bf16.msra.mxu0 %v11084
    %12421 = vmatpush.bf16.msra.mxu0 %v11078
    %12422 = vmatpush.bf16.msra.mxu0 %v11072
    %12423 = vmatpush.bf16.msra.mxu0 %v11066
    %12424 = vmatpush.bf16.msra.mxu0 %v11060
    %12425 = vmatmul.bf16.gmra.mxu0 %v8587
    %v12426 = vpop.f32.mrf.mxu0
    %v12427 = vadd.f32 %v12414, %v12426
    %v12428 = vpop.f32.mrf.mxu0
    %12429 = vdwg.mxu0
    %12430 = vmatpush.bf16.msra.mxu0 %v11150
    %12431 = vmatpush.bf16.msra.mxu0 %v11144
    %12432 = vmatpush.bf16.msra.mxu0 %v11138
    %12433 = vmatpush.bf16.msra.mxu0 %v11132
    %12434 = vmatpush.bf16.msra.mxu0 %v11126
    %12435 = vmatpush.bf16.msra.mxu0 %v11120
    %12436 = vmatpush.bf16.msra.mxu0 %v11114
    %12437 = vmatpush.bf16.msra.mxu0 %v11108
    %12438 = vmatmul.bf16.gmra.mxu0 %v8588
    %v12439 = vpop.f32.mrf.mxu0
    %v12440 = vadd.f32 %v12427, %v12439
    %v12441 = vpop.f32.mrf.mxu0
    %12442 = vdwg.mxu0
    %12443 = vmatpush.bf16.msra.mxu0 %v11198
    %12444 = vmatpush.bf16.msra.mxu0 %v11192
    %12445 = vmatpush.bf16.msra.mxu0 %v11186
    %12446 = vmatpush.bf16.msra.mxu0 %v11180
    %12447 = vmatpush.bf16.msra.mxu0 %v11174
    %12448 = vmatpush.bf16.msra.mxu0 %v11168
    %12449 = vmatpush.bf16.msra.mxu0 %v11162
    %12450 = vmatpush.bf16.msra.mxu0 %v11156
    %12451 = vmatmul.bf16.gmra.mxu0 %v8589
    %v12452 = vpop.f32.mrf.mxu0
    %v12453 = vadd.f32 %v12440, %v12452
    %v12454 = vpop.f32.mrf.mxu0
    %12455 = vdwg.mxu0
    %12456 = vmatpush.bf16.msra.mxu0 %v11246
    %12457 = vmatpush.bf16.msra.mxu0 %v11240
    %12458 = vmatpush.bf16.msra.mxu0 %v11234
    %12459 = vmatpush.bf16.msra.mxu0 %v11228
    %12460 = vmatpush.bf16.msra.mxu0 %v11222
    %12461 = vmatpush.bf16.msra.mxu0 %v11216
    %12462 = vmatpush.bf16.msra.mxu0 %v11210
    %12463 = vmatpush.bf16.msra.mxu0 %v11204
    %12464 = vmatmul.bf16.gmra.mxu0 %v8590
    %v12465 = vpop.f32.mrf.mxu0
    %v12466 = vadd.f32 %v12453, %v12465
    %v12467 = vpop.f32.mrf.mxu0
    %12468 = vdwg.mxu0
    %12469 = vmatpush.bf16.msra.mxu0 %v11294
    %12470 = vmatpush.bf16.msra.mxu0 %v11288
    %12471 = vmatpush.bf16.msra.mxu0 %v11282
    %12472 = vmatpush.bf16.msra.mxu0 %v11276
    %12473 = vmatpush.bf16.msra.mxu0 %v11270
    %12474 = vmatpush.bf16.msra.mxu0 %v11264
    %12475 = vmatpush.bf16.msra.mxu0 %v11258
    %12476 = vmatpush.bf16.msra.mxu0 %v11252
    %12477 = vmatmul.bf16.gmra.mxu0 %v8591
    %v12478 = vpop.f32.mrf.mxu0
    %v12479 = vadd.f32 %v12466, %v12478
    %v12480 = vpop.f32.mrf.mxu0
    %12481 = vdwg.mxu0
    %12482 = vmatpush.bf16.msra.mxu0 %v11342
    %12483 = vmatpush.bf16.msra.mxu0 %v11336
    %12484 = vmatpush.bf16.msra.mxu0 %v11330
    %12485 = vmatpush.bf16.msra.mxu0 %v11324
    %12486 = vmatpush.bf16.msra.mxu0 %v11318
    %12487 = vmatpush.bf16.msra.mxu0 %v11312
    %12488 = vmatpush.bf16.msra.mxu0 %v11306
    %12489 = vmatpush.bf16.msra.mxu0 %v11300
    %12490 = vmatmul.bf16.gmra.mxu0 %v8592
    %v12491 = vpop.f32.mrf.mxu0
    %v12492 = vadd.f32 %v12479, %v12491
    %v12493 = vpop.f32.mrf.mxu0
    %12494 = vdwg.mxu0
    %12495 = vmatpush.bf16.msra.mxu0 %v11390
    %12496 = vmatpush.bf16.msra.mxu0 %v11384
    %12497 = vmatpush.bf16.msra.mxu0 %v11378
    %12498 = vmatpush.bf16.msra.mxu0 %v11372
    %12499 = vmatpush.bf16.msra.mxu0 %v11366
    %12500 = vmatpush.bf16.msra.mxu0 %v11360
    %12501 = vmatpush.bf16.msra.mxu0 %v11354
    %12502 = vmatpush.bf16.msra.mxu0 %v11348
    %12503 = vmatmul.bf16.gmra.mxu0 %v8593
    %v12504 = vpop.f32.mrf.mxu0
    %v12505 = vadd.f32 %v12492, %v12504
    %v12506 = vpop.f32.mrf.mxu0
    %12507 = vdwg.mxu0
    %12508 = vmatpush.bf16.msra.mxu0 %v11438
    %12509 = vmatpush.bf16.msra.mxu0 %v11432
    %12510 = vmatpush.bf16.msra.mxu0 %v11426
    %12511 = vmatpush.bf16.msra.mxu0 %v11420
    %12512 = vmatpush.bf16.msra.mxu0 %v11414
    %12513 = vmatpush.bf16.msra.mxu0 %v11408
    %12514 = vmatpush.bf16.msra.mxu0 %v11402
    %12515 = vmatpush.bf16.msra.mxu0 %v11396
    %12516 = vmatmul.bf16.gmra.mxu0 %v8594
    %v12517 = vpop.f32.mrf.mxu0
    %v12518 = vadd.f32 %v12505, %v12517
    %v12519 = vpop.f32.mrf.mxu0
    %12520 = vdwg.mxu0
    %12521 = vmatpush.bf16.msra.mxu0 %v11486
    %12522 = vmatpush.bf16.msra.mxu0 %v11480
    %12523 = vmatpush.bf16.msra.mxu0 %v11474
    %12524 = vmatpush.bf16.msra.mxu0 %v11468
    %12525 = vmatpush.bf16.msra.mxu0 %v11462
    %12526 = vmatpush.bf16.msra.mxu0 %v11456
    %12527 = vmatpush.bf16.msra.mxu0 %v11450
    %12528 = vmatpush.bf16.msra.mxu0 %v11444
    %12529 = vmatmul.bf16.gmra.mxu0 %v8595
    %v12530 = vpop.f32.mrf.mxu0
    %v12531 = vadd.f32 %v12518, %v12530
    %v12532 = vpop.f32.mrf.mxu0
    %12533 = vdwg.mxu0
    %12534 = vmatpush.bf16.msra.mxu0 %v10959
    %12535 = vmatpush.bf16.msra.mxu0 %v10953
    %12536 = vmatpush.bf16.msra.mxu0 %v10947
    %12537 = vmatpush.bf16.msra.mxu0 %v10941
    %12538 = vmatpush.bf16.msra.mxu0 %v10935
    %12539 = vmatpush.bf16.msra.mxu0 %v10929
    %12540 = vmatpush.bf16.msra.mxu0 %v10923
    %12541 = vmatpush.bf16.msra.mxu0 %v10917
    %12542 = vmatmul.bf16.gmra.mxu0 %v8584
    %v12543 = vpop.f32.mrf.mxu0
    %v12544 = vadd.f32 %v9177, %v12543
    %v12545 = vpop.f32.mrf.mxu0
    %12546 = vdwg.mxu0
    %12547 = vmatpush.bf16.msra.mxu0 %v11007
    %12548 = vmatpush.bf16.msra.mxu0 %v11001
    %12549 = vmatpush.bf16.msra.mxu0 %v10995
    %12550 = vmatpush.bf16.msra.mxu0 %v10989
    %12551 = vmatpush.bf16.msra.mxu0 %v10983
    %12552 = vmatpush.bf16.msra.mxu0 %v10977
    %12553 = vmatpush.bf16.msra.mxu0 %v10971
    %12554 = vmatpush.bf16.msra.mxu0 %v10965
    %12555 = vmatmul.bf16.gmra.mxu0 %v8585
    %v12556 = vpop.f32.mrf.mxu0
    %v12557 = vadd.f32 %v12544, %v12556
    %v12558 = vpop.f32.mrf.mxu0
    %12559 = vdwg.mxu0
    %12560 = vmatpush.bf16.msra.mxu0 %v11055
    %12561 = vmatpush.bf16.msra.mxu0 %v11049
    %12562 = vmatpush.bf16.msra.mxu0 %v11043
    %12563 = vmatpush.bf16.msra.mxu0 %v11037
    %12564 = vmatpush.bf16.msra.mxu0 %v11031
    %12565 = vmatpush.bf16.msra.mxu0 %v11025
    %12566 = vmatpush.bf16.msra.mxu0 %v11019
    %12567 = vmatpush.bf16.msra.mxu0 %v11013
    %12568 = vmatmul.bf16.gmra.mxu0 %v8586
    %v12569 = vpop.f32.mrf.mxu0
    %v12570 = vadd.f32 %v12557, %v12569
    %v12571 = vpop.f32.mrf.mxu0
    %12572 = vdwg.mxu0
    %12573 = vmatpush.bf16.msra.mxu0 %v11103
    %12574 = vmatpush.bf16.msra.mxu0 %v11097
    %12575 = vmatpush.bf16.msra.mxu0 %v11091
    %12576 = vmatpush.bf16.msra.mxu0 %v11085
    %12577 = vmatpush.bf16.msra.mxu0 %v11079
    %12578 = vmatpush.bf16.msra.mxu0 %v11073
    %12579 = vmatpush.bf16.msra.mxu0 %v11067
    %12580 = vmatpush.bf16.msra.mxu0 %v11061
    %12581 = vmatmul.bf16.gmra.mxu0 %v8587
    %v12582 = vpop.f32.mrf.mxu0
    %v12583 = vadd.f32 %v12570, %v12582
    %v12584 = vpop.f32.mrf.mxu0
    %12585 = vdwg.mxu0
    %12586 = vmatpush.bf16.msra.mxu0 %v11151
    %12587 = vmatpush.bf16.msra.mxu0 %v11145
    %12588 = vmatpush.bf16.msra.mxu0 %v11139
    %12589 = vmatpush.bf16.msra.mxu0 %v11133
    %12590 = vmatpush.bf16.msra.mxu0 %v11127
    %12591 = vmatpush.bf16.msra.mxu0 %v11121
    %12592 = vmatpush.bf16.msra.mxu0 %v11115
    %12593 = vmatpush.bf16.msra.mxu0 %v11109
    %12594 = vmatmul.bf16.gmra.mxu0 %v8588
    %v12595 = vpop.f32.mrf.mxu0
    %v12596 = vadd.f32 %v12583, %v12595
    %v12597 = vpop.f32.mrf.mxu0
    %12598 = vdwg.mxu0
    %12599 = vmatpush.bf16.msra.mxu0 %v11199
    %12600 = vmatpush.bf16.msra.mxu0 %v11193
    %12601 = vmatpush.bf16.msra.mxu0 %v11187
    %12602 = vmatpush.bf16.msra.mxu0 %v11181
    %12603 = vmatpush.bf16.msra.mxu0 %v11175
    %12604 = vmatpush.bf16.msra.mxu0 %v11169
    %12605 = vmatpush.bf16.msra.mxu0 %v11163
    %12606 = vmatpush.bf16.msra.mxu0 %v11157
    %12607 = vmatmul.bf16.gmra.mxu0 %v8589
    %v12608 = vpop.f32.mrf.mxu0
    %v12609 = vadd.f32 %v12596, %v12608
    %v12610 = vpop.f32.mrf.mxu0
    %12611 = vdwg.mxu0
    %12612 = vmatpush.bf16.msra.mxu0 %v11247
    %12613 = vmatpush.bf16.msra.mxu0 %v11241
    %12614 = vmatpush.bf16.msra.mxu0 %v11235
    %12615 = vmatpush.bf16.msra.mxu0 %v11229
    %12616 = vmatpush.bf16.msra.mxu0 %v11223
    %12617 = vmatpush.bf16.msra.mxu0 %v11217
    %12618 = vmatpush.bf16.msra.mxu0 %v11211
    %12619 = vmatpush.bf16.msra.mxu0 %v11205
    %12620 = vmatmul.bf16.gmra.mxu0 %v8590
    %v12621 = vpop.f32.mrf.mxu0
    %v12622 = vadd.f32 %v12609, %v12621
    %v12623 = vpop.f32.mrf.mxu0
    %12624 = vdwg.mxu0
    %12625 = vmatpush.bf16.msra.mxu0 %v11295
    %12626 = vmatpush.bf16.msra.mxu0 %v11289
    %12627 = vmatpush.bf16.msra.mxu0 %v11283
    %12628 = vmatpush.bf16.msra.mxu0 %v11277
    %12629 = vmatpush.bf16.msra.mxu0 %v11271
    %12630 = vmatpush.bf16.msra.mxu0 %v11265
    %12631 = vmatpush.bf16.msra.mxu0 %v11259
    %12632 = vmatpush.bf16.msra.mxu0 %v11253
    %12633 = vmatmul.bf16.gmra.mxu0 %v8591
    %v12634 = vpop.f32.mrf.mxu0
    %v12635 = vadd.f32 %v12622, %v12634
    %v12636 = vpop.f32.mrf.mxu0
    %12637 = vdwg.mxu0
    %12638 = vmatpush.bf16.msra.mxu0 %v11343
    %12639 = vmatpush.bf16.msra.mxu0 %v11337
    %12640 = vmatpush.bf16.msra.mxu0 %v11331
    %12641 = vmatpush.bf16.msra.mxu0 %v11325
    %12642 = vmatpush.bf16.msra.mxu0 %v11319
    %12643 = vmatpush.bf16.msra.mxu0 %v11313
    %12644 = vmatpush.bf16.msra.mxu0 %v11307
    %12645 = vmatpush.bf16.msra.mxu0 %v11301
    %12646 = vmatmul.bf16.gmra.mxu0 %v8592
    %v12647 = vpop.f32.mrf.mxu0
    %v12648 = vadd.f32 %v12635, %v12647
    %v12649 = vpop.f32.mrf.mxu0
    %12650 = vdwg.mxu0
    %12651 = vmatpush.bf16.msra.mxu0 %v11391
    %12652 = vmatpush.bf16.msra.mxu0 %v11385
    %12653 = vmatpush.bf16.msra.mxu0 %v11379
    %12654 = vmatpush.bf16.msra.mxu0 %v11373
    %12655 = vmatpush.bf16.msra.mxu0 %v11367
    %12656 = vmatpush.bf16.msra.mxu0 %v11361
    %12657 = vmatpush.bf16.msra.mxu0 %v11355
    %12658 = vmatpush.bf16.msra.mxu0 %v11349
    %12659 = vmatmul.bf16.gmra.mxu0 %v8593
    %v12660 = vpop.f32.mrf.mxu0
    %v12661 = vadd.f32 %v12648, %v12660
    %v12662 = vpop.f32.mrf.mxu0
    %12663 = vdwg.mxu0
    %12664 = vmatpush.bf16.msra.mxu0 %v11439
    %12665 = vmatpush.bf16.msra.mxu0 %v11433
    %12666 = vmatpush.bf16.msra.mxu0 %v11427
    %12667 = vmatpush.bf16.msra.mxu0 %v11421
    %12668 = vmatpush.bf16.msra.mxu0 %v11415
    %12669 = vmatpush.bf16.msra.mxu0 %v11409
    %12670 = vmatpush.bf16.msra.mxu0 %v11403
    %12671 = vmatpush.bf16.msra.mxu0 %v11397
    %12672 = vmatmul.bf16.gmra.mxu0 %v8594
    %v12673 = vpop.f32.mrf.mxu0
    %v12674 = vadd.f32 %v12661, %v12673
    %v12675 = vpop.f32.mrf.mxu0
    %12676 = vdwg.mxu0
    %12677 = vmatpush.bf16.msra.mxu0 %v11487
    %12678 = vmatpush.bf16.msra.mxu0 %v11481
    %12679 = vmatpush.bf16.msra.mxu0 %v11475
    %12680 = vmatpush.bf16.msra.mxu0 %v11469
    %12681 = vmatpush.bf16.msra.mxu0 %v11463
    %12682 = vmatpush.bf16.msra.mxu0 %v11457
    %12683 = vmatpush.bf16.msra.mxu0 %v11451
    %12684 = vmatpush.bf16.msra.mxu0 %v11445
    %12685 = vmatmul.bf16.gmra.mxu0 %v8595
    %v12686 = vpop.f32.mrf.mxu0
    %v12687 = vadd.f32 %v12674, %v12686
    %v12688 = vpop.f32.mrf.mxu0
    %12689 = vdwg.mxu0
    %12690 = vmatpush.bf16.msra.mxu0 %v10960
    %12691 = vmatpush.bf16.msra.mxu0 %v10954
    %12692 = vmatpush.bf16.msra.mxu0 %v10948
    %12693 = vmatpush.bf16.msra.mxu0 %v10942
    %12694 = vmatpush.bf16.msra.mxu0 %v10936
    %12695 = vmatpush.bf16.msra.mxu0 %v10930
    %12696 = vmatpush.bf16.msra.mxu0 %v10924
    %12697 = vmatpush.bf16.msra.mxu0 %v10918
    %12698 = vmatmul.bf16.gmra.mxu0 %v8584
    %v12699 = vpop.f32.mrf.mxu0
    %v12700 = vadd.f32 %v9178, %v12699
    %v12701 = vpop.f32.mrf.mxu0
    %12702 = vdwg.mxu0
    %12703 = vmatpush.bf16.msra.mxu0 %v11008
    %12704 = vmatpush.bf16.msra.mxu0 %v11002
    %12705 = vmatpush.bf16.msra.mxu0 %v10996
    %12706 = vmatpush.bf16.msra.mxu0 %v10990
    %12707 = vmatpush.bf16.msra.mxu0 %v10984
    %12708 = vmatpush.bf16.msra.mxu0 %v10978
    %12709 = vmatpush.bf16.msra.mxu0 %v10972
    %12710 = vmatpush.bf16.msra.mxu0 %v10966
    %12711 = vmatmul.bf16.gmra.mxu0 %v8585
    %v12712 = vpop.f32.mrf.mxu0
    %v12713 = vadd.f32 %v12700, %v12712
    %v12714 = vpop.f32.mrf.mxu0
    %12715 = vdwg.mxu0
    %12716 = vmatpush.bf16.msra.mxu0 %v11056
    %12717 = vmatpush.bf16.msra.mxu0 %v11050
    %12718 = vmatpush.bf16.msra.mxu0 %v11044
    %12719 = vmatpush.bf16.msra.mxu0 %v11038
    %12720 = vmatpush.bf16.msra.mxu0 %v11032
    %12721 = vmatpush.bf16.msra.mxu0 %v11026
    %12722 = vmatpush.bf16.msra.mxu0 %v11020
    %12723 = vmatpush.bf16.msra.mxu0 %v11014
    %12724 = vmatmul.bf16.gmra.mxu0 %v8586
    %v12725 = vpop.f32.mrf.mxu0
    %v12726 = vadd.f32 %v12713, %v12725
    %v12727 = vpop.f32.mrf.mxu0
    %12728 = vdwg.mxu0
    %12729 = vmatpush.bf16.msra.mxu0 %v11104
    %12730 = vmatpush.bf16.msra.mxu0 %v11098
    %12731 = vmatpush.bf16.msra.mxu0 %v11092
    %12732 = vmatpush.bf16.msra.mxu0 %v11086
    %12733 = vmatpush.bf16.msra.mxu0 %v11080
    %12734 = vmatpush.bf16.msra.mxu0 %v11074
    %12735 = vmatpush.bf16.msra.mxu0 %v11068
    %12736 = vmatpush.bf16.msra.mxu0 %v11062
    %12737 = vmatmul.bf16.gmra.mxu0 %v8587
    %v12738 = vpop.f32.mrf.mxu0
    %v12739 = vadd.f32 %v12726, %v12738
    %v12740 = vpop.f32.mrf.mxu0
    %12741 = vdwg.mxu0
    %12742 = vmatpush.bf16.msra.mxu0 %v11152
    %12743 = vmatpush.bf16.msra.mxu0 %v11146
    %12744 = vmatpush.bf16.msra.mxu0 %v11140
    %12745 = vmatpush.bf16.msra.mxu0 %v11134
    %12746 = vmatpush.bf16.msra.mxu0 %v11128
    %12747 = vmatpush.bf16.msra.mxu0 %v11122
    %12748 = vmatpush.bf16.msra.mxu0 %v11116
    %12749 = vmatpush.bf16.msra.mxu0 %v11110
    %12750 = vmatmul.bf16.gmra.mxu0 %v8588
    %v12751 = vpop.f32.mrf.mxu0
    %v12752 = vadd.f32 %v12739, %v12751
    %v12753 = vpop.f32.mrf.mxu0
    %12754 = vdwg.mxu0
    %12755 = vmatpush.bf16.msra.mxu0 %v11200
    %12756 = vmatpush.bf16.msra.mxu0 %v11194
    %12757 = vmatpush.bf16.msra.mxu0 %v11188
    %12758 = vmatpush.bf16.msra.mxu0 %v11182
    %12759 = vmatpush.bf16.msra.mxu0 %v11176
    %12760 = vmatpush.bf16.msra.mxu0 %v11170
    %12761 = vmatpush.bf16.msra.mxu0 %v11164
    %12762 = vmatpush.bf16.msra.mxu0 %v11158
    %12763 = vmatmul.bf16.gmra.mxu0 %v8589
    %v12764 = vpop.f32.mrf.mxu0
    %v12765 = vadd.f32 %v12752, %v12764
    %v12766 = vpop.f32.mrf.mxu0
    %12767 = vdwg.mxu0
    %12768 = vmatpush.bf16.msra.mxu0 %v11248
    %12769 = vmatpush.bf16.msra.mxu0 %v11242
    %12770 = vmatpush.bf16.msra.mxu0 %v11236
    %12771 = vmatpush.bf16.msra.mxu0 %v11230
    %12772 = vmatpush.bf16.msra.mxu0 %v11224
    %12773 = vmatpush.bf16.msra.mxu0 %v11218
    %12774 = vmatpush.bf16.msra.mxu0 %v11212
    %12775 = vmatpush.bf16.msra.mxu0 %v11206
    %12776 = vmatmul.bf16.gmra.mxu0 %v8590
    %v12777 = vpop.f32.mrf.mxu0
    %v12778 = vadd.f32 %v12765, %v12777
    %v12779 = vpop.f32.mrf.mxu0
    %12780 = vdwg.mxu0
    %12781 = vmatpush.bf16.msra.mxu0 %v11296
    %12782 = vmatpush.bf16.msra.mxu0 %v11290
    %12783 = vmatpush.bf16.msra.mxu0 %v11284
    %12784 = vmatpush.bf16.msra.mxu0 %v11278
    %12785 = vmatpush.bf16.msra.mxu0 %v11272
    %12786 = vmatpush.bf16.msra.mxu0 %v11266
    %12787 = vmatpush.bf16.msra.mxu0 %v11260
    %12788 = vmatpush.bf16.msra.mxu0 %v11254
    %12789 = vmatmul.bf16.gmra.mxu0 %v8591
    %v12790 = vpop.f32.mrf.mxu0
    %v12791 = vadd.f32 %v12778, %v12790
    %v12792 = vpop.f32.mrf.mxu0
    %12793 = vdwg.mxu0
    %12794 = vmatpush.bf16.msra.mxu0 %v11344
    %12795 = vmatpush.bf16.msra.mxu0 %v11338
    %12796 = vmatpush.bf16.msra.mxu0 %v11332
    %12797 = vmatpush.bf16.msra.mxu0 %v11326
    %12798 = vmatpush.bf16.msra.mxu0 %v11320
    %12799 = vmatpush.bf16.msra.mxu0 %v11314
    %12800 = vmatpush.bf16.msra.mxu0 %v11308
    %12801 = vmatpush.bf16.msra.mxu0 %v11302
    %12802 = vmatmul.bf16.gmra.mxu0 %v8592
    %v12803 = vpop.f32.mrf.mxu0
    %v12804 = vadd.f32 %v12791, %v12803
    %v12805 = vpop.f32.mrf.mxu0
    %12806 = vdwg.mxu0
    %12807 = vmatpush.bf16.msra.mxu0 %v11392
    %12808 = vmatpush.bf16.msra.mxu0 %v11386
    %12809 = vmatpush.bf16.msra.mxu0 %v11380
    %12810 = vmatpush.bf16.msra.mxu0 %v11374
    %12811 = vmatpush.bf16.msra.mxu0 %v11368
    %12812 = vmatpush.bf16.msra.mxu0 %v11362
    %12813 = vmatpush.bf16.msra.mxu0 %v11356
    %12814 = vmatpush.bf16.msra.mxu0 %v11350
    %12815 = vmatmul.bf16.gmra.mxu0 %v8593
    %v12816 = vpop.f32.mrf.mxu0
    %v12817 = vadd.f32 %v12804, %v12816
    %v12818 = vpop.f32.mrf.mxu0
    %12819 = vdwg.mxu0
    %12820 = vmatpush.bf16.msra.mxu0 %v11440
    %12821 = vmatpush.bf16.msra.mxu0 %v11434
    %12822 = vmatpush.bf16.msra.mxu0 %v11428
    %12823 = vmatpush.bf16.msra.mxu0 %v11422
    %12824 = vmatpush.bf16.msra.mxu0 %v11416
    %12825 = vmatpush.bf16.msra.mxu0 %v11410
    %12826 = vmatpush.bf16.msra.mxu0 %v11404
    %12827 = vmatpush.bf16.msra.mxu0 %v11398
    %12828 = vmatmul.bf16.gmra.mxu0 %v8594
    %v12829 = vpop.f32.mrf.mxu0
    %v12830 = vadd.f32 %v12817, %v12829
    %v12831 = vpop.f32.mrf.mxu0
    %12832 = vdwg.mxu0
    %12833 = vmatpush.bf16.msra.mxu0 %v11488
    %12834 = vmatpush.bf16.msra.mxu0 %v11482
    %12835 = vmatpush.bf16.msra.mxu0 %v11476
    %12836 = vmatpush.bf16.msra.mxu0 %v11470
    %12837 = vmatpush.bf16.msra.mxu0 %v11464
    %12838 = vmatpush.bf16.msra.mxu0 %v11458
    %12839 = vmatpush.bf16.msra.mxu0 %v11452
    %12840 = vmatpush.bf16.msra.mxu0 %v11446
    %12841 = vmatmul.bf16.gmra.mxu0 %v8595
    %v12842 = vpop.f32.mrf.mxu0
    %v12843 = vadd.f32 %v12830, %v12842
    %v12844 = vpop.f32.mrf.mxu0
    %12845 = vdwg.mxu0
    %12846 = vmatpush.bf16.msra.mxu0 %v10961
    %12847 = vmatpush.bf16.msra.mxu0 %v10955
    %12848 = vmatpush.bf16.msra.mxu0 %v10949
    %12849 = vmatpush.bf16.msra.mxu0 %v10943
    %12850 = vmatpush.bf16.msra.mxu0 %v10937
    %12851 = vmatpush.bf16.msra.mxu0 %v10931
    %12852 = vmatpush.bf16.msra.mxu0 %v10925
    %12853 = vmatpush.bf16.msra.mxu0 %v10919
    %12854 = vmatmul.bf16.gmra.mxu0 %v8584
    %v12855 = vpop.f32.mrf.mxu0
    %v12856 = vadd.f32 %v9179, %v12855
    %v12857 = vpop.f32.mrf.mxu0
    %12858 = vdwg.mxu0
    %12859 = vmatpush.bf16.msra.mxu0 %v11009
    %12860 = vmatpush.bf16.msra.mxu0 %v11003
    %12861 = vmatpush.bf16.msra.mxu0 %v10997
    %12862 = vmatpush.bf16.msra.mxu0 %v10991
    %12863 = vmatpush.bf16.msra.mxu0 %v10985
    %12864 = vmatpush.bf16.msra.mxu0 %v10979
    %12865 = vmatpush.bf16.msra.mxu0 %v10973
    %12866 = vmatpush.bf16.msra.mxu0 %v10967
    %12867 = vmatmul.bf16.gmra.mxu0 %v8585
    %v12868 = vpop.f32.mrf.mxu0
    %v12869 = vadd.f32 %v12856, %v12868
    %v12870 = vpop.f32.mrf.mxu0
    %12871 = vdwg.mxu0
    %12872 = vmatpush.bf16.msra.mxu0 %v11057
    %12873 = vmatpush.bf16.msra.mxu0 %v11051
    %12874 = vmatpush.bf16.msra.mxu0 %v11045
    %12875 = vmatpush.bf16.msra.mxu0 %v11039
    %12876 = vmatpush.bf16.msra.mxu0 %v11033
    %12877 = vmatpush.bf16.msra.mxu0 %v11027
    %12878 = vmatpush.bf16.msra.mxu0 %v11021
    %12879 = vmatpush.bf16.msra.mxu0 %v11015
    %12880 = vmatmul.bf16.gmra.mxu0 %v8586
    %v12881 = vpop.f32.mrf.mxu0
    %v12882 = vadd.f32 %v12869, %v12881
    %v12883 = vpop.f32.mrf.mxu0
    %12884 = vdwg.mxu0
    %12885 = vmatpush.bf16.msra.mxu0 %v11105
    %12886 = vmatpush.bf16.msra.mxu0 %v11099
    %12887 = vmatpush.bf16.msra.mxu0 %v11093
    %12888 = vmatpush.bf16.msra.mxu0 %v11087
    %12889 = vmatpush.bf16.msra.mxu0 %v11081
    %12890 = vmatpush.bf16.msra.mxu0 %v11075
    %12891 = vmatpush.bf16.msra.mxu0 %v11069
    %12892 = vmatpush.bf16.msra.mxu0 %v11063
    %12893 = vmatmul.bf16.gmra.mxu0 %v8587
    %v12894 = vpop.f32.mrf.mxu0
    %v12895 = vadd.f32 %v12882, %v12894
    %v12896 = vpop.f32.mrf.mxu0
    %12897 = vdwg.mxu0
    %12898 = vmatpush.bf16.msra.mxu0 %v11153
    %12899 = vmatpush.bf16.msra.mxu0 %v11147
    %12900 = vmatpush.bf16.msra.mxu0 %v11141
    %12901 = vmatpush.bf16.msra.mxu0 %v11135
    %12902 = vmatpush.bf16.msra.mxu0 %v11129
    %12903 = vmatpush.bf16.msra.mxu0 %v11123
    %12904 = vmatpush.bf16.msra.mxu0 %v11117
    %12905 = vmatpush.bf16.msra.mxu0 %v11111
    %12906 = vmatmul.bf16.gmra.mxu0 %v8588
    %v12907 = vpop.f32.mrf.mxu0
    %v12908 = vadd.f32 %v12895, %v12907
    %v12909 = vpop.f32.mrf.mxu0
    %12910 = vdwg.mxu0
    %12911 = vmatpush.bf16.msra.mxu0 %v11201
    %12912 = vmatpush.bf16.msra.mxu0 %v11195
    %12913 = vmatpush.bf16.msra.mxu0 %v11189
    %12914 = vmatpush.bf16.msra.mxu0 %v11183
    %12915 = vmatpush.bf16.msra.mxu0 %v11177
    %12916 = vmatpush.bf16.msra.mxu0 %v11171
    %12917 = vmatpush.bf16.msra.mxu0 %v11165
    %12918 = vmatpush.bf16.msra.mxu0 %v11159
    %12919 = vmatmul.bf16.gmra.mxu0 %v8589
    %v12920 = vpop.f32.mrf.mxu0
    %v12921 = vadd.f32 %v12908, %v12920
    %v12922 = vpop.f32.mrf.mxu0
    %12923 = vdwg.mxu0
    %12924 = vmatpush.bf16.msra.mxu0 %v11249
    %12925 = vmatpush.bf16.msra.mxu0 %v11243
    %12926 = vmatpush.bf16.msra.mxu0 %v11237
    %12927 = vmatpush.bf16.msra.mxu0 %v11231
    %12928 = vmatpush.bf16.msra.mxu0 %v11225
    %12929 = vmatpush.bf16.msra.mxu0 %v11219
    %12930 = vmatpush.bf16.msra.mxu0 %v11213
    %12931 = vmatpush.bf16.msra.mxu0 %v11207
    %12932 = vmatmul.bf16.gmra.mxu0 %v8590
    %v12933 = vpop.f32.mrf.mxu0
    %v12934 = vadd.f32 %v12921, %v12933
    %v12935 = vpop.f32.mrf.mxu0
    %12936 = vdwg.mxu0
    %12937 = vmatpush.bf16.msra.mxu0 %v11297
    %12938 = vmatpush.bf16.msra.mxu0 %v11291
    %12939 = vmatpush.bf16.msra.mxu0 %v11285
    %12940 = vmatpush.bf16.msra.mxu0 %v11279
    %12941 = vmatpush.bf16.msra.mxu0 %v11273
    %12942 = vmatpush.bf16.msra.mxu0 %v11267
    %12943 = vmatpush.bf16.msra.mxu0 %v11261
    %12944 = vmatpush.bf16.msra.mxu0 %v11255
    %12945 = vmatmul.bf16.gmra.mxu0 %v8591
    %v12946 = vpop.f32.mrf.mxu0
    %v12947 = vadd.f32 %v12934, %v12946
    %v12948 = vpop.f32.mrf.mxu0
    %12949 = vdwg.mxu0
    %12950 = vmatpush.bf16.msra.mxu0 %v11345
    %12951 = vmatpush.bf16.msra.mxu0 %v11339
    %12952 = vmatpush.bf16.msra.mxu0 %v11333
    %12953 = vmatpush.bf16.msra.mxu0 %v11327
    %12954 = vmatpush.bf16.msra.mxu0 %v11321
    %12955 = vmatpush.bf16.msra.mxu0 %v11315
    %12956 = vmatpush.bf16.msra.mxu0 %v11309
    %12957 = vmatpush.bf16.msra.mxu0 %v11303
    %12958 = vmatmul.bf16.gmra.mxu0 %v8592
    %v12959 = vpop.f32.mrf.mxu0
    %v12960 = vadd.f32 %v12947, %v12959
    %v12961 = vpop.f32.mrf.mxu0
    %12962 = vdwg.mxu0
    %12963 = vmatpush.bf16.msra.mxu0 %v11393
    %12964 = vmatpush.bf16.msra.mxu0 %v11387
    %12965 = vmatpush.bf16.msra.mxu0 %v11381
    %12966 = vmatpush.bf16.msra.mxu0 %v11375
    %12967 = vmatpush.bf16.msra.mxu0 %v11369
    %12968 = vmatpush.bf16.msra.mxu0 %v11363
    %12969 = vmatpush.bf16.msra.mxu0 %v11357
    %12970 = vmatpush.bf16.msra.mxu0 %v11351
    %12971 = vmatmul.bf16.gmra.mxu0 %v8593
    %v12972 = vpop.f32.mrf.mxu0
    %v12973 = vadd.f32 %v12960, %v12972
    %v12974 = vpop.f32.mrf.mxu0
    %12975 = vdwg.mxu0
    %12976 = vmatpush.bf16.msra.mxu0 %v11441
    %12977 = vmatpush.bf16.msra.mxu0 %v11435
    %12978 = vmatpush.bf16.msra.mxu0 %v11429
    %12979 = vmatpush.bf16.msra.mxu0 %v11423
    %12980 = vmatpush.bf16.msra.mxu0 %v11417
    %12981 = vmatpush.bf16.msra.mxu0 %v11411
    %12982 = vmatpush.bf16.msra.mxu0 %v11405
    %12983 = vmatpush.bf16.msra.mxu0 %v11399
    %12984 = vmatmul.bf16.gmra.mxu0 %v8594
    %v12985 = vpop.f32.mrf.mxu0
    %v12986 = vadd.f32 %v12973, %v12985
    %v12987 = vpop.f32.mrf.mxu0
    %12988 = vdwg.mxu0
    %12989 = vmatpush.bf16.msra.mxu0 %v11489
    %12990 = vmatpush.bf16.msra.mxu0 %v11483
    %12991 = vmatpush.bf16.msra.mxu0 %v11477
    %12992 = vmatpush.bf16.msra.mxu0 %v11471
    %12993 = vmatpush.bf16.msra.mxu0 %v11465
    %12994 = vmatpush.bf16.msra.mxu0 %v11459
    %12995 = vmatpush.bf16.msra.mxu0 %v11453
    %12996 = vmatpush.bf16.msra.mxu0 %v11447
    %12997 = vmatmul.bf16.gmra.mxu0 %v8595
    %v12998 = vpop.f32.mrf.mxu0
    %v12999 = vadd.f32 %v12986, %v12998
    %v13000 = vpop.f32.mrf.mxu0
    %13001 = vdwg.mxu0
    %v13002 = vsub.f32 0.0, %v12219
    %v13003 = vsub.f32 0.0, %v12375
    %v13004 = vsub.f32 0.0, %v12531
    %v13005 = vsub.f32 0.0, %v12687
    %v13006 = vmul.f32 %v13002, 1.442695
    %v13007 = vpow.pop %v13006
    %v13008 = vmul.f32 %v13003, 1.442695
    %v13009 = vpow.pop %v13008
    %v13010 = vmul.f32 %v13004, 1.442695
    %v13011 = vpow.pop %v13010
    %v13012 = vmul.f32 %v13005, 1.442695
    %v13013 = vpow.pop %v13012
    %v13014 = vadd.f32 %v13007, 1.0
    %v13015 = vadd.f32 %v13009, 1.0
    %v13016 = vadd.f32 %v13011, 1.0
    %v13017 = vadd.f32 %v13013, 1.0
    %v13018 = vrcp.pop %v13014
    %v13019 = vmul.f32 %v13014, %v13018
    %v13020 = vsub.f32 1.0, %v13019
    %v13021 = vmul.f32 %v13018, %v13020
    %v13022 = vadd.f32 %v13018, %v13021
    %vm13023 = vweird.f32 %v13014
    %vm13024 = vweird.f32 %v13018
    %vm13025 = vmor %vm13023, %vm13024
    %v13026 = vsel %vm13025, %v13018, %v13022
    %v13027 = vand.u32 2147483647, %v13014
    %vm13028 = vcmp.eq.f32.partialorder %v13027, 8.507059e+37
    %v13029 = vand.u32 %v13014, 2147483648
    %v13030 = vor.u32 1.1754944e-38, %v13029
    %v13031 = vsel %vm13028, %v13030, %v13026
    %v13032 = vmul.f32 1.0, %v13031
    %v13033 = vrcp.pop %v13015
    %v13034 = vmul.f32 %v13015, %v13033
    %v13035 = vsub.f32 1.0, %v13034
    %v13036 = vmul.f32 %v13033, %v13035
    %v13037 = vadd.f32 %v13033, %v13036
    %vm13038 = vweird.f32 %v13015
    %vm13039 = vweird.f32 %v13033
    %vm13040 = vmor %vm13038, %vm13039
    %v13041 = vsel %vm13040, %v13033, %v13037
    %v13042 = vand.u32 2147483647, %v13015
    %vm13043 = vcmp.eq.f32.partialorder %v13042, 8.507059e+37
    %v13044 = vand.u32 %v13015, 2147483648
    %v13045 = vor.u32 1.1754944e-38, %v13044
    %v13046 = vsel %vm13043, %v13045, %v13041
    %v13047 = vmul.f32 1.0, %v13046
    %v13048 = vrcp.pop %v13016
    %v13049 = vmul.f32 %v13016, %v13048
    %v13050 = vsub.f32 1.0, %v13049
    %v13051 = vmul.f32 %v13048, %v13050
    %v13052 = vadd.f32 %v13048, %v13051
    %vm13053 = vweird.f32 %v13016
    %vm13054 = vweird.f32 %v13048
    %vm13055 = vmor %vm13053, %vm13054
    %v13056 = vsel %vm13055, %v13048, %v13052
    %v13057 = vand.u32 2147483647, %v13016
    %vm13058 = vcmp.eq.f32.partialorder %v13057, 8.507059e+37
    %v13059 = vand.u32 %v13016, 2147483648
    %v13060 = vor.u32 1.1754944e-38, %v13059
    %v13061 = vsel %vm13058, %v13060, %v13056
    %v13062 = vmul.f32 1.0, %v13061
    %v13063 = vrcp.pop %v13017
    %v13064 = vmul.f32 %v13017, %v13063
    %v13065 = vsub.f32 1.0, %v13064
    %v13066 = vmul.f32 %v13063, %v13065
    %v13067 = vadd.f32 %v13063, %v13066
    %vm13068 = vweird.f32 %v13017
    %vm13069 = vweird.f32 %v13063
    %vm13070 = vmor %vm13068, %vm13069
    %v13071 = vsel %vm13070, %v13063, %v13067
    %v13072 = vand.u32 2147483647, %v13017
    %vm13073 = vcmp.eq.f32.partialorder %v13072, 8.507059e+37
    %v13074 = vand.u32 %v13017, 2147483648
    %v13075 = vor.u32 1.1754944e-38, %v13074
    %v13076 = vsel %vm13073, %v13075, %v13071
    %v13077 = vmul.f32 1.0, %v13076
    %v13078 = vmul.f32 %v12219, %v13032
    %v13079 = vmul.f32 %v12375, %v13047
    %v13080 = vmul.f32 %v12531, %v13062
    %v13081 = vmul.f32 %v12687, %v13077
    %v13082 = vpack.c.bf16 %v13078, %v13078
    %v13083 = vpack.c.bf16 %v13079, %v13079
    %v13084 = vpack.c.bf16 %v13080, %v13080
    %v13085 = vpack.c.bf16 %v13081, %v13081
    %v13086 = vmax.f32 %v12843, 0.0
    %v13087 = vmax.f32 %v12999, 0.0
    %v13088 = vpack.c.bf16 %v13086, %v13086
    %v13089 = vpack.c.bf16 %v13087, %v13087
    %v13090 = vld [vmem:[#allocation16] sm:$0xf]
    %v13091 = vld [vmem:[#allocation16 + $0x4] sm:$0xf]
    %v13092 = vld [vmem:[#allocation16 + $0x8] sm:$0xf]
    %v13093 = vld [vmem:[#allocation16 + $0xc] sm:$0xf]
    %v13094 = vld [vmem:[#allocation16 + $0x10] sm:$0xf]
    %v13095 = vld [vmem:[#allocation16 + $0x14] sm:$0xf]
    %v13096 = vld [vmem:[#allocation16 + $0x18] sm:$0xf]
    %v13097 = vld [vmem:[#allocation16 + $0x1c] sm:$0xf]
    %v13098 = vld [vmem:[#allocation16 + $0x20] sm:$0xf]
    %v13099 = vld [vmem:[#allocation16 + $0x24] sm:$0xf]
    %v13100 = vld [vmem:[#allocation16 + $0x28] sm:$0xf]
    %v13101 = vld [vmem:[#allocation16 + $0x2c] sm:$0xf]
    %v13102 = vld [vmem:[#allocation16 + $0x30] sm:$0xf]
    %v13103 = vld [vmem:[#allocation16 + $0x34] sm:$0xf]
    %v13104 = vld [vmem:[#allocation16 + $0x38] sm:$0xf]
    %v13105 = vld [vmem:[#allocation16 + $0x3c] sm:$0xf]
    %v13106 = vld [vmem:[#allocation16 + $0x40] sm:$0xf]
    %v13107 = vld [vmem:[#allocation16 + $0x44] sm:$0xf]
    %v13108 = vld [vmem:[#allocation16 + $0x48] sm:$0xf]
    %v13109 = vld [vmem:[#allocation16 + $0x4c] sm:$0xf]
    %v13110 = vld [vmem:[#allocation16 + $0x50] sm:$0xf]
    %v13111 = vld [vmem:[#allocation16 + $0x54] sm:$0xf]
    %v13112 = vld [vmem:[#allocation16 + $0x58] sm:$0xf]
    %v13113 = vld [vmem:[#allocation16 + $0x5c] sm:$0xf]
    %v13114 = vld [vmem:[#allocation16 + $0x60] sm:$0xf]
    %v13115 = vld [vmem:[#allocation16 + $0x64] sm:$0xf]
    %v13116 = vld [vmem:[#allocation16 + $0x68] sm:$0xf]
    %v13117 = vld [vmem:[#allocation16 + $0x6c] sm:$0xf]
    %v13118 = vld [vmem:[#allocation16 + $0x70] sm:$0xf]
    %v13119 = vld [vmem:[#allocation16 + $0x74] sm:$0xf]
    %v13120 = vld [vmem:[#allocation16 + $0x78] sm:$0xf]
    %v13121 = vld [vmem:[#allocation16 + $0x7c] sm:$0xf]
    %v13122 = vld [vmem:[#allocation16 + $0x80] sm:$0xf]
    %v13123 = vld [vmem:[#allocation16 + $0x84] sm:$0xf]
    %v13124 = vld [vmem:[#allocation16 + $0x88] sm:$0xf]
    %v13125 = vld [vmem:[#allocation16 + $0x8c] sm:$0xf]
    %v13126 = vld [vmem:[#allocation16 + $0x90] sm:$0xf]
    %v13127 = vld [vmem:[#allocation16 + $0x94] sm:$0xf]
    %v13128 = vld [vmem:[#allocation16 + $0x98] sm:$0xf]
    %v13129 = vld [vmem:[#allocation16 + $0x9c] sm:$0xf]
    %v13130 = vld [vmem:[#allocation16 + $0xa0] sm:$0xf]
    %v13131 = vld [vmem:[#allocation16 + $0xa4] sm:$0xf]
    %v13132 = vld [vmem:[#allocation16 + $0xa8] sm:$0xf]
    %v13133 = vld [vmem:[#allocation16 + $0xac] sm:$0xf]
    %v13134 = vld [vmem:[#allocation16 + $0xb0] sm:$0xf]
    %v13135 = vld [vmem:[#allocation16 + $0xb4] sm:$0xf]
    %v13136 = vld [vmem:[#allocation16 + $0xb8] sm:$0xf]
    %v13137 = vld [vmem:[#allocation16 + $0xbc] sm:$0xf]
    %v13138 = vld [vmem:[#allocation16 + $0xc0] sm:$0xf]
    %v13139 = vld [vmem:[#allocation16 + $0xc4] sm:$0xf]
    %v13140 = vld [vmem:[#allocation16 + $0xc8] sm:$0xf]
    %v13141 = vld [vmem:[#allocation16 + $0xcc] sm:$0xf]
    %v13142 = vld [vmem:[#allocation16 + $0xd0] sm:$0xf]
    %v13143 = vld [vmem:[#allocation16 + $0xd4] sm:$0xf]
    %v13144 = vld [vmem:[#allocation16 + $0xd8] sm:$0xf]
    %v13145 = vld [vmem:[#allocation16 + $0xdc] sm:$0xf]
    %v13146 = vld [vmem:[#allocation16 + $0xe0] sm:$0xf]
    %v13147 = vld [vmem:[#allocation16 + $0xe4] sm:$0xf]
    %v13148 = vld [vmem:[#allocation16 + $0xe8] sm:$0xf]
    %v13149 = vld [vmem:[#allocation16 + $0xec] sm:$0xf]
    %v13150 = vld [vmem:[#allocation16 + $0xf0] sm:$0xf]
    %v13151 = vld [vmem:[#allocation16 + $0xf4] sm:$0xf]
    %v13152 = vld [vmem:[#allocation16 + $0xf8] sm:$0xf]
    %v13153 = vld [vmem:[#allocation16 + $0xfc] sm:$0xf]
    %v13154 = vld [vmem:[#allocation17] sm:$0xf]
    %v13155 = vld [vmem:[#allocation17 + $0x4] sm:$0xf]
    %v13156 = vld [vmem:[#allocation17 + $0x8] sm:$0xf]
    %v13157 = vld [vmem:[#allocation17 + $0xc] sm:$0xf]
    %v13158 = vld [vmem:[#allocation17 + $0x10] sm:$0xf]
    %v13159 = vld [vmem:[#allocation17 + $0x14] sm:$0xf]
    %v13160 = vld [vmem:[#allocation17 + $0x18] sm:$0xf]
    %v13161 = vld [vmem:[#allocation17 + $0x1c] sm:$0xf]
    %v13162 = vld [vmem:[#allocation17 + $0x20] sm:$0xf]
    %v13163 = vld [vmem:[#allocation17 + $0x24] sm:$0xf]
    %v13164 = vld [vmem:[#allocation17 + $0x28] sm:$0xf]
    %v13165 = vld [vmem:[#allocation17 + $0x2c] sm:$0xf]
    %v13166 = vld [vmem:[#allocation17 + $0x30] sm:$0xf]
    %v13167 = vld [vmem:[#allocation17 + $0x34] sm:$0xf]
    %v13168 = vld [vmem:[#allocation17 + $0x38] sm:$0xf]
    %v13169 = vld [vmem:[#allocation17 + $0x3c] sm:$0xf]
    %v13170 = vld [vmem:[#allocation17 + $0x40] sm:$0xf]
    %v13171 = vld [vmem:[#allocation17 + $0x44] sm:$0xf]
    %v13172 = vld [vmem:[#allocation17 + $0x48] sm:$0xf]
    %v13173 = vld [vmem:[#allocation17 + $0x4c] sm:$0xf]
    %v13174 = vld [vmem:[#allocation17 + $0x50] sm:$0xf]
    %v13175 = vld [vmem:[#allocation17 + $0x54] sm:$0xf]
    %v13176 = vld [vmem:[#allocation17 + $0x58] sm:$0xf]
    %v13177 = vld [vmem:[#allocation17 + $0x5c] sm:$0xf]
    %v13178 = vld [vmem:[#allocation17 + $0x60] sm:$0xf]
    %v13179 = vld [vmem:[#allocation17 + $0x64] sm:$0xf]
    %v13180 = vld [vmem:[#allocation17 + $0x68] sm:$0xf]
    %v13181 = vld [vmem:[#allocation17 + $0x6c] sm:$0xf]
    %v13182 = vld [vmem:[#allocation17 + $0x70] sm:$0xf]
    %v13183 = vld [vmem:[#allocation17 + $0x74] sm:$0xf]
    %v13184 = vld [vmem:[#allocation17 + $0x78] sm:$0xf]
    %v13185 = vld [vmem:[#allocation17 + $0x7c] sm:$0xf]
    %v13218 = vunpack.c.l.b16 %v13154
    %v13219 = vunpack.c.l.b16 %v13155
    %v13220 = vunpack.c.l.b16 %v13156
    %v13221 = vunpack.c.l.b16 %v13157
    %v13222 = vunpack.c.l.b16 %v13158
    %v13223 = vunpack.c.l.b16 %v13159
    %v13224 = vunpack.c.l.b16 %v13160
    %v13225 = vunpack.c.l.b16 %v13161
    %v13226 = vunpack.c.l.b16 %v13162
    %v13227 = vunpack.c.l.b16 %v13163
    %v13228 = vunpack.c.l.b16 %v13164
    %v13229 = vunpack.c.l.b16 %v13165
    %v13230 = vunpack.c.l.b16 %v13166
    %v13231 = vunpack.c.l.b16 %v13167
    %v13232 = vunpack.c.l.b16 %v13168
    %v13233 = vunpack.c.l.b16 %v13169
    %v13234 = vunpack.c.l.b16 %v13170
    %v13235 = vunpack.c.l.b16 %v13171
    %v13236 = vunpack.c.l.b16 %v13172
    %v13237 = vunpack.c.l.b16 %v13173
    %v13238 = vunpack.c.l.b16 %v13174
    %v13239 = vunpack.c.l.b16 %v13175
    %v13240 = vunpack.c.l.b16 %v13176
    %v13241 = vunpack.c.l.b16 %v13177
    %v13242 = vunpack.c.l.b16 %v13178
    %v13243 = vunpack.c.l.b16 %v13179
    %v13244 = vunpack.c.l.b16 %v13180
    %v13245 = vunpack.c.l.b16 %v13181
    %v13246 = vunpack.c.l.b16 %v13182
    %v13247 = vunpack.c.l.b16 %v13183
    %v13248 = vunpack.c.l.b16 %v13184
    %v13249 = vunpack.c.l.b16 %v13185
    %v13250 = vpack.c.b16 %v13219, %v13218
    %v13251 = vpack.c.b16 %v13221, %v13220
    %v13252 = vpack.c.b16 %v13223, %v13222
    %v13253 = vpack.c.b16 %v13225, %v13224
    %v13254 = vpack.c.b16 %v13227, %v13226
    %v13255 = vpack.c.b16 %v13229, %v13228
    %v13256 = vpack.c.b16 %v13231, %v13230
    %v13257 = vpack.c.b16 %v13233, %v13232
    %v13258 = vpack.c.b16 %v13235, %v13234
    %v13259 = vpack.c.b16 %v13237, %v13236
    %v13260 = vpack.c.b16 %v13239, %v13238
    %v13261 = vpack.c.b16 %v13241, %v13240
    %v13262 = vpack.c.b16 %v13243, %v13242
    %v13263 = vpack.c.b16 %v13245, %v13244
    %v13264 = vpack.c.b16 %v13247, %v13246
    %v13265 = vpack.c.b16 %v13249, %v13248
    %13282 = vmatpush.bf16.msra.mxu0 %v13257
    %13283 = vmatpush.bf16.msra.mxu0 %v13256
    %13284 = vmatpush.bf16.msra.mxu0 %v13255
    %13285 = vmatpush.bf16.msra.mxu0 %v13254
    %13286 = vmatpush.bf16.msra.mxu0 %v13253
    %13287 = vmatpush.bf16.msra.mxu0 %v13252
    %13288 = vmatpush.bf16.msra.mxu0 %v13251
    %13289 = vmatpush.bf16.msra.mxu0 %v13250
    %13290 = vmatmul.bf16.gmra.mxu0 %v13088
    %v13291 = vpop.f32.mrf.mxu0
    %v13292 = vadd.f32 0.0, %v13291
    %v13293 = vpop.f32.mrf.mxu0
    %13294 = vdwg.mxu0
    %13295 = vmatpush.bf16.msra.mxu0 %v13265
    %13296 = vmatpush.bf16.msra.mxu0 %v13264
    %13297 = vmatpush.bf16.msra.mxu0 %v13263
    %13298 = vmatpush.bf16.msra.mxu0 %v13262
    %13299 = vmatpush.bf16.msra.mxu0 %v13261
    %13300 = vmatpush.bf16.msra.mxu0 %v13260
    %13301 = vmatpush.bf16.msra.mxu0 %v13259
    %13302 = vmatpush.bf16.msra.mxu0 %v13258
    %13303 = vmatmul.bf16.gmra.mxu0 %v13089
    %v13304 = vpop.f32.mrf.mxu0
    %v13305 = vadd.f32 %v13292, %v13304
    %v13306 = vpop.f32.mrf.mxu0
    %13307 = vdwg.mxu0
    %v13372 = vunpack.c.l.b16 %v13090
    %v13373 = vunpack.c.l.b16 %v13091
    %v13374 = vunpack.c.l.b16 %v13092
    %v13375 = vunpack.c.l.b16 %v13093
    %v13376 = vunpack.c.l.b16 %v13094
    %v13377 = vunpack.c.l.b16 %v13095
    %v13378 = vunpack.c.l.b16 %v13096
    %v13379 = vunpack.c.l.b16 %v13097
    %v13380 = vunpack.c.l.b16 %v13098
    %v13381 = vunpack.c.l.b16 %v13099
    %v13382 = vunpack.c.l.b16 %v13100
    %v13383 = vunpack.c.l.b16 %v13101
    %v13384 = vunpack.c.l.b16 %v13102
    %v13385 = vunpack.c.l.b16 %v13103
    %v13386 = vunpack.c.l.b16 %v13104
    %v13387 = vunpack.c.l.b16 %v13105
    %v13388 = vunpack.c.l.b16 %v13106
    %v13389 = vunpack.c.l.b16 %v13107
    %v13390 = vunpack.c.l.b16 %v13108
    %v13391 = vunpack.c.l.b16 %v13109
    %v13392 = vunpack.c.l.b16 %v13110
    %v13393 = vunpack.c.l.b16 %v13111
    %v13394 = vunpack.c.l.b16 %v13112
    %v13395 = vunpack.c.l.b16 %v13113
    %v13396 = vunpack.c.l.b16 %v13114
    %v13397 = vunpack.c.l.b16 %v13115
    %v13398 = vunpack.c.l.b16 %v13116
    %v13399 = vunpack.c.l.b16 %v13117
    %v13400 = vunpack.c.l.b16 %v13118
    %v13401 = vunpack.c.l.b16 %v13119
    %v13402 = vunpack.c.l.b16 %v13120
    %v13403 = vunpack.c.l.b16 %v13121
    %v13404 = vunpack.c.l.b16 %v13122
    %v13405 = vunpack.c.l.b16 %v13123
    %v13406 = vunpack.c.l.b16 %v13124
    %v13407 = vunpack.c.l.b16 %v13125
    %v13408 = vunpack.c.l.b16 %v13126
    %v13409 = vunpack.c.l.b16 %v13127
    %v13410 = vunpack.c.l.b16 %v13128
    %v13411 = vunpack.c.l.b16 %v13129
    %v13412 = vunpack.c.l.b16 %v13130
    %v13413 = vunpack.c.l.b16 %v13131
    %v13414 = vunpack.c.l.b16 %v13132
    %v13415 = vunpack.c.l.b16 %v13133
    %v13416 = vunpack.c.l.b16 %v13134
    %v13417 = vunpack.c.l.b16 %v13135
    %v13418 = vunpack.c.l.b16 %v13136
    %v13419 = vunpack.c.l.b16 %v13137
    %v13420 = vunpack.c.l.b16 %v13138
    %v13421 = vunpack.c.l.b16 %v13139
    %v13422 = vunpack.c.l.b16 %v13140
    %v13423 = vunpack.c.l.b16 %v13141
    %v13424 = vunpack.c.l.b16 %v13142
    %v13425 = vunpack.c.l.b16 %v13143
    %v13426 = vunpack.c.l.b16 %v13144
    %v13427 = vunpack.c.l.b16 %v13145
    %v13428 = vunpack.c.l.b16 %v13146
    %v13429 = vunpack.c.l.b16 %v13147
    %v13430 = vunpack.c.l.b16 %v13148
    %v13431 = vunpack.c.l.b16 %v13149
    %v13432 = vunpack.c.l.b16 %v13150
    %v13433 = vunpack.c.l.b16 %v13151
    %v13434 = vunpack.c.l.b16 %v13152
    %v13435 = vunpack.c.l.b16 %v13153
    %v13436 = vpack.c.b16 %v13373, %v13372
    %v13437 = vpack.c.b16 %v13375, %v13374
    %v13438 = vpack.c.b16 %v13377, %v13376
    %v13439 = vpack.c.b16 %v13379, %v13378
    %v13440 = vpack.c.b16 %v13381, %v13380
    %v13441 = vpack.c.b16 %v13383, %v13382
    %v13442 = vpack.c.b16 %v13385, %v13384
    %v13443 = vpack.c.b16 %v13387, %v13386
    %v13444 = vpack.c.b16 %v13389, %v13388
    %v13445 = vpack.c.b16 %v13391, %v13390
    %v13446 = vpack.c.b16 %v13393, %v13392
    %v13447 = vpack.c.b16 %v13395, %v13394
    %v13448 = vpack.c.b16 %v13397, %v13396
    %v13449 = vpack.c.b16 %v13399, %v13398
    %v13450 = vpack.c.b16 %v13401, %v13400
    %v13451 = vpack.c.b16 %v13403, %v13402
    %v13452 = vpack.c.b16 %v13405, %v13404
    %v13453 = vpack.c.b16 %v13407, %v13406
    %v13454 = vpack.c.b16 %v13409, %v13408
    %v13455 = vpack.c.b16 %v13411, %v13410
    %v13456 = vpack.c.b16 %v13413, %v13412
    %v13457 = vpack.c.b16 %v13415, %v13414
    %v13458 = vpack.c.b16 %v13417, %v13416
    %v13459 = vpack.c.b16 %v13419, %v13418
    %v13460 = vpack.c.b16 %v13421, %v13420
    %v13461 = vpack.c.b16 %v13423, %v13422
    %v13462 = vpack.c.b16 %v13425, %v13424
    %v13463 = vpack.c.b16 %v13427, %v13426
    %v13464 = vpack.c.b16 %v13429, %v13428
    %v13465 = vpack.c.b16 %v13431, %v13430
    %v13466 = vpack.c.b16 %v13433, %v13432
    %v13467 = vpack.c.b16 %v13435, %v13434
    %13500 = vmatpush.bf16.msra.mxu0 %v13443
    %13501 = vmatpush.bf16.msra.mxu0 %v13442
    %13502 = vmatpush.bf16.msra.mxu0 %v13441
    %13503 = vmatpush.bf16.msra.mxu0 %v13440
    %13504 = vmatpush.bf16.msra.mxu0 %v13439
    %13505 = vmatpush.bf16.msra.mxu0 %v13438
    %13506 = vmatpush.bf16.msra.mxu0 %v13437
    %13507 = vmatpush.bf16.msra.mxu0 %v13436
    %13508 = vmatmul.bf16.gmra.mxu0 %v13082
    %v13509 = vpop.f32.mrf.mxu0
    %v13510 = vadd.f32 %v13305, %v13509
    %v13511 = vpop.f32.mrf.mxu0
    %13512 = vdwg.mxu0
    %13513 = vmatpush.bf16.msra.mxu0 %v13451
    %13514 = vmatpush.bf16.msra.mxu0 %v13450
    %13515 = vmatpush.bf16.msra.mxu0 %v13449
    %13516 = vmatpush.bf16.msra.mxu0 %v13448
    %13517 = vmatpush.bf16.msra.mxu0 %v13447
    %13518 = vmatpush.bf16.msra.mxu0 %v13446
    %13519 = vmatpush.bf16.msra.mxu0 %v13445
    %13520 = vmatpush.bf16.msra.mxu0 %v13444
    %13521 = vmatmul.bf16.gmra.mxu0 %v13083
    %v13522 = vpop.f32.mrf.mxu0
    %v13523 = vadd.f32 %v13510, %v13522
    %v13524 = vpop.f32.mrf.mxu0
    %13525 = vdwg.mxu0
    %13526 = vmatpush.bf16.msra.mxu0 %v13459
    %13527 = vmatpush.bf16.msra.mxu0 %v13458
    %13528 = vmatpush.bf16.msra.mxu0 %v13457
    %13529 = vmatpush.bf16.msra.mxu0 %v13456
    %13530 = vmatpush.bf16.msra.mxu0 %v13455
    %13531 = vmatpush.bf16.msra.mxu0 %v13454
    %13532 = vmatpush.bf16.msra.mxu0 %v13453
    %13533 = vmatpush.bf16.msra.mxu0 %v13452
    %13534 = vmatmul.bf16.gmra.mxu0 %v13084
    %v13535 = vpop.f32.mrf.mxu0
    %v13536 = vadd.f32 %v13523, %v13535
    %v13537 = vpop.f32.mrf.mxu0
    %13538 = vdwg.mxu0
    %13539 = vmatpush.bf16.msra.mxu0 %v13467
    %13540 = vmatpush.bf16.msra.mxu0 %v13466
    %13541 = vmatpush.bf16.msra.mxu0 %v13465
    %13542 = vmatpush.bf16.msra.mxu0 %v13464
    %13543 = vmatpush.bf16.msra.mxu0 %v13463
    %13544 = vmatpush.bf16.msra.mxu0 %v13462
    %13545 = vmatpush.bf16.msra.mxu0 %v13461
    %13546 = vmatpush.bf16.msra.mxu0 %v13460
    %13547 = vmatmul.bf16.gmra.mxu0 %v13085
    %v13548 = vpop.f32.mrf.mxu0
    %v13549 = vadd.f32 %v13536, %v13548
    %v13550 = vpop.f32.mrf.mxu0
    %13551 = vdwg.mxu0
    %v13552 = vld [vmem:[#allocation19] sm:$0x1]
    %v13554 = vperm.slane %v13552, 0
    %v13556 = vadd.f32 %v13549, %v13554
    %13557 = vst [vmem:[#allocation20] sm:$0x3] %v13556
    // Predicated region
    $region94: #{advanced_cnn_forward.1} parent=1 // pred_check
      _
    $region95: #{advanced_cnn_forward.1} parent=1 // pred_check_branch
      %13559 = sbr.rel (0) target = $region97
    $region96: #{advanced_cnn_forward.1} parent=1 // pred_region
      %13561 = vsyncadd [#allocation4], 0
      %s13563 = sshll.u32 [#allocation20], 4
      %s13564 = int_to_ptr.vmem [resolvable:$true] %s13563
      %s13565 = sshll.u32 %s12, 4
      %s13566 = int_to_ptr.hbm [resolvable:$true] %s13565
      %13568 = dma.vmem_to_hbm [thread:$0]  %s13564, 32, %s13566, [#allocation4]
    $region97: #{advanced_cnn_forward.1} parent=1 // pred_fallthru
      _
    // Predicated region
    $region98: #{advanced_cnn_forward.1} parent=1 // pred_check
      _
    $region99: #{advanced_cnn_forward.1} parent=1 // pred_check_branch
      %13570 = sbr.rel (0) target = $region101
    $region100: #{advanced_cnn_forward.1} parent=1 // pred_region
      %13572 = dma.done [#allocation4], 32
    $region101: #{advanced_cnn_forward.1} parent=1 // pred_fallthru
      _
    %13573 = vsyncpa [#allocation3], 1
    %13574 = vsyncpa [#allocation6], 1
    %13575 = vsyncpa [#allocation9], 1
    %13576 = vsyncpa [#allocation12], 1
    %13577 = vsyncpa [#allocation15], 1
    %13578 = vsyncpa [#allocation18], 1
    %13579 = vsyncpa [#allocation4], 1

</llo_original>
